<compile_context>
chip_gen: v7x
topology: tpu7x:2x2x1
jax: 0.10.0
libtpu: 0.0.40
codegen_flags: <defaults>
</compile_context>

<pallas_src>
import functools

import jax
import jax.numpy as jnp
from jax import lax
from jax.experimental import pallas as pl
from jax.experimental.pallas import tpu as pltpu


_VMEM_LIMIT = 32 * 1024 * 1024   # explicit scoped-VMEM budget, safe on v5e/v6e/v7x
_BLOCK_M_MAX = 512               # rows per M tile
_BN_EPS = 1e-5
_LEAKY_SLOPE = 0.2


def _round_up(x, m):
    return (x + m - 1) // m * m


# ----------------------------- Pallas kernels -----------------------------

def _mm_act_kernel(p_ref, w_ref, o_ref, *, act):
    """One M-tile of conv-as-matmul (bf16 in, f32 acc) + fused activation."""
    y = jnp.dot(p_ref[...], w_ref[...], preferred_element_type=jnp.float32)
    if act == "leaky":
        y = jnp.where(y >= 0, y, _LEAKY_SLOPE * y)
    elif act == "sigmoid":
        y = jax.nn.sigmoid(y)
    o_ref[...] = y.astype(o_ref.dtype)


def _mm_stats_kernel(p_ref, w_ref, y_ref, s_ref):
    """BN pass 1: M-tiled matmul + GLOBAL per-column sum / sum-of-squares.

    s_ref maps to the same (2, C) block on every grid step (grid axis is
    "arbitrary"), so it stays VMEM-resident and the batch statistics remain
    global while the matmul is tiled over M.
    """
    y = jnp.dot(p_ref[...], w_ref[...], preferred_element_type=jnp.float32)
    y_ref[...] = y.astype(y_ref.dtype)

    @pl.when(pl.program_id(0) == 0)
    def _():
        s_ref[...] = jnp.zeros_like(s_ref)

    tile_stats = jnp.concatenate(
        [jnp.sum(y, axis=0, keepdims=True),
         jnp.sum(y * y, axis=0, keepdims=True)], axis=0)          # (2, C)
    s_ref[...] += tile_stats


def _bn_leaky_kernel(y_ref, s_ref, g_ref, b_ref, o_ref, *, m_rows):
    """BN pass 2: apply global batch-norm affine + LeakyReLU to one M tile."""
    inv_m = 1.0 / m_rows
    s = s_ref[...]                                   # (2, C) global sums
    mean = s[0:1, :] * inv_m                         # (1, C)
    var = jnp.maximum(s[1:2, :] * inv_m - mean * mean, 0.0)
    scale = g_ref[...] * lax.rsqrt(var + _BN_EPS)    # (1, C)
    shift = b_ref[...] - mean * scale
    z = y_ref[...].astype(jnp.float32) * scale + shift
    o_ref[...] = jnp.where(z >= 0, z, _LEAKY_SLOPE * z).astype(o_ref.dtype)


# ------------------------------- JAX glue ---------------------------------

def _im2col(x, k, stride, pad):
    """x: (N, H, W, C) -> patches (N*Ho*Wo, k*k*C), Ho, Wo. Order (kh, kw, C)."""
    if pad > 0:
        x = jnp.pad(x, ((0, 0), (pad, pad), (pad, pad), (0, 0)))
    n, hp, wp, c = x.shape
    ho = (hp - k) // stride + 1
    wo = (wp - k) // stride + 1
    slabs = []
    for kh in range(k):
        for kw in range(k):
            slabs.append(
                x[:, kh:kh + stride * ho:stride, kw:kw + stride * wo:stride, :])
    p = jnp.stack(slabs, axis=3)                     # (N, Ho, Wo, k*k, C)
    return p.reshape(n * ho * wo, k * k * c), ho, wo


def _prep_weight(w, k_pad, c_pad):
    """(Cout, Cin, k, k) -> bf16 (k_pad, c_pad), row order (kh, kw, Cin)."""
    c_out, c_in, kh, kw = w.shape
    wf = jnp.transpose(w, (2, 3, 1, 0)).reshape(kh * kw * c_in, c_out)
    wf = jnp.pad(wf, ((0, k_pad - wf.shape[0]), (0, c_pad - c_out)))
    return wf.astype(jnp.bfloat16)


def _conv_block(x, w, gamma=None, beta=None, activation="leaky",
                k=4, stride=2, pad=1, out_dtype=jnp.bfloat16):
    """x: (N, H, W, Cin) NHWC; w: (Cout, Cin, k, k) (PyTorch layout)."""
    n = x.shape[0]
    c_out = w.shape[0]

    patches, ho, wo = _im2col(x.astype(jnp.bfloat16), k, stride, pad)
    m, k_dim = patches.shape
    k_pad = _round_up(k_dim, 128)                    # lane-dense contraction
    c_pad = _round_up(c_out, 128)                    # lane-dense output stores
    block_m = min(_BLOCK_M_MAX, _round_up(m, 8))
    m_pad = _round_up(m, block_m)
    grid_m = m_pad // block_m

    patches = jnp.pad(patches, ((0, m_pad - m), (0, k_pad - k_dim)))
    w_flat = _prep_weight(w, k_pad, c_pad)

    p_spec = pl.BlockSpec((block_m, k_pad), lambda i: (i, 0))
    w_spec = pl.BlockSpec((k_pad, c_pad), lambda i: (0, 0))
    y_spec = pl.BlockSpec((block_m, c_pad), lambda i: (i, 0))
    s_spec = pl.BlockSpec((2, c_pad), lambda i: (0, 0))
    v_spec = pl.BlockSpec((1, c_pad), lambda i: (0, 0))

    out_isize = jnp.dtype(out_dtype).itemsize
    mm_bytes = 2 * (m_pad * k_pad + k_pad * c_pad)   # bf16 operands
    mm_flops = 2 * m_pad * k_pad * c_pad

    if activation in ("leaky", "sigmoid"):
        out = pl.pallas_call(
            functools.partial(_mm_act_kernel, act=activation),
            out_shape=jax.ShapeDtypeStruct((m_pad, c_pad), out_dtype),
            grid=(grid_m,),
            in_specs=[p_spec, w_spec],
            out_specs=y_spec,
            compiler_params=pltpu.CompilerParams(
                dimension_semantics=("parallel",),
                vmem_limit_bytes=_VMEM_LIMIT),
            cost_estimate=pl.CostEstimate(
                flops=mm_flops,
                transcendentals=m_pad * c_pad if activation == "sigmoid" else 0,
                bytes_accessed=mm_bytes + m_pad * c_pad * out_isize),
        )(patches, w_flat)
    elif activation == "bn_leaky":
        # Pass 1: tiled matmul + global sum / sum-of-squares accumulation.
        y, stats = pl.pallas_call(
            _mm_stats_kernel,
            out_shape=(jax.ShapeDtypeStruct((m_pad, c_pad), jnp.bfloat16),
                       jax.ShapeDtypeStruct((2, c_pad), jnp.float32)),
            grid=(grid_m,),
            in_specs=[p_spec, w_spec],
            out_specs=(y_spec, s_spec),
            compiler_params=pltpu.CompilerParams(
                dimension_semantics=("arbitrary",),   # accumulator across M tiles
                vmem_limit_bytes=_VMEM_LIMIT),
            cost_estimate=pl.CostEstimate(
                flops=mm_flops + 3 * m_pad * c_pad,
                transcendentals=0,
                bytes_accessed=mm_bytes + 2 * m_pad * c_pad + 8 * c_pad),
        )(patches, w_flat)

        g = jnp.pad(gamma.astype(jnp.float32).reshape(1, c_out),
                    ((0, 0), (0, c_pad - c_out)))
        b = jnp.pad(beta.astype(jnp.float32).reshape(1, c_out),
                    ((0, 0), (0, c_pad - c_out)))

        # Pass 2: apply global BN affine + LeakyReLU, tiled over M (parallel).
        out = pl.pallas_call(
            functools.partial(_bn_leaky_kernel, m_rows=float(m)),
            out_shape=jax.ShapeDtypeStruct((m_pad, c_pad), out_dtype),
            grid=(grid_m,),
            in_specs=[y_spec, s_spec, v_spec, v_spec],
            out_specs=y_spec,
            compiler_params=pltpu.CompilerParams(
                dimension_semantics=("parallel",),
                vmem_limit_bytes=_VMEM_LIMIT),
            cost_estimate=pl.CostEstimate(
                flops=4 * m_pad * c_pad,
                transcendentals=c_pad,
                bytes_accessed=(2 + out_isize) * m_pad * c_pad + 12 * c_pad),
        )(y, stats, g, b)
    else:
        raise ValueError(activation)

    return out[:m, :c_out].reshape(n, ho, wo, c_out)


def init_params(key):
    """DCGAN-style deterministic init (weights ~ N(0, 0.02), BN gamma=1, beta=0)."""
    ks = jax.random.split(key, 5)

    def w(k, shape):
        return (0.02 * jax.random.normal(k, shape)).astype(jnp.float32)

    return {
        "w1": w(ks[0], (32, 3, 4, 4)),
        "w2": w(ks[1], (64, 32, 4, 4)),
        "w3": w(ks[2], (128, 64, 4, 4)),
        "g3": jnp.ones((128,), jnp.float32),
        "b3": jnp.zeros((128,), jnp.float32),
        "w4": w(ks[3], (256, 128, 4, 4)),
        "g4": jnp.ones((256,), jnp.float32),
        "b4": jnp.zeros((256,), jnp.float32),
        "w5": w(ks[4], (1, 256, 4, 4)),
    }


@jax.jit
def discriminator_forward(imgs_nchw, params):
    """imgs_nchw: (N, 3, 64, 64) float32 (PyTorch NCHW convention)."""
    x = jnp.transpose(imgs_nchw, (0, 2, 3, 1))                            # NHWC
    x = _conv_block(x, params["w1"], activation="leaky")                  # 64 -> 32
    x = _conv_block(x, params["w2"], activation="leaky")                  # 32 -> 16
    x = _conv_block(x, params["w3"], params["g3"], params["b3"],
                    activation="bn_leaky")                                # 16 -> 8
    x = _conv_block(x, params["w4"], params["g4"], params["b4"],
                    activation="bn_leaky")                                # 8 -> 4
    x = _conv_block(x, params["w5"], activation="sigmoid",
                    k=4, stride=1, pad=0, out_dtype=jnp.float32)          # 4 -> 1
    return x.reshape(-1, 1)                                               # (N, 1)


if __name__ == "__main__":
    key = jax.random.PRNGKey(0)
    k_img, k_par = jax.random.split(key)

    # Small batch; spatial 64 is required by the architecture (final 4x4 conv
    # with stride 1 / no padding collapses 64x64 input to a 1x1 logit map).
    imgs = jax.random.normal(k_img, (2, 3, 64, 64), dtype=jnp.float32)
    params = init_params(k_par)

    out = discriminator_forward(imgs, params)
    out = jax.block_until_ready(out)

    assert out.shape == (2, 1), out.shape
    assert bool(jnp.all(jnp.isfinite(out)))
    assert bool(jnp.all((out >= 0.0) & (out <= 1.0)))
    print("KERNEL_OK")
</pallas_src>

<mosaic_0001>
module attributes {stable_mosaic.version = 11 : i64} {
  func.func @_mm_act_kernel(%arg0: i32, %arg1: memref<512x128xbf16, #tpu.memory_space<vmem>>, %arg2: memref<128x128xbf16, #tpu.memory_space<vmem>>, %arg3: memref<512x128xbf16, #tpu.memory_space<vmem>>) attributes {dimension_semantics = [#tpu.dimension_semantics<parallel>], iteration_bounds = array<i64: 4>, scalar_prefetch = 0 : i64, scratch_operands = 0 : i64, tpu.core_type = #tpu.core_type<tc>, window_params = [{transform_indices = @transform_0, window_bounds = array<i64: 512, 128>}, {pipeline_mode = #tpu.pipeline_mode<synchronous>, transform_indices = @transform_1, window_bounds = array<i64: 128, 128>}, {transform_indices = @transform_2, window_bounds = array<i64: 512, 128>}]} {
    %c0 = arith.constant 0 : index
    %c0_0 = arith.constant 0 : index
    %0 = vector.load %arg1[%c0, %c0_0] : memref<512x128xbf16, #tpu.memory_space<vmem>>, vector<512x128xbf16>
    %c0_1 = arith.constant 0 : index
    %c0_2 = arith.constant 0 : index
    %1 = vector.load %arg2[%c0_1, %c0_2] : memref<128x128xbf16, #tpu.memory_space<vmem>>, vector<128x128xbf16>
    %cst = arith.constant dense<0.000000e+00> : vector<512x128xf32>
    %2 = tpu.matmul %0, %1, %cst {dimension_numbers = #tpu.dot_dimension_numbers<[1], [0], [0], [1], [0, 0, 1, 1], [], []>} : vector<512x128xbf16>, vector<128x128xbf16>, vector<512x128xf32> -> vector<512x128xf32>
    %cst_3 = arith.constant 0.000000e+00 : f32
    %3 = vector.broadcast %cst_3 : f32 to vector<512x128xf32>
    %4 = arith.cmpf oge, %2, %3 : vector<512x128xf32>
    %cst_4 = arith.constant 2.000000e-01 : f32
    %5 = vector.broadcast %cst_4 : f32 to vector<512x128xf32>
    %6 = arith.mulf %5, %2 : vector<512x128xf32>
    %7 = arith.select %4, %2, %6 : vector<512x128xi1>, vector<512x128xf32>
    %8 = arith.truncf %7 : vector<512x128xf32> to vector<512x128xbf16>
    %c0_5 = arith.constant 0 : index
    %c0_6 = arith.constant 0 : index
    %9 = vector.load %arg3[%c0_5, %c0_6] : memref<512x128xbf16, #tpu.memory_space<vmem>>, vector<512x128xbf16>
    tpu.vector_store %arg3[%c0_5, %c0_6], %8 {strides = array<i32>} : memref<512x128xbf16, #tpu.memory_space<vmem>>, vector<512x128xbf16>,
    return
  }
  func.func @transform_0(%arg0: i32) -> (i32, i32) {
    %c0_i32 = arith.constant 0 : i32
    %c0_i32_0 = arith.constant 0 : i32
    return %arg0, %c0_i32 : i32, i32
  }
  func.func @transform_1(%arg0: i32) -> (i32, i32) {
    %c0_i32 = arith.constant 0 : i32
    %c0_i32_0 = arith.constant 0 : i32
    %c0_i32_1 = arith.constant 0 : i32
    return %c0_i32, %c0_i32_0 : i32, i32
  }
  func.func @transform_2(%arg0: i32) -> (i32, i32) {
    %c0_i32 = arith.constant 0 : i32
    %c0_i32_0 = arith.constant 0 : i32
    return %arg0, %c0_i32 : i32, i32
  }
}

module attributes {stable_mosaic.version = 11 : i64} {
  func.func @_mm_act_kernel(%arg0: i32, %arg1: memref<512x512xbf16, #tpu.memory_space<vmem>>, %arg2: memref<512x128xbf16, #tpu.memory_space<vmem>>, %arg3: memref<512x128xbf16, #tpu.memory_space<vmem>>) attributes {dimension_semantics = [#tpu.dimension_semantics<parallel>], iteration_bounds = array<i64: 1>, scalar_prefetch = 0 : i64, scratch_operands = 0 : i64, tpu.core_type = #tpu.core_type<tc>, window_params = [{transform_indices = @transform_0, window_bounds = array<i64: 512, 512>}, {pipeline_mode = #tpu.pipeline_mode<synchronous>, transform_indices = @transform_1, window_bounds = array<i64: 512, 128>}, {transform_indices = @transform_2, window_bounds = array<i64: 512, 128>}]} {
    %c0 = arith.constant 0 : index
    %c0_0 = arith.constant 0 : index
    %0 = vector.load %arg1[%c0, %c0_0] : memref<512x512xbf16, #tpu.memory_space<vmem>>, vector<512x512xbf16>
    %c0_1 = arith.constant 0 : index
    %c0_2 = arith.constant 0 : index
    %1 = vector.load %arg2[%c0_1, %c0_2] : memref<512x128xbf16, #tpu.memory_space<vmem>>, vector<512x128xbf16>
    %cst = arith.constant dense<0.000000e+00> : vector<512x128xf32>
    %2 = tpu.matmul %0, %1, %cst {dimension_numbers = #tpu.dot_dimension_numbers<[1], [0], [0], [1], [0, 0, 1, 1], [], []>} : vector<512x512xbf16>, vector<512x128xbf16>, vector<512x128xf32> -> vector<512x128xf32>
    %cst_3 = arith.constant 0.000000e+00 : f32
    %3 = vector.broadcast %cst_3 : f32 to vector<512x128xf32>
    %4 = arith.cmpf oge, %2, %3 : vector<512x128xf32>
    %cst_4 = arith.constant 2.000000e-01 : f32
    %5 = vector.broadcast %cst_4 : f32 to vector<512x128xf32>
    %6 = arith.mulf %5, %2 : vector<512x128xf32>
    %7 = arith.select %4, %2, %6 : vector<512x128xi1>, vector<512x128xf32>
    %8 = arith.truncf %7 : vector<512x128xf32> to vector<512x128xbf16>
    %c0_5 = arith.constant 0 : index
    %c0_6 = arith.constant 0 : index
    %9 = vector.load %arg3[%c0_5, %c0_6] : memref<512x128xbf16, #tpu.memory_space<vmem>>, vector<512x128xbf16>
    tpu.vector_store %arg3[%c0_5, %c0_6], %8 {strides = array<i32>} : memref<512x128xbf16, #tpu.memory_space<vmem>>, vector<512x128xbf16>,
    return
  }
  func.func @transform_0(%arg0: i32) -> (i32, i32) {
    %c0_i32 = arith.constant 0 : i32
    %c0_i32_0 = arith.constant 0 : i32
    return %arg0, %c0_i32 : i32, i32
  }
  func.func @transform_1(%arg0: i32) -> (i32, i32) {
    %c0_i32 = arith.constant 0 : i32
    %c0_i32_0 = arith.constant 0 : i32
    %c0_i32_1 = arith.constant 0 : i32
    return %c0_i32, %c0_i32_0 : i32, i32
  }
  func.func @transform_2(%arg0: i32) -> (i32, i32) {
    %c0_i32 = arith.constant 0 : i32
    %c0_i32_0 = arith.constant 0 : i32
    return %arg0, %c0_i32 : i32, i32
  }
}

module attributes {stable_mosaic.version = 11 : i64} {
  func.func @_mm_stats_kernel(%arg0: i32, %arg1: memref<128x1024xbf16, #tpu.memory_space<vmem>>, %arg2: memref<1024x128xbf16, #tpu.memory_space<vmem>>, %arg3: memref<128x128xbf16, #tpu.memory_space<vmem>>, %arg4: memref<2x128xf32, #tpu.memory_space<vmem>>) attributes {dimension_semantics = [#tpu.dimension_semantics<arbitrary>], iteration_bounds = array<i64: 1>, scalar_prefetch = 0 : i64, scratch_operands = 0 : i64, tpu.core_type = #tpu.core_type<tc>, window_params = [{transform_indices = @transform_0, window_bounds = array<i64: 128, 1024>}, {pipeline_mode = #tpu.pipeline_mode<synchronous>, transform_indices = @transform_1, window_bounds = array<i64: 1024, 128>}, {transform_indices = @transform_2, window_bounds = array<i64: 128, 128>}, {pipeline_mode = #tpu.pipeline_mode<synchronous>, transform_indices = @transform_3, window_bounds = array<i64: 2, 128>}]} {
    %c0 = arith.constant 0 : index
    %c0_0 = arith.constant 0 : index
    %0 = vector.load %arg1[%c0, %c0_0] : memref<128x1024xbf16, #tpu.memory_space<vmem>>, vector<128x1024xbf16>
    %c0_1 = arith.constant 0 : index
    %c0_2 = arith.constant 0 : index
    %1 = vector.load %arg2[%c0_1, %c0_2] : memref<1024x128xbf16, #tpu.memory_space<vmem>>, vector<1024x128xbf16>
    %cst = arith.constant dense<0.000000e+00> : vector<128x128xf32>
    %2 = tpu.matmul %0, %1, %cst {dimension_numbers = #tpu.dot_dimension_numbers<[1], [0], [0], [1], [0, 0, 1, 1], [], []>} : vector<128x1024xbf16>, vector<1024x128xbf16>, vector<128x128xf32> -> vector<128x128xf32>
    %3 = arith.truncf %2 : vector<128x128xf32> to vector<128x128xbf16>
    %c0_3 = arith.constant 0 : index
    %c0_4 = arith.constant 0 : index
    %4 = vector.load %arg3[%c0_3, %c0_4] : memref<128x128xbf16, #tpu.memory_space<vmem>>, vector<128x128xbf16>
    tpu.vector_store %arg3[%c0_3, %c0_4], %3 {strides = array<i32>} : memref<128x128xbf16, #tpu.memory_space<vmem>>, vector<128x128xbf16>,
    %c0_i32 = arith.constant 0 : i32
    %5 = arith.cmpi eq, %arg0, %c0_i32 : i32
    %6 = arith.extui %5 : i1 to i32
    %c0_i32_5 = arith.constant 0 : i32
    %7 = arith.cmpi ne, %6, %c0_i32_5 : i32
    scf.if %7 {
      %cst_12 = arith.constant 0.000000e+00 : f32
      %17 = vector.broadcast %cst_12 : f32 to vector<2x128xf32>
      %c0_13 = arith.constant 0 : index
      %c0_14 = arith.constant 0 : index
      %18 = vector.load %arg4[%c0_13, %c0_14] : memref<2x128xf32, #tpu.memory_space<vmem>>, vector<2x128xf32>
      tpu.vector_store %arg4[%c0_13, %c0_14], %17 {strides = array<i32>} : memref<2x128xf32, #tpu.memory_space<vmem>>, vector<2x128xf32>,
    } else {
    }
    %cst_6 = arith.constant dense<0.000000e+00> : vector<128xf32>
    %8 = vector.multi_reduction <add>, %2, %cst_6 [0] : vector<128x128xf32> to vector<128xf32>
    %9 = vector.shape_cast %8 : vector<128xf32> to vector<1x128xf32>
    %10 = arith.mulf %2, %2 : vector<128x128xf32>
    %cst_7 = arith.constant dense<0.000000e+00> : vector<128xf32>
    %11 = vector.multi_reduction <add>, %10, %cst_7 [0] : vector<128x128xf32> to vector<128xf32>
    %12 = vector.shape_cast %11 : vector<128xf32> to vector<1x128xf32>
    %13 = tpu.concatenate %9, %12 in 0 : vector<1x128xf32>, vector<1x128xf32> -> vector<2x128xf32>
    %c0_8 = arith.constant 0 : index
    %c0_9 = arith.constant 0 : index
    %14 = vector.load %arg4[%c0_8, %c0_9] : memref<2x128xf32, #tpu.memory_space<vmem>>, vector<2x128xf32>
    %15 = arith.addf %14, %13 : vector<2x128xf32>
    %c0_10 = arith.constant 0 : index
    %c0_11 = arith.constant 0 : index
    %16 = vector.load %arg4[%c0_10, %c0_11] : memref<2x128xf32, #tpu.memory_space<vmem>>, vector<2x128xf32>
    tpu.vector_store %arg4[%c0_10, %c0_11], %15 {strides = array<i32>} : memref<2x128xf32, #tpu.memory_space<vmem>>, vector<2x128xf32>,
    return
  }
  func.func @transform_0(%arg0: i32) -> (i32, i32) {
    %c0_i32 = arith.constant 0 : i32
    %c0_i32_0 = arith.constant 0 : i32
    return %arg0, %c0_i32 : i32, i32
  }
  func.func @transform_1(%arg0: i32) -> (i32, i32) {
    %c0_i32 = arith.constant 0 : i32
    %c0_i32_0 = arith.constant 0 : i32
    %c0_i32_1 = arith.constant 0 : i32
    return %c0_i32, %c0_i32_0 : i32, i32
  }
  func.func @transform_2(%arg0: i32) -> (i32, i32) {
    %c0_i32 = arith.constant 0 : i32
    %c0_i32_0 = arith.constant 0 : i32
    return %arg0, %c0_i32 : i32, i32
  }
  func.func @transform_3(%arg0: i32) -> (i32, i32) {
    %c0_i32 = arith.constant 0 : i32
    %c0_i32_0 = arith.constant 0 : i32
    %c0_i32_1 = arith.constant 0 : i32
    return %c0_i32, %c0_i32_0 : i32, i32
  }
}

module attributes {stable_mosaic.version = 11 : i64} {
  func.func @_bn_leaky_kernel(%arg0: i32, %arg1: memref<128x128xbf16, #tpu.memory_space<vmem>>, %arg2: memref<2x128xf32, #tpu.memory_space<vmem>>, %arg3: memref<1x128xf32, #tpu.memory_space<vmem>>, %arg4: memref<1x128xf32, #tpu.memory_space<vmem>>, %arg5: memref<128x128xbf16, #tpu.memory_space<vmem>>) attributes {dimension_semantics = [#tpu.dimension_semantics<parallel>], iteration_bounds = array<i64: 1>, scalar_prefetch = 0 : i64, scratch_operands = 0 : i64, tpu.core_type = #tpu.core_type<tc>, window_params = [{transform_indices = @transform_0, window_bounds = array<i64: 128, 128>}, {pipeline_mode = #tpu.pipeline_mode<synchronous>, transform_indices = @transform_1, window_bounds = array<i64: 2, 128>}, {pipeline_mode = #tpu.pipeline_mode<synchronous>, transform_indices = @transform_2, window_bounds = array<i64: 1, 128>}, {pipeline_mode = #tpu.pipeline_mode<synchronous>, transform_indices = @transform_3, window_bounds = array<i64: 1, 128>}, {transform_indices = @transform_4, window_bounds = array<i64: 128, 128>}]} {
    %c0 = arith.constant 0 : index
    %c0_0 = arith.constant 0 : index
    %0 = vector.load %arg2[%c0, %c0_0] : memref<2x128xf32, #tpu.memory_space<vmem>>, vector<2x128xf32>
    %1 = vector.extract_strided_slice %0 {offsets = [0, 0], sizes = [1, 128], strides = [1, 1]} : vector<2x128xf32> to vector<1x128xf32>
    %cst = arith.constant 7.812500e-03 : f32
    %2 = vector.broadcast %cst : f32 to vector<1x128xf32>
    %3 = arith.mulf %1, %2 : vector<1x128xf32>
    %4 = vector.extract_strided_slice %0 {offsets = [1, 0], sizes = [1, 128], strides = [1, 1]} : vector<2x128xf32> to vector<1x128xf32>
    %cst_1 = arith.constant 7.812500e-03 : f32
    %5 = vector.broadcast %cst_1 : f32 to vector<1x128xf32>
    %6 = arith.mulf %4, %5 : vector<1x128xf32>
    %7 = arith.mulf %3, %3 : vector<1x128xf32>
    %8 = arith.subf %6, %7 : vector<1x128xf32>
    %cst_2 = arith.constant 0.000000e+00 : f32
    %9 = vector.broadcast %cst_2 : f32 to vector<1x128xf32>
    %10 = arith.maximumf %8, %9 : vector<1x128xf32>
    %c0_3 = arith.constant 0 : index
    %c0_4 = arith.constant 0 : index
    %11 = vector.load %arg3[%c0_3, %c0_4] : memref<1x128xf32, #tpu.memory_space<vmem>>, vector<1x128xf32>
    %cst_5 = arith.constant 9.99999974E-6 : f32
    %12 = vector.broadcast %cst_5 : f32 to vector<1x128xf32>
    %13 = arith.addf %10, %12 : vector<1x128xf32>
    %14 = math.rsqrt %13 : vector<1x128xf32>
    %15 = arith.mulf %11, %14 : vector<1x128xf32>
    %c0_6 = arith.constant 0 : index
    %c0_7 = arith.constant 0 : index
    %16 = vector.load %arg4[%c0_6, %c0_7] : memref<1x128xf32, #tpu.memory_space<vmem>>, vector<1x128xf32>
    %17 = arith.mulf %3, %15 : vector<1x128xf32>
    %18 = arith.subf %16, %17 : vector<1x128xf32>
    %c0_8 = arith.constant 0 : index
    %c0_9 = arith.constant 0 : index
    %19 = vector.load %arg1[%c0_8, %c0_9] : memref<128x128xbf16, #tpu.memory_space<vmem>>, vector<128x128xbf16>
    %20 = arith.extf %19 : vector<128x128xbf16> to vector<128x128xf32>
    %21 = vector.broadcast %15 : vector<1x128xf32> to vector<128x128xf32>
    %22 = arith.mulf %20, %21 : vector<128x128xf32>
    %23 = vector.broadcast %18 : vector<1x128xf32> to vector<128x128xf32>
    %24 = arith.addf %22, %23 : vector<128x128xf32>
    %cst_10 = arith.constant 0.000000e+00 : f32
    %25 = vector.broadcast %cst_10 : f32 to vector<128x128xf32>
    %26 = arith.cmpf oge, %24, %25 : vector<128x128xf32>
    %cst_11 = arith.constant 2.000000e-01 : f32
    %27 = vector.broadcast %cst_11 : f32 to vector<128x128xf32>
    %28 = arith.mulf %27, %24 : vector<128x128xf32>
    %29 = arith.select %26, %24, %28 : vector<128x128xi1>, vector<128x128xf32>
    %30 = arith.truncf %29 : vector<128x128xf32> to vector<128x128xbf16>
    %c0_12 = arith.constant 0 : index
    %c0_13 = arith.constant 0 : index
    %31 = vector.load %arg5[%c0_12, %c0_13] : memref<128x128xbf16, #tpu.memory_space<vmem>>, vector<128x128xbf16>
    tpu.vector_store %arg5[%c0_12, %c0_13], %30 {strides = array<i32>} : memref<128x128xbf16, #tpu.memory_space<vmem>>, vector<128x128xbf16>,
    return
  }
  func.func @transform_0(%arg0: i32) -> (i32, i32) {
    %c0_i32 = arith.constant 0 : i32
    %c0_i32_0 = arith.constant 0 : i32
    return %arg0, %c0_i32 : i32, i32
  }
  func.func @transform_1(%arg0: i32) -> (i32, i32) {
    %c0_i32 = arith.constant 0 : i32
    %c0_i32_0 = arith.constant 0 : i32
    %c0_i32_1 = arith.constant 0 : i32
    return %c0_i32, %c0_i32_0 : i32, i32
  }
  func.func @transform_2(%arg0: i32) -> (i32, i32) {
    %c0_i32 = arith.constant 0 : i32
    %c0_i32_0 = arith.constant 0 : i32
    %c0_i32_1 = arith.constant 0 : i32
    return %c0_i32, %c0_i32_0 : i32, i32
  }
  func.func @transform_3(%arg0: i32) -> (i32, i32) {
    %c0_i32 = arith.constant 0 : i32
    %c0_i32_0 = arith.constant 0 : i32
    %c0_i32_1 = arith.constant 0 : i32
    return %c0_i32, %c0_i32_0 : i32, i32
  }
  func.func @transform_4(%arg0: i32) -> (i32, i32) {
    %c0_i32 = arith.constant 0 : i32
    %c0_i32_0 = arith.constant 0 : i32
    return %arg0, %c0_i32 : i32, i32
  }
}

module attributes {stable_mosaic.version = 11 : i64} {
  func.func @_mm_stats_kernel(%arg0: i32, %arg1: memref<32x2048xbf16, #tpu.memory_space<vmem>>, %arg2: memref<2048x256xbf16, #tpu.memory_space<vmem>>, %arg3: memref<32x256xbf16, #tpu.memory_space<vmem>>, %arg4: memref<2x256xf32, #tpu.memory_space<vmem>>) attributes {dimension_semantics = [#tpu.dimension_semantics<arbitrary>], iteration_bounds = array<i64: 1>, scalar_prefetch = 0 : i64, scratch_operands = 0 : i64, tpu.core_type = #tpu.core_type<tc>, window_params = [{transform_indices = @transform_0, window_bounds = array<i64: 32, 2048>}, {pipeline_mode = #tpu.pipeline_mode<synchronous>, transform_indices = @transform_1, window_bounds = array<i64: 2048, 256>}, {transform_indices = @transform_2, window_bounds = array<i64: 32, 256>}, {pipeline_mode = #tpu.pipeline_mode<synchronous>, transform_indices = @transform_3, window_bounds = array<i64: 2, 256>}]} {
    %c0 = arith.constant 0 : index
    %c0_0 = arith.constant 0 : index
    %0 = vector.load %arg1[%c0, %c0_0] : memref<32x2048xbf16, #tpu.memory_space<vmem>>, vector<32x2048xbf16>
    %c0_1 = arith.constant 0 : index
    %c0_2 = arith.constant 0 : index
    %1 = vector.load %arg2[%c0_1, %c0_2] : memref<2048x256xbf16, #tpu.memory_space<vmem>>, vector<2048x256xbf16>
    %cst = arith.constant dense<0.000000e+00> : vector<32x256xf32>
    %2 = tpu.matmul %0, %1, %cst {dimension_numbers = #tpu.dot_dimension_numbers<[1], [0], [0], [1], [0, 0, 1, 1], [], []>} : vector<32x2048xbf16>, vector<2048x256xbf16>, vector<32x256xf32> -> vector<32x256xf32>
    %3 = arith.truncf %2 : vector<32x256xf32> to vector<32x256xbf16>
    %c0_3 = arith.constant 0 : index
    %c0_4 = arith.constant 0 : index
    %4 = vector.load %arg3[%c0_3, %c0_4] : memref<32x256xbf16, #tpu.memory_space<vmem>>, vector<32x256xbf16>
    tpu.vector_store %arg3[%c0_3, %c0_4], %3 {strides = array<i32>} : memref<32x256xbf16, #tpu.memory_space<vmem>>, vector<32x256xbf16>,
    %c0_i32 = arith.constant 0 : i32
    %5 = arith.cmpi eq, %arg0, %c0_i32 : i32
    %6 = arith.extui %5 : i1 to i32
    %c0_i32_5 = arith.constant 0 : i32
    %7 = arith.cmpi ne, %6, %c0_i32_5 : i32
    scf.if %7 {
      %cst_12 = arith.constant 0.000000e+00 : f32
      %17 = vector.broadcast %cst_12 : f32 to vector<2x256xf32>
      %c0_13 = arith.constant 0 : index
      %c0_14 = arith.constant 0 : index
      %18 = vector.load %arg4[%c0_13, %c0_14] : memref<2x256xf32, #tpu.memory_space<vmem>>, vector<2x256xf32>
      tpu.vector_store %arg4[%c0_13, %c0_14], %17 {strides = array<i32>} : memref<2x256xf32, #tpu.memory_space<vmem>>, vector<2x256xf32>,
    } else {
    }
    %cst_6 = arith.constant dense<0.000000e+00> : vector<256xf32>
    %8 = vector.multi_reduction <add>, %2, %cst_6 [0] : vector<32x256xf32> to vector<256xf32>
    %9 = vector.shape_cast %8 : vector<256xf32> to vector<1x256xf32>
    %10 = arith.mulf %2, %2 : vector<32x256xf32>
    %cst_7 = arith.constant dense<0.000000e+00> : vector<256xf32>
    %11 = vector.multi_reduction <add>, %10, %cst_7 [0] : vector<32x256xf32> to vector<256xf32>
    %12 = vector.shape_cast %11 : vector<256xf32> to vector<1x256xf32>
    %13 = tpu.concatenate %9, %12 in 0 : vector<1x256xf32>, vector<1x256xf32> -> vector<2x256xf32>
    %c0_8 = arith.constant 0 : index
    %c0_9 = arith.constant 0 : index
    %14 = vector.load %arg4[%c0_8, %c0_9] : memref<2x256xf32, #tpu.memory_space<vmem>>, vector<2x256xf32>
    %15 = arith.addf %14, %13 : vector<2x256xf32>
    %c0_10 = arith.constant 0 : index
    %c0_11 = arith.constant 0 : index
    %16 = vector.load %arg4[%c0_10, %c0_11] : memref<2x256xf32, #tpu.memory_space<vmem>>, vector<2x256xf32>
    tpu.vector_store %arg4[%c0_10, %c0_11], %15 {strides = array<i32>} : memref<2x256xf32, #tpu.memory_space<vmem>>, vector<2x256xf32>,
    return
  }
  func.func @transform_0(%arg0: i32) -> (i32, i32) {
    %c0_i32 = arith.constant 0 : i32
    %c0_i32_0 = arith.constant 0 : i32
    return %arg0, %c0_i32 : i32, i32
  }
  func.func @transform_1(%arg0: i32) -> (i32, i32) {
    %c0_i32 = arith.constant 0 : i32
    %c0_i32_0 = arith.constant 0 : i32
    %c0_i32_1 = arith.constant 0 : i32
    return %c0_i32, %c0_i32_0 : i32, i32
  }
  func.func @transform_2(%arg0: i32) -> (i32, i32) {
    %c0_i32 = arith.constant 0 : i32
    %c0_i32_0 = arith.constant 0 : i32
    return %arg0, %c0_i32 : i32, i32
  }
  func.func @transform_3(%arg0: i32) -> (i32, i32) {
    %c0_i32 = arith.constant 0 : i32
    %c0_i32_0 = arith.constant 0 : i32
    %c0_i32_1 = arith.constant 0 : i32
    return %c0_i32, %c0_i32_0 : i32, i32
  }
}

module attributes {stable_mosaic.version = 11 : i64} {
  func.func @_bn_leaky_kernel(%arg0: i32, %arg1: memref<32x256xbf16, #tpu.memory_space<vmem>>, %arg2: memref<2x256xf32, #tpu.memory_space<vmem>>, %arg3: memref<1x256xf32, #tpu.memory_space<vmem>>, %arg4: memref<1x256xf32, #tpu.memory_space<vmem>>, %arg5: memref<32x256xbf16, #tpu.memory_space<vmem>>) attributes {dimension_semantics = [#tpu.dimension_semantics<parallel>], iteration_bounds = array<i64: 1>, scalar_prefetch = 0 : i64, scratch_operands = 0 : i64, tpu.core_type = #tpu.core_type<tc>, window_params = [{transform_indices = @transform_0, window_bounds = array<i64: 32, 256>}, {pipeline_mode = #tpu.pipeline_mode<synchronous>, transform_indices = @transform_1, window_bounds = array<i64: 2, 256>}, {pipeline_mode = #tpu.pipeline_mode<synchronous>, transform_indices = @transform_2, window_bounds = array<i64: 1, 256>}, {pipeline_mode = #tpu.pipeline_mode<synchronous>, transform_indices = @transform_3, window_bounds = array<i64: 1, 256>}, {transform_indices = @transform_4, window_bounds = array<i64: 32, 256>}]} {
    %c0 = arith.constant 0 : index
    %c0_0 = arith.constant 0 : index
    %0 = vector.load %arg2[%c0, %c0_0] : memref<2x256xf32, #tpu.memory_space<vmem>>, vector<2x256xf32>
    %1 = vector.extract_strided_slice %0 {offsets = [0, 0], sizes = [1, 256], strides = [1, 1]} : vector<2x256xf32> to vector<1x256xf32>
    %cst = arith.constant 3.125000e-02 : f32
    %2 = vector.broadcast %cst : f32 to vector<1x256xf32>
    %3 = arith.mulf %1, %2 : vector<1x256xf32>
    %4 = vector.extract_strided_slice %0 {offsets = [1, 0], sizes = [1, 256], strides = [1, 1]} : vector<2x256xf32> to vector<1x256xf32>
    %cst_1 = arith.constant 3.125000e-02 : f32
    %5 = vector.broadcast %cst_1 : f32 to vector<1x256xf32>
    %6 = arith.mulf %4, %5 : vector<1x256xf32>
    %7 = arith.mulf %3, %3 : vector<1x256xf32>
    %8 = arith.subf %6, %7 : vector<1x256xf32>
    %cst_2 = arith.constant 0.000000e+00 : f32
    %9 = vector.broadcast %cst_2 : f32 to vector<1x256xf32>
    %10 = arith.maximumf %8, %9 : vector<1x256xf32>
    %c0_3 = arith.constant 0 : index
    %c0_4 = arith.constant 0 : index
    %11 = vector.load %arg3[%c0_3, %c0_4] : memref<1x256xf32, #tpu.memory_space<vmem>>, vector<1x256xf32>
    %cst_5 = arith.constant 9.99999974E-6 : f32
    %12 = vector.broadcast %cst_5 : f32 to vector<1x256xf32>
    %13 = arith.addf %10, %12 : vector<1x256xf32>
    %14 = math.rsqrt %13 : vector<1x256xf32>
    %15 = arith.mulf %11, %14 : vector<1x256xf32>
    %c0_6 = arith.constant 0 : index
    %c0_7 = arith.constant 0 : index
    %16 = vector.load %arg4[%c0_6, %c0_7] : memref<1x256xf32, #tpu.memory_space<vmem>>, vector<1x256xf32>
    %17 = arith.mulf %3, %15 : vector<1x256xf32>
    %18 = arith.subf %16, %17 : vector<1x256xf32>
    %c0_8 = arith.constant 0 : index
    %c0_9 = arith.constant 0 : index
    %19 = vector.load %arg1[%c0_8, %c0_9] : memref<32x256xbf16, #tpu.memory_space<vmem>>, vector<32x256xbf16>
    %20 = arith.extf %19 : vector<32x256xbf16> to vector<32x256xf32>
    %21 = vector.broadcast %15 : vector<1x256xf32> to vector<32x256xf32>
    %22 = arith.mulf %20, %21 : vector<32x256xf32>
    %23 = vector.broadcast %18 : vector<1x256xf32> to vector<32x256xf32>
    %24 = arith.addf %22, %23 : vector<32x256xf32>
    %cst_10 = arith.constant 0.000000e+00 : f32
    %25 = vector.broadcast %cst_10 : f32 to vector<32x256xf32>
    %26 = arith.cmpf oge, %24, %25 : vector<32x256xf32>
    %cst_11 = arith.constant 2.000000e-01 : f32
    %27 = vector.broadcast %cst_11 : f32 to vector<32x256xf32>
    %28 = arith.mulf %27, %24 : vector<32x256xf32>
    %29 = arith.select %26, %24, %28 : vector<32x256xi1>, vector<32x256xf32>
    %30 = arith.truncf %29 : vector<32x256xf32> to vector<32x256xbf16>
    %c0_12 = arith.constant 0 : index
    %c0_13 = arith.constant 0 : index
    %31 = vector.load %arg5[%c0_12, %c0_13] : memref<32x256xbf16, #tpu.memory_space<vmem>>, vector<32x256xbf16>
    tpu.vector_store %arg5[%c0_12, %c0_13], %30 {strides = array<i32>} : memref<32x256xbf16, #tpu.memory_space<vmem>>, vector<32x256xbf16>,
    return
  }
  func.func @transform_0(%arg0: i32) -> (i32, i32) {
    %c0_i32 = arith.constant 0 : i32
    %c0_i32_0 = arith.constant 0 : i32
    return %arg0, %c0_i32 : i32, i32
  }
  func.func @transform_1(%arg0: i32) -> (i32, i32) {
    %c0_i32 = arith.constant 0 : i32
    %c0_i32_0 = arith.constant 0 : i32
    %c0_i32_1 = arith.constant 0 : i32
    return %c0_i32, %c0_i32_0 : i32, i32
  }
  func.func @transform_2(%arg0: i32) -> (i32, i32) {
    %c0_i32 = arith.constant 0 : i32
    %c0_i32_0 = arith.constant 0 : i32
    %c0_i32_1 = arith.constant 0 : i32
    return %c0_i32, %c0_i32_0 : i32, i32
  }
  func.func @transform_3(%arg0: i32) -> (i32, i32) {
    %c0_i32 = arith.constant 0 : i32
    %c0_i32_0 = arith.constant 0 : i32
    %c0_i32_1 = arith.constant 0 : i32
    return %c0_i32, %c0_i32_0 : i32, i32
  }
  func.func @transform_4(%arg0: i32) -> (i32, i32) {
    %c0_i32 = arith.constant 0 : i32
    %c0_i32_0 = arith.constant 0 : i32
    return %arg0, %c0_i32 : i32, i32
  }
}

module attributes {stable_mosaic.version = 11 : i64} {
  func.func @_mm_act_kernel(%arg0: i32, %arg1: memref<8x4096xbf16, #tpu.memory_space<vmem>>, %arg2: memref<4096x128xbf16, #tpu.memory_space<vmem>>, %arg3: memref<8x128xf32, #tpu.memory_space<vmem>>) attributes {dimension_semantics = [#tpu.dimension_semantics<parallel>], iteration_bounds = array<i64: 1>, scalar_prefetch = 0 : i64, scratch_operands = 0 : i64, tpu.core_type = #tpu.core_type<tc>, window_params = [{transform_indices = @transform_0, window_bounds = array<i64: 8, 4096>}, {pipeline_mode = #tpu.pipeline_mode<synchronous>, transform_indices = @transform_1, window_bounds = array<i64: 4096, 128>}, {transform_indices = @transform_2, window_bounds = array<i64: 8, 128>}]} {
    %c0 = arith.constant 0 : index
    %c0_0 = arith.constant 0 : index
    %0 = vector.load %arg1[%c0, %c0_0] : memref<8x4096xbf16, #tpu.memory_space<vmem>>, vector<8x4096xbf16>
    %c0_1 = arith.constant 0 : index
    %c0_2 = arith.constant 0 : index
    %1 = vector.load %arg2[%c0_1, %c0_2] : memref<4096x128xbf16, #tpu.memory_space<vmem>>, vector<4096x128xbf16>
    %cst = arith.constant dense<0.000000e+00> : vector<8x128xf32>
    %2 = tpu.matmul %0, %1, %cst {dimension_numbers = #tpu.dot_dimension_numbers<[1], [0], [0], [1], [0, 0, 1, 1], [], []>} : vector<8x4096xbf16>, vector<4096x128xbf16>, vector<8x128xf32> -> vector<8x128xf32>
    %3 = arith.negf %2 : vector<8x128xf32>
    %4 = math.exp %3 : vector<8x128xf32>
    %cst_3 = arith.constant 1.000000e+00 : f32
    %5 = vector.broadcast %cst_3 : f32 to vector<8x128xf32>
    %6 = arith.addf %5, %4 : vector<8x128xf32>
    %7 = arith.divf %5, %6 : vector<8x128xf32>
    %c0_4 = arith.constant 0 : index
    %c0_5 = arith.constant 0 : index
    %8 = vector.load %arg3[%c0_4, %c0_5] : memref<8x128xf32, #tpu.memory_space<vmem>>, vector<8x128xf32>
    tpu.vector_store %arg3[%c0_4, %c0_5], %7 {strides = array<i32>} : memref<8x128xf32, #tpu.memory_space<vmem>>, vector<8x128xf32>,
    return
  }
  func.func @transform_0(%arg0: i32) -> (i32, i32) {
    %c0_i32 = arith.constant 0 : i32
    %c0_i32_0 = arith.constant 0 : i32
    return %arg0, %c0_i32 : i32, i32
  }
  func.func @transform_1(%arg0: i32) -> (i32, i32) {
    %c0_i32 = arith.constant 0 : i32
    %c0_i32_0 = arith.constant 0 : i32
    %c0_i32_1 = arith.constant 0 : i32
    return %c0_i32, %c0_i32_0 : i32, i32
  }
  func.func @transform_2(%arg0: i32) -> (i32, i32) {
    %c0_i32 = arith.constant 0 : i32
    %c0_i32_0 = arith.constant 0 : i32
    return %arg0, %c0_i32 : i32, i32
  }
}

</mosaic_0001>

<llo_original>
// kernel: discriminator_forward.7
$region0: #{discriminator_forward.7}
  #allocation0 [shape = 'u32[]', space=smem, size = 0x4, offset = 0x4, fixed_abs, tag = 'smem constant byte address 0x4 - core index']
  #allocation1 [shape = 'u32[144,128]{1,0:T(1,128)}', space=vmem, size = 0x12000, scoped, tag = 'internal scratch']
  %s0 = inlined_call_operand.vmem [shape: bf16[2048,128], index: 0, kind: input, shape index: {}]
  %s1 = inlined_call_operand.vmem [shape: bf16[128,128], index: 1, kind: input, shape index: {}]
  %s2 = inlined_call_operand.vmem [shape: bf16[2048,128], index: 2, kind: output, shape index: {}]
  %s3 = sld [smem:[#allocation0]]
  $region41: #{discriminator_forward.7} parent=0
    _
  %s5 = ssub.s32 1, %s3
  %s6 = scalar_select 0, %s5, %s3
  loop: start=0, step=1, limit=6
  $region2: #{discriminator_forward.7} parent=0 // loop_pre_header
    _
  $region3: #{discriminator_forward.7} parent=0 // loop_header
    %s8 = sphi 0, %s12
    %p9 = scmp.ge.s32.totalorder %s8, 6
    %s18 = sphi 0, %s20
    %s21 = sphi 0, %s18
    %s22 = sphi 0, %s21
    %s38 = sphi 0, %s22
    %s42 = sphi 0, %s42
    %s44 = sphi 0, %s42
    %s45 = sphi 0, %s44
    %s59 = sphi 0, %s45
    %s65 = sphi 0, %s67
    %s68 = sphi 0, %s65
    %s69 = sphi 0, %s68
    %s85 = sphi 0, %s69
  $region4: #{discriminator_forward.7} parent=0 // loop_header_branch
    %11 = sbr.rel (%p9) target = $region8
  $region5: #{discriminator_forward.7} parent=0 // loop_body
    %s13 = ssub.s32 %s8, 1
    %s14 = ssub.s32 %s8, 2
    %s15 = sadd.s32 %s8, 1
    %s16 = ssub.s32 %s8, %s15
    %p17 = scmp.eq.s32.totalorder %s16, 0
    %s19 = sadd.s32 %s18, 1
    %s20 = scalar_select %p17, %s18, %s19
    %p23 = pneg %p17
    %p24 = scmp.eq.s32.totalorder %s8, 3
    %p25 = por %p23, %p24
    %p26 = scmp.ne.s32.totalorder %s18, %s21
    %p27 = scmp.eq.s32.totalorder %s8, 0
    %p28 = por %p26, %p27
    %p29 = scmp.ne.s32.totalorder %s18, %s21
    %p30 = scmp.eq.s32.totalorder %s13, 3
    %p31 = por %p29, %p30
    %p32 = scmp.ne.s32.totalorder %s21, %s22
    %p33 = scmp.eq.s32.totalorder %s13, 0
    %p34 = por %p32, %p33
    %p35 = scmp.ne.s32.totalorder %s21, %s22
    %p36 = scmp.eq.s32.totalorder %s14, 3
    %p37 = por %p35, %p36
    %p39 = scmp.ne.s32.totalorder %s22, %s38
    %p40 = scmp.eq.s32.totalorder %s14, 0
    %p41 = por %p39, %p40
    %s43 = sadd.s32 %s42, 1
    %p46 = scmp.eq.s32.totalorder %s8, 3
    %p47 = scmp.ne.s32.totalorder %s42, %s44
    %p48 = scmp.eq.s32.totalorder %s8, 0
    %p49 = por %p47, %p48
    %p50 = scmp.ne.s32.totalorder %s42, %s44
    %p51 = scmp.eq.s32.totalorder %s13, 3
    %p52 = por %p50, %p51
    %p53 = scmp.ne.s32.totalorder %s44, %s45
    %p54 = scmp.eq.s32.totalorder %s13, 0
    %p55 = por %p53, %p54
    %p56 = scmp.ne.s32.totalorder %s44, %s45
    %p57 = scmp.eq.s32.totalorder %s14, 3
    %p58 = por %p56, %p57
    %p60 = scmp.ne.s32.totalorder %s45, %s59
    %p61 = scmp.eq.s32.totalorder %s14, 0
    %p62 = por %p60, %p61
    %s63 = ssub.s32 %s8, %s15
    %p64 = scmp.eq.s32.totalorder %s63, 0
    %s66 = sadd.s32 %s65, 1
    %s67 = scalar_select %p64, %s65, %s66
    %p70 = pneg %p64
    %p71 = scmp.eq.s32.totalorder %s8, 3
    %p72 = por %p70, %p71
    %p73 = scmp.ne.s32.totalorder %s65, %s68
    %p74 = scmp.eq.s32.totalorder %s8, 0
    %p75 = por %p73, %p74
    %p76 = scmp.ne.s32.totalorder %s65, %s68
    %p77 = scmp.eq.s32.totalorder %s13, 3
    %p78 = por %p76, %p77
    %p79 = scmp.ne.s32.totalorder %s68, %s69
    %p80 = scmp.eq.s32.totalorder %s13, 0
    %p81 = por %p79, %p80
    %p82 = scmp.ne.s32.totalorder %s68, %s69
    %p83 = scmp.eq.s32.totalorder %s14, 3
    %p84 = por %p82, %p83
    %p86 = scmp.ne.s32.totalorder %s69, %s85
    %p87 = scmp.eq.s32.totalorder %s14, 0
    %p88 = por %p86, %p87
    %p89 = scmp.le.s32.totalorder 1, %s8
    %p90 = scmp.lt.s32.totalorder %s8, 5
    %p91 = pnand %p89, %p90
    %p92 = pneg %p91
    // Predicated region
    $region9: #{discriminator_forward.7} parent=5 // pred_check
      _
    $region10: #{discriminator_forward.7} parent=5 // pred_check_branch
      %94 = sbr.rel (%p91) target = $region12
    $region11: #{discriminator_forward.7} parent=5 // pred_region
      %s95 = ssub.s32 %s8, 1
      // Predicated region
      $region13: #{discriminator_forward.7} parent=11 // pred_check
        %p96 = pneg %p55
      $region14: #{discriminator_forward.7} parent=11 // pred_check_branch
        %98 = sbr.rel (%p96) target = $region16
      $region15: #{discriminator_forward.7} parent=11 // pred_region
        _
      $region16: #{discriminator_forward.7} parent=11 // pred_fallthru
        _
    $region12: #{discriminator_forward.7} parent=5 // pred_fallthru
      _
    %p99 = scmp.lt.s32.totalorder %s8, 4
    // Predicated region
    $region17: #{discriminator_forward.7} parent=5 // pred_check
      %p100 = pneg %p99
    $region18: #{discriminator_forward.7} parent=5 // pred_check_branch
      %102 = sbr.rel (%p100) target = $region20
    $region19: #{discriminator_forward.7} parent=5 // pred_region
      // Predicated region
      $region21: #{discriminator_forward.7} parent=19 // pred_check
        %p103 = pneg %p28
      $region22: #{discriminator_forward.7} parent=19 // pred_check_branch
        %105 = sbr.rel (%p103) target = $region24
      $region23: #{discriminator_forward.7} parent=19 // pred_region
        %s106 = smul.u32 64, %s8
        %p107 = scmp.lt.s32.totalorder %s106, 255
        %s108 = scalar_select %p107, %s106, 255
        %s109 = smul.addr %s108, 4
        %s110 = scalar_lea.vmem %s0, %s109
        %s111 = smul.u32 64, %s8
      $region24: #{discriminator_forward.7} parent=19 // pred_fallthru
        _
    $region20: #{discriminator_forward.7} parent=5 // pred_fallthru
      _
    %p112 = scmp.le.s32.totalorder 1, %s8
    %p113 = scmp.lt.s32.totalorder %s8, 5
    %p114 = pnand %p112, %p113
    %p115 = pneg %p114
    // Predicated region
    $region25: #{discriminator_forward.7} parent=5 // pred_check
      _
    $region26: #{discriminator_forward.7} parent=5 // pred_check_branch
      %117 = sbr.rel (%p114) target = $region28
    $region27: #{discriminator_forward.7} parent=5 // pred_region
      %s118 = ssub.s32 %s8, 1
      %s119 = smul.u32 64, %s13
      %p120 = scmp.lt.s32.totalorder %s119, 255
      %s121 = scalar_select %p120, %s119, 255
      %s122 = smul.addr %s121, 4
      %s123 = scalar_lea.vmem %s0, %s122
      %p124 = pneg %p34
      %p125 = pneg %p31
      %p126 = pneg %p55
      %p127 = pneg %p52
      %p128 = pneg %p81
      %p129 = pneg %p78
      %s130 = smul.u32 64, %s13
      %p131 = scmp.lt.s32.totalorder %s130, 255
      %s132 = scalar_select %p131, %s130, 255
      %s133 = smul.addr %s132, 4
      %s134 = scalar_lea.vmem %s2, %s133
      %s135 = smul.u32 64, %s13
      %p136 = scmp.lt.s32.totalorder %s135, 255
      %s137 = scalar_select %p136, %s135, 255
      %s138 = smul.addr %s137, 4
      %s139 = scalar_lea.vmem %s0, %s138
      %s140 = smul.u32 64, %s13
      %s141 = smul.u32 64, %s13
      %p142 = scmp.lt.s32.totalorder %s141, 255
      %s143 = scalar_select %p142, %s141, 255
      %s144 = smul.addr %s143, 4
      %s145 = scalar_lea.vmem %s2, %s144
      %s146 = smul.u32 64, %s13
      %v148 = vld [vmem:[%s139] sm:$0xf]
      %v149 = vld [vmem:[%s139 + $0x4] sm:$0xf]
      %v150 = vld [vmem:[%s139 + $0x8] sm:$0xf]
      %v151 = vld [vmem:[%s139 + $0xc] sm:$0xf]
      %v152 = vld [vmem:[%s139 + $0x10] sm:$0xf]
      %v153 = vld [vmem:[%s139 + $0x14] sm:$0xf]
      %v154 = vld [vmem:[%s139 + $0x18] sm:$0xf]
      %v155 = vld [vmem:[%s139 + $0x1c] sm:$0xf]
      %v156 = vld [vmem:[%s139 + $0x20] sm:$0xf]
      %v157 = vld [vmem:[%s139 + $0x24] sm:$0xf]
      %v158 = vld [vmem:[%s139 + $0x28] sm:$0xf]
      %v159 = vld [vmem:[%s139 + $0x2c] sm:$0xf]
      %v160 = vld [vmem:[%s139 + $0x30] sm:$0xf]
      %v161 = vld [vmem:[%s139 + $0x34] sm:$0xf]
      %v162 = vld [vmem:[%s139 + $0x38] sm:$0xf]
      %v163 = vld [vmem:[%s139 + $0x3c] sm:$0xf]
      %v164 = vld [vmem:[%s139 + $0x40] sm:$0xf]
      %v165 = vld [vmem:[%s139 + $0x44] sm:$0xf]
      %v166 = vld [vmem:[%s139 + $0x48] sm:$0xf]
      %v167 = vld [vmem:[%s139 + $0x4c] sm:$0xf]
      %v168 = vld [vmem:[%s139 + $0x50] sm:$0xf]
      %v169 = vld [vmem:[%s139 + $0x54] sm:$0xf]
      %v170 = vld [vmem:[%s139 + $0x58] sm:$0xf]
      %v171 = vld [vmem:[%s139 + $0x5c] sm:$0xf]
      %v172 = vld [vmem:[%s139 + $0x60] sm:$0xf]
      %v173 = vld [vmem:[%s139 + $0x64] sm:$0xf]
      %v174 = vld [vmem:[%s139 + $0x68] sm:$0xf]
      %v175 = vld [vmem:[%s139 + $0x6c] sm:$0xf]
      %v176 = vld [vmem:[%s139 + $0x70] sm:$0xf]
      %v177 = vld [vmem:[%s139 + $0x74] sm:$0xf]
      %v178 = vld [vmem:[%s139 + $0x78] sm:$0xf]
      %v179 = vld [vmem:[%s139 + $0x7c] sm:$0xf]
      %v180 = vld [vmem:[%s139 + $0x80] sm:$0xf]
      %v181 = vld [vmem:[%s139 + $0x84] sm:$0xf]
      %v182 = vld [vmem:[%s139 + $0x88] sm:$0xf]
      %v183 = vld [vmem:[%s139 + $0x8c] sm:$0xf]
      %v184 = vld [vmem:[%s139 + $0x90] sm:$0xf]
      %v185 = vld [vmem:[%s139 + $0x94] sm:$0xf]
      %v186 = vld [vmem:[%s139 + $0x98] sm:$0xf]
      %v187 = vld [vmem:[%s139 + $0x9c] sm:$0xf]
      %v188 = vld [vmem:[%s139 + $0xa0] sm:$0xf]
      %v189 = vld [vmem:[%s139 + $0xa4] sm:$0xf]
      %v190 = vld [vmem:[%s139 + $0xa8] sm:$0xf]
      %v191 = vld [vmem:[%s139 + $0xac] sm:$0xf]
      %v192 = vld [vmem:[%s139 + $0xb0] sm:$0xf]
      %v193 = vld [vmem:[%s139 + $0xb4] sm:$0xf]
      %v194 = vld [vmem:[%s139 + $0xb8] sm:$0xf]
      %v195 = vld [vmem:[%s139 + $0xbc] sm:$0xf]
      %v196 = vld [vmem:[%s139 + $0xc0] sm:$0xf]
      %v197 = vld [vmem:[%s139 + $0xc4] sm:$0xf]
      %v198 = vld [vmem:[%s139 + $0xc8] sm:$0xf]
      %v199 = vld [vmem:[%s139 + $0xcc] sm:$0xf]
      %v200 = vld [vmem:[%s139 + $0xd0] sm:$0xf]
      %v201 = vld [vmem:[%s139 + $0xd4] sm:$0xf]
      %v202 = vld [vmem:[%s139 + $0xd8] sm:$0xf]
      %v203 = vld [vmem:[%s139 + $0xdc] sm:$0xf]
      %v204 = vld [vmem:[%s139 + $0xe0] sm:$0xf]
      %v205 = vld [vmem:[%s139 + $0xe4] sm:$0xf]
      %v206 = vld [vmem:[%s139 + $0xe8] sm:$0xf]
      %v207 = vld [vmem:[%s139 + $0xec] sm:$0xf]
      %v208 = vld [vmem:[%s139 + $0xf0] sm:$0xf]
      %v209 = vld [vmem:[%s139 + $0xf4] sm:$0xf]
      %v210 = vld [vmem:[%s139 + $0xf8] sm:$0xf]
      %v211 = vld [vmem:[%s139 + $0xfc] sm:$0xf]
      %v212 = vld [vmem:[%s1] sm:$0xf]
      %v213 = vld [vmem:[%s1 + $0x4] sm:$0xf]
      %v214 = vld [vmem:[%s1 + $0x8] sm:$0xf]
      %v215 = vld [vmem:[%s1 + $0xc] sm:$0xf]
      %v216 = vld [vmem:[%s1 + $0x10] sm:$0xf]
      %v217 = vld [vmem:[%s1 + $0x14] sm:$0xf]
      %v218 = vld [vmem:[%s1 + $0x18] sm:$0xf]
      %v219 = vld [vmem:[%s1 + $0x1c] sm:$0xf]
      %v220 = vld [vmem:[%s1 + $0x20] sm:$0xf]
      %v221 = vld [vmem:[%s1 + $0x24] sm:$0xf]
      %v222 = vld [vmem:[%s1 + $0x28] sm:$0xf]
      %v223 = vld [vmem:[%s1 + $0x2c] sm:$0xf]
      %v224 = vld [vmem:[%s1 + $0x30] sm:$0xf]
      %v225 = vld [vmem:[%s1 + $0x34] sm:$0xf]
      %v226 = vld [vmem:[%s1 + $0x38] sm:$0xf]
      %v227 = vld [vmem:[%s1 + $0x3c] sm:$0xf]
      %v292 = vunpack.c.l.b16 %v148
      %v293 = vunpack.c.l.b16 %v149
      %v294 = vunpack.c.l.b16 %v150
      %v295 = vunpack.c.l.b16 %v151
      %v296 = vunpack.c.l.b16 %v152
      %v297 = vunpack.c.l.b16 %v153
      %v298 = vunpack.c.l.b16 %v154
      %v299 = vunpack.c.l.b16 %v155
      %v300 = vunpack.c.l.b16 %v156
      %v301 = vunpack.c.l.b16 %v157
      %v302 = vunpack.c.l.b16 %v158
      %v303 = vunpack.c.l.b16 %v159
      %v304 = vunpack.c.l.b16 %v160
      %v305 = vunpack.c.l.b16 %v161
      %v306 = vunpack.c.l.b16 %v162
      %v307 = vunpack.c.l.b16 %v163
      %v308 = vunpack.c.l.b16 %v164
      %v309 = vunpack.c.l.b16 %v165
      %v310 = vunpack.c.l.b16 %v166
      %v311 = vunpack.c.l.b16 %v167
      %v312 = vunpack.c.l.b16 %v168
      %v313 = vunpack.c.l.b16 %v169
      %v314 = vunpack.c.l.b16 %v170
      %v315 = vunpack.c.l.b16 %v171
      %v316 = vunpack.c.l.b16 %v172
      %v317 = vunpack.c.l.b16 %v173
      %v318 = vunpack.c.l.b16 %v174
      %v319 = vunpack.c.l.b16 %v175
      %v320 = vunpack.c.l.b16 %v176
      %v321 = vunpack.c.l.b16 %v177
      %v322 = vunpack.c.l.b16 %v178
      %v323 = vunpack.c.l.b16 %v179
      %v324 = vunpack.c.l.b16 %v180
      %v325 = vunpack.c.l.b16 %v181
      %v326 = vunpack.c.l.b16 %v182
      %v327 = vunpack.c.l.b16 %v183
      %v328 = vunpack.c.l.b16 %v184
      %v329 = vunpack.c.l.b16 %v185
      %v330 = vunpack.c.l.b16 %v186
      %v331 = vunpack.c.l.b16 %v187
      %v332 = vunpack.c.l.b16 %v188
      %v333 = vunpack.c.l.b16 %v189
      %v334 = vunpack.c.l.b16 %v190
      %v335 = vunpack.c.l.b16 %v191
      %v336 = vunpack.c.l.b16 %v192
      %v337 = vunpack.c.l.b16 %v193
      %v338 = vunpack.c.l.b16 %v194
      %v339 = vunpack.c.l.b16 %v195
      %v340 = vunpack.c.l.b16 %v196
      %v341 = vunpack.c.l.b16 %v197
      %v342 = vunpack.c.l.b16 %v198
      %v343 = vunpack.c.l.b16 %v199
      %v344 = vunpack.c.l.b16 %v200
      %v345 = vunpack.c.l.b16 %v201
      %v346 = vunpack.c.l.b16 %v202
      %v347 = vunpack.c.l.b16 %v203
      %v348 = vunpack.c.l.b16 %v204
      %v349 = vunpack.c.l.b16 %v205
      %v350 = vunpack.c.l.b16 %v206
      %v351 = vunpack.c.l.b16 %v207
      %v352 = vunpack.c.l.b16 %v208
      %v353 = vunpack.c.l.b16 %v209
      %v354 = vunpack.c.l.b16 %v210
      %v355 = vunpack.c.l.b16 %v211
      %v356 = vpack.c.b16 %v293, %v292
      %v357 = vpack.c.b16 %v295, %v294
      %v358 = vpack.c.b16 %v297, %v296
      %v359 = vpack.c.b16 %v299, %v298
      %v360 = vpack.c.b16 %v301, %v300
      %v361 = vpack.c.b16 %v303, %v302
      %v362 = vpack.c.b16 %v305, %v304
      %v363 = vpack.c.b16 %v307, %v306
      %v364 = vpack.c.b16 %v309, %v308
      %v365 = vpack.c.b16 %v311, %v310
      %v366 = vpack.c.b16 %v313, %v312
      %v367 = vpack.c.b16 %v315, %v314
      %v368 = vpack.c.b16 %v317, %v316
      %v369 = vpack.c.b16 %v319, %v318
      %v370 = vpack.c.b16 %v321, %v320
      %v371 = vpack.c.b16 %v323, %v322
      %v372 = vpack.c.b16 %v325, %v324
      %v373 = vpack.c.b16 %v327, %v326
      %v374 = vpack.c.b16 %v329, %v328
      %v375 = vpack.c.b16 %v331, %v330
      %v376 = vpack.c.b16 %v333, %v332
      %v377 = vpack.c.b16 %v335, %v334
      %v378 = vpack.c.b16 %v337, %v336
      %v379 = vpack.c.b16 %v339, %v338
      %v380 = vpack.c.b16 %v341, %v340
      %v381 = vpack.c.b16 %v343, %v342
      %v382 = vpack.c.b16 %v345, %v344
      %v383 = vpack.c.b16 %v347, %v346
      %v384 = vpack.c.b16 %v349, %v348
      %v385 = vpack.c.b16 %v351, %v350
      %v386 = vpack.c.b16 %v353, %v352
      %v387 = vpack.c.b16 %v355, %v354
      %v436 = vunpack.c.l.b16 %v212
      %v437 = vunpack.c.l.b16 %v213
      %v438 = vunpack.c.l.b16 %v214
      %v439 = vunpack.c.l.b16 %v215
      %v440 = vunpack.c.l.b16 %v216
      %v441 = vunpack.c.l.b16 %v217
      %v442 = vunpack.c.l.b16 %v218
      %v443 = vunpack.c.l.b16 %v219
      %v444 = vunpack.c.l.b16 %v220
      %v445 = vunpack.c.l.b16 %v221
      %v446 = vunpack.c.l.b16 %v222
      %v447 = vunpack.c.l.b16 %v223
      %v448 = vunpack.c.l.b16 %v224
      %v449 = vunpack.c.l.b16 %v225
      %v450 = vunpack.c.l.b16 %v226
      %v451 = vunpack.c.l.b16 %v227
      %v452 = vpack.c.b16 %v437, %v436
      %v453 = vpack.c.b16 %v439, %v438
      %v454 = vpack.c.b16 %v441, %v440
      %v455 = vpack.c.b16 %v443, %v442
      %v456 = vpack.c.b16 %v445, %v444
      %v457 = vpack.c.b16 %v447, %v446
      %v458 = vpack.c.b16 %v449, %v448
      %v459 = vpack.c.b16 %v451, %v450
      %468 = vmatprep.subr.bf16.mxu0 0
      %469 = vmatpush1.bf16.msra.mxu0 %v452
      %470 = vmatprep.subr.bf16.mxu0 0
      %471 = vmatpush1.bf16.msra.mxu0 %v453
      %472 = vmatprep.subr.bf16.mxu0 0
      %473 = vmatpush1.bf16.msra.mxu0 %v454
      %474 = vmatprep.subr.bf16.mxu0 0
      %475 = vmatpush1.bf16.msra.mxu0 %v455
      %476 = vmatprep.subr.bf16.mxu0 0
      %477 = vmatpush1.bf16.msra.mxu0 %v456
      %478 = vmatprep.subr.bf16.mxu0 0
      %479 = vmatpush1.bf16.msra.mxu0 %v457
      %480 = vmatprep.subr.bf16.mxu0 0
      %481 = vmatpush1.bf16.msra.mxu0 %v458
      %482 = vmatprep.subr.bf16.mxu0 0
      %483 = vmatpush1.bf16.msra.mxu0 %v459
      %484 = vmatprep.subr.bf16.mxu0 0
      %485 = vmatpush1.bf16.msra.mxu0 0
      %486 = vmatprep.subr.bf16.mxu0 0
      %487 = vmatpush1.bf16.msra.mxu0 0
      %488 = vmatprep.subr.bf16.mxu0 0
      %489 = vmatpush1.bf16.msra.mxu0 0
      %490 = vmatprep.subr.bf16.mxu0 0
      %491 = vmatpush1.bf16.msra.mxu0 0
      %492 = vmatprep.subr.bf16.mxu0 0
      %493 = vmatpush1.bf16.msra.mxu0 0
      %494 = vmatprep.subr.bf16.mxu0 0
      %495 = vmatpush1.bf16.msra.mxu0 0
      %496 = vmatprep.subr.bf16.mxu0 0
      %497 = vmatpush1.bf16.msra.mxu0 0
      %498 = vmatprep.subr.bf16.mxu0 0
      %499 = vmatpush1.bf16.msra.mxu0 0
      %500 = vmatprep.mubr.bf16.mxu0 0
      %501 = vmatmul.mubr.bf16.gmra.mrb[0].mxu0 %v356
      %v502 = vpop.f32.mrb[0].mxu0
      %v503 = vadd.f32 0.0, %v502
      %v504 = vpop.f32.mrb[0].mxu0
      %v505 = vpop.f32.mrb[0].mxu0
      %v506 = vadd.f32 0.0, %v505
      %v507 = vpop.f32.mrb[0].mxu0
      %508 = vmatprep.mubr.bf16.mxu0 0
      %509 = vmatmul.mubr.bf16.gmra.mrb[0].mxu0 %v357
      %v510 = vpop.f32.mrb[0].mxu0
      %v511 = vadd.f32 0.0, %v510
      %v512 = vpop.f32.mrb[0].mxu0
      %v513 = vpop.f32.mrb[0].mxu0
      %v514 = vadd.f32 0.0, %v513
      %v515 = vpop.f32.mrb[0].mxu0
      %516 = vmatprep.mubr.bf16.mxu0 0
      %517 = vmatmul.mubr.bf16.gmra.mrb[0].mxu0 %v358
      %v518 = vpop.f32.mrb[0].mxu0
      %v519 = vadd.f32 0.0, %v518
      %v520 = vpop.f32.mrb[0].mxu0
      %v521 = vpop.f32.mrb[0].mxu0
      %v522 = vadd.f32 0.0, %v521
      %v523 = vpop.f32.mrb[0].mxu0
      %524 = vmatprep.mubr.bf16.mxu0 0
      %525 = vmatmul.mubr.bf16.gmra.mrb[0].mxu0 %v359
      %v526 = vpop.f32.mrb[0].mxu0
      %v527 = vadd.f32 0.0, %v526
      %v528 = vpop.f32.mrb[0].mxu0
      %v529 = vpop.f32.mrb[0].mxu0
      %v530 = vadd.f32 0.0, %v529
      %v531 = vpop.f32.mrb[0].mxu0
      %532 = vmatprep.mubr.bf16.mxu0 0
      %533 = vmatmul.mubr.bf16.gmra.mrb[0].mxu0 %v360
      %v534 = vpop.f32.mrb[0].mxu0
      %v535 = vadd.f32 0.0, %v534
      %v536 = vpop.f32.mrb[0].mxu0
      %v537 = vpop.f32.mrb[0].mxu0
      %v538 = vadd.f32 0.0, %v537
      %v539 = vpop.f32.mrb[0].mxu0
      %540 = vmatprep.mubr.bf16.mxu0 0
      %541 = vmatmul.mubr.bf16.gmra.mrb[0].mxu0 %v361
      %v542 = vpop.f32.mrb[0].mxu0
      %v543 = vadd.f32 0.0, %v542
      %v544 = vpop.f32.mrb[0].mxu0
      %v545 = vpop.f32.mrb[0].mxu0
      %v546 = vadd.f32 0.0, %v545
      %v547 = vpop.f32.mrb[0].mxu0
      %548 = vmatprep.mubr.bf16.mxu0 0
      %549 = vmatmul.mubr.bf16.gmra.mrb[0].mxu0 %v362
      %v550 = vpop.f32.mrb[0].mxu0
      %v551 = vadd.f32 0.0, %v550
      %v552 = vpop.f32.mrb[0].mxu0
      %v553 = vpop.f32.mrb[0].mxu0
      %v554 = vadd.f32 0.0, %v553
      %v555 = vpop.f32.mrb[0].mxu0
      %556 = vmatprep.mubr.bf16.mxu0 0
      %557 = vmatmul.mubr.bf16.gmra.mrb[0].mxu0 %v363
      %v558 = vpop.f32.mrb[0].mxu0
      %v559 = vadd.f32 0.0, %v558
      %v560 = vpop.f32.mrb[0].mxu0
      %v561 = vpop.f32.mrb[0].mxu0
      %v562 = vadd.f32 0.0, %v561
      %v563 = vpop.f32.mrb[0].mxu0
      %564 = vmatprep.mubr.bf16.mxu0 0
      %565 = vmatmul.mubr.bf16.gmra.mrb[0].mxu0 %v364
      %v566 = vpop.f32.mrb[0].mxu0
      %v567 = vadd.f32 0.0, %v566
      %v568 = vpop.f32.mrb[0].mxu0
      %v569 = vpop.f32.mrb[0].mxu0
      %v570 = vadd.f32 0.0, %v569
      %v571 = vpop.f32.mrb[0].mxu0
      %572 = vmatprep.mubr.bf16.mxu0 0
      %573 = vmatmul.mubr.bf16.gmra.mrb[0].mxu0 %v365
      %v574 = vpop.f32.mrb[0].mxu0
      %v575 = vadd.f32 0.0, %v574
      %v576 = vpop.f32.mrb[0].mxu0
      %v577 = vpop.f32.mrb[0].mxu0
      %v578 = vadd.f32 0.0, %v577
      %v579 = vpop.f32.mrb[0].mxu0
      %580 = vmatprep.mubr.bf16.mxu0 0
      %581 = vmatmul.mubr.bf16.gmra.mrb[0].mxu0 %v366
      %v582 = vpop.f32.mrb[0].mxu0
      %v583 = vadd.f32 0.0, %v582
      %v584 = vpop.f32.mrb[0].mxu0
      %v585 = vpop.f32.mrb[0].mxu0
      %v586 = vadd.f32 0.0, %v585
      %v587 = vpop.f32.mrb[0].mxu0
      %588 = vmatprep.mubr.bf16.mxu0 0
      %589 = vmatmul.mubr.bf16.gmra.mrb[0].mxu0 %v367
      %v590 = vpop.f32.mrb[0].mxu0
      %v591 = vadd.f32 0.0, %v590
      %v592 = vpop.f32.mrb[0].mxu0
      %v593 = vpop.f32.mrb[0].mxu0
      %v594 = vadd.f32 0.0, %v593
      %v595 = vpop.f32.mrb[0].mxu0
      %596 = vmatprep.mubr.bf16.mxu0 0
      %597 = vmatmul.mubr.bf16.gmra.mrb[0].mxu0 %v368
      %v598 = vpop.f32.mrb[0].mxu0
      %v599 = vadd.f32 0.0, %v598
      %v600 = vpop.f32.mrb[0].mxu0
      %v601 = vpop.f32.mrb[0].mxu0
      %v602 = vadd.f32 0.0, %v601
      %v603 = vpop.f32.mrb[0].mxu0
      %604 = vmatprep.mubr.bf16.mxu0 0
      %605 = vmatmul.mubr.bf16.gmra.mrb[0].mxu0 %v369
      %v606 = vpop.f32.mrb[0].mxu0
      %v607 = vadd.f32 0.0, %v606
      %v608 = vpop.f32.mrb[0].mxu0
      %v609 = vpop.f32.mrb[0].mxu0
      %v610 = vadd.f32 0.0, %v609
      %v611 = vpop.f32.mrb[0].mxu0
      %612 = vmatprep.mubr.bf16.mxu0 0
      %613 = vmatmul.mubr.bf16.gmra.mrb[0].mxu0 %v370
      %v614 = vpop.f32.mrb[0].mxu0
      %v615 = vadd.f32 0.0, %v614
      %v616 = vpop.f32.mrb[0].mxu0
      %v617 = vpop.f32.mrb[0].mxu0
      %v618 = vadd.f32 0.0, %v617
      %v619 = vpop.f32.mrb[0].mxu0
      %620 = vmatprep.mubr.bf16.mxu0 0
      %621 = vmatmul.mubr.bf16.gmra.mrb[0].mxu0 %v371
      %v622 = vpop.f32.mrb[0].mxu0
      %v623 = vadd.f32 0.0, %v622
      %v624 = vpop.f32.mrb[0].mxu0
      %v625 = vpop.f32.mrb[0].mxu0
      %v626 = vadd.f32 0.0, %v625
      %v627 = vpop.f32.mrb[0].mxu0
      %628 = vmatprep.mubr.bf16.mxu0 0
      %629 = vmatmul.mubr.bf16.gmra.mrb[0].mxu0 %v372
      %v630 = vpop.f32.mrb[0].mxu0
      %v631 = vadd.f32 0.0, %v630
      %v632 = vpop.f32.mrb[0].mxu0
      %v633 = vpop.f32.mrb[0].mxu0
      %v634 = vadd.f32 0.0, %v633
      %v635 = vpop.f32.mrb[0].mxu0
      %636 = vmatprep.mubr.bf16.mxu0 0
      %637 = vmatmul.mubr.bf16.gmra.mrb[0].mxu0 %v373
      %v638 = vpop.f32.mrb[0].mxu0
      %v639 = vadd.f32 0.0, %v638
      %v640 = vpop.f32.mrb[0].mxu0
      %v641 = vpop.f32.mrb[0].mxu0
      %v642 = vadd.f32 0.0, %v641
      %v643 = vpop.f32.mrb[0].mxu0
      %644 = vmatprep.mubr.bf16.mxu0 0
      %645 = vmatmul.mubr.bf16.gmra.mrb[0].mxu0 %v374
      %v646 = vpop.f32.mrb[0].mxu0
      %v647 = vadd.f32 0.0, %v646
      %v648 = vpop.f32.mrb[0].mxu0
      %v649 = vpop.f32.mrb[0].mxu0
      %v650 = vadd.f32 0.0, %v649
      %v651 = vpop.f32.mrb[0].mxu0
      %652 = vmatprep.mubr.bf16.mxu0 0
      %653 = vmatmul.mubr.bf16.gmra.mrb[0].mxu0 %v375
      %v654 = vpop.f32.mrb[0].mxu0
      %v655 = vadd.f32 0.0, %v654
      %v656 = vpop.f32.mrb[0].mxu0
      %v657 = vpop.f32.mrb[0].mxu0
      %v658 = vadd.f32 0.0, %v657
      %v659 = vpop.f32.mrb[0].mxu0
      %660 = vmatprep.mubr.bf16.mxu0 0
      %661 = vmatmul.mubr.bf16.gmra.mrb[0].mxu0 %v376
      %v662 = vpop.f32.mrb[0].mxu0
      %v663 = vadd.f32 0.0, %v662
      %v664 = vpop.f32.mrb[0].mxu0
      %v665 = vpop.f32.mrb[0].mxu0
      %v666 = vadd.f32 0.0, %v665
      %v667 = vpop.f32.mrb[0].mxu0
      %668 = vmatprep.mubr.bf16.mxu0 0
      %669 = vmatmul.mubr.bf16.gmra.mrb[0].mxu0 %v377
      %v670 = vpop.f32.mrb[0].mxu0
      %v671 = vadd.f32 0.0, %v670
      %v672 = vpop.f32.mrb[0].mxu0
      %v673 = vpop.f32.mrb[0].mxu0
      %v674 = vadd.f32 0.0, %v673
      %v675 = vpop.f32.mrb[0].mxu0
      %676 = vmatprep.mubr.bf16.mxu0 0
      %677 = vmatmul.mubr.bf16.gmra.mrb[0].mxu0 %v378
      %v678 = vpop.f32.mrb[0].mxu0
      %v679 = vadd.f32 0.0, %v678
      %v680 = vpop.f32.mrb[0].mxu0
      %v681 = vpop.f32.mrb[0].mxu0
      %v682 = vadd.f32 0.0, %v681
      %v683 = vpop.f32.mrb[0].mxu0
      %684 = vmatprep.mubr.bf16.mxu0 0
      %685 = vmatmul.mubr.bf16.gmra.mrb[0].mxu0 %v379
      %v686 = vpop.f32.mrb[0].mxu0
      %v687 = vadd.f32 0.0, %v686
      %v688 = vpop.f32.mrb[0].mxu0
      %v689 = vpop.f32.mrb[0].mxu0
      %v690 = vadd.f32 0.0, %v689
      %v691 = vpop.f32.mrb[0].mxu0
      %692 = vmatprep.mubr.bf16.mxu0 0
      %693 = vmatmul.mubr.bf16.gmra.mrb[0].mxu0 %v380
      %v694 = vpop.f32.mrb[0].mxu0
      %v695 = vadd.f32 0.0, %v694
      %v696 = vpop.f32.mrb[0].mxu0
      %v697 = vpop.f32.mrb[0].mxu0
      %v698 = vadd.f32 0.0, %v697
      %v699 = vpop.f32.mrb[0].mxu0
      %700 = vmatprep.mubr.bf16.mxu0 0
      %701 = vmatmul.mubr.bf16.gmra.mrb[0].mxu0 %v381
      %v702 = vpop.f32.mrb[0].mxu0
      %v703 = vadd.f32 0.0, %v702
      %v704 = vpop.f32.mrb[0].mxu0
      %v705 = vpop.f32.mrb[0].mxu0
      %v706 = vadd.f32 0.0, %v705
      %v707 = vpop.f32.mrb[0].mxu0
      %708 = vmatprep.mubr.bf16.mxu0 0
      %709 = vmatmul.mubr.bf16.gmra.mrb[0].mxu0 %v382
      %v710 = vpop.f32.mrb[0].mxu0
      %v711 = vadd.f32 0.0, %v710
      %v712 = vpop.f32.mrb[0].mxu0
      %v713 = vpop.f32.mrb[0].mxu0
      %v714 = vadd.f32 0.0, %v713
      %v715 = vpop.f32.mrb[0].mxu0
      %716 = vmatprep.mubr.bf16.mxu0 0
      %717 = vmatmul.mubr.bf16.gmra.mrb[0].mxu0 %v383
      %v718 = vpop.f32.mrb[0].mxu0
      %v719 = vadd.f32 0.0, %v718
      %v720 = vpop.f32.mrb[0].mxu0
      %v721 = vpop.f32.mrb[0].mxu0
      %v722 = vadd.f32 0.0, %v721
      %v723 = vpop.f32.mrb[0].mxu0
      %724 = vmatprep.mubr.bf16.mxu0 0
      %725 = vmatmul.mubr.bf16.gmra.mrb[0].mxu0 %v384
      %v726 = vpop.f32.mrb[0].mxu0
      %v727 = vadd.f32 0.0, %v726
      %v728 = vpop.f32.mrb[0].mxu0
      %v729 = vpop.f32.mrb[0].mxu0
      %v730 = vadd.f32 0.0, %v729
      %v731 = vpop.f32.mrb[0].mxu0
      %732 = vmatprep.mubr.bf16.mxu0 0
      %733 = vmatmul.mubr.bf16.gmra.mrb[0].mxu0 %v385
      %v734 = vpop.f32.mrb[0].mxu0
      %v735 = vadd.f32 0.0, %v734
      %v736 = vpop.f32.mrb[0].mxu0
      %v737 = vpop.f32.mrb[0].mxu0
      %v738 = vadd.f32 0.0, %v737
      %v739 = vpop.f32.mrb[0].mxu0
      %740 = vmatprep.mubr.bf16.mxu0 0
      %741 = vmatmul.mubr.bf16.gmra.mrb[0].mxu0 %v386
      %v742 = vpop.f32.mrb[0].mxu0
      %v743 = vadd.f32 0.0, %v742
      %v744 = vpop.f32.mrb[0].mxu0
      %v745 = vpop.f32.mrb[0].mxu0
      %v746 = vadd.f32 0.0, %v745
      %v747 = vpop.f32.mrb[0].mxu0
      %748 = vmatprep.mubr.bf16.mxu0 0
      %749 = vmatmul.mubr.bf16.gmra.mrb[0].mxu0 %v387
      %v750 = vpop.f32.mrb[0].mxu0
      %v751 = vadd.f32 0.0, %v750
      %v752 = vpop.f32.mrb[0].mxu0
      %v753 = vpop.f32.mrb[0].mxu0
      %v754 = vadd.f32 0.0, %v753
      %v755 = vpop.f32.mrb[0].mxu0
      %756 = vdwg.mxu0
      %vm757 = vcmp.ge.f32.partialorder %v503, 0.0
      %vm758 = vcmp.ge.f32.partialorder %v506, 0.0
      %vm759 = vcmp.ge.f32.partialorder %v511, 0.0
      %vm760 = vcmp.ge.f32.partialorder %v514, 0.0
      %vm761 = vcmp.ge.f32.partialorder %v519, 0.0
      %vm762 = vcmp.ge.f32.partialorder %v522, 0.0
      %vm763 = vcmp.ge.f32.partialorder %v527, 0.0
      %vm764 = vcmp.ge.f32.partialorder %v530, 0.0
      %vm765 = vcmp.ge.f32.partialorder %v535, 0.0
      %vm766 = vcmp.ge.f32.partialorder %v538, 0.0
      %vm767 = vcmp.ge.f32.partialorder %v543, 0.0
      %vm768 = vcmp.ge.f32.partialorder %v546, 0.0
      %vm769 = vcmp.ge.f32.partialorder %v551, 0.0
      %vm770 = vcmp.ge.f32.partialorder %v554, 0.0
      %vm771 = vcmp.ge.f32.partialorder %v559, 0.0
      %vm772 = vcmp.ge.f32.partialorder %v562, 0.0
      %vm773 = vcmp.ge.f32.partialorder %v567, 0.0
      %vm774 = vcmp.ge.f32.partialorder %v570, 0.0
      %vm775 = vcmp.ge.f32.partialorder %v575, 0.0
      %vm776 = vcmp.ge.f32.partialorder %v578, 0.0
      %vm777 = vcmp.ge.f32.partialorder %v583, 0.0
      %vm778 = vcmp.ge.f32.partialorder %v586, 0.0
      %vm779 = vcmp.ge.f32.partialorder %v591, 0.0
      %vm780 = vcmp.ge.f32.partialorder %v594, 0.0
      %vm781 = vcmp.ge.f32.partialorder %v599, 0.0
      %vm782 = vcmp.ge.f32.partialorder %v602, 0.0
      %vm783 = vcmp.ge.f32.partialorder %v607, 0.0
      %vm784 = vcmp.ge.f32.partialorder %v610, 0.0
      %vm785 = vcmp.ge.f32.partialorder %v615, 0.0
      %vm786 = vcmp.ge.f32.partialorder %v618, 0.0
      %vm787 = vcmp.ge.f32.partialorder %v623, 0.0
      %vm788 = vcmp.ge.f32.partialorder %v626, 0.0
      %vm789 = vcmp.ge.f32.partialorder %v631, 0.0
      %vm790 = vcmp.ge.f32.partialorder %v634, 0.0
      %vm791 = vcmp.ge.f32.partialorder %v639, 0.0
      %vm792 = vcmp.ge.f32.partialorder %v642, 0.0
      %vm793 = vcmp.ge.f32.partialorder %v647, 0.0
      %vm794 = vcmp.ge.f32.partialorder %v650, 0.0
      %vm795 = vcmp.ge.f32.partialorder %v655, 0.0
      %vm796 = vcmp.ge.f32.partialorder %v658, 0.0
      %vm797 = vcmp.ge.f32.partialorder %v663, 0.0
      %vm798 = vcmp.ge.f32.partialorder %v666, 0.0
      %vm799 = vcmp.ge.f32.partialorder %v671, 0.0
      %vm800 = vcmp.ge.f32.partialorder %v674, 0.0
      %vm801 = vcmp.ge.f32.partialorder %v679, 0.0
      %vm802 = vcmp.ge.f32.partialorder %v682, 0.0
      %vm803 = vcmp.ge.f32.partialorder %v687, 0.0
      %vm804 = vcmp.ge.f32.partialorder %v690, 0.0
      %vm805 = vcmp.ge.f32.partialorder %v695, 0.0
      %vm806 = vcmp.ge.f32.partialorder %v698, 0.0
      %vm807 = vcmp.ge.f32.partialorder %v703, 0.0
      %vm808 = vcmp.ge.f32.partialorder %v706, 0.0
      %vm809 = vcmp.ge.f32.partialorder %v711, 0.0
      %vm810 = vcmp.ge.f32.partialorder %v714, 0.0
      %vm811 = vcmp.ge.f32.partialorder %v719, 0.0
      %vm812 = vcmp.ge.f32.partialorder %v722, 0.0
      %vm813 = vcmp.ge.f32.partialorder %v727, 0.0
      %vm814 = vcmp.ge.f32.partialorder %v730, 0.0
      %vm815 = vcmp.ge.f32.partialorder %v735, 0.0
      %vm816 = vcmp.ge.f32.partialorder %v738, 0.0
      %vm817 = vcmp.ge.f32.partialorder %v743, 0.0
      %vm818 = vcmp.ge.f32.partialorder %v746, 0.0
      %vm819 = vcmp.ge.f32.partialorder %v751, 0.0
      %vm820 = vcmp.ge.f32.partialorder %v754, 0.0
      %v821 = vmul.f32 %v503, 0.2
      %v822 = vmul.f32 %v506, 0.2
      %v823 = vmul.f32 %v511, 0.2
      %v824 = vmul.f32 %v514, 0.2
      %v825 = vmul.f32 %v519, 0.2
      %v826 = vmul.f32 %v522, 0.2
      %v827 = vmul.f32 %v527, 0.2
      %v828 = vmul.f32 %v530, 0.2
      %v829 = vmul.f32 %v535, 0.2
      %v830 = vmul.f32 %v538, 0.2
      %v831 = vmul.f32 %v543, 0.2
      %v832 = vmul.f32 %v546, 0.2
      %v833 = vmul.f32 %v551, 0.2
      %v834 = vmul.f32 %v554, 0.2
      %v835 = vmul.f32 %v559, 0.2
      %v836 = vmul.f32 %v562, 0.2
      %v837 = vmul.f32 %v567, 0.2
      %v838 = vmul.f32 %v570, 0.2
      %v839 = vmul.f32 %v575, 0.2
      %v840 = vmul.f32 %v578, 0.2
      %v841 = vmul.f32 %v583, 0.2
      %v842 = vmul.f32 %v586, 0.2
      %v843 = vmul.f32 %v591, 0.2
      %v844 = vmul.f32 %v594, 0.2
      %v845 = vmul.f32 %v599, 0.2
      %v846 = vmul.f32 %v602, 0.2
      %v847 = vmul.f32 %v607, 0.2
      %v848 = vmul.f32 %v610, 0.2
      %v849 = vmul.f32 %v615, 0.2
      %v850 = vmul.f32 %v618, 0.2
      %v851 = vmul.f32 %v623, 0.2
      %v852 = vmul.f32 %v626, 0.2
      %v853 = vmul.f32 %v631, 0.2
      %v854 = vmul.f32 %v634, 0.2
      %v855 = vmul.f32 %v639, 0.2
      %v856 = vmul.f32 %v642, 0.2
      %v857 = vmul.f32 %v647, 0.2
      %v858 = vmul.f32 %v650, 0.2
      %v859 = vmul.f32 %v655, 0.2
      %v860 = vmul.f32 %v658, 0.2
      %v861 = vmul.f32 %v663, 0.2
      %v862 = vmul.f32 %v666, 0.2
      %v863 = vmul.f32 %v671, 0.2
      %v864 = vmul.f32 %v674, 0.2
      %v865 = vmul.f32 %v679, 0.2
      %v866 = vmul.f32 %v682, 0.2
      %v867 = vmul.f32 %v687, 0.2
      %v868 = vmul.f32 %v690, 0.2
      %v869 = vmul.f32 %v695, 0.2
      %v870 = vmul.f32 %v698, 0.2
      %v871 = vmul.f32 %v703, 0.2
      %v872 = vmul.f32 %v706, 0.2
      %v873 = vmul.f32 %v711, 0.2
      %v874 = vmul.f32 %v714, 0.2
      %v875 = vmul.f32 %v719, 0.2
      %v876 = vmul.f32 %v722, 0.2
      %v877 = vmul.f32 %v727, 0.2
      %v878 = vmul.f32 %v730, 0.2
      %v879 = vmul.f32 %v735, 0.2
      %v880 = vmul.f32 %v738, 0.2
      %v881 = vmul.f32 %v743, 0.2
      %v882 = vmul.f32 %v746, 0.2
      %v883 = vmul.f32 %v751, 0.2
      %v884 = vmul.f32 %v754, 0.2
      %v885 = vsel %vm757, %v503, %v821
      %v886 = vsel %vm758, %v506, %v822
      %v887 = vsel %vm759, %v511, %v823
      %v888 = vsel %vm760, %v514, %v824
      %v889 = vsel %vm761, %v519, %v825
      %v890 = vsel %vm762, %v522, %v826
      %v891 = vsel %vm763, %v527, %v827
      %v892 = vsel %vm764, %v530, %v828
      %v893 = vsel %vm765, %v535, %v829
      %v894 = vsel %vm766, %v538, %v830
      %v895 = vsel %vm767, %v543, %v831
      %v896 = vsel %vm768, %v546, %v832
      %v897 = vsel %vm769, %v551, %v833
      %v898 = vsel %vm770, %v554, %v834
      %v899 = vsel %vm771, %v559, %v835
      %v900 = vsel %vm772, %v562, %v836
      %v901 = vsel %vm773, %v567, %v837
      %v902 = vsel %vm774, %v570, %v838
      %v903 = vsel %vm775, %v575, %v839
      %v904 = vsel %vm776, %v578, %v840
      %v905 = vsel %vm777, %v583, %v841
      %v906 = vsel %vm778, %v586, %v842
      %v907 = vsel %vm779, %v591, %v843
      %v908 = vsel %vm780, %v594, %v844
      %v909 = vsel %vm781, %v599, %v845
      %v910 = vsel %vm782, %v602, %v846
      %v911 = vsel %vm783, %v607, %v847
      %v912 = vsel %vm784, %v610, %v848
      %v913 = vsel %vm785, %v615, %v849
      %v914 = vsel %vm786, %v618, %v850
      %v915 = vsel %vm787, %v623, %v851
      %v916 = vsel %vm788, %v626, %v852
      %v917 = vsel %vm789, %v631, %v853
      %v918 = vsel %vm790, %v634, %v854
      %v919 = vsel %vm791, %v639, %v855
      %v920 = vsel %vm792, %v642, %v856
      %v921 = vsel %vm793, %v647, %v857
      %v922 = vsel %vm794, %v650, %v858
      %v923 = vsel %vm795, %v655, %v859
      %v924 = vsel %vm796, %v658, %v860
      %v925 = vsel %vm797, %v663, %v861
      %v926 = vsel %vm798, %v666, %v862
      %v927 = vsel %vm799, %v671, %v863
      %v928 = vsel %vm800, %v674, %v864
      %v929 = vsel %vm801, %v679, %v865
      %v930 = vsel %vm802, %v682, %v866
      %v931 = vsel %vm803, %v687, %v867
      %v932 = vsel %vm804, %v690, %v868
      %v933 = vsel %vm805, %v695, %v869
      %v934 = vsel %vm806, %v698, %v870
      %v935 = vsel %vm807, %v703, %v871
      %v936 = vsel %vm808, %v706, %v872
      %v937 = vsel %vm809, %v711, %v873
      %v938 = vsel %vm810, %v714, %v874
      %v939 = vsel %vm811, %v719, %v875
      %v940 = vsel %vm812, %v722, %v876
      %v941 = vsel %vm813, %v727, %v877
      %v942 = vsel %vm814, %v730, %v878
      %v943 = vsel %vm815, %v735, %v879
      %v944 = vsel %vm816, %v738, %v880
      %v945 = vsel %vm817, %v743, %v881
      %v946 = vsel %vm818, %v746, %v882
      %v947 = vsel %vm819, %v751, %v883
      %v948 = vsel %vm820, %v754, %v884
      %v949 = vpack.c.bf16 %v886, %v885
      %v950 = vpack.c.bf16 %v888, %v887
      %v951 = vpack.c.bf16 %v890, %v889
      %v952 = vpack.c.bf16 %v892, %v891
      %v953 = vpack.c.bf16 %v894, %v893
      %v954 = vpack.c.bf16 %v896, %v895
      %v955 = vpack.c.bf16 %v898, %v897
      %v956 = vpack.c.bf16 %v900, %v899
      %v957 = vpack.c.bf16 %v902, %v901
      %v958 = vpack.c.bf16 %v904, %v903
      %v959 = vpack.c.bf16 %v906, %v905
      %v960 = vpack.c.bf16 %v908, %v907
      %v961 = vpack.c.bf16 %v910, %v909
      %v962 = vpack.c.bf16 %v912, %v911
      %v963 = vpack.c.bf16 %v914, %v913
      %v964 = vpack.c.bf16 %v916, %v915
      %v965 = vpack.c.bf16 %v918, %v917
      %v966 = vpack.c.bf16 %v920, %v919
      %v967 = vpack.c.bf16 %v922, %v921
      %v968 = vpack.c.bf16 %v924, %v923
      %v969 = vpack.c.bf16 %v926, %v925
      %v970 = vpack.c.bf16 %v928, %v927
      %v971 = vpack.c.bf16 %v930, %v929
      %v972 = vpack.c.bf16 %v932, %v931
      %v973 = vpack.c.bf16 %v934, %v933
      %v974 = vpack.c.bf16 %v936, %v935
      %v975 = vpack.c.bf16 %v938, %v937
      %v976 = vpack.c.bf16 %v940, %v939
      %v977 = vpack.c.bf16 %v942, %v941
      %v978 = vpack.c.bf16 %v944, %v943
      %v979 = vpack.c.bf16 %v946, %v945
      %v980 = vpack.c.bf16 %v948, %v947
      %v1013 = vunpack.c.l.b16 %v949
      %v1014 = vunpack.c.h.b16 %v949
      %v1015 = vunpack.c.l.b16 %v950
      %v1016 = vunpack.c.h.b16 %v950
      %v1017 = vunpack.c.l.b16 %v951
      %v1018 = vunpack.c.h.b16 %v951
      %v1019 = vunpack.c.l.b16 %v952
      %v1020 = vunpack.c.h.b16 %v952
      %v1021 = vunpack.c.l.b16 %v953
      %v1022 = vunpack.c.h.b16 %v953
      %v1023 = vunpack.c.l.b16 %v954
      %v1024 = vunpack.c.h.b16 %v954
      %v1025 = vunpack.c.l.b16 %v955
      %v1026 = vunpack.c.h.b16 %v955
      %v1027 = vunpack.c.l.b16 %v956
      %v1028 = vunpack.c.h.b16 %v956
      %v1029 = vunpack.c.l.b16 %v957
      %v1030 = vunpack.c.h.b16 %v957
      %v1031 = vunpack.c.l.b16 %v958
      %v1032 = vunpack.c.h.b16 %v958
      %v1033 = vunpack.c.l.b16 %v959
      %v1034 = vunpack.c.h.b16 %v959
      %v1035 = vunpack.c.l.b16 %v960
      %v1036 = vunpack.c.h.b16 %v960
      %v1037 = vunpack.c.l.b16 %v961
      %v1038 = vunpack.c.h.b16 %v961
      %v1039 = vunpack.c.l.b16 %v962
      %v1040 = vunpack.c.h.b16 %v962
      %v1041 = vunpack.c.l.b16 %v963
      %v1042 = vunpack.c.h.b16 %v963
      %v1043 = vunpack.c.l.b16 %v964
      %v1044 = vunpack.c.h.b16 %v964
      %v1045 = vunpack.c.l.b16 %v965
      %v1046 = vunpack.c.h.b16 %v965
      %v1047 = vunpack.c.l.b16 %v966
      %v1048 = vunpack.c.h.b16 %v966
      %v1049 = vunpack.c.l.b16 %v967
      %v1050 = vunpack.c.h.b16 %v967
      %v1051 = vunpack.c.l.b16 %v968
      %v1052 = vunpack.c.h.b16 %v968
      %v1053 = vunpack.c.l.b16 %v969
      %v1054 = vunpack.c.h.b16 %v969
      %v1055 = vunpack.c.l.b16 %v970
      %v1056 = vunpack.c.h.b16 %v970
      %v1057 = vunpack.c.l.b16 %v971
      %v1058 = vunpack.c.h.b16 %v971
      %v1059 = vunpack.c.l.b16 %v972
      %v1060 = vunpack.c.h.b16 %v972
      %v1061 = vunpack.c.l.b16 %v973
      %v1062 = vunpack.c.h.b16 %v973
      %v1063 = vunpack.c.l.b16 %v974
      %v1064 = vunpack.c.h.b16 %v974
      %v1065 = vunpack.c.l.b16 %v975
      %v1066 = vunpack.c.h.b16 %v975
      %v1067 = vunpack.c.l.b16 %v976
      %v1068 = vunpack.c.h.b16 %v976
      %v1069 = vunpack.c.l.b16 %v977
      %v1070 = vunpack.c.h.b16 %v977
      %v1071 = vunpack.c.l.b16 %v978
      %v1072 = vunpack.c.h.b16 %v978
      %v1073 = vunpack.c.l.b16 %v979
      %v1074 = vunpack.c.h.b16 %v979
      %v1075 = vunpack.c.l.b16 %v980
      %v1076 = vunpack.c.h.b16 %v980
      %v1077 = vpack.c.b16 %v1013, %v1013
      %v1078 = vpack.c.b16 %v1014, %v1014
      %v1079 = vpack.c.b16 %v1015, %v1015
      %v1080 = vpack.c.b16 %v1016, %v1016
      %v1081 = vpack.c.b16 %v1017, %v1017
      %v1082 = vpack.c.b16 %v1018, %v1018
      %v1083 = vpack.c.b16 %v1019, %v1019
      %v1084 = vpack.c.b16 %v1020, %v1020
      %v1085 = vpack.c.b16 %v1021, %v1021
      %v1086 = vpack.c.b16 %v1022, %v1022
      %v1087 = vpack.c.b16 %v1023, %v1023
      %v1088 = vpack.c.b16 %v1024, %v1024
      %v1089 = vpack.c.b16 %v1025, %v1025
      %v1090 = vpack.c.b16 %v1026, %v1026
      %v1091 = vpack.c.b16 %v1027, %v1027
      %v1092 = vpack.c.b16 %v1028, %v1028
      %v1093 = vpack.c.b16 %v1029, %v1029
      %v1094 = vpack.c.b16 %v1030, %v1030
      %v1095 = vpack.c.b16 %v1031, %v1031
      %v1096 = vpack.c.b16 %v1032, %v1032
      %v1097 = vpack.c.b16 %v1033, %v1033
      %v1098 = vpack.c.b16 %v1034, %v1034
      %v1099 = vpack.c.b16 %v1035, %v1035
      %v1100 = vpack.c.b16 %v1036, %v1036
      %v1101 = vpack.c.b16 %v1037, %v1037
      %v1102 = vpack.c.b16 %v1038, %v1038
      %v1103 = vpack.c.b16 %v1039, %v1039
      %v1104 = vpack.c.b16 %v1040, %v1040
      %v1105 = vpack.c.b16 %v1041, %v1041
      %v1106 = vpack.c.b16 %v1042, %v1042
      %v1107 = vpack.c.b16 %v1043, %v1043
      %v1108 = vpack.c.b16 %v1044, %v1044
      %v1109 = vpack.c.b16 %v1045, %v1045
      %v1110 = vpack.c.b16 %v1046, %v1046
      %v1111 = vpack.c.b16 %v1047, %v1047
      %v1112 = vpack.c.b16 %v1048, %v1048
      %v1113 = vpack.c.b16 %v1049, %v1049
      %v1114 = vpack.c.b16 %v1050, %v1050
      %v1115 = vpack.c.b16 %v1051, %v1051
      %v1116 = vpack.c.b16 %v1052, %v1052
      %v1117 = vpack.c.b16 %v1053, %v1053
      %v1118 = vpack.c.b16 %v1054, %v1054
      %v1119 = vpack.c.b16 %v1055, %v1055
      %v1120 = vpack.c.b16 %v1056, %v1056
      %v1121 = vpack.c.b16 %v1057, %v1057
      %v1122 = vpack.c.b16 %v1058, %v1058
      %v1123 = vpack.c.b16 %v1059, %v1059
      %v1124 = vpack.c.b16 %v1060, %v1060
      %v1125 = vpack.c.b16 %v1061, %v1061
      %v1126 = vpack.c.b16 %v1062, %v1062
      %v1127 = vpack.c.b16 %v1063, %v1063
      %v1128 = vpack.c.b16 %v1064, %v1064
      %v1129 = vpack.c.b16 %v1065, %v1065
      %v1130 = vpack.c.b16 %v1066, %v1066
      %v1131 = vpack.c.b16 %v1067, %v1067
      %v1132 = vpack.c.b16 %v1068, %v1068
      %v1133 = vpack.c.b16 %v1069, %v1069
      %v1134 = vpack.c.b16 %v1070, %v1070
      %v1135 = vpack.c.b16 %v1071, %v1071
      %v1136 = vpack.c.b16 %v1072, %v1072
      %v1137 = vpack.c.b16 %v1073, %v1073
      %v1138 = vpack.c.b16 %v1074, %v1074
      %v1139 = vpack.c.b16 %v1075, %v1075
      %v1140 = vpack.c.b16 %v1076, %v1076
      %1205 = vst [vmem:[%s145] sm:$0xf] %v1077
      %1206 = vst [vmem:[%s145 + $0x4] sm:$0xf] %v1078
      %1207 = vst [vmem:[%s145 + $0x8] sm:$0xf] %v1079
      %1208 = vst [vmem:[%s145 + $0xc] sm:$0xf] %v1080
      %1209 = vst [vmem:[%s145 + $0x10] sm:$0xf] %v1081
      %1210 = vst [vmem:[%s145 + $0x14] sm:$0xf] %v1082
      %1211 = vst [vmem:[%s145 + $0x18] sm:$0xf] %v1083
      %1212 = vst [vmem:[%s145 + $0x1c] sm:$0xf] %v1084
      %1213 = vst [vmem:[%s145 + $0x20] sm:$0xf] %v1085
      %1214 = vst [vmem:[%s145 + $0x24] sm:$0xf] %v1086
      %1215 = vst [vmem:[%s145 + $0x28] sm:$0xf] %v1087
      %1216 = vst [vmem:[%s145 + $0x2c] sm:$0xf] %v1088
      %1217 = vst [vmem:[%s145 + $0x30] sm:$0xf] %v1089
      %1218 = vst [vmem:[%s145 + $0x34] sm:$0xf] %v1090
      %1219 = vst [vmem:[%s145 + $0x38] sm:$0xf] %v1091
      %1220 = vst [vmem:[%s145 + $0x3c] sm:$0xf] %v1092
      %1221 = vst [vmem:[%s145 + $0x40] sm:$0xf] %v1093
      %1222 = vst [vmem:[%s145 + $0x44] sm:$0xf] %v1094
      %1223 = vst [vmem:[%s145 + $0x48] sm:$0xf] %v1095
      %1224 = vst [vmem:[%s145 + $0x4c] sm:$0xf] %v1096
      %1225 = vst [vmem:[%s145 + $0x50] sm:$0xf] %v1097
      %1226 = vst [vmem:[%s145 + $0x54] sm:$0xf] %v1098
      %1227 = vst [vmem:[%s145 + $0x58] sm:$0xf] %v1099
      %1228 = vst [vmem:[%s145 + $0x5c] sm:$0xf] %v1100
      %1229 = vst [vmem:[%s145 + $0x60] sm:$0xf] %v1101
      %1230 = vst [vmem:[%s145 + $0x64] sm:$0xf] %v1102
      %1231 = vst [vmem:[%s145 + $0x68] sm:$0xf] %v1103
      %1232 = vst [vmem:[%s145 + $0x6c] sm:$0xf] %v1104
      %1233 = vst [vmem:[%s145 + $0x70] sm:$0xf] %v1105
      %1234 = vst [vmem:[%s145 + $0x74] sm:$0xf] %v1106
      %1235 = vst [vmem:[%s145 + $0x78] sm:$0xf] %v1107
      %1236 = vst [vmem:[%s145 + $0x7c] sm:$0xf] %v1108
      %1237 = vst [vmem:[%s145 + $0x80] sm:$0xf] %v1109
      %1238 = vst [vmem:[%s145 + $0x84] sm:$0xf] %v1110
      %1239 = vst [vmem:[%s145 + $0x88] sm:$0xf] %v1111
      %1240 = vst [vmem:[%s145 + $0x8c] sm:$0xf] %v1112
      %1241 = vst [vmem:[%s145 + $0x90] sm:$0xf] %v1113
      %1242 = vst [vmem:[%s145 + $0x94] sm:$0xf] %v1114
      %1243 = vst [vmem:[%s145 + $0x98] sm:$0xf] %v1115
      %1244 = vst [vmem:[%s145 + $0x9c] sm:$0xf] %v1116
      %1245 = vst [vmem:[%s145 + $0xa0] sm:$0xf] %v1117
      %1246 = vst [vmem:[%s145 + $0xa4] sm:$0xf] %v1118
      %1247 = vst [vmem:[%s145 + $0xa8] sm:$0xf] %v1119
      %1248 = vst [vmem:[%s145 + $0xac] sm:$0xf] %v1120
      %1249 = vst [vmem:[%s145 + $0xb0] sm:$0xf] %v1121
      %1250 = vst [vmem:[%s145 + $0xb4] sm:$0xf] %v1122
      %1251 = vst [vmem:[%s145 + $0xb8] sm:$0xf] %v1123
      %1252 = vst [vmem:[%s145 + $0xbc] sm:$0xf] %v1124
      %1253 = vst [vmem:[%s145 + $0xc0] sm:$0xf] %v1125
      %1254 = vst [vmem:[%s145 + $0xc4] sm:$0xf] %v1126
      %1255 = vst [vmem:[%s145 + $0xc8] sm:$0xf] %v1127
      %1256 = vst [vmem:[%s145 + $0xcc] sm:$0xf] %v1128
      %1257 = vst [vmem:[%s145 + $0xd0] sm:$0xf] %v1129
      %1258 = vst [vmem:[%s145 + $0xd4] sm:$0xf] %v1130
      %1259 = vst [vmem:[%s145 + $0xd8] sm:$0xf] %v1131
      %1260 = vst [vmem:[%s145 + $0xdc] sm:$0xf] %v1132
      %1261 = vst [vmem:[%s145 + $0xe0] sm:$0xf] %v1133
      %1262 = vst [vmem:[%s145 + $0xe4] sm:$0xf] %v1134
      %1263 = vst [vmem:[%s145 + $0xe8] sm:$0xf] %v1135
      %1264 = vst [vmem:[%s145 + $0xec] sm:$0xf] %v1136
      %1265 = vst [vmem:[%s145 + $0xf0] sm:$0xf] %v1137
      %1266 = vst [vmem:[%s145 + $0xf4] sm:$0xf] %v1138
      %1267 = vst [vmem:[%s145 + $0xf8] sm:$0xf] %v1139
      %1268 = vst [vmem:[%s145 + $0xfc] sm:$0xf] %v1140
      %s1269 = smul.u32 64, %s13
      %p1270 = scmp.lt.s32.totalorder %s1269, 255
      %s1271 = scalar_select %p1270, %s1269, 255
      %s1272 = smul.addr %s1271, 4
      %s1273 = scalar_lea.vmem %s2, %s1272
      // Predicated region
      $region29: #{discriminator_forward.7} parent=27 // pred_check
        %p1274 = pneg %p78
      $region30: #{discriminator_forward.7} parent=27 // pred_check_branch
        %1276 = sbr.rel (%p1274) target = $region32
      $region31: #{discriminator_forward.7} parent=27 // pred_region
        %s1277 = smul.u32 64, %s13
      $region32: #{discriminator_forward.7} parent=27 // pred_fallthru
        _
    $region28: #{discriminator_forward.7} parent=5 // pred_fallthru
      _
    %p1278 = scmp.le.s32.totalorder 2, %s8
    // Predicated region
    $region33: #{discriminator_forward.7} parent=5 // pred_check
      %p1279 = pneg %p1278
    $region34: #{discriminator_forward.7} parent=5 // pred_check_branch
      %1281 = sbr.rel (%p1279) target = $region36
    $region35: #{discriminator_forward.7} parent=5 // pred_region
      %s1282 = ssub.s32 %s8, 2
      // Predicated region
      $region37: #{discriminator_forward.7} parent=35 // pred_check
        %p1283 = pneg %p84
      $region38: #{discriminator_forward.7} parent=35 // pred_check_branch
        %1285 = sbr.rel (%p1283) target = $region40
      $region39: #{discriminator_forward.7} parent=35 // pred_region
        %s1286 = smul.u32 64, %s14
        %p1287 = scmp.lt.s32.totalorder %s1286, 255
        %s1288 = scalar_select %p1287, %s1286, 255
        %s1289 = smul.addr %s1288, 4
        %s1290 = scalar_lea.vmem %s2, %s1289
      $region40: #{discriminator_forward.7} parent=35 // pred_fallthru
        _
    $region36: #{discriminator_forward.7} parent=5 // pred_fallthru
      _
  $region6: #{discriminator_forward.7} parent=0 // loop_footer
    %s12 = sadd.s32 1, %s8
  $region7: #{discriminator_forward.7} parent=0 // loop_footer_branch
    %7 = sbr.rel target = $region3
  $region8: #{discriminator_forward.7} parent=0 // loop_exit
    _

// kernel: discriminator_forward.8
$region0: #{discriminator_forward.8}
  #allocation0 [shape = 'u32[]', space=smem, size = 0x4, offset = 0x4, fixed_abs, tag = 'smem constant byte address 0x4 - core index']
  #allocation1 [shape = 'u32[144,128]{1,0:T(1,128)}', space=vmem, size = 0x12000, scoped, tag = 'internal scratch']
  %s0 = inlined_call_operand.vmem [shape: bf16[512,512], index: 0, kind: input, shape index: {}]
  %s1 = inlined_call_operand.vmem [shape: bf16[512,128], index: 1, kind: input, shape index: {}]
  %s2 = inlined_call_operand.vmem [shape: bf16[512,128], index: 2, kind: output, shape index: {}]
  %s3 = sld [smem:[#allocation0]]
  $region18: #{discriminator_forward.8} parent=0
    _
  %s5 = ssub.s32 1, %s3
  %s6 = scalar_select 0, %s5, %s3
  // Predicated region
  $region2: #{discriminator_forward.8} parent=0 // pred_check
    _
  $region3: #{discriminator_forward.8} parent=0 // pred_check_branch
    %8 = sbr.rel (0) target = $region5
  $region4: #{discriminator_forward.8} parent=0 // pred_region
    _
  $region5: #{discriminator_forward.8} parent=0 // pred_fallthru
    _
  // Predicated region
  $region6: #{discriminator_forward.8} parent=0 // pred_check
    _
  $region7: #{discriminator_forward.8} parent=0 // pred_check_branch
    %10 = sbr.rel (0) target = $region9
  $region8: #{discriminator_forward.8} parent=0 // pred_region
    _
  $region9: #{discriminator_forward.8} parent=0 // pred_fallthru
    _
  %v12 = vld [vmem:[%s0] sm:$0xff]
  %v13 = vld [vmem:[%s0 + $0x8] sm:$0xff]
  %v14 = vld [vmem:[%s0 + $0x10] sm:$0xff]
  %v15 = vld [vmem:[%s0 + $0x18] sm:$0xff]
  %v16 = vld [vmem:[%s0 + $0x20] sm:$0xff]
  %v17 = vld [vmem:[%s0 + $0x28] sm:$0xff]
  %v18 = vld [vmem:[%s0 + $0x30] sm:$0xff]
  %v19 = vld [vmem:[%s0 + $0x38] sm:$0xff]
  %v20 = vld [vmem:[%s0 + $0x40] sm:$0xff]
  %v21 = vld [vmem:[%s0 + $0x48] sm:$0xff]
  %v22 = vld [vmem:[%s0 + $0x50] sm:$0xff]
  %v23 = vld [vmem:[%s0 + $0x58] sm:$0xff]
  %v24 = vld [vmem:[%s0 + $0x60] sm:$0xff]
  %v25 = vld [vmem:[%s0 + $0x68] sm:$0xff]
  %v26 = vld [vmem:[%s0 + $0x70] sm:$0xff]
  %v27 = vld [vmem:[%s0 + $0x78] sm:$0xff]
  %v28 = vld [vmem:[%s0 + $0x80] sm:$0xff]
  %v29 = vld [vmem:[%s0 + $0x88] sm:$0xff]
  %v30 = vld [vmem:[%s0 + $0x90] sm:$0xff]
  %v31 = vld [vmem:[%s0 + $0x98] sm:$0xff]
  %v32 = vld [vmem:[%s0 + $0xa0] sm:$0xff]
  %v33 = vld [vmem:[%s0 + $0xa8] sm:$0xff]
  %v34 = vld [vmem:[%s0 + $0xb0] sm:$0xff]
  %v35 = vld [vmem:[%s0 + $0xb8] sm:$0xff]
  %v36 = vld [vmem:[%s0 + $0xc0] sm:$0xff]
  %v37 = vld [vmem:[%s0 + $0xc8] sm:$0xff]
  %v38 = vld [vmem:[%s0 + $0xd0] sm:$0xff]
  %v39 = vld [vmem:[%s0 + $0xd8] sm:$0xff]
  %v40 = vld [vmem:[%s0 + $0xe0] sm:$0xff]
  %v41 = vld [vmem:[%s0 + $0xe8] sm:$0xff]
  %v42 = vld [vmem:[%s0 + $0xf0] sm:$0xff]
  %v43 = vld [vmem:[%s0 + $0xf8] sm:$0xff]
  %v44 = vld [vmem:[%s0 + $0x100] sm:$0xff]
  %v45 = vld [vmem:[%s0 + $0x108] sm:$0xff]
  %v46 = vld [vmem:[%s0 + $0x110] sm:$0xff]
  %v47 = vld [vmem:[%s0 + $0x118] sm:$0xff]
  %v48 = vld [vmem:[%s0 + $0x120] sm:$0xff]
  %v49 = vld [vmem:[%s0 + $0x128] sm:$0xff]
  %v50 = vld [vmem:[%s0 + $0x130] sm:$0xff]
  %v51 = vld [vmem:[%s0 + $0x138] sm:$0xff]
  %v52 = vld [vmem:[%s0 + $0x140] sm:$0xff]
  %v53 = vld [vmem:[%s0 + $0x148] sm:$0xff]
  %v54 = vld [vmem:[%s0 + $0x150] sm:$0xff]
  %v55 = vld [vmem:[%s0 + $0x158] sm:$0xff]
  %v56 = vld [vmem:[%s0 + $0x160] sm:$0xff]
  %v57 = vld [vmem:[%s0 + $0x168] sm:$0xff]
  %v58 = vld [vmem:[%s0 + $0x170] sm:$0xff]
  %v59 = vld [vmem:[%s0 + $0x178] sm:$0xff]
  %v60 = vld [vmem:[%s0 + $0x180] sm:$0xff]
  %v61 = vld [vmem:[%s0 + $0x188] sm:$0xff]
  %v62 = vld [vmem:[%s0 + $0x190] sm:$0xff]
  %v63 = vld [vmem:[%s0 + $0x198] sm:$0xff]
  %v64 = vld [vmem:[%s0 + $0x1a0] sm:$0xff]
  %v65 = vld [vmem:[%s0 + $0x1a8] sm:$0xff]
  %v66 = vld [vmem:[%s0 + $0x1b0] sm:$0xff]
  %v67 = vld [vmem:[%s0 + $0x1b8] sm:$0xff]
  %v68 = vld [vmem:[%s0 + $0x1c0] sm:$0xff]
  %v69 = vld [vmem:[%s0 + $0x1c8] sm:$0xff]
  %v70 = vld [vmem:[%s0 + $0x1d0] sm:$0xff]
  %v71 = vld [vmem:[%s0 + $0x1d8] sm:$0xff]
  %v72 = vld [vmem:[%s0 + $0x1e0] sm:$0xff]
  %v73 = vld [vmem:[%s0 + $0x1e8] sm:$0xff]
  %v74 = vld [vmem:[%s0 + $0x1f0] sm:$0xff]
  %v75 = vld [vmem:[%s0 + $0x1f8] sm:$0xff]
  %v76 = vld [vmem:[%s0 + $0x200] sm:$0xff]
  %v77 = vld [vmem:[%s0 + $0x208] sm:$0xff]
  %v78 = vld [vmem:[%s0 + $0x210] sm:$0xff]
  %v79 = vld [vmem:[%s0 + $0x218] sm:$0xff]
  %v80 = vld [vmem:[%s0 + $0x220] sm:$0xff]
  %v81 = vld [vmem:[%s0 + $0x228] sm:$0xff]
  %v82 = vld [vmem:[%s0 + $0x230] sm:$0xff]
  %v83 = vld [vmem:[%s0 + $0x238] sm:$0xff]
  %v84 = vld [vmem:[%s0 + $0x240] sm:$0xff]
  %v85 = vld [vmem:[%s0 + $0x248] sm:$0xff]
  %v86 = vld [vmem:[%s0 + $0x250] sm:$0xff]
  %v87 = vld [vmem:[%s0 + $0x258] sm:$0xff]
  %v88 = vld [vmem:[%s0 + $0x260] sm:$0xff]
  %v89 = vld [vmem:[%s0 + $0x268] sm:$0xff]
  %v90 = vld [vmem:[%s0 + $0x270] sm:$0xff]
  %v91 = vld [vmem:[%s0 + $0x278] sm:$0xff]
  %v92 = vld [vmem:[%s0 + $0x280] sm:$0xff]
  %v93 = vld [vmem:[%s0 + $0x288] sm:$0xff]
  %v94 = vld [vmem:[%s0 + $0x290] sm:$0xff]
  %v95 = vld [vmem:[%s0 + $0x298] sm:$0xff]
  %v96 = vld [vmem:[%s0 + $0x2a0] sm:$0xff]
  %v97 = vld [vmem:[%s0 + $0x2a8] sm:$0xff]
  %v98 = vld [vmem:[%s0 + $0x2b0] sm:$0xff]
  %v99 = vld [vmem:[%s0 + $0x2b8] sm:$0xff]
  %v100 = vld [vmem:[%s0 + $0x2c0] sm:$0xff]
  %v101 = vld [vmem:[%s0 + $0x2c8] sm:$0xff]
  %v102 = vld [vmem:[%s0 + $0x2d0] sm:$0xff]
  %v103 = vld [vmem:[%s0 + $0x2d8] sm:$0xff]
  %v104 = vld [vmem:[%s0 + $0x2e0] sm:$0xff]
  %v105 = vld [vmem:[%s0 + $0x2e8] sm:$0xff]
  %v106 = vld [vmem:[%s0 + $0x2f0] sm:$0xff]
  %v107 = vld [vmem:[%s0 + $0x2f8] sm:$0xff]
  %v108 = vld [vmem:[%s0 + $0x300] sm:$0xff]
  %v109 = vld [vmem:[%s0 + $0x308] sm:$0xff]
  %v110 = vld [vmem:[%s0 + $0x310] sm:$0xff]
  %v111 = vld [vmem:[%s0 + $0x318] sm:$0xff]
  %v112 = vld [vmem:[%s0 + $0x320] sm:$0xff]
  %v113 = vld [vmem:[%s0 + $0x328] sm:$0xff]
  %v114 = vld [vmem:[%s0 + $0x330] sm:$0xff]
  %v115 = vld [vmem:[%s0 + $0x338] sm:$0xff]
  %v116 = vld [vmem:[%s0 + $0x340] sm:$0xff]
  %v117 = vld [vmem:[%s0 + $0x348] sm:$0xff]
  %v118 = vld [vmem:[%s0 + $0x350] sm:$0xff]
  %v119 = vld [vmem:[%s0 + $0x358] sm:$0xff]
  %v120 = vld [vmem:[%s0 + $0x360] sm:$0xff]
  %v121 = vld [vmem:[%s0 + $0x368] sm:$0xff]
  %v122 = vld [vmem:[%s0 + $0x370] sm:$0xff]
  %v123 = vld [vmem:[%s0 + $0x378] sm:$0xff]
  %v124 = vld [vmem:[%s0 + $0x380] sm:$0xff]
  %v125 = vld [vmem:[%s0 + $0x388] sm:$0xff]
  %v126 = vld [vmem:[%s0 + $0x390] sm:$0xff]
  %v127 = vld [vmem:[%s0 + $0x398] sm:$0xff]
  %v128 = vld [vmem:[%s0 + $0x3a0] sm:$0xff]
  %v129 = vld [vmem:[%s0 + $0x3a8] sm:$0xff]
  %v130 = vld [vmem:[%s0 + $0x3b0] sm:$0xff]
  %v131 = vld [vmem:[%s0 + $0x3b8] sm:$0xff]
  %v132 = vld [vmem:[%s0 + $0x3c0] sm:$0xff]
  %v133 = vld [vmem:[%s0 + $0x3c8] sm:$0xff]
  %v134 = vld [vmem:[%s0 + $0x3d0] sm:$0xff]
  %v135 = vld [vmem:[%s0 + $0x3d8] sm:$0xff]
  %v136 = vld [vmem:[%s0 + $0x3e0] sm:$0xff]
  %v137 = vld [vmem:[%s0 + $0x3e8] sm:$0xff]
  %v138 = vld [vmem:[%s0 + $0x3f0] sm:$0xff]
  %v139 = vld [vmem:[%s0 + $0x3f8] sm:$0xff]
  %v140 = vld [vmem:[%s1] sm:$0xf]
  %v141 = vld [vmem:[%s1 + $0x4] sm:$0xf]
  %v142 = vld [vmem:[%s1 + $0x8] sm:$0xf]
  %v143 = vld [vmem:[%s1 + $0xc] sm:$0xf]
  %v144 = vld [vmem:[%s1 + $0x10] sm:$0xf]
  %v145 = vld [vmem:[%s1 + $0x14] sm:$0xf]
  %v146 = vld [vmem:[%s1 + $0x18] sm:$0xf]
  %v147 = vld [vmem:[%s1 + $0x1c] sm:$0xf]
  %v148 = vld [vmem:[%s1 + $0x20] sm:$0xf]
  %v149 = vld [vmem:[%s1 + $0x24] sm:$0xf]
  %v150 = vld [vmem:[%s1 + $0x28] sm:$0xf]
  %v151 = vld [vmem:[%s1 + $0x2c] sm:$0xf]
  %v152 = vld [vmem:[%s1 + $0x30] sm:$0xf]
  %v153 = vld [vmem:[%s1 + $0x34] sm:$0xf]
  %v154 = vld [vmem:[%s1 + $0x38] sm:$0xf]
  %v155 = vld [vmem:[%s1 + $0x3c] sm:$0xf]
  %v156 = vld [vmem:[%s1 + $0x40] sm:$0xf]
  %v157 = vld [vmem:[%s1 + $0x44] sm:$0xf]
  %v158 = vld [vmem:[%s1 + $0x48] sm:$0xf]
  %v159 = vld [vmem:[%s1 + $0x4c] sm:$0xf]
  %v160 = vld [vmem:[%s1 + $0x50] sm:$0xf]
  %v161 = vld [vmem:[%s1 + $0x54] sm:$0xf]
  %v162 = vld [vmem:[%s1 + $0x58] sm:$0xf]
  %v163 = vld [vmem:[%s1 + $0x5c] sm:$0xf]
  %v164 = vld [vmem:[%s1 + $0x60] sm:$0xf]
  %v165 = vld [vmem:[%s1 + $0x64] sm:$0xf]
  %v166 = vld [vmem:[%s1 + $0x68] sm:$0xf]
  %v167 = vld [vmem:[%s1 + $0x6c] sm:$0xf]
  %v168 = vld [vmem:[%s1 + $0x70] sm:$0xf]
  %v169 = vld [vmem:[%s1 + $0x74] sm:$0xf]
  %v170 = vld [vmem:[%s1 + $0x78] sm:$0xf]
  %v171 = vld [vmem:[%s1 + $0x7c] sm:$0xf]
  %v172 = vld [vmem:[%s1 + $0x80] sm:$0xf]
  %v173 = vld [vmem:[%s1 + $0x84] sm:$0xf]
  %v174 = vld [vmem:[%s1 + $0x88] sm:$0xf]
  %v175 = vld [vmem:[%s1 + $0x8c] sm:$0xf]
  %v176 = vld [vmem:[%s1 + $0x90] sm:$0xf]
  %v177 = vld [vmem:[%s1 + $0x94] sm:$0xf]
  %v178 = vld [vmem:[%s1 + $0x98] sm:$0xf]
  %v179 = vld [vmem:[%s1 + $0x9c] sm:$0xf]
  %v180 = vld [vmem:[%s1 + $0xa0] sm:$0xf]
  %v181 = vld [vmem:[%s1 + $0xa4] sm:$0xf]
  %v182 = vld [vmem:[%s1 + $0xa8] sm:$0xf]
  %v183 = vld [vmem:[%s1 + $0xac] sm:$0xf]
  %v184 = vld [vmem:[%s1 + $0xb0] sm:$0xf]
  %v185 = vld [vmem:[%s1 + $0xb4] sm:$0xf]
  %v186 = vld [vmem:[%s1 + $0xb8] sm:$0xf]
  %v187 = vld [vmem:[%s1 + $0xbc] sm:$0xf]
  %v188 = vld [vmem:[%s1 + $0xc0] sm:$0xf]
  %v189 = vld [vmem:[%s1 + $0xc4] sm:$0xf]
  %v190 = vld [vmem:[%s1 + $0xc8] sm:$0xf]
  %v191 = vld [vmem:[%s1 + $0xcc] sm:$0xf]
  %v192 = vld [vmem:[%s1 + $0xd0] sm:$0xf]
  %v193 = vld [vmem:[%s1 + $0xd4] sm:$0xf]
  %v194 = vld [vmem:[%s1 + $0xd8] sm:$0xf]
  %v195 = vld [vmem:[%s1 + $0xdc] sm:$0xf]
  %v196 = vld [vmem:[%s1 + $0xe0] sm:$0xf]
  %v197 = vld [vmem:[%s1 + $0xe4] sm:$0xf]
  %v198 = vld [vmem:[%s1 + $0xe8] sm:$0xf]
  %v199 = vld [vmem:[%s1 + $0xec] sm:$0xf]
  %v200 = vld [vmem:[%s1 + $0xf0] sm:$0xf]
  %v201 = vld [vmem:[%s1 + $0xf4] sm:$0xf]
  %v202 = vld [vmem:[%s1 + $0xf8] sm:$0xf]
  %v203 = vld [vmem:[%s1 + $0xfc] sm:$0xf]
  %v332 = vunpack.c.l.b16 %v12
  %v333 = vunpack.c.h.b16 %v12
  %v334 = vunpack.c.l.b16 %v13
  %v335 = vunpack.c.h.b16 %v13
  %v336 = vunpack.c.l.b16 %v14
  %v337 = vunpack.c.h.b16 %v14
  %v338 = vunpack.c.l.b16 %v15
  %v339 = vunpack.c.h.b16 %v15
  %v340 = vunpack.c.l.b16 %v16
  %v341 = vunpack.c.h.b16 %v16
  %v342 = vunpack.c.l.b16 %v17
  %v343 = vunpack.c.h.b16 %v17
  %v344 = vunpack.c.l.b16 %v18
  %v345 = vunpack.c.h.b16 %v18
  %v346 = vunpack.c.l.b16 %v19
  %v347 = vunpack.c.h.b16 %v19
  %v348 = vunpack.c.l.b16 %v20
  %v349 = vunpack.c.h.b16 %v20
  %v350 = vunpack.c.l.b16 %v21
  %v351 = vunpack.c.h.b16 %v21
  %v352 = vunpack.c.l.b16 %v22
  %v353 = vunpack.c.h.b16 %v22
  %v354 = vunpack.c.l.b16 %v23
  %v355 = vunpack.c.h.b16 %v23
  %v356 = vunpack.c.l.b16 %v24
  %v357 = vunpack.c.h.b16 %v24
  %v358 = vunpack.c.l.b16 %v25
  %v359 = vunpack.c.h.b16 %v25
  %v360 = vunpack.c.l.b16 %v26
  %v361 = vunpack.c.h.b16 %v26
  %v362 = vunpack.c.l.b16 %v27
  %v363 = vunpack.c.h.b16 %v27
  %v364 = vunpack.c.l.b16 %v28
  %v365 = vunpack.c.h.b16 %v28
  %v366 = vunpack.c.l.b16 %v29
  %v367 = vunpack.c.h.b16 %v29
  %v368 = vunpack.c.l.b16 %v30
  %v369 = vunpack.c.h.b16 %v30
  %v370 = vunpack.c.l.b16 %v31
  %v371 = vunpack.c.h.b16 %v31
  %v372 = vunpack.c.l.b16 %v32
  %v373 = vunpack.c.h.b16 %v32
  %v374 = vunpack.c.l.b16 %v33
  %v375 = vunpack.c.h.b16 %v33
  %v376 = vunpack.c.l.b16 %v34
  %v377 = vunpack.c.h.b16 %v34
  %v378 = vunpack.c.l.b16 %v35
  %v379 = vunpack.c.h.b16 %v35
  %v380 = vunpack.c.l.b16 %v36
  %v381 = vunpack.c.h.b16 %v36
  %v382 = vunpack.c.l.b16 %v37
  %v383 = vunpack.c.h.b16 %v37
  %v384 = vunpack.c.l.b16 %v38
  %v385 = vunpack.c.h.b16 %v38
  %v386 = vunpack.c.l.b16 %v39
  %v387 = vunpack.c.h.b16 %v39
  %v388 = vunpack.c.l.b16 %v40
  %v389 = vunpack.c.h.b16 %v40
  %v390 = vunpack.c.l.b16 %v41
  %v391 = vunpack.c.h.b16 %v41
  %v392 = vunpack.c.l.b16 %v42
  %v393 = vunpack.c.h.b16 %v42
  %v394 = vunpack.c.l.b16 %v43
  %v395 = vunpack.c.h.b16 %v43
  %v396 = vunpack.c.l.b16 %v44
  %v397 = vunpack.c.h.b16 %v44
  %v398 = vunpack.c.l.b16 %v45
  %v399 = vunpack.c.h.b16 %v45
  %v400 = vunpack.c.l.b16 %v46
  %v401 = vunpack.c.h.b16 %v46
  %v402 = vunpack.c.l.b16 %v47
  %v403 = vunpack.c.h.b16 %v47
  %v404 = vunpack.c.l.b16 %v48
  %v405 = vunpack.c.h.b16 %v48
  %v406 = vunpack.c.l.b16 %v49
  %v407 = vunpack.c.h.b16 %v49
  %v408 = vunpack.c.l.b16 %v50
  %v409 = vunpack.c.h.b16 %v50
  %v410 = vunpack.c.l.b16 %v51
  %v411 = vunpack.c.h.b16 %v51
  %v412 = vunpack.c.l.b16 %v52
  %v413 = vunpack.c.h.b16 %v52
  %v414 = vunpack.c.l.b16 %v53
  %v415 = vunpack.c.h.b16 %v53
  %v416 = vunpack.c.l.b16 %v54
  %v417 = vunpack.c.h.b16 %v54
  %v418 = vunpack.c.l.b16 %v55
  %v419 = vunpack.c.h.b16 %v55
  %v420 = vunpack.c.l.b16 %v56
  %v421 = vunpack.c.h.b16 %v56
  %v422 = vunpack.c.l.b16 %v57
  %v423 = vunpack.c.h.b16 %v57
  %v424 = vunpack.c.l.b16 %v58
  %v425 = vunpack.c.h.b16 %v58
  %v426 = vunpack.c.l.b16 %v59
  %v427 = vunpack.c.h.b16 %v59
  %v428 = vunpack.c.l.b16 %v60
  %v429 = vunpack.c.h.b16 %v60
  %v430 = vunpack.c.l.b16 %v61
  %v431 = vunpack.c.h.b16 %v61
  %v432 = vunpack.c.l.b16 %v62
  %v433 = vunpack.c.h.b16 %v62
  %v434 = vunpack.c.l.b16 %v63
  %v435 = vunpack.c.h.b16 %v63
  %v436 = vunpack.c.l.b16 %v64
  %v437 = vunpack.c.h.b16 %v64
  %v438 = vunpack.c.l.b16 %v65
  %v439 = vunpack.c.h.b16 %v65
  %v440 = vunpack.c.l.b16 %v66
  %v441 = vunpack.c.h.b16 %v66
  %v442 = vunpack.c.l.b16 %v67
  %v443 = vunpack.c.h.b16 %v67
  %v444 = vunpack.c.l.b16 %v68
  %v445 = vunpack.c.h.b16 %v68
  %v446 = vunpack.c.l.b16 %v69
  %v447 = vunpack.c.h.b16 %v69
  %v448 = vunpack.c.l.b16 %v70
  %v449 = vunpack.c.h.b16 %v70
  %v450 = vunpack.c.l.b16 %v71
  %v451 = vunpack.c.h.b16 %v71
  %v452 = vunpack.c.l.b16 %v72
  %v453 = vunpack.c.h.b16 %v72
  %v454 = vunpack.c.l.b16 %v73
  %v455 = vunpack.c.h.b16 %v73
  %v456 = vunpack.c.l.b16 %v74
  %v457 = vunpack.c.h.b16 %v74
  %v458 = vunpack.c.l.b16 %v75
  %v459 = vunpack.c.h.b16 %v75
  %v460 = vunpack.c.l.b16 %v76
  %v461 = vunpack.c.h.b16 %v76
  %v462 = vunpack.c.l.b16 %v77
  %v463 = vunpack.c.h.b16 %v77
  %v464 = vunpack.c.l.b16 %v78
  %v465 = vunpack.c.h.b16 %v78
  %v466 = vunpack.c.l.b16 %v79
  %v467 = vunpack.c.h.b16 %v79
  %v468 = vunpack.c.l.b16 %v80
  %v469 = vunpack.c.h.b16 %v80
  %v470 = vunpack.c.l.b16 %v81
  %v471 = vunpack.c.h.b16 %v81
  %v472 = vunpack.c.l.b16 %v82
  %v473 = vunpack.c.h.b16 %v82
  %v474 = vunpack.c.l.b16 %v83
  %v475 = vunpack.c.h.b16 %v83
  %v476 = vunpack.c.l.b16 %v84
  %v477 = vunpack.c.h.b16 %v84
  %v478 = vunpack.c.l.b16 %v85
  %v479 = vunpack.c.h.b16 %v85
  %v480 = vunpack.c.l.b16 %v86
  %v481 = vunpack.c.h.b16 %v86
  %v482 = vunpack.c.l.b16 %v87
  %v483 = vunpack.c.h.b16 %v87
  %v484 = vunpack.c.l.b16 %v88
  %v485 = vunpack.c.h.b16 %v88
  %v486 = vunpack.c.l.b16 %v89
  %v487 = vunpack.c.h.b16 %v89
  %v488 = vunpack.c.l.b16 %v90
  %v489 = vunpack.c.h.b16 %v90
  %v490 = vunpack.c.l.b16 %v91
  %v491 = vunpack.c.h.b16 %v91
  %v492 = vunpack.c.l.b16 %v92
  %v493 = vunpack.c.h.b16 %v92
  %v494 = vunpack.c.l.b16 %v93
  %v495 = vunpack.c.h.b16 %v93
  %v496 = vunpack.c.l.b16 %v94
  %v497 = vunpack.c.h.b16 %v94
  %v498 = vunpack.c.l.b16 %v95
  %v499 = vunpack.c.h.b16 %v95
  %v500 = vunpack.c.l.b16 %v96
  %v501 = vunpack.c.h.b16 %v96
  %v502 = vunpack.c.l.b16 %v97
  %v503 = vunpack.c.h.b16 %v97
  %v504 = vunpack.c.l.b16 %v98
  %v505 = vunpack.c.h.b16 %v98
  %v506 = vunpack.c.l.b16 %v99
  %v507 = vunpack.c.h.b16 %v99
  %v508 = vunpack.c.l.b16 %v100
  %v509 = vunpack.c.h.b16 %v100
  %v510 = vunpack.c.l.b16 %v101
  %v511 = vunpack.c.h.b16 %v101
  %v512 = vunpack.c.l.b16 %v102
  %v513 = vunpack.c.h.b16 %v102
  %v514 = vunpack.c.l.b16 %v103
  %v515 = vunpack.c.h.b16 %v103
  %v516 = vunpack.c.l.b16 %v104
  %v517 = vunpack.c.h.b16 %v104
  %v518 = vunpack.c.l.b16 %v105
  %v519 = vunpack.c.h.b16 %v105
  %v520 = vunpack.c.l.b16 %v106
  %v521 = vunpack.c.h.b16 %v106
  %v522 = vunpack.c.l.b16 %v107
  %v523 = vunpack.c.h.b16 %v107
  %v524 = vunpack.c.l.b16 %v108
  %v525 = vunpack.c.h.b16 %v108
  %v526 = vunpack.c.l.b16 %v109
  %v527 = vunpack.c.h.b16 %v109
  %v528 = vunpack.c.l.b16 %v110
  %v529 = vunpack.c.h.b16 %v110
  %v530 = vunpack.c.l.b16 %v111
  %v531 = vunpack.c.h.b16 %v111
  %v532 = vunpack.c.l.b16 %v112
  %v533 = vunpack.c.h.b16 %v112
  %v534 = vunpack.c.l.b16 %v113
  %v535 = vunpack.c.h.b16 %v113
  %v536 = vunpack.c.l.b16 %v114
  %v537 = vunpack.c.h.b16 %v114
  %v538 = vunpack.c.l.b16 %v115
  %v539 = vunpack.c.h.b16 %v115
  %v540 = vunpack.c.l.b16 %v116
  %v541 = vunpack.c.h.b16 %v116
  %v542 = vunpack.c.l.b16 %v117
  %v543 = vunpack.c.h.b16 %v117
  %v544 = vunpack.c.l.b16 %v118
  %v545 = vunpack.c.h.b16 %v118
  %v546 = vunpack.c.l.b16 %v119
  %v547 = vunpack.c.h.b16 %v119
  %v548 = vunpack.c.l.b16 %v120
  %v549 = vunpack.c.h.b16 %v120
  %v550 = vunpack.c.l.b16 %v121
  %v551 = vunpack.c.h.b16 %v121
  %v552 = vunpack.c.l.b16 %v122
  %v553 = vunpack.c.h.b16 %v122
  %v554 = vunpack.c.l.b16 %v123
  %v555 = vunpack.c.h.b16 %v123
  %v556 = vunpack.c.l.b16 %v124
  %v557 = vunpack.c.h.b16 %v124
  %v558 = vunpack.c.l.b16 %v125
  %v559 = vunpack.c.h.b16 %v125
  %v560 = vunpack.c.l.b16 %v126
  %v561 = vunpack.c.h.b16 %v126
  %v562 = vunpack.c.l.b16 %v127
  %v563 = vunpack.c.h.b16 %v127
  %v564 = vunpack.c.l.b16 %v128
  %v565 = vunpack.c.h.b16 %v128
  %v566 = vunpack.c.l.b16 %v129
  %v567 = vunpack.c.h.b16 %v129
  %v568 = vunpack.c.l.b16 %v130
  %v569 = vunpack.c.h.b16 %v130
  %v570 = vunpack.c.l.b16 %v131
  %v571 = vunpack.c.h.b16 %v131
  %v572 = vunpack.c.l.b16 %v132
  %v573 = vunpack.c.h.b16 %v132
  %v574 = vunpack.c.l.b16 %v133
  %v575 = vunpack.c.h.b16 %v133
  %v576 = vunpack.c.l.b16 %v134
  %v577 = vunpack.c.h.b16 %v134
  %v578 = vunpack.c.l.b16 %v135
  %v579 = vunpack.c.h.b16 %v135
  %v580 = vunpack.c.l.b16 %v136
  %v581 = vunpack.c.h.b16 %v136
  %v582 = vunpack.c.l.b16 %v137
  %v583 = vunpack.c.h.b16 %v137
  %v584 = vunpack.c.l.b16 %v138
  %v585 = vunpack.c.h.b16 %v138
  %v586 = vunpack.c.l.b16 %v139
  %v587 = vunpack.c.h.b16 %v139
  %v588 = vpack.c.b16 %v336, %v332
  %v589 = vpack.c.b16 %v337, %v333
  %v590 = vpack.c.b16 %v338, %v334
  %v591 = vpack.c.b16 %v339, %v335
  %v592 = vpack.c.b16 %v344, %v340
  %v593 = vpack.c.b16 %v345, %v341
  %v594 = vpack.c.b16 %v346, %v342
  %v595 = vpack.c.b16 %v347, %v343
  %v596 = vpack.c.b16 %v352, %v348
  %v597 = vpack.c.b16 %v353, %v349
  %v598 = vpack.c.b16 %v354, %v350
  %v599 = vpack.c.b16 %v355, %v351
  %v600 = vpack.c.b16 %v360, %v356
  %v601 = vpack.c.b16 %v361, %v357
  %v602 = vpack.c.b16 %v362, %v358
  %v603 = vpack.c.b16 %v363, %v359
  %v604 = vpack.c.b16 %v368, %v364
  %v605 = vpack.c.b16 %v369, %v365
  %v606 = vpack.c.b16 %v370, %v366
  %v607 = vpack.c.b16 %v371, %v367
  %v608 = vpack.c.b16 %v376, %v372
  %v609 = vpack.c.b16 %v377, %v373
  %v610 = vpack.c.b16 %v378, %v374
  %v611 = vpack.c.b16 %v379, %v375
  %v612 = vpack.c.b16 %v384, %v380
  %v613 = vpack.c.b16 %v385, %v381
  %v614 = vpack.c.b16 %v386, %v382
  %v615 = vpack.c.b16 %v387, %v383
  %v616 = vpack.c.b16 %v392, %v388
  %v617 = vpack.c.b16 %v393, %v389
  %v618 = vpack.c.b16 %v394, %v390
  %v619 = vpack.c.b16 %v395, %v391
  %v620 = vpack.c.b16 %v400, %v396
  %v621 = vpack.c.b16 %v401, %v397
  %v622 = vpack.c.b16 %v402, %v398
  %v623 = vpack.c.b16 %v403, %v399
  %v624 = vpack.c.b16 %v408, %v404
  %v625 = vpack.c.b16 %v409, %v405
  %v626 = vpack.c.b16 %v410, %v406
  %v627 = vpack.c.b16 %v411, %v407
  %v628 = vpack.c.b16 %v416, %v412
  %v629 = vpack.c.b16 %v417, %v413
  %v630 = vpack.c.b16 %v418, %v414
  %v631 = vpack.c.b16 %v419, %v415
  %v632 = vpack.c.b16 %v424, %v420
  %v633 = vpack.c.b16 %v425, %v421
  %v634 = vpack.c.b16 %v426, %v422
  %v635 = vpack.c.b16 %v427, %v423
  %v636 = vpack.c.b16 %v432, %v428
  %v637 = vpack.c.b16 %v433, %v429
  %v638 = vpack.c.b16 %v434, %v430
  %v639 = vpack.c.b16 %v435, %v431
  %v640 = vpack.c.b16 %v440, %v436
  %v641 = vpack.c.b16 %v441, %v437
  %v642 = vpack.c.b16 %v442, %v438
  %v643 = vpack.c.b16 %v443, %v439
  %v644 = vpack.c.b16 %v448, %v444
  %v645 = vpack.c.b16 %v449, %v445
  %v646 = vpack.c.b16 %v450, %v446
  %v647 = vpack.c.b16 %v451, %v447
  %v648 = vpack.c.b16 %v456, %v452
  %v649 = vpack.c.b16 %v457, %v453
  %v650 = vpack.c.b16 %v458, %v454
  %v651 = vpack.c.b16 %v459, %v455
  %v652 = vpack.c.b16 %v464, %v460
  %v653 = vpack.c.b16 %v465, %v461
  %v654 = vpack.c.b16 %v466, %v462
  %v655 = vpack.c.b16 %v467, %v463
  %v656 = vpack.c.b16 %v472, %v468
  %v657 = vpack.c.b16 %v473, %v469
  %v658 = vpack.c.b16 %v474, %v470
  %v659 = vpack.c.b16 %v475, %v471
  %v660 = vpack.c.b16 %v480, %v476
  %v661 = vpack.c.b16 %v481, %v477
  %v662 = vpack.c.b16 %v482, %v478
  %v663 = vpack.c.b16 %v483, %v479
  %v664 = vpack.c.b16 %v488, %v484
  %v665 = vpack.c.b16 %v489, %v485
  %v666 = vpack.c.b16 %v490, %v486
  %v667 = vpack.c.b16 %v491, %v487
  %v668 = vpack.c.b16 %v496, %v492
  %v669 = vpack.c.b16 %v497, %v493
  %v670 = vpack.c.b16 %v498, %v494
  %v671 = vpack.c.b16 %v499, %v495
  %v672 = vpack.c.b16 %v504, %v500
  %v673 = vpack.c.b16 %v505, %v501
  %v674 = vpack.c.b16 %v506, %v502
  %v675 = vpack.c.b16 %v507, %v503
  %v676 = vpack.c.b16 %v512, %v508
  %v677 = vpack.c.b16 %v513, %v509
  %v678 = vpack.c.b16 %v514, %v510
  %v679 = vpack.c.b16 %v515, %v511
  %v680 = vpack.c.b16 %v520, %v516
  %v681 = vpack.c.b16 %v521, %v517
  %v682 = vpack.c.b16 %v522, %v518
  %v683 = vpack.c.b16 %v523, %v519
  %v684 = vpack.c.b16 %v528, %v524
  %v685 = vpack.c.b16 %v529, %v525
  %v686 = vpack.c.b16 %v530, %v526
  %v687 = vpack.c.b16 %v531, %v527
  %v688 = vpack.c.b16 %v536, %v532
  %v689 = vpack.c.b16 %v537, %v533
  %v690 = vpack.c.b16 %v538, %v534
  %v691 = vpack.c.b16 %v539, %v535
  %v692 = vpack.c.b16 %v544, %v540
  %v693 = vpack.c.b16 %v545, %v541
  %v694 = vpack.c.b16 %v546, %v542
  %v695 = vpack.c.b16 %v547, %v543
  %v696 = vpack.c.b16 %v552, %v548
  %v697 = vpack.c.b16 %v553, %v549
  %v698 = vpack.c.b16 %v554, %v550
  %v699 = vpack.c.b16 %v555, %v551
  %v700 = vpack.c.b16 %v560, %v556
  %v701 = vpack.c.b16 %v561, %v557
  %v702 = vpack.c.b16 %v562, %v558
  %v703 = vpack.c.b16 %v563, %v559
  %v704 = vpack.c.b16 %v568, %v564
  %v705 = vpack.c.b16 %v569, %v565
  %v706 = vpack.c.b16 %v570, %v566
  %v707 = vpack.c.b16 %v571, %v567
  %v708 = vpack.c.b16 %v576, %v572
  %v709 = vpack.c.b16 %v577, %v573
  %v710 = vpack.c.b16 %v578, %v574
  %v711 = vpack.c.b16 %v579, %v575
  %v712 = vpack.c.b16 %v584, %v580
  %v713 = vpack.c.b16 %v585, %v581
  %v714 = vpack.c.b16 %v586, %v582
  %v715 = vpack.c.b16 %v587, %v583
  %v908 = vunpack.c.l.b16 %v140
  %v909 = vunpack.c.l.b16 %v141
  %v910 = vunpack.c.l.b16 %v142
  %v911 = vunpack.c.l.b16 %v143
  %v912 = vunpack.c.l.b16 %v144
  %v913 = vunpack.c.l.b16 %v145
  %v914 = vunpack.c.l.b16 %v146
  %v915 = vunpack.c.l.b16 %v147
  %v916 = vunpack.c.l.b16 %v148
  %v917 = vunpack.c.l.b16 %v149
  %v918 = vunpack.c.l.b16 %v150
  %v919 = vunpack.c.l.b16 %v151
  %v920 = vunpack.c.l.b16 %v152
  %v921 = vunpack.c.l.b16 %v153
  %v922 = vunpack.c.l.b16 %v154
  %v923 = vunpack.c.l.b16 %v155
  %v924 = vunpack.c.l.b16 %v156
  %v925 = vunpack.c.l.b16 %v157
  %v926 = vunpack.c.l.b16 %v158
  %v927 = vunpack.c.l.b16 %v159
  %v928 = vunpack.c.l.b16 %v160
  %v929 = vunpack.c.l.b16 %v161
  %v930 = vunpack.c.l.b16 %v162
  %v931 = vunpack.c.l.b16 %v163
  %v932 = vunpack.c.l.b16 %v164
  %v933 = vunpack.c.l.b16 %v165
  %v934 = vunpack.c.l.b16 %v166
  %v935 = vunpack.c.l.b16 %v167
  %v936 = vunpack.c.l.b16 %v168
  %v937 = vunpack.c.l.b16 %v169
  %v938 = vunpack.c.l.b16 %v170
  %v939 = vunpack.c.l.b16 %v171
  %v940 = vunpack.c.l.b16 %v172
  %v941 = vunpack.c.l.b16 %v173
  %v942 = vunpack.c.l.b16 %v174
  %v943 = vunpack.c.l.b16 %v175
  %v944 = vunpack.c.l.b16 %v176
  %v945 = vunpack.c.l.b16 %v177
  %v946 = vunpack.c.l.b16 %v178
  %v947 = vunpack.c.l.b16 %v179
  %v948 = vunpack.c.l.b16 %v180
  %v949 = vunpack.c.l.b16 %v181
  %v950 = vunpack.c.l.b16 %v182
  %v951 = vunpack.c.l.b16 %v183
  %v952 = vunpack.c.l.b16 %v184
  %v953 = vunpack.c.l.b16 %v185
  %v954 = vunpack.c.l.b16 %v186
  %v955 = vunpack.c.l.b16 %v187
  %v956 = vunpack.c.l.b16 %v188
  %v957 = vunpack.c.l.b16 %v189
  %v958 = vunpack.c.l.b16 %v190
  %v959 = vunpack.c.l.b16 %v191
  %v960 = vunpack.c.l.b16 %v192
  %v961 = vunpack.c.l.b16 %v193
  %v962 = vunpack.c.l.b16 %v194
  %v963 = vunpack.c.l.b16 %v195
  %v964 = vunpack.c.l.b16 %v196
  %v965 = vunpack.c.l.b16 %v197
  %v966 = vunpack.c.l.b16 %v198
  %v967 = vunpack.c.l.b16 %v199
  %v968 = vunpack.c.l.b16 %v200
  %v969 = vunpack.c.l.b16 %v201
  %v970 = vunpack.c.l.b16 %v202
  %v971 = vunpack.c.l.b16 %v203
  %v972 = vpack.c.b16 %v909, %v908
  %v973 = vpack.c.b16 %v911, %v910
  %v974 = vpack.c.b16 %v913, %v912
  %v975 = vpack.c.b16 %v915, %v914
  %v976 = vpack.c.b16 %v917, %v916
  %v977 = vpack.c.b16 %v919, %v918
  %v978 = vpack.c.b16 %v921, %v920
  %v979 = vpack.c.b16 %v923, %v922
  %v980 = vpack.c.b16 %v925, %v924
  %v981 = vpack.c.b16 %v927, %v926
  %v982 = vpack.c.b16 %v929, %v928
  %v983 = vpack.c.b16 %v931, %v930
  %v984 = vpack.c.b16 %v933, %v932
  %v985 = vpack.c.b16 %v935, %v934
  %v986 = vpack.c.b16 %v937, %v936
  %v987 = vpack.c.b16 %v939, %v938
  %v988 = vpack.c.b16 %v941, %v940
  %v989 = vpack.c.b16 %v943, %v942
  %v990 = vpack.c.b16 %v945, %v944
  %v991 = vpack.c.b16 %v947, %v946
  %v992 = vpack.c.b16 %v949, %v948
  %v993 = vpack.c.b16 %v951, %v950
  %v994 = vpack.c.b16 %v953, %v952
  %v995 = vpack.c.b16 %v955, %v954
  %v996 = vpack.c.b16 %v957, %v956
  %v997 = vpack.c.b16 %v959, %v958
  %v998 = vpack.c.b16 %v961, %v960
  %v999 = vpack.c.b16 %v963, %v962
  %v1000 = vpack.c.b16 %v965, %v964
  %v1001 = vpack.c.b16 %v967, %v966
  %v1002 = vpack.c.b16 %v969, %v968
  %v1003 = vpack.c.b16 %v971, %v970
  %1036 = vmatprep.subr.bf16.mxu0 0
  %1037 = vmatpush1.bf16.msra.mxu0 %v972
  %1038 = vmatprep.subr.bf16.mxu0 0
  %1039 = vmatpush1.bf16.msra.mxu0 %v973
  %1040 = vmatprep.subr.bf16.mxu0 0
  %1041 = vmatpush1.bf16.msra.mxu0 %v974
  %1042 = vmatprep.subr.bf16.mxu0 0
  %1043 = vmatpush1.bf16.msra.mxu0 %v975
  %1044 = vmatprep.subr.bf16.mxu0 0
  %1045 = vmatpush1.bf16.msra.mxu0 %v976
  %1046 = vmatprep.subr.bf16.mxu0 0
  %1047 = vmatpush1.bf16.msra.mxu0 %v977
  %1048 = vmatprep.subr.bf16.mxu0 0
  %1049 = vmatpush1.bf16.msra.mxu0 %v978
  %1050 = vmatprep.subr.bf16.mxu0 0
  %1051 = vmatpush1.bf16.msra.mxu0 %v979
  %1052 = vmatprep.subr.bf16.mxu0 0
  %1053 = vmatpush1.bf16.msra.mxu0 %v980
  %1054 = vmatprep.subr.bf16.mxu0 0
  %1055 = vmatpush1.bf16.msra.mxu0 %v981
  %1056 = vmatprep.subr.bf16.mxu0 0
  %1057 = vmatpush1.bf16.msra.mxu0 %v982
  %1058 = vmatprep.subr.bf16.mxu0 0
  %1059 = vmatpush1.bf16.msra.mxu0 %v983
  %1060 = vmatprep.subr.bf16.mxu0 0
  %1061 = vmatpush1.bf16.msra.mxu0 %v984
  %1062 = vmatprep.subr.bf16.mxu0 0
  %1063 = vmatpush1.bf16.msra.mxu0 %v985
  %1064 = vmatprep.subr.bf16.mxu0 0
  %1065 = vmatpush1.bf16.msra.mxu0 %v986
  %1066 = vmatprep.subr.bf16.mxu0 0
  %1067 = vmatpush1.bf16.msra.mxu0 %v987
  %1068 = vmatprep.mubr.bf16.mxu0 %v589
  %1069 = vmatmul.mubr.bf16.gmra.mrb[0].mxu0 %v588
  %v1070 = vpop.f32.mrb[0].mxu0
  %v1071 = vadd.f32 0.0, %v1070
  %v1072 = vpop.f32.mrb[0].mxu0
  %v1073 = vpop.f32.mrb[0].mxu0
  %v1074 = vadd.f32 0.0, %v1073
  %v1075 = vpop.f32.mrb[0].mxu0
  %1076 = vmatprep.mubr.bf16.mxu0 %v593
  %1077 = vmatmul.mubr.bf16.gmra.mrb[0].mxu0 %v592
  %v1078 = vpop.f32.mrb[0].mxu0
  %v1079 = vadd.f32 0.0, %v1078
  %v1080 = vpop.f32.mrb[0].mxu0
  %v1081 = vpop.f32.mrb[0].mxu0
  %v1082 = vadd.f32 0.0, %v1081
  %v1083 = vpop.f32.mrb[0].mxu0
  %1084 = vmatprep.mubr.bf16.mxu0 %v597
  %1085 = vmatmul.mubr.bf16.gmra.mrb[0].mxu0 %v596
  %v1086 = vpop.f32.mrb[0].mxu0
  %v1087 = vadd.f32 0.0, %v1086
  %v1088 = vpop.f32.mrb[0].mxu0
  %v1089 = vpop.f32.mrb[0].mxu0
  %v1090 = vadd.f32 0.0, %v1089
  %v1091 = vpop.f32.mrb[0].mxu0
  %1092 = vmatprep.mubr.bf16.mxu0 %v601
  %1093 = vmatmul.mubr.bf16.gmra.mrb[0].mxu0 %v600
  %v1094 = vpop.f32.mrb[0].mxu0
  %v1095 = vadd.f32 0.0, %v1094
  %v1096 = vpop.f32.mrb[0].mxu0
  %v1097 = vpop.f32.mrb[0].mxu0
  %v1098 = vadd.f32 0.0, %v1097
  %v1099 = vpop.f32.mrb[0].mxu0
  %1100 = vmatprep.mubr.bf16.mxu0 %v605
  %1101 = vmatmul.mubr.bf16.gmra.mrb[0].mxu0 %v604
  %v1102 = vpop.f32.mrb[0].mxu0
  %v1103 = vadd.f32 0.0, %v1102
  %v1104 = vpop.f32.mrb[0].mxu0
  %v1105 = vpop.f32.mrb[0].mxu0
  %v1106 = vadd.f32 0.0, %v1105
  %v1107 = vpop.f32.mrb[0].mxu0
  %1108 = vmatprep.mubr.bf16.mxu0 %v609
  %1109 = vmatmul.mubr.bf16.gmra.mrb[0].mxu0 %v608
  %v1110 = vpop.f32.mrb[0].mxu0
  %v1111 = vadd.f32 0.0, %v1110
  %v1112 = vpop.f32.mrb[0].mxu0
  %v1113 = vpop.f32.mrb[0].mxu0
  %v1114 = vadd.f32 0.0, %v1113
  %v1115 = vpop.f32.mrb[0].mxu0
  %1116 = vmatprep.mubr.bf16.mxu0 %v613
  %1117 = vmatmul.mubr.bf16.gmra.mrb[0].mxu0 %v612
  %v1118 = vpop.f32.mrb[0].mxu0
  %v1119 = vadd.f32 0.0, %v1118
  %v1120 = vpop.f32.mrb[0].mxu0
  %v1121 = vpop.f32.mrb[0].mxu0
  %v1122 = vadd.f32 0.0, %v1121
  %v1123 = vpop.f32.mrb[0].mxu0
  %1124 = vmatprep.mubr.bf16.mxu0 %v617
  %1125 = vmatmul.mubr.bf16.gmra.mrb[0].mxu0 %v616
  %v1126 = vpop.f32.mrb[0].mxu0
  %v1127 = vadd.f32 0.0, %v1126
  %v1128 = vpop.f32.mrb[0].mxu0
  %v1129 = vpop.f32.mrb[0].mxu0
  %v1130 = vadd.f32 0.0, %v1129
  %v1131 = vpop.f32.mrb[0].mxu0
  %1132 = vmatprep.mubr.bf16.mxu0 %v621
  %1133 = vmatmul.mubr.bf16.gmra.mrb[0].mxu0 %v620
  %v1134 = vpop.f32.mrb[0].mxu0
  %v1135 = vadd.f32 0.0, %v1134
  %v1136 = vpop.f32.mrb[0].mxu0
  %v1137 = vpop.f32.mrb[0].mxu0
  %v1138 = vadd.f32 0.0, %v1137
  %v1139 = vpop.f32.mrb[0].mxu0
  %1140 = vmatprep.mubr.bf16.mxu0 %v625
  %1141 = vmatmul.mubr.bf16.gmra.mrb[0].mxu0 %v624
  %v1142 = vpop.f32.mrb[0].mxu0
  %v1143 = vadd.f32 0.0, %v1142
  %v1144 = vpop.f32.mrb[0].mxu0
  %v1145 = vpop.f32.mrb[0].mxu0
  %v1146 = vadd.f32 0.0, %v1145
  %v1147 = vpop.f32.mrb[0].mxu0
  %1148 = vmatprep.mubr.bf16.mxu0 %v629
  %1149 = vmatmul.mubr.bf16.gmra.mrb[0].mxu0 %v628
  %v1150 = vpop.f32.mrb[0].mxu0
  %v1151 = vadd.f32 0.0, %v1150
  %v1152 = vpop.f32.mrb[0].mxu0
  %v1153 = vpop.f32.mrb[0].mxu0
  %v1154 = vadd.f32 0.0, %v1153
  %v1155 = vpop.f32.mrb[0].mxu0
  %1156 = vmatprep.mubr.bf16.mxu0 %v633
  %1157 = vmatmul.mubr.bf16.gmra.mrb[0].mxu0 %v632
  %v1158 = vpop.f32.mrb[0].mxu0
  %v1159 = vadd.f32 0.0, %v1158
  %v1160 = vpop.f32.mrb[0].mxu0
  %v1161 = vpop.f32.mrb[0].mxu0
  %v1162 = vadd.f32 0.0, %v1161
  %v1163 = vpop.f32.mrb[0].mxu0
  %1164 = vmatprep.mubr.bf16.mxu0 %v637
  %1165 = vmatmul.mubr.bf16.gmra.mrb[0].mxu0 %v636
  %v1166 = vpop.f32.mrb[0].mxu0
  %v1167 = vadd.f32 0.0, %v1166
  %v1168 = vpop.f32.mrb[0].mxu0
  %v1169 = vpop.f32.mrb[0].mxu0
  %v1170 = vadd.f32 0.0, %v1169
  %v1171 = vpop.f32.mrb[0].mxu0
  %1172 = vmatprep.mubr.bf16.mxu0 %v641
  %1173 = vmatmul.mubr.bf16.gmra.mrb[0].mxu0 %v640
  %v1174 = vpop.f32.mrb[0].mxu0
  %v1175 = vadd.f32 0.0, %v1174
  %v1176 = vpop.f32.mrb[0].mxu0
  %v1177 = vpop.f32.mrb[0].mxu0
  %v1178 = vadd.f32 0.0, %v1177
  %v1179 = vpop.f32.mrb[0].mxu0
  %1180 = vmatprep.mubr.bf16.mxu0 %v645
  %1181 = vmatmul.mubr.bf16.gmra.mrb[0].mxu0 %v644
  %v1182 = vpop.f32.mrb[0].mxu0
  %v1183 = vadd.f32 0.0, %v1182
  %v1184 = vpop.f32.mrb[0].mxu0
  %v1185 = vpop.f32.mrb[0].mxu0
  %v1186 = vadd.f32 0.0, %v1185
  %v1187 = vpop.f32.mrb[0].mxu0
  %1188 = vmatprep.mubr.bf16.mxu0 %v649
  %1189 = vmatmul.mubr.bf16.gmra.mrb[0].mxu0 %v648
  %v1190 = vpop.f32.mrb[0].mxu0
  %v1191 = vadd.f32 0.0, %v1190
  %v1192 = vpop.f32.mrb[0].mxu0
  %v1193 = vpop.f32.mrb[0].mxu0
  %v1194 = vadd.f32 0.0, %v1193
  %v1195 = vpop.f32.mrb[0].mxu0
  %1196 = vmatprep.mubr.bf16.mxu0 %v653
  %1197 = vmatmul.mubr.bf16.gmra.mrb[0].mxu0 %v652
  %v1198 = vpop.f32.mrb[0].mxu0
  %v1199 = vadd.f32 0.0, %v1198
  %v1200 = vpop.f32.mrb[0].mxu0
  %v1201 = vpop.f32.mrb[0].mxu0
  %v1202 = vadd.f32 0.0, %v1201
  %v1203 = vpop.f32.mrb[0].mxu0
  %1204 = vmatprep.mubr.bf16.mxu0 %v657
  %1205 = vmatmul.mubr.bf16.gmra.mrb[0].mxu0 %v656
  %v1206 = vpop.f32.mrb[0].mxu0
  %v1207 = vadd.f32 0.0, %v1206
  %v1208 = vpop.f32.mrb[0].mxu0
  %v1209 = vpop.f32.mrb[0].mxu0
  %v1210 = vadd.f32 0.0, %v1209
  %v1211 = vpop.f32.mrb[0].mxu0
  %1212 = vmatprep.mubr.bf16.mxu0 %v661
  %1213 = vmatmul.mubr.bf16.gmra.mrb[0].mxu0 %v660
  %v1214 = vpop.f32.mrb[0].mxu0
  %v1215 = vadd.f32 0.0, %v1214
  %v1216 = vpop.f32.mrb[0].mxu0
  %v1217 = vpop.f32.mrb[0].mxu0
  %v1218 = vadd.f32 0.0, %v1217
  %v1219 = vpop.f32.mrb[0].mxu0
  %1220 = vmatprep.mubr.bf16.mxu0 %v665
  %1221 = vmatmul.mubr.bf16.gmra.mrb[0].mxu0 %v664
  %v1222 = vpop.f32.mrb[0].mxu0
  %v1223 = vadd.f32 0.0, %v1222
  %v1224 = vpop.f32.mrb[0].mxu0
  %v1225 = vpop.f32.mrb[0].mxu0
  %v1226 = vadd.f32 0.0, %v1225
  %v1227 = vpop.f32.mrb[0].mxu0
  %1228 = vmatprep.mubr.bf16.mxu0 %v669
  %1229 = vmatmul.mubr.bf16.gmra.mrb[0].mxu0 %v668
  %v1230 = vpop.f32.mrb[0].mxu0
  %v1231 = vadd.f32 0.0, %v1230
  %v1232 = vpop.f32.mrb[0].mxu0
  %v1233 = vpop.f32.mrb[0].mxu0
  %v1234 = vadd.f32 0.0, %v1233
  %v1235 = vpop.f32.mrb[0].mxu0
  %1236 = vmatprep.mubr.bf16.mxu0 %v673
  %1237 = vmatmul.mubr.bf16.gmra.mrb[0].mxu0 %v672
  %v1238 = vpop.f32.mrb[0].mxu0
  %v1239 = vadd.f32 0.0, %v1238
  %v1240 = vpop.f32.mrb[0].mxu0
  %v1241 = vpop.f32.mrb[0].mxu0
  %v1242 = vadd.f32 0.0, %v1241
  %v1243 = vpop.f32.mrb[0].mxu0
  %1244 = vmatprep.mubr.bf16.mxu0 %v677
  %1245 = vmatmul.mubr.bf16.gmra.mrb[0].mxu0 %v676
  %v1246 = vpop.f32.mrb[0].mxu0
  %v1247 = vadd.f32 0.0, %v1246
  %v1248 = vpop.f32.mrb[0].mxu0
  %v1249 = vpop.f32.mrb[0].mxu0
  %v1250 = vadd.f32 0.0, %v1249
  %v1251 = vpop.f32.mrb[0].mxu0
  %1252 = vmatprep.mubr.bf16.mxu0 %v681
  %1253 = vmatmul.mubr.bf16.gmra.mrb[0].mxu0 %v680
  %v1254 = vpop.f32.mrb[0].mxu0
  %v1255 = vadd.f32 0.0, %v1254
  %v1256 = vpop.f32.mrb[0].mxu0
  %v1257 = vpop.f32.mrb[0].mxu0
  %v1258 = vadd.f32 0.0, %v1257
  %v1259 = vpop.f32.mrb[0].mxu0
  %1260 = vmatprep.mubr.bf16.mxu0 %v685
  %1261 = vmatmul.mubr.bf16.gmra.mrb[0].mxu0 %v684
  %v1262 = vpop.f32.mrb[0].mxu0
  %v1263 = vadd.f32 0.0, %v1262
  %v1264 = vpop.f32.mrb[0].mxu0
  %v1265 = vpop.f32.mrb[0].mxu0
  %v1266 = vadd.f32 0.0, %v1265
  %v1267 = vpop.f32.mrb[0].mxu0
  %1268 = vmatprep.mubr.bf16.mxu0 %v689
  %1269 = vmatmul.mubr.bf16.gmra.mrb[0].mxu0 %v688
  %v1270 = vpop.f32.mrb[0].mxu0
  %v1271 = vadd.f32 0.0, %v1270
  %v1272 = vpop.f32.mrb[0].mxu0
  %v1273 = vpop.f32.mrb[0].mxu0
  %v1274 = vadd.f32 0.0, %v1273
  %v1275 = vpop.f32.mrb[0].mxu0
  %1276 = vmatprep.mubr.bf16.mxu0 %v693
  %1277 = vmatmul.mubr.bf16.gmra.mrb[0].mxu0 %v692
  %v1278 = vpop.f32.mrb[0].mxu0
  %v1279 = vadd.f32 0.0, %v1278
  %v1280 = vpop.f32.mrb[0].mxu0
  %v1281 = vpop.f32.mrb[0].mxu0
  %v1282 = vadd.f32 0.0, %v1281
  %v1283 = vpop.f32.mrb[0].mxu0
  %1284 = vmatprep.mubr.bf16.mxu0 %v697
  %1285 = vmatmul.mubr.bf16.gmra.mrb[0].mxu0 %v696
  %v1286 = vpop.f32.mrb[0].mxu0
  %v1287 = vadd.f32 0.0, %v1286
  %v1288 = vpop.f32.mrb[0].mxu0
  %v1289 = vpop.f32.mrb[0].mxu0
  %v1290 = vadd.f32 0.0, %v1289
  %v1291 = vpop.f32.mrb[0].mxu0
  %1292 = vmatprep.mubr.bf16.mxu0 %v701
  %1293 = vmatmul.mubr.bf16.gmra.mrb[0].mxu0 %v700
  %v1294 = vpop.f32.mrb[0].mxu0
  %v1295 = vadd.f32 0.0, %v1294
  %v1296 = vpop.f32.mrb[0].mxu0
  %v1297 = vpop.f32.mrb[0].mxu0
  %v1298 = vadd.f32 0.0, %v1297
  %v1299 = vpop.f32.mrb[0].mxu0
  %1300 = vmatprep.mubr.bf16.mxu0 %v705
  %1301 = vmatmul.mubr.bf16.gmra.mrb[0].mxu0 %v704
  %v1302 = vpop.f32.mrb[0].mxu0
  %v1303 = vadd.f32 0.0, %v1302
  %v1304 = vpop.f32.mrb[0].mxu0
  %v1305 = vpop.f32.mrb[0].mxu0
  %v1306 = vadd.f32 0.0, %v1305
  %v1307 = vpop.f32.mrb[0].mxu0
  %1308 = vmatprep.mubr.bf16.mxu0 %v709
  %1309 = vmatmul.mubr.bf16.gmra.mrb[0].mxu0 %v708
  %v1310 = vpop.f32.mrb[0].mxu0
  %v1311 = vadd.f32 0.0, %v1310
  %v1312 = vpop.f32.mrb[0].mxu0
  %v1313 = vpop.f32.mrb[0].mxu0
  %v1314 = vadd.f32 0.0, %v1313
  %v1315 = vpop.f32.mrb[0].mxu0
  %1316 = vmatprep.mubr.bf16.mxu0 %v713
  %1317 = vmatmul.mubr.bf16.gmra.mrb[0].mxu0 %v712
  %v1318 = vpop.f32.mrb[0].mxu0
  %v1319 = vadd.f32 0.0, %v1318
  %v1320 = vpop.f32.mrb[0].mxu0
  %v1321 = vpop.f32.mrb[0].mxu0
  %v1322 = vadd.f32 0.0, %v1321
  %v1323 = vpop.f32.mrb[0].mxu0
  %1324 = vdwg.mxu0
  %1325 = vmatprep.subr.bf16.mxu0 0
  %1326 = vmatpush1.bf16.msra.mxu0 %v988
  %1327 = vmatprep.subr.bf16.mxu0 0
  %1328 = vmatpush1.bf16.msra.mxu0 %v989
  %1329 = vmatprep.subr.bf16.mxu0 0
  %1330 = vmatpush1.bf16.msra.mxu0 %v990
  %1331 = vmatprep.subr.bf16.mxu0 0
  %1332 = vmatpush1.bf16.msra.mxu0 %v991
  %1333 = vmatprep.subr.bf16.mxu0 0
  %1334 = vmatpush1.bf16.msra.mxu0 %v992
  %1335 = vmatprep.subr.bf16.mxu0 0
  %1336 = vmatpush1.bf16.msra.mxu0 %v993
  %1337 = vmatprep.subr.bf16.mxu0 0
  %1338 = vmatpush1.bf16.msra.mxu0 %v994
  %1339 = vmatprep.subr.bf16.mxu0 0
  %1340 = vmatpush1.bf16.msra.mxu0 %v995
  %1341 = vmatprep.subr.bf16.mxu0 0
  %1342 = vmatpush1.bf16.msra.mxu0 %v996
  %1343 = vmatprep.subr.bf16.mxu0 0
  %1344 = vmatpush1.bf16.msra.mxu0 %v997
  %1345 = vmatprep.subr.bf16.mxu0 0
  %1346 = vmatpush1.bf16.msra.mxu0 %v998
  %1347 = vmatprep.subr.bf16.mxu0 0
  %1348 = vmatpush1.bf16.msra.mxu0 %v999
  %1349 = vmatprep.subr.bf16.mxu0 0
  %1350 = vmatpush1.bf16.msra.mxu0 %v1000
  %1351 = vmatprep.subr.bf16.mxu0 0
  %1352 = vmatpush1.bf16.msra.mxu0 %v1001
  %1353 = vmatprep.subr.bf16.mxu0 0
  %1354 = vmatpush1.bf16.msra.mxu0 %v1002
  %1355 = vmatprep.subr.bf16.mxu0 0
  %1356 = vmatpush1.bf16.msra.mxu0 %v1003
  %1357 = vmatprep.mubr.bf16.mxu0 %v591
  %1358 = vmatmul.mubr.bf16.gmra.mrb[0].mxu0 %v590
  %v1359 = vpop.f32.mrb[0].mxu0
  %v1360 = vadd.f32 %v1071, %v1359
  %v1361 = vpop.f32.mrb[0].mxu0
  %v1362 = vpop.f32.mrb[0].mxu0
  %v1363 = vadd.f32 %v1074, %v1362
  %v1364 = vpop.f32.mrb[0].mxu0
  %1365 = vmatprep.mubr.bf16.mxu0 %v595
  %1366 = vmatmul.mubr.bf16.gmra.mrb[0].mxu0 %v594
  %v1367 = vpop.f32.mrb[0].mxu0
  %v1368 = vadd.f32 %v1079, %v1367
  %v1369 = vpop.f32.mrb[0].mxu0
  %v1370 = vpop.f32.mrb[0].mxu0
  %v1371 = vadd.f32 %v1082, %v1370
  %v1372 = vpop.f32.mrb[0].mxu0
  %1373 = vmatprep.mubr.bf16.mxu0 %v599
  %1374 = vmatmul.mubr.bf16.gmra.mrb[0].mxu0 %v598
  %v1375 = vpop.f32.mrb[0].mxu0
  %v1376 = vadd.f32 %v1087, %v1375
  %v1377 = vpop.f32.mrb[0].mxu0
  %v1378 = vpop.f32.mrb[0].mxu0
  %v1379 = vadd.f32 %v1090, %v1378
  %v1380 = vpop.f32.mrb[0].mxu0
  %1381 = vmatprep.mubr.bf16.mxu0 %v603
  %1382 = vmatmul.mubr.bf16.gmra.mrb[0].mxu0 %v602
  %v1383 = vpop.f32.mrb[0].mxu0
  %v1384 = vadd.f32 %v1095, %v1383
  %v1385 = vpop.f32.mrb[0].mxu0
  %v1386 = vpop.f32.mrb[0].mxu0
  %v1387 = vadd.f32 %v1098, %v1386
  %v1388 = vpop.f32.mrb[0].mxu0
  %1389 = vmatprep.mubr.bf16.mxu0 %v607
  %1390 = vmatmul.mubr.bf16.gmra.mrb[0].mxu0 %v606
  %v1391 = vpop.f32.mrb[0].mxu0
  %v1392 = vadd.f32 %v1103, %v1391
  %v1393 = vpop.f32.mrb[0].mxu0
  %v1394 = vpop.f32.mrb[0].mxu0
  %v1395 = vadd.f32 %v1106, %v1394
  %v1396 = vpop.f32.mrb[0].mxu0
  %1397 = vmatprep.mubr.bf16.mxu0 %v611
  %1398 = vmatmul.mubr.bf16.gmra.mrb[0].mxu0 %v610
  %v1399 = vpop.f32.mrb[0].mxu0
  %v1400 = vadd.f32 %v1111, %v1399
  %v1401 = vpop.f32.mrb[0].mxu0
  %v1402 = vpop.f32.mrb[0].mxu0
  %v1403 = vadd.f32 %v1114, %v1402
  %v1404 = vpop.f32.mrb[0].mxu0
  %1405 = vmatprep.mubr.bf16.mxu0 %v615
  %1406 = vmatmul.mubr.bf16.gmra.mrb[0].mxu0 %v614
  %v1407 = vpop.f32.mrb[0].mxu0
  %v1408 = vadd.f32 %v1119, %v1407
  %v1409 = vpop.f32.mrb[0].mxu0
  %v1410 = vpop.f32.mrb[0].mxu0
  %v1411 = vadd.f32 %v1122, %v1410
  %v1412 = vpop.f32.mrb[0].mxu0
  %1413 = vmatprep.mubr.bf16.mxu0 %v619
  %1414 = vmatmul.mubr.bf16.gmra.mrb[0].mxu0 %v618
  %v1415 = vpop.f32.mrb[0].mxu0
  %v1416 = vadd.f32 %v1127, %v1415
  %v1417 = vpop.f32.mrb[0].mxu0
  %v1418 = vpop.f32.mrb[0].mxu0
  %v1419 = vadd.f32 %v1130, %v1418
  %v1420 = vpop.f32.mrb[0].mxu0
  %1421 = vmatprep.mubr.bf16.mxu0 %v623
  %1422 = vmatmul.mubr.bf16.gmra.mrb[0].mxu0 %v622
  %v1423 = vpop.f32.mrb[0].mxu0
  %v1424 = vadd.f32 %v1135, %v1423
  %v1425 = vpop.f32.mrb[0].mxu0
  %v1426 = vpop.f32.mrb[0].mxu0
  %v1427 = vadd.f32 %v1138, %v1426
  %v1428 = vpop.f32.mrb[0].mxu0
  %1429 = vmatprep.mubr.bf16.mxu0 %v627
  %1430 = vmatmul.mubr.bf16.gmra.mrb[0].mxu0 %v626
  %v1431 = vpop.f32.mrb[0].mxu0
  %v1432 = vadd.f32 %v1143, %v1431
  %v1433 = vpop.f32.mrb[0].mxu0
  %v1434 = vpop.f32.mrb[0].mxu0
  %v1435 = vadd.f32 %v1146, %v1434
  %v1436 = vpop.f32.mrb[0].mxu0
  %1437 = vmatprep.mubr.bf16.mxu0 %v631
  %1438 = vmatmul.mubr.bf16.gmra.mrb[0].mxu0 %v630
  %v1439 = vpop.f32.mrb[0].mxu0
  %v1440 = vadd.f32 %v1151, %v1439
  %v1441 = vpop.f32.mrb[0].mxu0
  %v1442 = vpop.f32.mrb[0].mxu0
  %v1443 = vadd.f32 %v1154, %v1442
  %v1444 = vpop.f32.mrb[0].mxu0
  %1445 = vmatprep.mubr.bf16.mxu0 %v635
  %1446 = vmatmul.mubr.bf16.gmra.mrb[0].mxu0 %v634
  %v1447 = vpop.f32.mrb[0].mxu0
  %v1448 = vadd.f32 %v1159, %v1447
  %v1449 = vpop.f32.mrb[0].mxu0
  %v1450 = vpop.f32.mrb[0].mxu0
  %v1451 = vadd.f32 %v1162, %v1450
  %v1452 = vpop.f32.mrb[0].mxu0
  %1453 = vmatprep.mubr.bf16.mxu0 %v639
  %1454 = vmatmul.mubr.bf16.gmra.mrb[0].mxu0 %v638
  %v1455 = vpop.f32.mrb[0].mxu0
  %v1456 = vadd.f32 %v1167, %v1455
  %v1457 = vpop.f32.mrb[0].mxu0
  %v1458 = vpop.f32.mrb[0].mxu0
  %v1459 = vadd.f32 %v1170, %v1458
  %v1460 = vpop.f32.mrb[0].mxu0
  %1461 = vmatprep.mubr.bf16.mxu0 %v643
  %1462 = vmatmul.mubr.bf16.gmra.mrb[0].mxu0 %v642
  %v1463 = vpop.f32.mrb[0].mxu0
  %v1464 = vadd.f32 %v1175, %v1463
  %v1465 = vpop.f32.mrb[0].mxu0
  %v1466 = vpop.f32.mrb[0].mxu0
  %v1467 = vadd.f32 %v1178, %v1466
  %v1468 = vpop.f32.mrb[0].mxu0
  %1469 = vmatprep.mubr.bf16.mxu0 %v647
  %1470 = vmatmul.mubr.bf16.gmra.mrb[0].mxu0 %v646
  %v1471 = vpop.f32.mrb[0].mxu0
  %v1472 = vadd.f32 %v1183, %v1471
  %v1473 = vpop.f32.mrb[0].mxu0
  %v1474 = vpop.f32.mrb[0].mxu0
  %v1475 = vadd.f32 %v1186, %v1474
  %v1476 = vpop.f32.mrb[0].mxu0
  %1477 = vmatprep.mubr.bf16.mxu0 %v651
  %1478 = vmatmul.mubr.bf16.gmra.mrb[0].mxu0 %v650
  %v1479 = vpop.f32.mrb[0].mxu0
  %v1480 = vadd.f32 %v1191, %v1479
  %v1481 = vpop.f32.mrb[0].mxu0
  %v1482 = vpop.f32.mrb[0].mxu0
  %v1483 = vadd.f32 %v1194, %v1482
  %v1484 = vpop.f32.mrb[0].mxu0
  %1485 = vmatprep.mubr.bf16.mxu0 %v655
  %1486 = vmatmul.mubr.bf16.gmra.mrb[0].mxu0 %v654
  %v1487 = vpop.f32.mrb[0].mxu0
  %v1488 = vadd.f32 %v1199, %v1487
  %v1489 = vpop.f32.mrb[0].mxu0
  %v1490 = vpop.f32.mrb[0].mxu0
  %v1491 = vadd.f32 %v1202, %v1490
  %v1492 = vpop.f32.mrb[0].mxu0
  %1493 = vmatprep.mubr.bf16.mxu0 %v659
  %1494 = vmatmul.mubr.bf16.gmra.mrb[0].mxu0 %v658
  %v1495 = vpop.f32.mrb[0].mxu0
  %v1496 = vadd.f32 %v1207, %v1495
  %v1497 = vpop.f32.mrb[0].mxu0
  %v1498 = vpop.f32.mrb[0].mxu0
  %v1499 = vadd.f32 %v1210, %v1498
  %v1500 = vpop.f32.mrb[0].mxu0
  %1501 = vmatprep.mubr.bf16.mxu0 %v663
  %1502 = vmatmul.mubr.bf16.gmra.mrb[0].mxu0 %v662
  %v1503 = vpop.f32.mrb[0].mxu0
  %v1504 = vadd.f32 %v1215, %v1503
  %v1505 = vpop.f32.mrb[0].mxu0
  %v1506 = vpop.f32.mrb[0].mxu0
  %v1507 = vadd.f32 %v1218, %v1506
  %v1508 = vpop.f32.mrb[0].mxu0
  %1509 = vmatprep.mubr.bf16.mxu0 %v667
  %1510 = vmatmul.mubr.bf16.gmra.mrb[0].mxu0 %v666
  %v1511 = vpop.f32.mrb[0].mxu0
  %v1512 = vadd.f32 %v1223, %v1511
  %v1513 = vpop.f32.mrb[0].mxu0
  %v1514 = vpop.f32.mrb[0].mxu0
  %v1515 = vadd.f32 %v1226, %v1514
  %v1516 = vpop.f32.mrb[0].mxu0
  %1517 = vmatprep.mubr.bf16.mxu0 %v671
  %1518 = vmatmul.mubr.bf16.gmra.mrb[0].mxu0 %v670
  %v1519 = vpop.f32.mrb[0].mxu0
  %v1520 = vadd.f32 %v1231, %v1519
  %v1521 = vpop.f32.mrb[0].mxu0
  %v1522 = vpop.f32.mrb[0].mxu0
  %v1523 = vadd.f32 %v1234, %v1522
  %v1524 = vpop.f32.mrb[0].mxu0
  %1525 = vmatprep.mubr.bf16.mxu0 %v675
  %1526 = vmatmul.mubr.bf16.gmra.mrb[0].mxu0 %v674
  %v1527 = vpop.f32.mrb[0].mxu0
  %v1528 = vadd.f32 %v1239, %v1527
  %v1529 = vpop.f32.mrb[0].mxu0
  %v1530 = vpop.f32.mrb[0].mxu0
  %v1531 = vadd.f32 %v1242, %v1530
  %v1532 = vpop.f32.mrb[0].mxu0
  %1533 = vmatprep.mubr.bf16.mxu0 %v679
  %1534 = vmatmul.mubr.bf16.gmra.mrb[0].mxu0 %v678
  %v1535 = vpop.f32.mrb[0].mxu0
  %v1536 = vadd.f32 %v1247, %v1535
  %v1537 = vpop.f32.mrb[0].mxu0
  %v1538 = vpop.f32.mrb[0].mxu0
  %v1539 = vadd.f32 %v1250, %v1538
  %v1540 = vpop.f32.mrb[0].mxu0
  %1541 = vmatprep.mubr.bf16.mxu0 %v683
  %1542 = vmatmul.mubr.bf16.gmra.mrb[0].mxu0 %v682
  %v1543 = vpop.f32.mrb[0].mxu0
  %v1544 = vadd.f32 %v1255, %v1543
  %v1545 = vpop.f32.mrb[0].mxu0
  %v1546 = vpop.f32.mrb[0].mxu0
  %v1547 = vadd.f32 %v1258, %v1546
  %v1548 = vpop.f32.mrb[0].mxu0
  %1549 = vmatprep.mubr.bf16.mxu0 %v687
  %1550 = vmatmul.mubr.bf16.gmra.mrb[0].mxu0 %v686
  %v1551 = vpop.f32.mrb[0].mxu0
  %v1552 = vadd.f32 %v1263, %v1551
  %v1553 = vpop.f32.mrb[0].mxu0
  %v1554 = vpop.f32.mrb[0].mxu0
  %v1555 = vadd.f32 %v1266, %v1554
  %v1556 = vpop.f32.mrb[0].mxu0
  %1557 = vmatprep.mubr.bf16.mxu0 %v691
  %1558 = vmatmul.mubr.bf16.gmra.mrb[0].mxu0 %v690
  %v1559 = vpop.f32.mrb[0].mxu0
  %v1560 = vadd.f32 %v1271, %v1559
  %v1561 = vpop.f32.mrb[0].mxu0
  %v1562 = vpop.f32.mrb[0].mxu0
  %v1563 = vadd.f32 %v1274, %v1562
  %v1564 = vpop.f32.mrb[0].mxu0
  %1565 = vmatprep.mubr.bf16.mxu0 %v695
  %1566 = vmatmul.mubr.bf16.gmra.mrb[0].mxu0 %v694
  %v1567 = vpop.f32.mrb[0].mxu0
  %v1568 = vadd.f32 %v1279, %v1567
  %v1569 = vpop.f32.mrb[0].mxu0
  %v1570 = vpop.f32.mrb[0].mxu0
  %v1571 = vadd.f32 %v1282, %v1570
  %v1572 = vpop.f32.mrb[0].mxu0
  %1573 = vmatprep.mubr.bf16.mxu0 %v699
  %1574 = vmatmul.mubr.bf16.gmra.mrb[0].mxu0 %v698
  %v1575 = vpop.f32.mrb[0].mxu0
  %v1576 = vadd.f32 %v1287, %v1575
  %v1577 = vpop.f32.mrb[0].mxu0
  %v1578 = vpop.f32.mrb[0].mxu0
  %v1579 = vadd.f32 %v1290, %v1578
  %v1580 = vpop.f32.mrb[0].mxu0
  %1581 = vmatprep.mubr.bf16.mxu0 %v703
  %1582 = vmatmul.mubr.bf16.gmra.mrb[0].mxu0 %v702
  %v1583 = vpop.f32.mrb[0].mxu0
  %v1584 = vadd.f32 %v1295, %v1583
  %v1585 = vpop.f32.mrb[0].mxu0
  %v1586 = vpop.f32.mrb[0].mxu0
  %v1587 = vadd.f32 %v1298, %v1586
  %v1588 = vpop.f32.mrb[0].mxu0
  %1589 = vmatprep.mubr.bf16.mxu0 %v707
  %1590 = vmatmul.mubr.bf16.gmra.mrb[0].mxu0 %v706
  %v1591 = vpop.f32.mrb[0].mxu0
  %v1592 = vadd.f32 %v1303, %v1591
  %v1593 = vpop.f32.mrb[0].mxu0
  %v1594 = vpop.f32.mrb[0].mxu0
  %v1595 = vadd.f32 %v1306, %v1594
  %v1596 = vpop.f32.mrb[0].mxu0
  %1597 = vmatprep.mubr.bf16.mxu0 %v711
  %1598 = vmatmul.mubr.bf16.gmra.mrb[0].mxu0 %v710
  %v1599 = vpop.f32.mrb[0].mxu0
  %v1600 = vadd.f32 %v1311, %v1599
  %v1601 = vpop.f32.mrb[0].mxu0
  %v1602 = vpop.f32.mrb[0].mxu0
  %v1603 = vadd.f32 %v1314, %v1602
  %v1604 = vpop.f32.mrb[0].mxu0
  %1605 = vmatprep.mubr.bf16.mxu0 %v715
  %1606 = vmatmul.mubr.bf16.gmra.mrb[0].mxu0 %v714
  %v1607 = vpop.f32.mrb[0].mxu0
  %v1608 = vadd.f32 %v1319, %v1607
  %v1609 = vpop.f32.mrb[0].mxu0
  %v1610 = vpop.f32.mrb[0].mxu0
  %v1611 = vadd.f32 %v1322, %v1610
  %v1612 = vpop.f32.mrb[0].mxu0
  %1613 = vdwg.mxu0
  %vm1614 = vcmp.ge.f32.partialorder %v1360, 0.0
  %vm1615 = vcmp.ge.f32.partialorder %v1363, 0.0
  %vm1616 = vcmp.ge.f32.partialorder %v1368, 0.0
  %vm1617 = vcmp.ge.f32.partialorder %v1371, 0.0
  %vm1618 = vcmp.ge.f32.partialorder %v1376, 0.0
  %vm1619 = vcmp.ge.f32.partialorder %v1379, 0.0
  %vm1620 = vcmp.ge.f32.partialorder %v1384, 0.0
  %vm1621 = vcmp.ge.f32.partialorder %v1387, 0.0
  %vm1622 = vcmp.ge.f32.partialorder %v1392, 0.0
  %vm1623 = vcmp.ge.f32.partialorder %v1395, 0.0
  %vm1624 = vcmp.ge.f32.partialorder %v1400, 0.0
  %vm1625 = vcmp.ge.f32.partialorder %v1403, 0.0
  %vm1626 = vcmp.ge.f32.partialorder %v1408, 0.0
  %vm1627 = vcmp.ge.f32.partialorder %v1411, 0.0
  %vm1628 = vcmp.ge.f32.partialorder %v1416, 0.0
  %vm1629 = vcmp.ge.f32.partialorder %v1419, 0.0
  %vm1630 = vcmp.ge.f32.partialorder %v1424, 0.0
  %vm1631 = vcmp.ge.f32.partialorder %v1427, 0.0
  %vm1632 = vcmp.ge.f32.partialorder %v1432, 0.0
  %vm1633 = vcmp.ge.f32.partialorder %v1435, 0.0
  %vm1634 = vcmp.ge.f32.partialorder %v1440, 0.0
  %vm1635 = vcmp.ge.f32.partialorder %v1443, 0.0
  %vm1636 = vcmp.ge.f32.partialorder %v1448, 0.0
  %vm1637 = vcmp.ge.f32.partialorder %v1451, 0.0
  %vm1638 = vcmp.ge.f32.partialorder %v1456, 0.0
  %vm1639 = vcmp.ge.f32.partialorder %v1459, 0.0
  %vm1640 = vcmp.ge.f32.partialorder %v1464, 0.0
  %vm1641 = vcmp.ge.f32.partialorder %v1467, 0.0
  %vm1642 = vcmp.ge.f32.partialorder %v1472, 0.0
  %vm1643 = vcmp.ge.f32.partialorder %v1475, 0.0
  %vm1644 = vcmp.ge.f32.partialorder %v1480, 0.0
  %vm1645 = vcmp.ge.f32.partialorder %v1483, 0.0
  %vm1646 = vcmp.ge.f32.partialorder %v1488, 0.0
  %vm1647 = vcmp.ge.f32.partialorder %v1491, 0.0
  %vm1648 = vcmp.ge.f32.partialorder %v1496, 0.0
  %vm1649 = vcmp.ge.f32.partialorder %v1499, 0.0
  %vm1650 = vcmp.ge.f32.partialorder %v1504, 0.0
  %vm1651 = vcmp.ge.f32.partialorder %v1507, 0.0
  %vm1652 = vcmp.ge.f32.partialorder %v1512, 0.0
  %vm1653 = vcmp.ge.f32.partialorder %v1515, 0.0
  %vm1654 = vcmp.ge.f32.partialorder %v1520, 0.0
  %vm1655 = vcmp.ge.f32.partialorder %v1523, 0.0
  %vm1656 = vcmp.ge.f32.partialorder %v1528, 0.0
  %vm1657 = vcmp.ge.f32.partialorder %v1531, 0.0
  %vm1658 = vcmp.ge.f32.partialorder %v1536, 0.0
  %vm1659 = vcmp.ge.f32.partialorder %v1539, 0.0
  %vm1660 = vcmp.ge.f32.partialorder %v1544, 0.0
  %vm1661 = vcmp.ge.f32.partialorder %v1547, 0.0
  %vm1662 = vcmp.ge.f32.partialorder %v1552, 0.0
  %vm1663 = vcmp.ge.f32.partialorder %v1555, 0.0
  %vm1664 = vcmp.ge.f32.partialorder %v1560, 0.0
  %vm1665 = vcmp.ge.f32.partialorder %v1563, 0.0
  %vm1666 = vcmp.ge.f32.partialorder %v1568, 0.0
  %vm1667 = vcmp.ge.f32.partialorder %v1571, 0.0
  %vm1668 = vcmp.ge.f32.partialorder %v1576, 0.0
  %vm1669 = vcmp.ge.f32.partialorder %v1579, 0.0
  %vm1670 = vcmp.ge.f32.partialorder %v1584, 0.0
  %vm1671 = vcmp.ge.f32.partialorder %v1587, 0.0
  %vm1672 = vcmp.ge.f32.partialorder %v1592, 0.0
  %vm1673 = vcmp.ge.f32.partialorder %v1595, 0.0
  %vm1674 = vcmp.ge.f32.partialorder %v1600, 0.0
  %vm1675 = vcmp.ge.f32.partialorder %v1603, 0.0
  %vm1676 = vcmp.ge.f32.partialorder %v1608, 0.0
  %vm1677 = vcmp.ge.f32.partialorder %v1611, 0.0
  %v1678 = vmul.f32 %v1360, 0.2
  %v1679 = vmul.f32 %v1363, 0.2
  %v1680 = vmul.f32 %v1368, 0.2
  %v1681 = vmul.f32 %v1371, 0.2
  %v1682 = vmul.f32 %v1376, 0.2
  %v1683 = vmul.f32 %v1379, 0.2
  %v1684 = vmul.f32 %v1384, 0.2
  %v1685 = vmul.f32 %v1387, 0.2
  %v1686 = vmul.f32 %v1392, 0.2
  %v1687 = vmul.f32 %v1395, 0.2
  %v1688 = vmul.f32 %v1400, 0.2
  %v1689 = vmul.f32 %v1403, 0.2
  %v1690 = vmul.f32 %v1408, 0.2
  %v1691 = vmul.f32 %v1411, 0.2
  %v1692 = vmul.f32 %v1416, 0.2
  %v1693 = vmul.f32 %v1419, 0.2
  %v1694 = vmul.f32 %v1424, 0.2
  %v1695 = vmul.f32 %v1427, 0.2
  %v1696 = vmul.f32 %v1432, 0.2
  %v1697 = vmul.f32 %v1435, 0.2
  %v1698 = vmul.f32 %v1440, 0.2
  %v1699 = vmul.f32 %v1443, 0.2
  %v1700 = vmul.f32 %v1448, 0.2
  %v1701 = vmul.f32 %v1451, 0.2
  %v1702 = vmul.f32 %v1456, 0.2
  %v1703 = vmul.f32 %v1459, 0.2
  %v1704 = vmul.f32 %v1464, 0.2
  %v1705 = vmul.f32 %v1467, 0.2
  %v1706 = vmul.f32 %v1472, 0.2
  %v1707 = vmul.f32 %v1475, 0.2
  %v1708 = vmul.f32 %v1480, 0.2
  %v1709 = vmul.f32 %v1483, 0.2
  %v1710 = vmul.f32 %v1488, 0.2
  %v1711 = vmul.f32 %v1491, 0.2
  %v1712 = vmul.f32 %v1496, 0.2
  %v1713 = vmul.f32 %v1499, 0.2
  %v1714 = vmul.f32 %v1504, 0.2
  %v1715 = vmul.f32 %v1507, 0.2
  %v1716 = vmul.f32 %v1512, 0.2
  %v1717 = vmul.f32 %v1515, 0.2
  %v1718 = vmul.f32 %v1520, 0.2
  %v1719 = vmul.f32 %v1523, 0.2
  %v1720 = vmul.f32 %v1528, 0.2
  %v1721 = vmul.f32 %v1531, 0.2
  %v1722 = vmul.f32 %v1536, 0.2
  %v1723 = vmul.f32 %v1539, 0.2
  %v1724 = vmul.f32 %v1544, 0.2
  %v1725 = vmul.f32 %v1547, 0.2
  %v1726 = vmul.f32 %v1552, 0.2
  %v1727 = vmul.f32 %v1555, 0.2
  %v1728 = vmul.f32 %v1560, 0.2
  %v1729 = vmul.f32 %v1563, 0.2
  %v1730 = vmul.f32 %v1568, 0.2
  %v1731 = vmul.f32 %v1571, 0.2
  %v1732 = vmul.f32 %v1576, 0.2
  %v1733 = vmul.f32 %v1579, 0.2
  %v1734 = vmul.f32 %v1584, 0.2
  %v1735 = vmul.f32 %v1587, 0.2
  %v1736 = vmul.f32 %v1592, 0.2
  %v1737 = vmul.f32 %v1595, 0.2
  %v1738 = vmul.f32 %v1600, 0.2
  %v1739 = vmul.f32 %v1603, 0.2
  %v1740 = vmul.f32 %v1608, 0.2
  %v1741 = vmul.f32 %v1611, 0.2
  %v1742 = vsel %vm1614, %v1360, %v1678
  %v1743 = vsel %vm1615, %v1363, %v1679
  %v1744 = vsel %vm1616, %v1368, %v1680
  %v1745 = vsel %vm1617, %v1371, %v1681
  %v1746 = vsel %vm1618, %v1376, %v1682
  %v1747 = vsel %vm1619, %v1379, %v1683
  %v1748 = vsel %vm1620, %v1384, %v1684
  %v1749 = vsel %vm1621, %v1387, %v1685
  %v1750 = vsel %vm1622, %v1392, %v1686
  %v1751 = vsel %vm1623, %v1395, %v1687
  %v1752 = vsel %vm1624, %v1400, %v1688
  %v1753 = vsel %vm1625, %v1403, %v1689
  %v1754 = vsel %vm1626, %v1408, %v1690
  %v1755 = vsel %vm1627, %v1411, %v1691
  %v1756 = vsel %vm1628, %v1416, %v1692
  %v1757 = vsel %vm1629, %v1419, %v1693
  %v1758 = vsel %vm1630, %v1424, %v1694
  %v1759 = vsel %vm1631, %v1427, %v1695
  %v1760 = vsel %vm1632, %v1432, %v1696
  %v1761 = vsel %vm1633, %v1435, %v1697
  %v1762 = vsel %vm1634, %v1440, %v1698
  %v1763 = vsel %vm1635, %v1443, %v1699
  %v1764 = vsel %vm1636, %v1448, %v1700
  %v1765 = vsel %vm1637, %v1451, %v1701
  %v1766 = vsel %vm1638, %v1456, %v1702
  %v1767 = vsel %vm1639, %v1459, %v1703
  %v1768 = vsel %vm1640, %v1464, %v1704
  %v1769 = vsel %vm1641, %v1467, %v1705
  %v1770 = vsel %vm1642, %v1472, %v1706
  %v1771 = vsel %vm1643, %v1475, %v1707
  %v1772 = vsel %vm1644, %v1480, %v1708
  %v1773 = vsel %vm1645, %v1483, %v1709
  %v1774 = vsel %vm1646, %v1488, %v1710
  %v1775 = vsel %vm1647, %v1491, %v1711
  %v1776 = vsel %vm1648, %v1496, %v1712
  %v1777 = vsel %vm1649, %v1499, %v1713
  %v1778 = vsel %vm1650, %v1504, %v1714
  %v1779 = vsel %vm1651, %v1507, %v1715
  %v1780 = vsel %vm1652, %v1512, %v1716
  %v1781 = vsel %vm1653, %v1515, %v1717
  %v1782 = vsel %vm1654, %v1520, %v1718
  %v1783 = vsel %vm1655, %v1523, %v1719
  %v1784 = vsel %vm1656, %v1528, %v1720
  %v1785 = vsel %vm1657, %v1531, %v1721
  %v1786 = vsel %vm1658, %v1536, %v1722
  %v1787 = vsel %vm1659, %v1539, %v1723
  %v1788 = vsel %vm1660, %v1544, %v1724
  %v1789 = vsel %vm1661, %v1547, %v1725
  %v1790 = vsel %vm1662, %v1552, %v1726
  %v1791 = vsel %vm1663, %v1555, %v1727
  %v1792 = vsel %vm1664, %v1560, %v1728
  %v1793 = vsel %vm1665, %v1563, %v1729
  %v1794 = vsel %vm1666, %v1568, %v1730
  %v1795 = vsel %vm1667, %v1571, %v1731
  %v1796 = vsel %vm1668, %v1576, %v1732
  %v1797 = vsel %vm1669, %v1579, %v1733
  %v1798 = vsel %vm1670, %v1584, %v1734
  %v1799 = vsel %vm1671, %v1587, %v1735
  %v1800 = vsel %vm1672, %v1592, %v1736
  %v1801 = vsel %vm1673, %v1595, %v1737
  %v1802 = vsel %vm1674, %v1600, %v1738
  %v1803 = vsel %vm1675, %v1603, %v1739
  %v1804 = vsel %vm1676, %v1608, %v1740
  %v1805 = vsel %vm1677, %v1611, %v1741
  %v1806 = vpack.c.bf16 %v1743, %v1742
  %v1807 = vpack.c.bf16 %v1745, %v1744
  %v1808 = vpack.c.bf16 %v1747, %v1746
  %v1809 = vpack.c.bf16 %v1749, %v1748
  %v1810 = vpack.c.bf16 %v1751, %v1750
  %v1811 = vpack.c.bf16 %v1753, %v1752
  %v1812 = vpack.c.bf16 %v1755, %v1754
  %v1813 = vpack.c.bf16 %v1757, %v1756
  %v1814 = vpack.c.bf16 %v1759, %v1758
  %v1815 = vpack.c.bf16 %v1761, %v1760
  %v1816 = vpack.c.bf16 %v1763, %v1762
  %v1817 = vpack.c.bf16 %v1765, %v1764
  %v1818 = vpack.c.bf16 %v1767, %v1766
  %v1819 = vpack.c.bf16 %v1769, %v1768
  %v1820 = vpack.c.bf16 %v1771, %v1770
  %v1821 = vpack.c.bf16 %v1773, %v1772
  %v1822 = vpack.c.bf16 %v1775, %v1774
  %v1823 = vpack.c.bf16 %v1777, %v1776
  %v1824 = vpack.c.bf16 %v1779, %v1778
  %v1825 = vpack.c.bf16 %v1781, %v1780
  %v1826 = vpack.c.bf16 %v1783, %v1782
  %v1827 = vpack.c.bf16 %v1785, %v1784
  %v1828 = vpack.c.bf16 %v1787, %v1786
  %v1829 = vpack.c.bf16 %v1789, %v1788
  %v1830 = vpack.c.bf16 %v1791, %v1790
  %v1831 = vpack.c.bf16 %v1793, %v1792
  %v1832 = vpack.c.bf16 %v1795, %v1794
  %v1833 = vpack.c.bf16 %v1797, %v1796
  %v1834 = vpack.c.bf16 %v1799, %v1798
  %v1835 = vpack.c.bf16 %v1801, %v1800
  %v1836 = vpack.c.bf16 %v1803, %v1802
  %v1837 = vpack.c.bf16 %v1805, %v1804
  %v1870 = vunpack.c.l.b16 %v1806
  %v1871 = vunpack.c.h.b16 %v1806
  %v1872 = vunpack.c.l.b16 %v1807
  %v1873 = vunpack.c.h.b16 %v1807
  %v1874 = vunpack.c.l.b16 %v1808
  %v1875 = vunpack.c.h.b16 %v1808
  %v1876 = vunpack.c.l.b16 %v1809
  %v1877 = vunpack.c.h.b16 %v1809
  %v1878 = vunpack.c.l.b16 %v1810
  %v1879 = vunpack.c.h.b16 %v1810
  %v1880 = vunpack.c.l.b16 %v1811
  %v1881 = vunpack.c.h.b16 %v1811
  %v1882 = vunpack.c.l.b16 %v1812
  %v1883 = vunpack.c.h.b16 %v1812
  %v1884 = vunpack.c.l.b16 %v1813
  %v1885 = vunpack.c.h.b16 %v1813
  %v1886 = vunpack.c.l.b16 %v1814
  %v1887 = vunpack.c.h.b16 %v1814
  %v1888 = vunpack.c.l.b16 %v1815
  %v1889 = vunpack.c.h.b16 %v1815
  %v1890 = vunpack.c.l.b16 %v1816
  %v1891 = vunpack.c.h.b16 %v1816
  %v1892 = vunpack.c.l.b16 %v1817
  %v1893 = vunpack.c.h.b16 %v1817
  %v1894 = vunpack.c.l.b16 %v1818
  %v1895 = vunpack.c.h.b16 %v1818
  %v1896 = vunpack.c.l.b16 %v1819
  %v1897 = vunpack.c.h.b16 %v1819
  %v1898 = vunpack.c.l.b16 %v1820
  %v1899 = vunpack.c.h.b16 %v1820
  %v1900 = vunpack.c.l.b16 %v1821
  %v1901 = vunpack.c.h.b16 %v1821
  %v1902 = vunpack.c.l.b16 %v1822
  %v1903 = vunpack.c.h.b16 %v1822
  %v1904 = vunpack.c.l.b16 %v1823
  %v1905 = vunpack.c.h.b16 %v1823
  %v1906 = vunpack.c.l.b16 %v1824
  %v1907 = vunpack.c.h.b16 %v1824
  %v1908 = vunpack.c.l.b16 %v1825
  %v1909 = vunpack.c.h.b16 %v1825
  %v1910 = vunpack.c.l.b16 %v1826
  %v1911 = vunpack.c.h.b16 %v1826
  %v1912 = vunpack.c.l.b16 %v1827
  %v1913 = vunpack.c.h.b16 %v1827
  %v1914 = vunpack.c.l.b16 %v1828
  %v1915 = vunpack.c.h.b16 %v1828
  %v1916 = vunpack.c.l.b16 %v1829
  %v1917 = vunpack.c.h.b16 %v1829
  %v1918 = vunpack.c.l.b16 %v1830
  %v1919 = vunpack.c.h.b16 %v1830
  %v1920 = vunpack.c.l.b16 %v1831
  %v1921 = vunpack.c.h.b16 %v1831
  %v1922 = vunpack.c.l.b16 %v1832
  %v1923 = vunpack.c.h.b16 %v1832
  %v1924 = vunpack.c.l.b16 %v1833
  %v1925 = vunpack.c.h.b16 %v1833
  %v1926 = vunpack.c.l.b16 %v1834
  %v1927 = vunpack.c.h.b16 %v1834
  %v1928 = vunpack.c.l.b16 %v1835
  %v1929 = vunpack.c.h.b16 %v1835
  %v1930 = vunpack.c.l.b16 %v1836
  %v1931 = vunpack.c.h.b16 %v1836
  %v1932 = vunpack.c.l.b16 %v1837
  %v1933 = vunpack.c.h.b16 %v1837
  %v1934 = vpack.c.b16 %v1870, %v1870
  %v1935 = vpack.c.b16 %v1871, %v1871
  %v1936 = vpack.c.b16 %v1872, %v1872
  %v1937 = vpack.c.b16 %v1873, %v1873
  %v1938 = vpack.c.b16 %v1874, %v1874
  %v1939 = vpack.c.b16 %v1875, %v1875
  %v1940 = vpack.c.b16 %v1876, %v1876
  %v1941 = vpack.c.b16 %v1877, %v1877
  %v1942 = vpack.c.b16 %v1878, %v1878
  %v1943 = vpack.c.b16 %v1879, %v1879
  %v1944 = vpack.c.b16 %v1880, %v1880
  %v1945 = vpack.c.b16 %v1881, %v1881
  %v1946 = vpack.c.b16 %v1882, %v1882
  %v1947 = vpack.c.b16 %v1883, %v1883
  %v1948 = vpack.c.b16 %v1884, %v1884
  %v1949 = vpack.c.b16 %v1885, %v1885
  %v1950 = vpack.c.b16 %v1886, %v1886
  %v1951 = vpack.c.b16 %v1887, %v1887
  %v1952 = vpack.c.b16 %v1888, %v1888
  %v1953 = vpack.c.b16 %v1889, %v1889
  %v1954 = vpack.c.b16 %v1890, %v1890
  %v1955 = vpack.c.b16 %v1891, %v1891
  %v1956 = vpack.c.b16 %v1892, %v1892
  %v1957 = vpack.c.b16 %v1893, %v1893
  %v1958 = vpack.c.b16 %v1894, %v1894
  %v1959 = vpack.c.b16 %v1895, %v1895
  %v1960 = vpack.c.b16 %v1896, %v1896
  %v1961 = vpack.c.b16 %v1897, %v1897
  %v1962 = vpack.c.b16 %v1898, %v1898
  %v1963 = vpack.c.b16 %v1899, %v1899
  %v1964 = vpack.c.b16 %v1900, %v1900
  %v1965 = vpack.c.b16 %v1901, %v1901
  %v1966 = vpack.c.b16 %v1902, %v1902
  %v1967 = vpack.c.b16 %v1903, %v1903
  %v1968 = vpack.c.b16 %v1904, %v1904
  %v1969 = vpack.c.b16 %v1905, %v1905
  %v1970 = vpack.c.b16 %v1906, %v1906
  %v1971 = vpack.c.b16 %v1907, %v1907
  %v1972 = vpack.c.b16 %v1908, %v1908
  %v1973 = vpack.c.b16 %v1909, %v1909
  %v1974 = vpack.c.b16 %v1910, %v1910
  %v1975 = vpack.c.b16 %v1911, %v1911
  %v1976 = vpack.c.b16 %v1912, %v1912
  %v1977 = vpack.c.b16 %v1913, %v1913
  %v1978 = vpack.c.b16 %v1914, %v1914
  %v1979 = vpack.c.b16 %v1915, %v1915
  %v1980 = vpack.c.b16 %v1916, %v1916
  %v1981 = vpack.c.b16 %v1917, %v1917
  %v1982 = vpack.c.b16 %v1918, %v1918
  %v1983 = vpack.c.b16 %v1919, %v1919
  %v1984 = vpack.c.b16 %v1920, %v1920
  %v1985 = vpack.c.b16 %v1921, %v1921
  %v1986 = vpack.c.b16 %v1922, %v1922
  %v1987 = vpack.c.b16 %v1923, %v1923
  %v1988 = vpack.c.b16 %v1924, %v1924
  %v1989 = vpack.c.b16 %v1925, %v1925
  %v1990 = vpack.c.b16 %v1926, %v1926
  %v1991 = vpack.c.b16 %v1927, %v1927
  %v1992 = vpack.c.b16 %v1928, %v1928
  %v1993 = vpack.c.b16 %v1929, %v1929
  %v1994 = vpack.c.b16 %v1930, %v1930
  %v1995 = vpack.c.b16 %v1931, %v1931
  %v1996 = vpack.c.b16 %v1932, %v1932
  %v1997 = vpack.c.b16 %v1933, %v1933
  %2062 = vst [vmem:[%s2] sm:$0xf] %v1934
  %2063 = vst [vmem:[%s2 + $0x4] sm:$0xf] %v1935
  %2064 = vst [vmem:[%s2 + $0x8] sm:$0xf] %v1936
  %2065 = vst [vmem:[%s2 + $0xc] sm:$0xf] %v1937
  %2066 = vst [vmem:[%s2 + $0x10] sm:$0xf] %v1938
  %2067 = vst [vmem:[%s2 + $0x14] sm:$0xf] %v1939
  %2068 = vst [vmem:[%s2 + $0x18] sm:$0xf] %v1940
  %2069 = vst [vmem:[%s2 + $0x1c] sm:$0xf] %v1941
  %2070 = vst [vmem:[%s2 + $0x20] sm:$0xf] %v1942
  %2071 = vst [vmem:[%s2 + $0x24] sm:$0xf] %v1943
  %2072 = vst [vmem:[%s2 + $0x28] sm:$0xf] %v1944
  %2073 = vst [vmem:[%s2 + $0x2c] sm:$0xf] %v1945
  %2074 = vst [vmem:[%s2 + $0x30] sm:$0xf] %v1946
  %2075 = vst [vmem:[%s2 + $0x34] sm:$0xf] %v1947
  %2076 = vst [vmem:[%s2 + $0x38] sm:$0xf] %v1948
  %2077 = vst [vmem:[%s2 + $0x3c] sm:$0xf] %v1949
  %2078 = vst [vmem:[%s2 + $0x40] sm:$0xf] %v1950
  %2079 = vst [vmem:[%s2 + $0x44] sm:$0xf] %v1951
  %2080 = vst [vmem:[%s2 + $0x48] sm:$0xf] %v1952
  %2081 = vst [vmem:[%s2 + $0x4c] sm:$0xf] %v1953
  %2082 = vst [vmem:[%s2 + $0x50] sm:$0xf] %v1954
  %2083 = vst [vmem:[%s2 + $0x54] sm:$0xf] %v1955
  %2084 = vst [vmem:[%s2 + $0x58] sm:$0xf] %v1956
  %2085 = vst [vmem:[%s2 + $0x5c] sm:$0xf] %v1957
  %2086 = vst [vmem:[%s2 + $0x60] sm:$0xf] %v1958
  %2087 = vst [vmem:[%s2 + $0x64] sm:$0xf] %v1959
  %2088 = vst [vmem:[%s2 + $0x68] sm:$0xf] %v1960
  %2089 = vst [vmem:[%s2 + $0x6c] sm:$0xf] %v1961
  %2090 = vst [vmem:[%s2 + $0x70] sm:$0xf] %v1962
  %2091 = vst [vmem:[%s2 + $0x74] sm:$0xf] %v1963
  %2092 = vst [vmem:[%s2 + $0x78] sm:$0xf] %v1964
  %2093 = vst [vmem:[%s2 + $0x7c] sm:$0xf] %v1965
  %2094 = vst [vmem:[%s2 + $0x80] sm:$0xf] %v1966
  %2095 = vst [vmem:[%s2 + $0x84] sm:$0xf] %v1967
  %2096 = vst [vmem:[%s2 + $0x88] sm:$0xf] %v1968
  %2097 = vst [vmem:[%s2 + $0x8c] sm:$0xf] %v1969
  %2098 = vst [vmem:[%s2 + $0x90] sm:$0xf] %v1970
  %2099 = vst [vmem:[%s2 + $0x94] sm:$0xf] %v1971
  %2100 = vst [vmem:[%s2 + $0x98] sm:$0xf] %v1972
  %2101 = vst [vmem:[%s2 + $0x9c] sm:$0xf] %v1973
  %2102 = vst [vmem:[%s2 + $0xa0] sm:$0xf] %v1974
  %2103 = vst [vmem:[%s2 + $0xa4] sm:$0xf] %v1975
  %2104 = vst [vmem:[%s2 + $0xa8] sm:$0xf] %v1976
  %2105 = vst [vmem:[%s2 + $0xac] sm:$0xf] %v1977
  %2106 = vst [vmem:[%s2 + $0xb0] sm:$0xf] %v1978
  %2107 = vst [vmem:[%s2 + $0xb4] sm:$0xf] %v1979
  %2108 = vst [vmem:[%s2 + $0xb8] sm:$0xf] %v1980
  %2109 = vst [vmem:[%s2 + $0xbc] sm:$0xf] %v1981
  %2110 = vst [vmem:[%s2 + $0xc0] sm:$0xf] %v1982
  %2111 = vst [vmem:[%s2 + $0xc4] sm:$0xf] %v1983
  %2112 = vst [vmem:[%s2 + $0xc8] sm:$0xf] %v1984
  %2113 = vst [vmem:[%s2 + $0xcc] sm:$0xf] %v1985
  %2114 = vst [vmem:[%s2 + $0xd0] sm:$0xf] %v1986
  %2115 = vst [vmem:[%s2 + $0xd4] sm:$0xf] %v1987
  %2116 = vst [vmem:[%s2 + $0xd8] sm:$0xf] %v1988
  %2117 = vst [vmem:[%s2 + $0xdc] sm:$0xf] %v1989
  %2118 = vst [vmem:[%s2 + $0xe0] sm:$0xf] %v1990
  %2119 = vst [vmem:[%s2 + $0xe4] sm:$0xf] %v1991
  %2120 = vst [vmem:[%s2 + $0xe8] sm:$0xf] %v1992
  %2121 = vst [vmem:[%s2 + $0xec] sm:$0xf] %v1993
  %2122 = vst [vmem:[%s2 + $0xf0] sm:$0xf] %v1994
  %2123 = vst [vmem:[%s2 + $0xf4] sm:$0xf] %v1995
  %2124 = vst [vmem:[%s2 + $0xf8] sm:$0xf] %v1996
  %2125 = vst [vmem:[%s2 + $0xfc] sm:$0xf] %v1997
  // Predicated region
  $region10: #{discriminator_forward.8} parent=0 // pred_check
    _
  $region11: #{discriminator_forward.8} parent=0 // pred_check_branch
    %2127 = sbr.rel (0) target = $region13
  $region12: #{discriminator_forward.8} parent=0 // pred_region
    _
  $region13: #{discriminator_forward.8} parent=0 // pred_fallthru
    _
  // Predicated region
  $region14: #{discriminator_forward.8} parent=0 // pred_check
    _
  $region15: #{discriminator_forward.8} parent=0 // pred_check_branch
    %2129 = sbr.rel (0) target = $region17
  $region16: #{discriminator_forward.8} parent=0 // pred_region
    _
  $region17: #{discriminator_forward.8} parent=0 // pred_fallthru
    _

// kernel: discriminator_forward.10
$region0: #{discriminator_forward.10}
  #allocation0 [shape = 'u32[]', space=smem, size = 0x4, offset = 0x4, fixed_abs, tag = 'smem constant byte address 0x4 - core index']
  #allocation1 [shape = 'u32[144,128]{1,0:T(1,128)}', space=vmem, size = 0x12000, scoped, tag = 'internal scratch']
  %s0 = inlined_call_operand.vmem [shape: bf16[128,128], index: 0, kind: input, shape index: {}]
  %s1 = inlined_call_operand.vmem [shape: f32[2,128], index: 1, kind: input, shape index: {}]
  %s2 = inlined_call_operand.vmem [shape: f32[1,128], index: 2, kind: input, shape index: {}]
  %s3 = inlined_call_operand.vmem [shape: f32[1,128], index: 3, kind: input, shape index: {}]
  %s4 = inlined_call_operand.vmem [shape: bf16[128,128], index: 4, kind: output, shape index: {}]
  %s5 = sld [smem:[#allocation0]]
  $region26: #{discriminator_forward.10} parent=0
    _
  %s7 = ssub.s32 1, %s5
  %s8 = scalar_select 0, %s7, %s5
  // Predicated region
  $region2: #{discriminator_forward.10} parent=0 // pred_check
    _
  $region3: #{discriminator_forward.10} parent=0 // pred_check_branch
    %10 = sbr.rel (0) target = $region5
  $region4: #{discriminator_forward.10} parent=0 // pred_region
    _
  $region5: #{discriminator_forward.10} parent=0 // pred_fallthru
    _
  // Predicated region
  $region6: #{discriminator_forward.10} parent=0 // pred_check
    _
  $region7: #{discriminator_forward.10} parent=0 // pred_check_branch
    %12 = sbr.rel (0) target = $region9
  $region8: #{discriminator_forward.10} parent=0 // pred_region
    _
  $region9: #{discriminator_forward.10} parent=0 // pred_fallthru
    _
  // Predicated region
  $region10: #{discriminator_forward.10} parent=0 // pred_check
    _
  $region11: #{discriminator_forward.10} parent=0 // pred_check_branch
    %14 = sbr.rel (0) target = $region13
  $region12: #{discriminator_forward.10} parent=0 // pred_region
    _
  $region13: #{discriminator_forward.10} parent=0 // pred_fallthru
    _
  // Predicated region
  $region14: #{discriminator_forward.10} parent=0 // pred_check
    _
  $region15: #{discriminator_forward.10} parent=0 // pred_check_branch
    %16 = sbr.rel (0) target = $region17
  $region16: #{discriminator_forward.10} parent=0 // pred_region
    _
  $region17: #{discriminator_forward.10} parent=0 // pred_fallthru
    _
  %v17 = vld [vmem:[%s1] sm:$0x3]
  %v18 = vmul.f32 %v17, 0.0078125
  %v19 = vmul.f32 %v18, %v18
  %v21 = vrot.slane %v19, 7
  %v23 = vsub.f32 %v18, %v21
  %v24 = vmax.f32 %v23, 0.0
  %v25 = vld [vmem:[%s2] sm:$0x1]
  %v26 = vadd.f32 %v24, 1e-05
  %v27 = vrsqrt.pop %v26
  %v30 = vunpack.c.l.s4 1966171168
  %v31 = vunpack.c.0.s8 %v30
  %v32 = vlaneseq
  %v33 = vshrl.u32 %v32, 7
  %v34 = vsub.s32 %v31, %v33
  %v35 = vrot.slane %v27, %v34
  %v36 = vcombine.high %v35, %v35
  %v38 = vunpack.c.l.s4 1966171168
  %v39 = vunpack.c.0.s8 %v38
  %v40 = vlaneseq
  %v41 = vshrl.u32 %v40, 7
  %v42 = vsub.s32 %v39, %v41
  %v43 = vrot.slane %v36, %v42
  %v45 = vmul.f32 %v25, %v43
  %v46 = vld [vmem:[%s3] sm:$0x1]
  %v47 = vmul.f32 %v18, %v45
  %v48 = vsub.f32 %v46, %v47
  %v49 = vld [vmem:[%s0] sm:$0xf]
  %v50 = vld [vmem:[%s0 + $0x4] sm:$0xf]
  %v51 = vld [vmem:[%s0 + $0x8] sm:$0xf]
  %v52 = vld [vmem:[%s0 + $0xc] sm:$0xf]
  %v53 = vld [vmem:[%s0 + $0x10] sm:$0xf]
  %v54 = vld [vmem:[%s0 + $0x14] sm:$0xf]
  %v55 = vld [vmem:[%s0 + $0x18] sm:$0xf]
  %v56 = vld [vmem:[%s0 + $0x1c] sm:$0xf]
  %v57 = vld [vmem:[%s0 + $0x20] sm:$0xf]
  %v58 = vld [vmem:[%s0 + $0x24] sm:$0xf]
  %v59 = vld [vmem:[%s0 + $0x28] sm:$0xf]
  %v60 = vld [vmem:[%s0 + $0x2c] sm:$0xf]
  %v61 = vld [vmem:[%s0 + $0x30] sm:$0xf]
  %v62 = vld [vmem:[%s0 + $0x34] sm:$0xf]
  %v63 = vld [vmem:[%s0 + $0x38] sm:$0xf]
  %v64 = vld [vmem:[%s0 + $0x3c] sm:$0xf]
  %v65 = vunpack.c.l.bf16 %v49
  %v66 = vunpack.c.l.bf16 %v50
  %v67 = vunpack.c.l.bf16 %v51
  %v68 = vunpack.c.l.bf16 %v52
  %v69 = vunpack.c.l.bf16 %v53
  %v70 = vunpack.c.l.bf16 %v54
  %v71 = vunpack.c.l.bf16 %v55
  %v72 = vunpack.c.l.bf16 %v56
  %v73 = vunpack.c.l.bf16 %v57
  %v74 = vunpack.c.l.bf16 %v58
  %v75 = vunpack.c.l.bf16 %v59
  %v76 = vunpack.c.l.bf16 %v60
  %v77 = vunpack.c.l.bf16 %v61
  %v78 = vunpack.c.l.bf16 %v62
  %v79 = vunpack.c.l.bf16 %v63
  %v80 = vunpack.c.l.bf16 %v64
  %v82 = vlaneseq
  %v83 = vshrl.u32 %v82, 7
  %v84 = vsub.s32 0, %v83
  %v85 = vrot.slane %v45, %v84
  %v87 = vmul.f32 %v65, %v85
  %v88 = vmul.f32 %v66, %v85
  %v89 = vmul.f32 %v67, %v85
  %v90 = vmul.f32 %v68, %v85
  %v91 = vmul.f32 %v69, %v85
  %v92 = vmul.f32 %v70, %v85
  %v93 = vmul.f32 %v71, %v85
  %v94 = vmul.f32 %v72, %v85
  %v95 = vmul.f32 %v73, %v85
  %v96 = vmul.f32 %v74, %v85
  %v97 = vmul.f32 %v75, %v85
  %v98 = vmul.f32 %v76, %v85
  %v99 = vmul.f32 %v77, %v85
  %v100 = vmul.f32 %v78, %v85
  %v101 = vmul.f32 %v79, %v85
  %v102 = vmul.f32 %v80, %v85
  %v104 = vlaneseq
  %v105 = vshrl.u32 %v104, 7
  %v106 = vsub.s32 0, %v105
  %v107 = vrot.slane %v48, %v106
  %v109 = vadd.f32 %v87, %v107
  %v110 = vadd.f32 %v88, %v107
  %v111 = vadd.f32 %v89, %v107
  %v112 = vadd.f32 %v90, %v107
  %v113 = vadd.f32 %v91, %v107
  %v114 = vadd.f32 %v92, %v107
  %v115 = vadd.f32 %v93, %v107
  %v116 = vadd.f32 %v94, %v107
  %v117 = vadd.f32 %v95, %v107
  %v118 = vadd.f32 %v96, %v107
  %v119 = vadd.f32 %v97, %v107
  %v120 = vadd.f32 %v98, %v107
  %v121 = vadd.f32 %v99, %v107
  %v122 = vadd.f32 %v100, %v107
  %v123 = vadd.f32 %v101, %v107
  %v124 = vadd.f32 %v102, %v107
  %vm125 = vcmp.ge.f32.partialorder %v109, 0.0
  %vm126 = vcmp.ge.f32.partialorder %v110, 0.0
  %vm127 = vcmp.ge.f32.partialorder %v111, 0.0
  %vm128 = vcmp.ge.f32.partialorder %v112, 0.0
  %vm129 = vcmp.ge.f32.partialorder %v113, 0.0
  %vm130 = vcmp.ge.f32.partialorder %v114, 0.0
  %vm131 = vcmp.ge.f32.partialorder %v115, 0.0
  %vm132 = vcmp.ge.f32.partialorder %v116, 0.0
  %vm133 = vcmp.ge.f32.partialorder %v117, 0.0
  %vm134 = vcmp.ge.f32.partialorder %v118, 0.0
  %vm135 = vcmp.ge.f32.partialorder %v119, 0.0
  %vm136 = vcmp.ge.f32.partialorder %v120, 0.0
  %vm137 = vcmp.ge.f32.partialorder %v121, 0.0
  %vm138 = vcmp.ge.f32.partialorder %v122, 0.0
  %vm139 = vcmp.ge.f32.partialorder %v123, 0.0
  %vm140 = vcmp.ge.f32.partialorder %v124, 0.0
  %v141 = vmul.f32 %v109, 0.2
  %v142 = vmul.f32 %v110, 0.2
  %v143 = vmul.f32 %v111, 0.2
  %v144 = vmul.f32 %v112, 0.2
  %v145 = vmul.f32 %v113, 0.2
  %v146 = vmul.f32 %v114, 0.2
  %v147 = vmul.f32 %v115, 0.2
  %v148 = vmul.f32 %v116, 0.2
  %v149 = vmul.f32 %v117, 0.2
  %v150 = vmul.f32 %v118, 0.2
  %v151 = vmul.f32 %v119, 0.2
  %v152 = vmul.f32 %v120, 0.2
  %v153 = vmul.f32 %v121, 0.2
  %v154 = vmul.f32 %v122, 0.2
  %v155 = vmul.f32 %v123, 0.2
  %v156 = vmul.f32 %v124, 0.2
  %v157 = vsel %vm125, %v109, %v141
  %v158 = vsel %vm126, %v110, %v142
  %v159 = vsel %vm127, %v111, %v143
  %v160 = vsel %vm128, %v112, %v144
  %v161 = vsel %vm129, %v113, %v145
  %v162 = vsel %vm130, %v114, %v146
  %v163 = vsel %vm131, %v115, %v147
  %v164 = vsel %vm132, %v116, %v148
  %v165 = vsel %vm133, %v117, %v149
  %v166 = vsel %vm134, %v118, %v150
  %v167 = vsel %vm135, %v119, %v151
  %v168 = vsel %vm136, %v120, %v152
  %v169 = vsel %vm137, %v121, %v153
  %v170 = vsel %vm138, %v122, %v154
  %v171 = vsel %vm139, %v123, %v155
  %v172 = vsel %vm140, %v124, %v156
  %v173 = vpack.c.bf16 %v158, %v157
  %v174 = vpack.c.bf16 %v160, %v159
  %v175 = vpack.c.bf16 %v162, %v161
  %v176 = vpack.c.bf16 %v164, %v163
  %v177 = vpack.c.bf16 %v166, %v165
  %v178 = vpack.c.bf16 %v168, %v167
  %v179 = vpack.c.bf16 %v170, %v169
  %v180 = vpack.c.bf16 %v172, %v171
  %v189 = vunpack.c.l.b16 %v173
  %v190 = vunpack.c.h.b16 %v173
  %v191 = vunpack.c.l.b16 %v174
  %v192 = vunpack.c.h.b16 %v174
  %v193 = vunpack.c.l.b16 %v175
  %v194 = vunpack.c.h.b16 %v175
  %v195 = vunpack.c.l.b16 %v176
  %v196 = vunpack.c.h.b16 %v176
  %v197 = vunpack.c.l.b16 %v177
  %v198 = vunpack.c.h.b16 %v177
  %v199 = vunpack.c.l.b16 %v178
  %v200 = vunpack.c.h.b16 %v178
  %v201 = vunpack.c.l.b16 %v179
  %v202 = vunpack.c.h.b16 %v179
  %v203 = vunpack.c.l.b16 %v180
  %v204 = vunpack.c.h.b16 %v180
  %v205 = vpack.c.b16 %v189, %v189
  %v206 = vpack.c.b16 %v190, %v190
  %v207 = vpack.c.b16 %v191, %v191
  %v208 = vpack.c.b16 %v192, %v192
  %v209 = vpack.c.b16 %v193, %v193
  %v210 = vpack.c.b16 %v194, %v194
  %v211 = vpack.c.b16 %v195, %v195
  %v212 = vpack.c.b16 %v196, %v196
  %v213 = vpack.c.b16 %v197, %v197
  %v214 = vpack.c.b16 %v198, %v198
  %v215 = vpack.c.b16 %v199, %v199
  %v216 = vpack.c.b16 %v200, %v200
  %v217 = vpack.c.b16 %v201, %v201
  %v218 = vpack.c.b16 %v202, %v202
  %v219 = vpack.c.b16 %v203, %v203
  %v220 = vpack.c.b16 %v204, %v204
  %237 = vst [vmem:[%s4] sm:$0xf] %v205
  %238 = vst [vmem:[%s4 + $0x4] sm:$0xf] %v206
  %239 = vst [vmem:[%s4 + $0x8] sm:$0xf] %v207
  %240 = vst [vmem:[%s4 + $0xc] sm:$0xf] %v208
  %241 = vst [vmem:[%s4 + $0x10] sm:$0xf] %v209
  %242 = vst [vmem:[%s4 + $0x14] sm:$0xf] %v210
  %243 = vst [vmem:[%s4 + $0x18] sm:$0xf] %v211
  %244 = vst [vmem:[%s4 + $0x1c] sm:$0xf] %v212
  %245 = vst [vmem:[%s4 + $0x20] sm:$0xf] %v213
  %246 = vst [vmem:[%s4 + $0x24] sm:$0xf] %v214
  %247 = vst [vmem:[%s4 + $0x28] sm:$0xf] %v215
  %248 = vst [vmem:[%s4 + $0x2c] sm:$0xf] %v216
  %249 = vst [vmem:[%s4 + $0x30] sm:$0xf] %v217
  %250 = vst [vmem:[%s4 + $0x34] sm:$0xf] %v218
  %251 = vst [vmem:[%s4 + $0x38] sm:$0xf] %v219
  %252 = vst [vmem:[%s4 + $0x3c] sm:$0xf] %v220
  // Predicated region
  $region18: #{discriminator_forward.10} parent=0 // pred_check
    _
  $region19: #{discriminator_forward.10} parent=0 // pred_check_branch
    %254 = sbr.rel (0) target = $region21
  $region20: #{discriminator_forward.10} parent=0 // pred_region
    _
  $region21: #{discriminator_forward.10} parent=0 // pred_fallthru
    _
  // Predicated region
  $region22: #{discriminator_forward.10} parent=0 // pred_check
    _
  $region23: #{discriminator_forward.10} parent=0 // pred_check_branch
    %256 = sbr.rel (0) target = $region25
  $region24: #{discriminator_forward.10} parent=0 // pred_region
    _
  $region25: #{discriminator_forward.10} parent=0 // pred_fallthru
    _

// kernel: discriminator_forward.9
$region0: #{discriminator_forward.9}
  #allocation0 [shape = 'u32[]', space=smem, size = 0x4, offset = 0x4, fixed_abs, tag = 'smem constant byte address 0x4 - core index']
  #allocation1 [shape = 'u32[144,128]{1,0:T(1,128)}', space=vmem, size = 0x12000, scoped, tag = 'internal scratch']
  %s0 = inlined_call_operand.vmem [shape: bf16[128,1024], index: 0, kind: input, shape index: {}]
  %s1 = inlined_call_operand.vmem [shape: bf16[1024,128], index: 1, kind: input, shape index: {}]
  %s2 = inlined_call_operand.vmem [shape: bf16[128,128], index: 2, kind: output, shape index: {0}]
  %s3 = inlined_call_operand.vmem [shape: f32[2,128], index: 3, kind: output, shape index: {1}]
  %4 = xla_tuple %s2, %s3
  %s5 = sld [smem:[#allocation0]]
  $region30: #{discriminator_forward.9} parent=0
    _
  %s7 = ssub.s32 1, %s5
  %s8 = scalar_select 0, %s7, %s5
  // Predicated region
  $region2: #{discriminator_forward.9} parent=0 // pred_check
    _
  $region3: #{discriminator_forward.9} parent=0 // pred_check_branch
    %10 = sbr.rel (0) target = $region5
  $region4: #{discriminator_forward.9} parent=0 // pred_region
    _
  $region5: #{discriminator_forward.9} parent=0 // pred_fallthru
    _
  // Predicated region
  $region6: #{discriminator_forward.9} parent=0 // pred_check
    _
  $region7: #{discriminator_forward.9} parent=0 // pred_check_branch
    %12 = sbr.rel (0) target = $region9
  $region8: #{discriminator_forward.9} parent=0 // pred_region
    _
  $region9: #{discriminator_forward.9} parent=0 // pred_fallthru
    _
  %v14 = vld [vmem:[%s0] sm:$0xff]
  %v15 = vld [vmem:[%s0 + $0x8] sm:$0xff]
  %v16 = vld [vmem:[%s0 + $0x10] sm:$0xff]
  %v17 = vld [vmem:[%s0 + $0x18] sm:$0xff]
  %v18 = vld [vmem:[%s0 + $0x20] sm:$0xff]
  %v19 = vld [vmem:[%s0 + $0x28] sm:$0xff]
  %v20 = vld [vmem:[%s0 + $0x30] sm:$0xff]
  %v21 = vld [vmem:[%s0 + $0x38] sm:$0xff]
  %v22 = vld [vmem:[%s0 + $0x40] sm:$0xff]
  %v23 = vld [vmem:[%s0 + $0x48] sm:$0xff]
  %v24 = vld [vmem:[%s0 + $0x50] sm:$0xff]
  %v25 = vld [vmem:[%s0 + $0x58] sm:$0xff]
  %v26 = vld [vmem:[%s0 + $0x60] sm:$0xff]
  %v27 = vld [vmem:[%s0 + $0x68] sm:$0xff]
  %v28 = vld [vmem:[%s0 + $0x70] sm:$0xff]
  %v29 = vld [vmem:[%s0 + $0x78] sm:$0xff]
  %v30 = vld [vmem:[%s0 + $0x80] sm:$0xff]
  %v31 = vld [vmem:[%s0 + $0x88] sm:$0xff]
  %v32 = vld [vmem:[%s0 + $0x90] sm:$0xff]
  %v33 = vld [vmem:[%s0 + $0x98] sm:$0xff]
  %v34 = vld [vmem:[%s0 + $0xa0] sm:$0xff]
  %v35 = vld [vmem:[%s0 + $0xa8] sm:$0xff]
  %v36 = vld [vmem:[%s0 + $0xb0] sm:$0xff]
  %v37 = vld [vmem:[%s0 + $0xb8] sm:$0xff]
  %v38 = vld [vmem:[%s0 + $0xc0] sm:$0xff]
  %v39 = vld [vmem:[%s0 + $0xc8] sm:$0xff]
  %v40 = vld [vmem:[%s0 + $0xd0] sm:$0xff]
  %v41 = vld [vmem:[%s0 + $0xd8] sm:$0xff]
  %v42 = vld [vmem:[%s0 + $0xe0] sm:$0xff]
  %v43 = vld [vmem:[%s0 + $0xe8] sm:$0xff]
  %v44 = vld [vmem:[%s0 + $0xf0] sm:$0xff]
  %v45 = vld [vmem:[%s0 + $0xf8] sm:$0xff]
  %v46 = vld [vmem:[%s0 + $0x100] sm:$0xff]
  %v47 = vld [vmem:[%s0 + $0x108] sm:$0xff]
  %v48 = vld [vmem:[%s0 + $0x110] sm:$0xff]
  %v49 = vld [vmem:[%s0 + $0x118] sm:$0xff]
  %v50 = vld [vmem:[%s0 + $0x120] sm:$0xff]
  %v51 = vld [vmem:[%s0 + $0x128] sm:$0xff]
  %v52 = vld [vmem:[%s0 + $0x130] sm:$0xff]
  %v53 = vld [vmem:[%s0 + $0x138] sm:$0xff]
  %v54 = vld [vmem:[%s0 + $0x140] sm:$0xff]
  %v55 = vld [vmem:[%s0 + $0x148] sm:$0xff]
  %v56 = vld [vmem:[%s0 + $0x150] sm:$0xff]
  %v57 = vld [vmem:[%s0 + $0x158] sm:$0xff]
  %v58 = vld [vmem:[%s0 + $0x160] sm:$0xff]
  %v59 = vld [vmem:[%s0 + $0x168] sm:$0xff]
  %v60 = vld [vmem:[%s0 + $0x170] sm:$0xff]
  %v61 = vld [vmem:[%s0 + $0x178] sm:$0xff]
  %v62 = vld [vmem:[%s0 + $0x180] sm:$0xff]
  %v63 = vld [vmem:[%s0 + $0x188] sm:$0xff]
  %v64 = vld [vmem:[%s0 + $0x190] sm:$0xff]
  %v65 = vld [vmem:[%s0 + $0x198] sm:$0xff]
  %v66 = vld [vmem:[%s0 + $0x1a0] sm:$0xff]
  %v67 = vld [vmem:[%s0 + $0x1a8] sm:$0xff]
  %v68 = vld [vmem:[%s0 + $0x1b0] sm:$0xff]
  %v69 = vld [vmem:[%s0 + $0x1b8] sm:$0xff]
  %v70 = vld [vmem:[%s0 + $0x1c0] sm:$0xff]
  %v71 = vld [vmem:[%s0 + $0x1c8] sm:$0xff]
  %v72 = vld [vmem:[%s0 + $0x1d0] sm:$0xff]
  %v73 = vld [vmem:[%s0 + $0x1d8] sm:$0xff]
  %v74 = vld [vmem:[%s0 + $0x1e0] sm:$0xff]
  %v75 = vld [vmem:[%s0 + $0x1e8] sm:$0xff]
  %v76 = vld [vmem:[%s0 + $0x1f0] sm:$0xff]
  %v77 = vld [vmem:[%s0 + $0x1f8] sm:$0xff]
  %v78 = vld [vmem:[%s1] sm:$0xf]
  %v79 = vld [vmem:[%s1 + $0x4] sm:$0xf]
  %v80 = vld [vmem:[%s1 + $0x8] sm:$0xf]
  %v81 = vld [vmem:[%s1 + $0xc] sm:$0xf]
  %v82 = vld [vmem:[%s1 + $0x10] sm:$0xf]
  %v83 = vld [vmem:[%s1 + $0x14] sm:$0xf]
  %v84 = vld [vmem:[%s1 + $0x18] sm:$0xf]
  %v85 = vld [vmem:[%s1 + $0x1c] sm:$0xf]
  %v86 = vld [vmem:[%s1 + $0x20] sm:$0xf]
  %v87 = vld [vmem:[%s1 + $0x24] sm:$0xf]
  %v88 = vld [vmem:[%s1 + $0x28] sm:$0xf]
  %v89 = vld [vmem:[%s1 + $0x2c] sm:$0xf]
  %v90 = vld [vmem:[%s1 + $0x30] sm:$0xf]
  %v91 = vld [vmem:[%s1 + $0x34] sm:$0xf]
  %v92 = vld [vmem:[%s1 + $0x38] sm:$0xf]
  %v93 = vld [vmem:[%s1 + $0x3c] sm:$0xf]
  %v94 = vld [vmem:[%s1 + $0x40] sm:$0xf]
  %v95 = vld [vmem:[%s1 + $0x44] sm:$0xf]
  %v96 = vld [vmem:[%s1 + $0x48] sm:$0xf]
  %v97 = vld [vmem:[%s1 + $0x4c] sm:$0xf]
  %v98 = vld [vmem:[%s1 + $0x50] sm:$0xf]
  %v99 = vld [vmem:[%s1 + $0x54] sm:$0xf]
  %v100 = vld [vmem:[%s1 + $0x58] sm:$0xf]
  %v101 = vld [vmem:[%s1 + $0x5c] sm:$0xf]
  %v102 = vld [vmem:[%s1 + $0x60] sm:$0xf]
  %v103 = vld [vmem:[%s1 + $0x64] sm:$0xf]
  %v104 = vld [vmem:[%s1 + $0x68] sm:$0xf]
  %v105 = vld [vmem:[%s1 + $0x6c] sm:$0xf]
  %v106 = vld [vmem:[%s1 + $0x70] sm:$0xf]
  %v107 = vld [vmem:[%s1 + $0x74] sm:$0xf]
  %v108 = vld [vmem:[%s1 + $0x78] sm:$0xf]
  %v109 = vld [vmem:[%s1 + $0x7c] sm:$0xf]
  %v110 = vld [vmem:[%s1 + $0x80] sm:$0xf]
  %v111 = vld [vmem:[%s1 + $0x84] sm:$0xf]
  %v112 = vld [vmem:[%s1 + $0x88] sm:$0xf]
  %v113 = vld [vmem:[%s1 + $0x8c] sm:$0xf]
  %v114 = vld [vmem:[%s1 + $0x90] sm:$0xf]
  %v115 = vld [vmem:[%s1 + $0x94] sm:$0xf]
  %v116 = vld [vmem:[%s1 + $0x98] sm:$0xf]
  %v117 = vld [vmem:[%s1 + $0x9c] sm:$0xf]
  %v118 = vld [vmem:[%s1 + $0xa0] sm:$0xf]
  %v119 = vld [vmem:[%s1 + $0xa4] sm:$0xf]
  %v120 = vld [vmem:[%s1 + $0xa8] sm:$0xf]
  %v121 = vld [vmem:[%s1 + $0xac] sm:$0xf]
  %v122 = vld [vmem:[%s1 + $0xb0] sm:$0xf]
  %v123 = vld [vmem:[%s1 + $0xb4] sm:$0xf]
  %v124 = vld [vmem:[%s1 + $0xb8] sm:$0xf]
  %v125 = vld [vmem:[%s1 + $0xbc] sm:$0xf]
  %v126 = vld [vmem:[%s1 + $0xc0] sm:$0xf]
  %v127 = vld [vmem:[%s1 + $0xc4] sm:$0xf]
  %v128 = vld [vmem:[%s1 + $0xc8] sm:$0xf]
  %v129 = vld [vmem:[%s1 + $0xcc] sm:$0xf]
  %v130 = vld [vmem:[%s1 + $0xd0] sm:$0xf]
  %v131 = vld [vmem:[%s1 + $0xd4] sm:$0xf]
  %v132 = vld [vmem:[%s1 + $0xd8] sm:$0xf]
  %v133 = vld [vmem:[%s1 + $0xdc] sm:$0xf]
  %v134 = vld [vmem:[%s1 + $0xe0] sm:$0xf]
  %v135 = vld [vmem:[%s1 + $0xe4] sm:$0xf]
  %v136 = vld [vmem:[%s1 + $0xe8] sm:$0xf]
  %v137 = vld [vmem:[%s1 + $0xec] sm:$0xf]
  %v138 = vld [vmem:[%s1 + $0xf0] sm:$0xf]
  %v139 = vld [vmem:[%s1 + $0xf4] sm:$0xf]
  %v140 = vld [vmem:[%s1 + $0xf8] sm:$0xf]
  %v141 = vld [vmem:[%s1 + $0xfc] sm:$0xf]
  %v142 = vld [vmem:[%s1 + $0x100] sm:$0xf]
  %v143 = vld [vmem:[%s1 + $0x104] sm:$0xf]
  %v144 = vld [vmem:[%s1 + $0x108] sm:$0xf]
  %v145 = vld [vmem:[%s1 + $0x10c] sm:$0xf]
  %v146 = vld [vmem:[%s1 + $0x110] sm:$0xf]
  %v147 = vld [vmem:[%s1 + $0x114] sm:$0xf]
  %v148 = vld [vmem:[%s1 + $0x118] sm:$0xf]
  %v149 = vld [vmem:[%s1 + $0x11c] sm:$0xf]
  %v150 = vld [vmem:[%s1 + $0x120] sm:$0xf]
  %v151 = vld [vmem:[%s1 + $0x124] sm:$0xf]
  %v152 = vld [vmem:[%s1 + $0x128] sm:$0xf]
  %v153 = vld [vmem:[%s1 + $0x12c] sm:$0xf]
  %v154 = vld [vmem:[%s1 + $0x130] sm:$0xf]
  %v155 = vld [vmem:[%s1 + $0x134] sm:$0xf]
  %v156 = vld [vmem:[%s1 + $0x138] sm:$0xf]
  %v157 = vld [vmem:[%s1 + $0x13c] sm:$0xf]
  %v158 = vld [vmem:[%s1 + $0x140] sm:$0xf]
  %v159 = vld [vmem:[%s1 + $0x144] sm:$0xf]
  %v160 = vld [vmem:[%s1 + $0x148] sm:$0xf]
  %v161 = vld [vmem:[%s1 + $0x14c] sm:$0xf]
  %v162 = vld [vmem:[%s1 + $0x150] sm:$0xf]
  %v163 = vld [vmem:[%s1 + $0x154] sm:$0xf]
  %v164 = vld [vmem:[%s1 + $0x158] sm:$0xf]
  %v165 = vld [vmem:[%s1 + $0x15c] sm:$0xf]
  %v166 = vld [vmem:[%s1 + $0x160] sm:$0xf]
  %v167 = vld [vmem:[%s1 + $0x164] sm:$0xf]
  %v168 = vld [vmem:[%s1 + $0x168] sm:$0xf]
  %v169 = vld [vmem:[%s1 + $0x16c] sm:$0xf]
  %v170 = vld [vmem:[%s1 + $0x170] sm:$0xf]
  %v171 = vld [vmem:[%s1 + $0x174] sm:$0xf]
  %v172 = vld [vmem:[%s1 + $0x178] sm:$0xf]
  %v173 = vld [vmem:[%s1 + $0x17c] sm:$0xf]
  %v174 = vld [vmem:[%s1 + $0x180] sm:$0xf]
  %v175 = vld [vmem:[%s1 + $0x184] sm:$0xf]
  %v176 = vld [vmem:[%s1 + $0x188] sm:$0xf]
  %v177 = vld [vmem:[%s1 + $0x18c] sm:$0xf]
  %v178 = vld [vmem:[%s1 + $0x190] sm:$0xf]
  %v179 = vld [vmem:[%s1 + $0x194] sm:$0xf]
  %v180 = vld [vmem:[%s1 + $0x198] sm:$0xf]
  %v181 = vld [vmem:[%s1 + $0x19c] sm:$0xf]
  %v182 = vld [vmem:[%s1 + $0x1a0] sm:$0xf]
  %v183 = vld [vmem:[%s1 + $0x1a4] sm:$0xf]
  %v184 = vld [vmem:[%s1 + $0x1a8] sm:$0xf]
  %v185 = vld [vmem:[%s1 + $0x1ac] sm:$0xf]
  %v186 = vld [vmem:[%s1 + $0x1b0] sm:$0xf]
  %v187 = vld [vmem:[%s1 + $0x1b4] sm:$0xf]
  %v188 = vld [vmem:[%s1 + $0x1b8] sm:$0xf]
  %v189 = vld [vmem:[%s1 + $0x1bc] sm:$0xf]
  %v190 = vld [vmem:[%s1 + $0x1c0] sm:$0xf]
  %v191 = vld [vmem:[%s1 + $0x1c4] sm:$0xf]
  %v192 = vld [vmem:[%s1 + $0x1c8] sm:$0xf]
  %v193 = vld [vmem:[%s1 + $0x1cc] sm:$0xf]
  %v194 = vld [vmem:[%s1 + $0x1d0] sm:$0xf]
  %v195 = vld [vmem:[%s1 + $0x1d4] sm:$0xf]
  %v196 = vld [vmem:[%s1 + $0x1d8] sm:$0xf]
  %v197 = vld [vmem:[%s1 + $0x1dc] sm:$0xf]
  %v198 = vld [vmem:[%s1 + $0x1e0] sm:$0xf]
  %v199 = vld [vmem:[%s1 + $0x1e4] sm:$0xf]
  %v200 = vld [vmem:[%s1 + $0x1e8] sm:$0xf]
  %v201 = vld [vmem:[%s1 + $0x1ec] sm:$0xf]
  %v202 = vld [vmem:[%s1 + $0x1f0] sm:$0xf]
  %v203 = vld [vmem:[%s1 + $0x1f4] sm:$0xf]
  %v204 = vld [vmem:[%s1 + $0x1f8] sm:$0xf]
  %v205 = vld [vmem:[%s1 + $0x1fc] sm:$0xf]
  %v270 = vunpack.c.l.b16 %v14
  %v271 = vunpack.c.h.b16 %v14
  %v272 = vunpack.c.l.b16 %v15
  %v273 = vunpack.c.h.b16 %v15
  %v274 = vunpack.c.l.b16 %v16
  %v275 = vunpack.c.h.b16 %v16
  %v276 = vunpack.c.l.b16 %v17
  %v277 = vunpack.c.h.b16 %v17
  %v278 = vunpack.c.l.b16 %v18
  %v279 = vunpack.c.h.b16 %v18
  %v280 = vunpack.c.l.b16 %v19
  %v281 = vunpack.c.h.b16 %v19
  %v282 = vunpack.c.l.b16 %v20
  %v283 = vunpack.c.h.b16 %v20
  %v284 = vunpack.c.l.b16 %v21
  %v285 = vunpack.c.h.b16 %v21
  %v286 = vunpack.c.l.b16 %v22
  %v287 = vunpack.c.h.b16 %v22
  %v288 = vunpack.c.l.b16 %v23
  %v289 = vunpack.c.h.b16 %v23
  %v290 = vunpack.c.l.b16 %v24
  %v291 = vunpack.c.h.b16 %v24
  %v292 = vunpack.c.l.b16 %v25
  %v293 = vunpack.c.h.b16 %v25
  %v294 = vunpack.c.l.b16 %v26
  %v295 = vunpack.c.h.b16 %v26
  %v296 = vunpack.c.l.b16 %v27
  %v297 = vunpack.c.h.b16 %v27
  %v298 = vunpack.c.l.b16 %v28
  %v299 = vunpack.c.h.b16 %v28
  %v300 = vunpack.c.l.b16 %v29
  %v301 = vunpack.c.h.b16 %v29
  %v302 = vunpack.c.l.b16 %v30
  %v303 = vunpack.c.h.b16 %v30
  %v304 = vunpack.c.l.b16 %v31
  %v305 = vunpack.c.h.b16 %v31
  %v306 = vunpack.c.l.b16 %v32
  %v307 = vunpack.c.h.b16 %v32
  %v308 = vunpack.c.l.b16 %v33
  %v309 = vunpack.c.h.b16 %v33
  %v310 = vunpack.c.l.b16 %v34
  %v311 = vunpack.c.h.b16 %v34
  %v312 = vunpack.c.l.b16 %v35
  %v313 = vunpack.c.h.b16 %v35
  %v314 = vunpack.c.l.b16 %v36
  %v315 = vunpack.c.h.b16 %v36
  %v316 = vunpack.c.l.b16 %v37
  %v317 = vunpack.c.h.b16 %v37
  %v318 = vunpack.c.l.b16 %v38
  %v319 = vunpack.c.h.b16 %v38
  %v320 = vunpack.c.l.b16 %v39
  %v321 = vunpack.c.h.b16 %v39
  %v322 = vunpack.c.l.b16 %v40
  %v323 = vunpack.c.h.b16 %v40
  %v324 = vunpack.c.l.b16 %v41
  %v325 = vunpack.c.h.b16 %v41
  %v326 = vunpack.c.l.b16 %v42
  %v327 = vunpack.c.h.b16 %v42
  %v328 = vunpack.c.l.b16 %v43
  %v329 = vunpack.c.h.b16 %v43
  %v330 = vunpack.c.l.b16 %v44
  %v331 = vunpack.c.h.b16 %v44
  %v332 = vunpack.c.l.b16 %v45
  %v333 = vunpack.c.h.b16 %v45
  %v334 = vunpack.c.l.b16 %v46
  %v335 = vunpack.c.h.b16 %v46
  %v336 = vunpack.c.l.b16 %v47
  %v337 = vunpack.c.h.b16 %v47
  %v338 = vunpack.c.l.b16 %v48
  %v339 = vunpack.c.h.b16 %v48
  %v340 = vunpack.c.l.b16 %v49
  %v341 = vunpack.c.h.b16 %v49
  %v342 = vunpack.c.l.b16 %v50
  %v343 = vunpack.c.h.b16 %v50
  %v344 = vunpack.c.l.b16 %v51
  %v345 = vunpack.c.h.b16 %v51
  %v346 = vunpack.c.l.b16 %v52
  %v347 = vunpack.c.h.b16 %v52
  %v348 = vunpack.c.l.b16 %v53
  %v349 = vunpack.c.h.b16 %v53
  %v350 = vunpack.c.l.b16 %v54
  %v351 = vunpack.c.h.b16 %v54
  %v352 = vunpack.c.l.b16 %v55
  %v353 = vunpack.c.h.b16 %v55
  %v354 = vunpack.c.l.b16 %v56
  %v355 = vunpack.c.h.b16 %v56
  %v356 = vunpack.c.l.b16 %v57
  %v357 = vunpack.c.h.b16 %v57
  %v358 = vunpack.c.l.b16 %v58
  %v359 = vunpack.c.h.b16 %v58
  %v360 = vunpack.c.l.b16 %v59
  %v361 = vunpack.c.h.b16 %v59
  %v362 = vunpack.c.l.b16 %v60
  %v363 = vunpack.c.h.b16 %v60
  %v364 = vunpack.c.l.b16 %v61
  %v365 = vunpack.c.h.b16 %v61
  %v366 = vunpack.c.l.b16 %v62
  %v367 = vunpack.c.h.b16 %v62
  %v368 = vunpack.c.l.b16 %v63
  %v369 = vunpack.c.h.b16 %v63
  %v370 = vunpack.c.l.b16 %v64
  %v371 = vunpack.c.h.b16 %v64
  %v372 = vunpack.c.l.b16 %v65
  %v373 = vunpack.c.h.b16 %v65
  %v374 = vunpack.c.l.b16 %v66
  %v375 = vunpack.c.h.b16 %v66
  %v376 = vunpack.c.l.b16 %v67
  %v377 = vunpack.c.h.b16 %v67
  %v378 = vunpack.c.l.b16 %v68
  %v379 = vunpack.c.h.b16 %v68
  %v380 = vunpack.c.l.b16 %v69
  %v381 = vunpack.c.h.b16 %v69
  %v382 = vunpack.c.l.b16 %v70
  %v383 = vunpack.c.h.b16 %v70
  %v384 = vunpack.c.l.b16 %v71
  %v385 = vunpack.c.h.b16 %v71
  %v386 = vunpack.c.l.b16 %v72
  %v387 = vunpack.c.h.b16 %v72
  %v388 = vunpack.c.l.b16 %v73
  %v389 = vunpack.c.h.b16 %v73
  %v390 = vunpack.c.l.b16 %v74
  %v391 = vunpack.c.h.b16 %v74
  %v392 = vunpack.c.l.b16 %v75
  %v393 = vunpack.c.h.b16 %v75
  %v394 = vunpack.c.l.b16 %v76
  %v395 = vunpack.c.h.b16 %v76
  %v396 = vunpack.c.l.b16 %v77
  %v397 = vunpack.c.h.b16 %v77
  %v398 = vpack.c.b16 %v278, %v270
  %v399 = vpack.c.b16 %v279, %v271
  %v400 = vpack.c.b16 %v280, %v272
  %v401 = vpack.c.b16 %v281, %v273
  %v402 = vpack.c.b16 %v282, %v274
  %v403 = vpack.c.b16 %v283, %v275
  %v404 = vpack.c.b16 %v284, %v276
  %v405 = vpack.c.b16 %v285, %v277
  %v406 = vpack.c.b16 %v294, %v286
  %v407 = vpack.c.b16 %v295, %v287
  %v408 = vpack.c.b16 %v296, %v288
  %v409 = vpack.c.b16 %v297, %v289
  %v410 = vpack.c.b16 %v298, %v290
  %v411 = vpack.c.b16 %v299, %v291
  %v412 = vpack.c.b16 %v300, %v292
  %v413 = vpack.c.b16 %v301, %v293
  %v414 = vpack.c.b16 %v310, %v302
  %v415 = vpack.c.b16 %v311, %v303
  %v416 = vpack.c.b16 %v312, %v304
  %v417 = vpack.c.b16 %v313, %v305
  %v418 = vpack.c.b16 %v314, %v306
  %v419 = vpack.c.b16 %v315, %v307
  %v420 = vpack.c.b16 %v316, %v308
  %v421 = vpack.c.b16 %v317, %v309
  %v422 = vpack.c.b16 %v326, %v318
  %v423 = vpack.c.b16 %v327, %v319
  %v424 = vpack.c.b16 %v328, %v320
  %v425 = vpack.c.b16 %v329, %v321
  %v426 = vpack.c.b16 %v330, %v322
  %v427 = vpack.c.b16 %v331, %v323
  %v428 = vpack.c.b16 %v332, %v324
  %v429 = vpack.c.b16 %v333, %v325
  %v430 = vpack.c.b16 %v342, %v334
  %v431 = vpack.c.b16 %v343, %v335
  %v432 = vpack.c.b16 %v344, %v336
  %v433 = vpack.c.b16 %v345, %v337
  %v434 = vpack.c.b16 %v346, %v338
  %v435 = vpack.c.b16 %v347, %v339
  %v436 = vpack.c.b16 %v348, %v340
  %v437 = vpack.c.b16 %v349, %v341
  %v438 = vpack.c.b16 %v358, %v350
  %v439 = vpack.c.b16 %v359, %v351
  %v440 = vpack.c.b16 %v360, %v352
  %v441 = vpack.c.b16 %v361, %v353
  %v442 = vpack.c.b16 %v362, %v354
  %v443 = vpack.c.b16 %v363, %v355
  %v444 = vpack.c.b16 %v364, %v356
  %v445 = vpack.c.b16 %v365, %v357
  %v446 = vpack.c.b16 %v374, %v366
  %v447 = vpack.c.b16 %v375, %v367
  %v448 = vpack.c.b16 %v376, %v368
  %v449 = vpack.c.b16 %v377, %v369
  %v450 = vpack.c.b16 %v378, %v370
  %v451 = vpack.c.b16 %v379, %v371
  %v452 = vpack.c.b16 %v380, %v372
  %v453 = vpack.c.b16 %v381, %v373
  %v454 = vpack.c.b16 %v390, %v382
  %v455 = vpack.c.b16 %v391, %v383
  %v456 = vpack.c.b16 %v392, %v384
  %v457 = vpack.c.b16 %v393, %v385
  %v458 = vpack.c.b16 %v394, %v386
  %v459 = vpack.c.b16 %v395, %v387
  %v460 = vpack.c.b16 %v396, %v388
  %v461 = vpack.c.b16 %v397, %v389
  %v654 = vunpack.c.l.b16 %v78
  %v655 = vunpack.c.l.b16 %v79
  %v656 = vunpack.c.l.b16 %v80
  %v657 = vunpack.c.l.b16 %v81
  %v658 = vunpack.c.l.b16 %v82
  %v659 = vunpack.c.l.b16 %v83
  %v660 = vunpack.c.l.b16 %v84
  %v661 = vunpack.c.l.b16 %v85
  %v662 = vunpack.c.l.b16 %v86
  %v663 = vunpack.c.l.b16 %v87
  %v664 = vunpack.c.l.b16 %v88
  %v665 = vunpack.c.l.b16 %v89
  %v666 = vunpack.c.l.b16 %v90
  %v667 = vunpack.c.l.b16 %v91
  %v668 = vunpack.c.l.b16 %v92
  %v669 = vunpack.c.l.b16 %v93
  %v670 = vunpack.c.l.b16 %v94
  %v671 = vunpack.c.l.b16 %v95
  %v672 = vunpack.c.l.b16 %v96
  %v673 = vunpack.c.l.b16 %v97
  %v674 = vunpack.c.l.b16 %v98
  %v675 = vunpack.c.l.b16 %v99
  %v676 = vunpack.c.l.b16 %v100
  %v677 = vunpack.c.l.b16 %v101
  %v678 = vunpack.c.l.b16 %v102
  %v679 = vunpack.c.l.b16 %v103
  %v680 = vunpack.c.l.b16 %v104
  %v681 = vunpack.c.l.b16 %v105
  %v682 = vunpack.c.l.b16 %v106
  %v683 = vunpack.c.l.b16 %v107
  %v684 = vunpack.c.l.b16 %v108
  %v685 = vunpack.c.l.b16 %v109
  %v686 = vunpack.c.l.b16 %v110
  %v687 = vunpack.c.l.b16 %v111
  %v688 = vunpack.c.l.b16 %v112
  %v689 = vunpack.c.l.b16 %v113
  %v690 = vunpack.c.l.b16 %v114
  %v691 = vunpack.c.l.b16 %v115
  %v692 = vunpack.c.l.b16 %v116
  %v693 = vunpack.c.l.b16 %v117
  %v694 = vunpack.c.l.b16 %v118
  %v695 = vunpack.c.l.b16 %v119
  %v696 = vunpack.c.l.b16 %v120
  %v697 = vunpack.c.l.b16 %v121
  %v698 = vunpack.c.l.b16 %v122
  %v699 = vunpack.c.l.b16 %v123
  %v700 = vunpack.c.l.b16 %v124
  %v701 = vunpack.c.l.b16 %v125
  %v702 = vunpack.c.l.b16 %v126
  %v703 = vunpack.c.l.b16 %v127
  %v704 = vunpack.c.l.b16 %v128
  %v705 = vunpack.c.l.b16 %v129
  %v706 = vunpack.c.l.b16 %v130
  %v707 = vunpack.c.l.b16 %v131
  %v708 = vunpack.c.l.b16 %v132
  %v709 = vunpack.c.l.b16 %v133
  %v710 = vunpack.c.l.b16 %v134
  %v711 = vunpack.c.l.b16 %v135
  %v712 = vunpack.c.l.b16 %v136
  %v713 = vunpack.c.l.b16 %v137
  %v714 = vunpack.c.l.b16 %v138
  %v715 = vunpack.c.l.b16 %v139
  %v716 = vunpack.c.l.b16 %v140
  %v717 = vunpack.c.l.b16 %v141
  %v718 = vunpack.c.l.b16 %v142
  %v719 = vunpack.c.l.b16 %v143
  %v720 = vunpack.c.l.b16 %v144
  %v721 = vunpack.c.l.b16 %v145
  %v722 = vunpack.c.l.b16 %v146
  %v723 = vunpack.c.l.b16 %v147
  %v724 = vunpack.c.l.b16 %v148
  %v725 = vunpack.c.l.b16 %v149
  %v726 = vunpack.c.l.b16 %v150
  %v727 = vunpack.c.l.b16 %v151
  %v728 = vunpack.c.l.b16 %v152
  %v729 = vunpack.c.l.b16 %v153
  %v730 = vunpack.c.l.b16 %v154
  %v731 = vunpack.c.l.b16 %v155
  %v732 = vunpack.c.l.b16 %v156
  %v733 = vunpack.c.l.b16 %v157
  %v734 = vunpack.c.l.b16 %v158
  %v735 = vunpack.c.l.b16 %v159
  %v736 = vunpack.c.l.b16 %v160
  %v737 = vunpack.c.l.b16 %v161
  %v738 = vunpack.c.l.b16 %v162
  %v739 = vunpack.c.l.b16 %v163
  %v740 = vunpack.c.l.b16 %v164
  %v741 = vunpack.c.l.b16 %v165
  %v742 = vunpack.c.l.b16 %v166
  %v743 = vunpack.c.l.b16 %v167
  %v744 = vunpack.c.l.b16 %v168
  %v745 = vunpack.c.l.b16 %v169
  %v746 = vunpack.c.l.b16 %v170
  %v747 = vunpack.c.l.b16 %v171
  %v748 = vunpack.c.l.b16 %v172
  %v749 = vunpack.c.l.b16 %v173
  %v750 = vunpack.c.l.b16 %v174
  %v751 = vunpack.c.l.b16 %v175
  %v752 = vunpack.c.l.b16 %v176
  %v753 = vunpack.c.l.b16 %v177
  %v754 = vunpack.c.l.b16 %v178
  %v755 = vunpack.c.l.b16 %v179
  %v756 = vunpack.c.l.b16 %v180
  %v757 = vunpack.c.l.b16 %v181
  %v758 = vunpack.c.l.b16 %v182
  %v759 = vunpack.c.l.b16 %v183
  %v760 = vunpack.c.l.b16 %v184
  %v761 = vunpack.c.l.b16 %v185
  %v762 = vunpack.c.l.b16 %v186
  %v763 = vunpack.c.l.b16 %v187
  %v764 = vunpack.c.l.b16 %v188
  %v765 = vunpack.c.l.b16 %v189
  %v766 = vunpack.c.l.b16 %v190
  %v767 = vunpack.c.l.b16 %v191
  %v768 = vunpack.c.l.b16 %v192
  %v769 = vunpack.c.l.b16 %v193
  %v770 = vunpack.c.l.b16 %v194
  %v771 = vunpack.c.l.b16 %v195
  %v772 = vunpack.c.l.b16 %v196
  %v773 = vunpack.c.l.b16 %v197
  %v774 = vunpack.c.l.b16 %v198
  %v775 = vunpack.c.l.b16 %v199
  %v776 = vunpack.c.l.b16 %v200
  %v777 = vunpack.c.l.b16 %v201
  %v778 = vunpack.c.l.b16 %v202
  %v779 = vunpack.c.l.b16 %v203
  %v780 = vunpack.c.l.b16 %v204
  %v781 = vunpack.c.l.b16 %v205
  %v782 = vpack.c.b16 %v655, %v654
  %v783 = vpack.c.b16 %v657, %v656
  %v784 = vpack.c.b16 %v659, %v658
  %v785 = vpack.c.b16 %v661, %v660
  %v786 = vpack.c.b16 %v663, %v662
  %v787 = vpack.c.b16 %v665, %v664
  %v788 = vpack.c.b16 %v667, %v666
  %v789 = vpack.c.b16 %v669, %v668
  %v790 = vpack.c.b16 %v671, %v670
  %v791 = vpack.c.b16 %v673, %v672
  %v792 = vpack.c.b16 %v675, %v674
  %v793 = vpack.c.b16 %v677, %v676
  %v794 = vpack.c.b16 %v679, %v678
  %v795 = vpack.c.b16 %v681, %v680
  %v796 = vpack.c.b16 %v683, %v682
  %v797 = vpack.c.b16 %v685, %v684
  %v798 = vpack.c.b16 %v687, %v686
  %v799 = vpack.c.b16 %v689, %v688
  %v800 = vpack.c.b16 %v691, %v690
  %v801 = vpack.c.b16 %v693, %v692
  %v802 = vpack.c.b16 %v695, %v694
  %v803 = vpack.c.b16 %v697, %v696
  %v804 = vpack.c.b16 %v699, %v698
  %v805 = vpack.c.b16 %v701, %v700
  %v806 = vpack.c.b16 %v703, %v702
  %v807 = vpack.c.b16 %v705, %v704
  %v808 = vpack.c.b16 %v707, %v706
  %v809 = vpack.c.b16 %v709, %v708
  %v810 = vpack.c.b16 %v711, %v710
  %v811 = vpack.c.b16 %v713, %v712
  %v812 = vpack.c.b16 %v715, %v714
  %v813 = vpack.c.b16 %v717, %v716
  %v814 = vpack.c.b16 %v719, %v718
  %v815 = vpack.c.b16 %v721, %v720
  %v816 = vpack.c.b16 %v723, %v722
  %v817 = vpack.c.b16 %v725, %v724
  %v818 = vpack.c.b16 %v727, %v726
  %v819 = vpack.c.b16 %v729, %v728
  %v820 = vpack.c.b16 %v731, %v730
  %v821 = vpack.c.b16 %v733, %v732
  %v822 = vpack.c.b16 %v735, %v734
  %v823 = vpack.c.b16 %v737, %v736
  %v824 = vpack.c.b16 %v739, %v738
  %v825 = vpack.c.b16 %v741, %v740
  %v826 = vpack.c.b16 %v743, %v742
  %v827 = vpack.c.b16 %v745, %v744
  %v828 = vpack.c.b16 %v747, %v746
  %v829 = vpack.c.b16 %v749, %v748
  %v830 = vpack.c.b16 %v751, %v750
  %v831 = vpack.c.b16 %v753, %v752
  %v832 = vpack.c.b16 %v755, %v754
  %v833 = vpack.c.b16 %v757, %v756
  %v834 = vpack.c.b16 %v759, %v758
  %v835 = vpack.c.b16 %v761, %v760
  %v836 = vpack.c.b16 %v763, %v762
  %v837 = vpack.c.b16 %v765, %v764
  %v838 = vpack.c.b16 %v767, %v766
  %v839 = vpack.c.b16 %v769, %v768
  %v840 = vpack.c.b16 %v771, %v770
  %v841 = vpack.c.b16 %v773, %v772
  %v842 = vpack.c.b16 %v775, %v774
  %v843 = vpack.c.b16 %v777, %v776
  %v844 = vpack.c.b16 %v779, %v778
  %v845 = vpack.c.b16 %v781, %v780
  %910 = vmatprep.subr.bf16.mxu0 0
  %911 = vmatpush1.bf16.msra.mxu0 %v782
  %912 = vmatprep.subr.bf16.mxu0 0
  %913 = vmatpush1.bf16.msra.mxu0 %v783
  %914 = vmatprep.subr.bf16.mxu0 0
  %915 = vmatpush1.bf16.msra.mxu0 %v784
  %916 = vmatprep.subr.bf16.mxu0 0
  %917 = vmatpush1.bf16.msra.mxu0 %v785
  %918 = vmatprep.subr.bf16.mxu0 0
  %919 = vmatpush1.bf16.msra.mxu0 %v786
  %920 = vmatprep.subr.bf16.mxu0 0
  %921 = vmatpush1.bf16.msra.mxu0 %v787
  %922 = vmatprep.subr.bf16.mxu0 0
  %923 = vmatpush1.bf16.msra.mxu0 %v788
  %924 = vmatprep.subr.bf16.mxu0 0
  %925 = vmatpush1.bf16.msra.mxu0 %v789
  %926 = vmatprep.subr.bf16.mxu0 0
  %927 = vmatpush1.bf16.msra.mxu0 %v790
  %928 = vmatprep.subr.bf16.mxu0 0
  %929 = vmatpush1.bf16.msra.mxu0 %v791
  %930 = vmatprep.subr.bf16.mxu0 0
  %931 = vmatpush1.bf16.msra.mxu0 %v792
  %932 = vmatprep.subr.bf16.mxu0 0
  %933 = vmatpush1.bf16.msra.mxu0 %v793
  %934 = vmatprep.subr.bf16.mxu0 0
  %935 = vmatpush1.bf16.msra.mxu0 %v794
  %936 = vmatprep.subr.bf16.mxu0 0
  %937 = vmatpush1.bf16.msra.mxu0 %v795
  %938 = vmatprep.subr.bf16.mxu0 0
  %939 = vmatpush1.bf16.msra.mxu0 %v796
  %940 = vmatprep.subr.bf16.mxu0 0
  %941 = vmatpush1.bf16.msra.mxu0 %v797
  %942 = vmatprep.mubr.bf16.mxu0 %v399
  %943 = vmatmul.mubr.bf16.gmra.mrb[0].mxu0 %v398
  %v944 = vpop.f32.mrb[0].mxu0
  %v945 = vadd.f32 0.0, %v944
  %v946 = vpop.f32.mrb[0].mxu0
  %v947 = vpop.f32.mrb[0].mxu0
  %v948 = vadd.f32 0.0, %v947
  %v949 = vpop.f32.mrb[0].mxu0
  %950 = vmatprep.mubr.bf16.mxu0 %v407
  %951 = vmatmul.mubr.bf16.gmra.mrb[0].mxu0 %v406
  %v952 = vpop.f32.mrb[0].mxu0
  %v953 = vadd.f32 0.0, %v952
  %v954 = vpop.f32.mrb[0].mxu0
  %v955 = vpop.f32.mrb[0].mxu0
  %v956 = vadd.f32 0.0, %v955
  %v957 = vpop.f32.mrb[0].mxu0
  %958 = vmatprep.mubr.bf16.mxu0 %v415
  %959 = vmatmul.mubr.bf16.gmra.mrb[0].mxu0 %v414
  %v960 = vpop.f32.mrb[0].mxu0
  %v961 = vadd.f32 0.0, %v960
  %v962 = vpop.f32.mrb[0].mxu0
  %v963 = vpop.f32.mrb[0].mxu0
  %v964 = vadd.f32 0.0, %v963
  %v965 = vpop.f32.mrb[0].mxu0
  %966 = vmatprep.mubr.bf16.mxu0 %v423
  %967 = vmatmul.mubr.bf16.gmra.mrb[0].mxu0 %v422
  %v968 = vpop.f32.mrb[0].mxu0
  %v969 = vadd.f32 0.0, %v968
  %v970 = vpop.f32.mrb[0].mxu0
  %v971 = vpop.f32.mrb[0].mxu0
  %v972 = vadd.f32 0.0, %v971
  %v973 = vpop.f32.mrb[0].mxu0
  %974 = vmatprep.mubr.bf16.mxu0 %v431
  %975 = vmatmul.mubr.bf16.gmra.mrb[0].mxu0 %v430
  %v976 = vpop.f32.mrb[0].mxu0
  %v977 = vadd.f32 0.0, %v976
  %v978 = vpop.f32.mrb[0].mxu0
  %v979 = vpop.f32.mrb[0].mxu0
  %v980 = vadd.f32 0.0, %v979
  %v981 = vpop.f32.mrb[0].mxu0
  %982 = vmatprep.mubr.bf16.mxu0 %v439
  %983 = vmatmul.mubr.bf16.gmra.mrb[0].mxu0 %v438
  %v984 = vpop.f32.mrb[0].mxu0
  %v985 = vadd.f32 0.0, %v984
  %v986 = vpop.f32.mrb[0].mxu0
  %v987 = vpop.f32.mrb[0].mxu0
  %v988 = vadd.f32 0.0, %v987
  %v989 = vpop.f32.mrb[0].mxu0
  %990 = vmatprep.mubr.bf16.mxu0 %v447
  %991 = vmatmul.mubr.bf16.gmra.mrb[0].mxu0 %v446
  %v992 = vpop.f32.mrb[0].mxu0
  %v993 = vadd.f32 0.0, %v992
  %v994 = vpop.f32.mrb[0].mxu0
  %v995 = vpop.f32.mrb[0].mxu0
  %v996 = vadd.f32 0.0, %v995
  %v997 = vpop.f32.mrb[0].mxu0
  %998 = vmatprep.mubr.bf16.mxu0 %v455
  %999 = vmatmul.mubr.bf16.gmra.mrb[0].mxu0 %v454
  %v1000 = vpop.f32.mrb[0].mxu0
  %v1001 = vadd.f32 0.0, %v1000
  %v1002 = vpop.f32.mrb[0].mxu0
  %v1003 = vpop.f32.mrb[0].mxu0
  %v1004 = vadd.f32 0.0, %v1003
  %v1005 = vpop.f32.mrb[0].mxu0
  %1006 = vdwg.mxu0
  %1007 = vmatprep.subr.bf16.mxu0 0
  %1008 = vmatpush1.bf16.msra.mxu0 %v798
  %1009 = vmatprep.subr.bf16.mxu0 0
  %1010 = vmatpush1.bf16.msra.mxu0 %v799
  %1011 = vmatprep.subr.bf16.mxu0 0
  %1012 = vmatpush1.bf16.msra.mxu0 %v800
  %1013 = vmatprep.subr.bf16.mxu0 0
  %1014 = vmatpush1.bf16.msra.mxu0 %v801
  %1015 = vmatprep.subr.bf16.mxu0 0
  %1016 = vmatpush1.bf16.msra.mxu0 %v802
  %1017 = vmatprep.subr.bf16.mxu0 0
  %1018 = vmatpush1.bf16.msra.mxu0 %v803
  %1019 = vmatprep.subr.bf16.mxu0 0
  %1020 = vmatpush1.bf16.msra.mxu0 %v804
  %1021 = vmatprep.subr.bf16.mxu0 0
  %1022 = vmatpush1.bf16.msra.mxu0 %v805
  %1023 = vmatprep.subr.bf16.mxu0 0
  %1024 = vmatpush1.bf16.msra.mxu0 %v806
  %1025 = vmatprep.subr.bf16.mxu0 0
  %1026 = vmatpush1.bf16.msra.mxu0 %v807
  %1027 = vmatprep.subr.bf16.mxu0 0
  %1028 = vmatpush1.bf16.msra.mxu0 %v808
  %1029 = vmatprep.subr.bf16.mxu0 0
  %1030 = vmatpush1.bf16.msra.mxu0 %v809
  %1031 = vmatprep.subr.bf16.mxu0 0
  %1032 = vmatpush1.bf16.msra.mxu0 %v810
  %1033 = vmatprep.subr.bf16.mxu0 0
  %1034 = vmatpush1.bf16.msra.mxu0 %v811
  %1035 = vmatprep.subr.bf16.mxu0 0
  %1036 = vmatpush1.bf16.msra.mxu0 %v812
  %1037 = vmatprep.subr.bf16.mxu0 0
  %1038 = vmatpush1.bf16.msra.mxu0 %v813
  %1039 = vmatprep.mubr.bf16.mxu0 %v401
  %1040 = vmatmul.mubr.bf16.gmra.mrb[0].mxu0 %v400
  %v1041 = vpop.f32.mrb[0].mxu0
  %v1042 = vadd.f32 %v945, %v1041
  %v1043 = vpop.f32.mrb[0].mxu0
  %v1044 = vpop.f32.mrb[0].mxu0
  %v1045 = vadd.f32 %v948, %v1044
  %v1046 = vpop.f32.mrb[0].mxu0
  %1047 = vmatprep.mubr.bf16.mxu0 %v409
  %1048 = vmatmul.mubr.bf16.gmra.mrb[0].mxu0 %v408
  %v1049 = vpop.f32.mrb[0].mxu0
  %v1050 = vadd.f32 %v953, %v1049
  %v1051 = vpop.f32.mrb[0].mxu0
  %v1052 = vpop.f32.mrb[0].mxu0
  %v1053 = vadd.f32 %v956, %v1052
  %v1054 = vpop.f32.mrb[0].mxu0
  %1055 = vmatprep.mubr.bf16.mxu0 %v417
  %1056 = vmatmul.mubr.bf16.gmra.mrb[0].mxu0 %v416
  %v1057 = vpop.f32.mrb[0].mxu0
  %v1058 = vadd.f32 %v961, %v1057
  %v1059 = vpop.f32.mrb[0].mxu0
  %v1060 = vpop.f32.mrb[0].mxu0
  %v1061 = vadd.f32 %v964, %v1060
  %v1062 = vpop.f32.mrb[0].mxu0
  %1063 = vmatprep.mubr.bf16.mxu0 %v425
  %1064 = vmatmul.mubr.bf16.gmra.mrb[0].mxu0 %v424
  %v1065 = vpop.f32.mrb[0].mxu0
  %v1066 = vadd.f32 %v969, %v1065
  %v1067 = vpop.f32.mrb[0].mxu0
  %v1068 = vpop.f32.mrb[0].mxu0
  %v1069 = vadd.f32 %v972, %v1068
  %v1070 = vpop.f32.mrb[0].mxu0
  %1071 = vmatprep.mubr.bf16.mxu0 %v433
  %1072 = vmatmul.mubr.bf16.gmra.mrb[0].mxu0 %v432
  %v1073 = vpop.f32.mrb[0].mxu0
  %v1074 = vadd.f32 %v977, %v1073
  %v1075 = vpop.f32.mrb[0].mxu0
  %v1076 = vpop.f32.mrb[0].mxu0
  %v1077 = vadd.f32 %v980, %v1076
  %v1078 = vpop.f32.mrb[0].mxu0
  %1079 = vmatprep.mubr.bf16.mxu0 %v441
  %1080 = vmatmul.mubr.bf16.gmra.mrb[0].mxu0 %v440
  %v1081 = vpop.f32.mrb[0].mxu0
  %v1082 = vadd.f32 %v985, %v1081
  %v1083 = vpop.f32.mrb[0].mxu0
  %v1084 = vpop.f32.mrb[0].mxu0
  %v1085 = vadd.f32 %v988, %v1084
  %v1086 = vpop.f32.mrb[0].mxu0
  %1087 = vmatprep.mubr.bf16.mxu0 %v449
  %1088 = vmatmul.mubr.bf16.gmra.mrb[0].mxu0 %v448
  %v1089 = vpop.f32.mrb[0].mxu0
  %v1090 = vadd.f32 %v993, %v1089
  %v1091 = vpop.f32.mrb[0].mxu0
  %v1092 = vpop.f32.mrb[0].mxu0
  %v1093 = vadd.f32 %v996, %v1092
  %v1094 = vpop.f32.mrb[0].mxu0
  %1095 = vmatprep.mubr.bf16.mxu0 %v457
  %1096 = vmatmul.mubr.bf16.gmra.mrb[0].mxu0 %v456
  %v1097 = vpop.f32.mrb[0].mxu0
  %v1098 = vadd.f32 %v1001, %v1097
  %v1099 = vpop.f32.mrb[0].mxu0
  %v1100 = vpop.f32.mrb[0].mxu0
  %v1101 = vadd.f32 %v1004, %v1100
  %v1102 = vpop.f32.mrb[0].mxu0
  %1103 = vdwg.mxu0
  %1104 = vmatprep.subr.bf16.mxu0 0
  %1105 = vmatpush1.bf16.msra.mxu0 %v814
  %1106 = vmatprep.subr.bf16.mxu0 0
  %1107 = vmatpush1.bf16.msra.mxu0 %v815
  %1108 = vmatprep.subr.bf16.mxu0 0
  %1109 = vmatpush1.bf16.msra.mxu0 %v816
  %1110 = vmatprep.subr.bf16.mxu0 0
  %1111 = vmatpush1.bf16.msra.mxu0 %v817
  %1112 = vmatprep.subr.bf16.mxu0 0
  %1113 = vmatpush1.bf16.msra.mxu0 %v818
  %1114 = vmatprep.subr.bf16.mxu0 0
  %1115 = vmatpush1.bf16.msra.mxu0 %v819
  %1116 = vmatprep.subr.bf16.mxu0 0
  %1117 = vmatpush1.bf16.msra.mxu0 %v820
  %1118 = vmatprep.subr.bf16.mxu0 0
  %1119 = vmatpush1.bf16.msra.mxu0 %v821
  %1120 = vmatprep.subr.bf16.mxu0 0
  %1121 = vmatpush1.bf16.msra.mxu0 %v822
  %1122 = vmatprep.subr.bf16.mxu0 0
  %1123 = vmatpush1.bf16.msra.mxu0 %v823
  %1124 = vmatprep.subr.bf16.mxu0 0
  %1125 = vmatpush1.bf16.msra.mxu0 %v824
  %1126 = vmatprep.subr.bf16.mxu0 0
  %1127 = vmatpush1.bf16.msra.mxu0 %v825
  %1128 = vmatprep.subr.bf16.mxu0 0
  %1129 = vmatpush1.bf16.msra.mxu0 %v826
  %1130 = vmatprep.subr.bf16.mxu0 0
  %1131 = vmatpush1.bf16.msra.mxu0 %v827
  %1132 = vmatprep.subr.bf16.mxu0 0
  %1133 = vmatpush1.bf16.msra.mxu0 %v828
  %1134 = vmatprep.subr.bf16.mxu0 0
  %1135 = vmatpush1.bf16.msra.mxu0 %v829
  %1136 = vmatprep.mubr.bf16.mxu0 %v403
  %1137 = vmatmul.mubr.bf16.gmra.mrb[0].mxu0 %v402
  %v1138 = vpop.f32.mrb[0].mxu0
  %v1139 = vadd.f32 %v1042, %v1138
  %v1140 = vpop.f32.mrb[0].mxu0
  %v1141 = vpop.f32.mrb[0].mxu0
  %v1142 = vadd.f32 %v1045, %v1141
  %v1143 = vpop.f32.mrb[0].mxu0
  %1144 = vmatprep.mubr.bf16.mxu0 %v411
  %1145 = vmatmul.mubr.bf16.gmra.mrb[0].mxu0 %v410
  %v1146 = vpop.f32.mrb[0].mxu0
  %v1147 = vadd.f32 %v1050, %v1146
  %v1148 = vpop.f32.mrb[0].mxu0
  %v1149 = vpop.f32.mrb[0].mxu0
  %v1150 = vadd.f32 %v1053, %v1149
  %v1151 = vpop.f32.mrb[0].mxu0
  %1152 = vmatprep.mubr.bf16.mxu0 %v419
  %1153 = vmatmul.mubr.bf16.gmra.mrb[0].mxu0 %v418
  %v1154 = vpop.f32.mrb[0].mxu0
  %v1155 = vadd.f32 %v1058, %v1154
  %v1156 = vpop.f32.mrb[0].mxu0
  %v1157 = vpop.f32.mrb[0].mxu0
  %v1158 = vadd.f32 %v1061, %v1157
  %v1159 = vpop.f32.mrb[0].mxu0
  %1160 = vmatprep.mubr.bf16.mxu0 %v427
  %1161 = vmatmul.mubr.bf16.gmra.mrb[0].mxu0 %v426
  %v1162 = vpop.f32.mrb[0].mxu0
  %v1163 = vadd.f32 %v1066, %v1162
  %v1164 = vpop.f32.mrb[0].mxu0
  %v1165 = vpop.f32.mrb[0].mxu0
  %v1166 = vadd.f32 %v1069, %v1165
  %v1167 = vpop.f32.mrb[0].mxu0
  %1168 = vmatprep.mubr.bf16.mxu0 %v435
  %1169 = vmatmul.mubr.bf16.gmra.mrb[0].mxu0 %v434
  %v1170 = vpop.f32.mrb[0].mxu0
  %v1171 = vadd.f32 %v1074, %v1170
  %v1172 = vpop.f32.mrb[0].mxu0
  %v1173 = vpop.f32.mrb[0].mxu0
  %v1174 = vadd.f32 %v1077, %v1173
  %v1175 = vpop.f32.mrb[0].mxu0
  %1176 = vmatprep.mubr.bf16.mxu0 %v443
  %1177 = vmatmul.mubr.bf16.gmra.mrb[0].mxu0 %v442
  %v1178 = vpop.f32.mrb[0].mxu0
  %v1179 = vadd.f32 %v1082, %v1178
  %v1180 = vpop.f32.mrb[0].mxu0
  %v1181 = vpop.f32.mrb[0].mxu0
  %v1182 = vadd.f32 %v1085, %v1181
  %v1183 = vpop.f32.mrb[0].mxu0
  %1184 = vmatprep.mubr.bf16.mxu0 %v451
  %1185 = vmatmul.mubr.bf16.gmra.mrb[0].mxu0 %v450
  %v1186 = vpop.f32.mrb[0].mxu0
  %v1187 = vadd.f32 %v1090, %v1186
  %v1188 = vpop.f32.mrb[0].mxu0
  %v1189 = vpop.f32.mrb[0].mxu0
  %v1190 = vadd.f32 %v1093, %v1189
  %v1191 = vpop.f32.mrb[0].mxu0
  %1192 = vmatprep.mubr.bf16.mxu0 %v459
  %1193 = vmatmul.mubr.bf16.gmra.mrb[0].mxu0 %v458
  %v1194 = vpop.f32.mrb[0].mxu0
  %v1195 = vadd.f32 %v1098, %v1194
  %v1196 = vpop.f32.mrb[0].mxu0
  %v1197 = vpop.f32.mrb[0].mxu0
  %v1198 = vadd.f32 %v1101, %v1197
  %v1199 = vpop.f32.mrb[0].mxu0
  %1200 = vdwg.mxu0
  %1201 = vmatprep.subr.bf16.mxu0 0
  %1202 = vmatpush1.bf16.msra.mxu0 %v830
  %1203 = vmatprep.subr.bf16.mxu0 0
  %1204 = vmatpush1.bf16.msra.mxu0 %v831
  %1205 = vmatprep.subr.bf16.mxu0 0
  %1206 = vmatpush1.bf16.msra.mxu0 %v832
  %1207 = vmatprep.subr.bf16.mxu0 0
  %1208 = vmatpush1.bf16.msra.mxu0 %v833
  %1209 = vmatprep.subr.bf16.mxu0 0
  %1210 = vmatpush1.bf16.msra.mxu0 %v834
  %1211 = vmatprep.subr.bf16.mxu0 0
  %1212 = vmatpush1.bf16.msra.mxu0 %v835
  %1213 = vmatprep.subr.bf16.mxu0 0
  %1214 = vmatpush1.bf16.msra.mxu0 %v836
  %1215 = vmatprep.subr.bf16.mxu0 0
  %1216 = vmatpush1.bf16.msra.mxu0 %v837
  %1217 = vmatprep.subr.bf16.mxu0 0
  %1218 = vmatpush1.bf16.msra.mxu0 %v838
  %1219 = vmatprep.subr.bf16.mxu0 0
  %1220 = vmatpush1.bf16.msra.mxu0 %v839
  %1221 = vmatprep.subr.bf16.mxu0 0
  %1222 = vmatpush1.bf16.msra.mxu0 %v840
  %1223 = vmatprep.subr.bf16.mxu0 0
  %1224 = vmatpush1.bf16.msra.mxu0 %v841
  %1225 = vmatprep.subr.bf16.mxu0 0
  %1226 = vmatpush1.bf16.msra.mxu0 %v842
  %1227 = vmatprep.subr.bf16.mxu0 0
  %1228 = vmatpush1.bf16.msra.mxu0 %v843
  %1229 = vmatprep.subr.bf16.mxu0 0
  %1230 = vmatpush1.bf16.msra.mxu0 %v844
  %1231 = vmatprep.subr.bf16.mxu0 0
  %1232 = vmatpush1.bf16.msra.mxu0 %v845
  %1233 = vmatprep.mubr.bf16.mxu0 %v405
  %1234 = vmatmul.mubr.bf16.gmra.mrb[0].mxu0 %v404
  %v1235 = vpop.f32.mrb[0].mxu0
  %v1236 = vadd.f32 %v1139, %v1235
  %v1237 = vpop.f32.mrb[0].mxu0
  %v1238 = vpop.f32.mrb[0].mxu0
  %v1239 = vadd.f32 %v1142, %v1238
  %v1240 = vpop.f32.mrb[0].mxu0
  %1241 = vmatprep.mubr.bf16.mxu0 %v413
  %1242 = vmatmul.mubr.bf16.gmra.mrb[0].mxu0 %v412
  %v1243 = vpop.f32.mrb[0].mxu0
  %v1244 = vadd.f32 %v1147, %v1243
  %v1245 = vpop.f32.mrb[0].mxu0
  %v1246 = vpop.f32.mrb[0].mxu0
  %v1247 = vadd.f32 %v1150, %v1246
  %v1248 = vpop.f32.mrb[0].mxu0
  %1249 = vmatprep.mubr.bf16.mxu0 %v421
  %1250 = vmatmul.mubr.bf16.gmra.mrb[0].mxu0 %v420
  %v1251 = vpop.f32.mrb[0].mxu0
  %v1252 = vadd.f32 %v1155, %v1251
  %v1253 = vpop.f32.mrb[0].mxu0
  %v1254 = vpop.f32.mrb[0].mxu0
  %v1255 = vadd.f32 %v1158, %v1254
  %v1256 = vpop.f32.mrb[0].mxu0
  %1257 = vmatprep.mubr.bf16.mxu0 %v429
  %1258 = vmatmul.mubr.bf16.gmra.mrb[0].mxu0 %v428
  %v1259 = vpop.f32.mrb[0].mxu0
  %v1260 = vadd.f32 %v1163, %v1259
  %v1261 = vpop.f32.mrb[0].mxu0
  %v1262 = vpop.f32.mrb[0].mxu0
  %v1263 = vadd.f32 %v1166, %v1262
  %v1264 = vpop.f32.mrb[0].mxu0
  %1265 = vmatprep.mubr.bf16.mxu0 %v437
  %1266 = vmatmul.mubr.bf16.gmra.mrb[0].mxu0 %v436
  %v1267 = vpop.f32.mrb[0].mxu0
  %v1268 = vadd.f32 %v1171, %v1267
  %v1269 = vpop.f32.mrb[0].mxu0
  %v1270 = vpop.f32.mrb[0].mxu0
  %v1271 = vadd.f32 %v1174, %v1270
  %v1272 = vpop.f32.mrb[0].mxu0
  %1273 = vmatprep.mubr.bf16.mxu0 %v445
  %1274 = vmatmul.mubr.bf16.gmra.mrb[0].mxu0 %v444
  %v1275 = vpop.f32.mrb[0].mxu0
  %v1276 = vadd.f32 %v1179, %v1275
  %v1277 = vpop.f32.mrb[0].mxu0
  %v1278 = vpop.f32.mrb[0].mxu0
  %v1279 = vadd.f32 %v1182, %v1278
  %v1280 = vpop.f32.mrb[0].mxu0
  %1281 = vmatprep.mubr.bf16.mxu0 %v453
  %1282 = vmatmul.mubr.bf16.gmra.mrb[0].mxu0 %v452
  %v1283 = vpop.f32.mrb[0].mxu0
  %v1284 = vadd.f32 %v1187, %v1283
  %v1285 = vpop.f32.mrb[0].mxu0
  %v1286 = vpop.f32.mrb[0].mxu0
  %v1287 = vadd.f32 %v1190, %v1286
  %v1288 = vpop.f32.mrb[0].mxu0
  %1289 = vmatprep.mubr.bf16.mxu0 %v461
  %1290 = vmatmul.mubr.bf16.gmra.mrb[0].mxu0 %v460
  %v1291 = vpop.f32.mrb[0].mxu0
  %v1292 = vadd.f32 %v1195, %v1291
  %v1293 = vpop.f32.mrb[0].mxu0
  %v1294 = vpop.f32.mrb[0].mxu0
  %v1295 = vadd.f32 %v1198, %v1294
  %v1296 = vpop.f32.mrb[0].mxu0
  %1297 = vdwg.mxu0
  %v1298 = vpack.c.bf16 %v1239, %v1236
  %v1299 = vpack.c.bf16 %v1247, %v1244
  %v1300 = vpack.c.bf16 %v1255, %v1252
  %v1301 = vpack.c.bf16 %v1263, %v1260
  %v1302 = vpack.c.bf16 %v1271, %v1268
  %v1303 = vpack.c.bf16 %v1279, %v1276
  %v1304 = vpack.c.bf16 %v1287, %v1284
  %v1305 = vpack.c.bf16 %v1295, %v1292
  %v1314 = vunpack.c.l.b16 %v1298
  %v1315 = vunpack.c.h.b16 %v1298
  %v1316 = vunpack.c.l.b16 %v1299
  %v1317 = vunpack.c.h.b16 %v1299
  %v1318 = vunpack.c.l.b16 %v1300
  %v1319 = vunpack.c.h.b16 %v1300
  %v1320 = vunpack.c.l.b16 %v1301
  %v1321 = vunpack.c.h.b16 %v1301
  %v1322 = vunpack.c.l.b16 %v1302
  %v1323 = vunpack.c.h.b16 %v1302
  %v1324 = vunpack.c.l.b16 %v1303
  %v1325 = vunpack.c.h.b16 %v1303
  %v1326 = vunpack.c.l.b16 %v1304
  %v1327 = vunpack.c.h.b16 %v1304
  %v1328 = vunpack.c.l.b16 %v1305
  %v1329 = vunpack.c.h.b16 %v1305
  %v1330 = vpack.c.b16 %v1314, %v1314
  %v1331 = vpack.c.b16 %v1315, %v1315
  %v1332 = vpack.c.b16 %v1316, %v1316
  %v1333 = vpack.c.b16 %v1317, %v1317
  %v1334 = vpack.c.b16 %v1318, %v1318
  %v1335 = vpack.c.b16 %v1319, %v1319
  %v1336 = vpack.c.b16 %v1320, %v1320
  %v1337 = vpack.c.b16 %v1321, %v1321
  %v1338 = vpack.c.b16 %v1322, %v1322
  %v1339 = vpack.c.b16 %v1323, %v1323
  %v1340 = vpack.c.b16 %v1324, %v1324
  %v1341 = vpack.c.b16 %v1325, %v1325
  %v1342 = vpack.c.b16 %v1326, %v1326
  %v1343 = vpack.c.b16 %v1327, %v1327
  %v1344 = vpack.c.b16 %v1328, %v1328
  %v1345 = vpack.c.b16 %v1329, %v1329
  %1362 = vst [vmem:[%s2] sm:$0xf] %v1330
  %1363 = vst [vmem:[%s2 + $0x4] sm:$0xf] %v1331
  %1364 = vst [vmem:[%s2 + $0x8] sm:$0xf] %v1332
  %1365 = vst [vmem:[%s2 + $0xc] sm:$0xf] %v1333
  %1366 = vst [vmem:[%s2 + $0x10] sm:$0xf] %v1334
  %1367 = vst [vmem:[%s2 + $0x14] sm:$0xf] %v1335
  %1368 = vst [vmem:[%s2 + $0x18] sm:$0xf] %v1336
  %1369 = vst [vmem:[%s2 + $0x1c] sm:$0xf] %v1337
  %1370 = vst [vmem:[%s2 + $0x20] sm:$0xf] %v1338
  %1371 = vst [vmem:[%s2 + $0x24] sm:$0xf] %v1339
  %1372 = vst [vmem:[%s2 + $0x28] sm:$0xf] %v1340
  %1373 = vst [vmem:[%s2 + $0x2c] sm:$0xf] %v1341
  %1374 = vst [vmem:[%s2 + $0x30] sm:$0xf] %v1342
  %1375 = vst [vmem:[%s2 + $0x34] sm:$0xf] %v1343
  %1376 = vst [vmem:[%s2 + $0x38] sm:$0xf] %v1344
  %1377 = vst [vmem:[%s2 + $0x3c] sm:$0xf] %v1345
  %p1378 = scmp.eq.s32.totalorder 0, 0
  // Predicated region
  $region10: #{discriminator_forward.9} parent=0 // pred_check
    %p1379 = pneg %p1378
  $region11: #{discriminator_forward.9} parent=0 // pred_check_branch
    %1381 = sbr.rel (%p1379) target = $region13
  $region12: #{discriminator_forward.9} parent=0 // pred_region
    %1382 = vst [vmem:[%s3] sm:$0x3] 0.0
  $region13: #{discriminator_forward.9} parent=0 // pred_fallthru
    _
  %v1383 = vadd.f32 %v1236, %v1239
  %v1384 = vadd.f32 %v1383, %v1244
  %v1385 = vadd.f32 %v1384, %v1247
  %v1386 = vadd.f32 %v1385, %v1252
  %v1387 = vadd.f32 %v1386, %v1255
  %v1388 = vadd.f32 %v1387, %v1260
  %v1389 = vadd.f32 %v1388, %v1263
  %v1390 = vadd.f32 %v1389, %v1268
  %v1391 = vadd.f32 %v1390, %v1271
  %v1392 = vadd.f32 %v1391, %v1276
  %v1393 = vadd.f32 %v1392, %v1279
  %v1394 = vadd.f32 %v1393, %v1284
  %v1395 = vadd.f32 %v1394, %v1287
  %v1396 = vadd.f32 %v1395, %v1292
  %v1397 = vadd.f32 %v1396, %v1295
  %v1398 = vrot.slane %v1397, 4
  %v1399 = vadd.f32 %v1397, %v1398
  %v1400 = vrot.slane %v1399, 2
  %v1401 = vadd.f32 %v1399, %v1400
  %v1402 = vrot.slane %v1401, 1
  %v1403 = vadd.f32 %v1401, %v1402
  %v1404 = vmul.f32 %v1236, %v1236
  %v1405 = vmul.f32 %v1239, %v1239
  %v1406 = vmul.f32 %v1244, %v1244
  %v1407 = vmul.f32 %v1247, %v1247
  %v1408 = vmul.f32 %v1252, %v1252
  %v1409 = vmul.f32 %v1255, %v1255
  %v1410 = vmul.f32 %v1260, %v1260
  %v1411 = vmul.f32 %v1263, %v1263
  %v1412 = vmul.f32 %v1268, %v1268
  %v1413 = vmul.f32 %v1271, %v1271
  %v1414 = vmul.f32 %v1276, %v1276
  %v1415 = vmul.f32 %v1279, %v1279
  %v1416 = vmul.f32 %v1284, %v1284
  %v1417 = vmul.f32 %v1287, %v1287
  %v1418 = vmul.f32 %v1292, %v1292
  %v1419 = vmul.f32 %v1295, %v1295
  %v1420 = vadd.f32 %v1404, %v1405
  %v1421 = vadd.f32 %v1420, %v1406
  %v1422 = vadd.f32 %v1421, %v1407
  %v1423 = vadd.f32 %v1422, %v1408
  %v1424 = vadd.f32 %v1423, %v1409
  %v1425 = vadd.f32 %v1424, %v1410
  %v1426 = vadd.f32 %v1425, %v1411
  %v1427 = vadd.f32 %v1426, %v1412
  %v1428 = vadd.f32 %v1427, %v1413
  %v1429 = vadd.f32 %v1428, %v1414
  %v1430 = vadd.f32 %v1429, %v1415
  %v1431 = vadd.f32 %v1430, %v1416
  %v1432 = vadd.f32 %v1431, %v1417
  %v1433 = vadd.f32 %v1432, %v1418
  %v1434 = vadd.f32 %v1433, %v1419
  %v1435 = vrot.slane %v1434, 4
  %v1436 = vadd.f32 %v1434, %v1435
  %v1437 = vrot.slane %v1436, 2
  %v1438 = vadd.f32 %v1436, %v1437
  %v1439 = vrot.slane %v1438, 1
  %v1440 = vadd.f32 %v1438, %v1439
  %vm1441 = vcmask 1040384
  %v1442 = vsel %vm1441, %v1403, %v1440
  %v1443 = vld [vmem:[%s3] sm:$0x3]
  %v1444 = vadd.f32 %v1443, %v1442
  %1445 = vst [vmem:[%s3] sm:$0x3] %v1444
  // Predicated region
  $region14: #{discriminator_forward.9} parent=0 // pred_check
    _
  $region15: #{discriminator_forward.9} parent=0 // pred_check_branch
    %1447 = sbr.rel (0) target = $region17
  $region16: #{discriminator_forward.9} parent=0 // pred_region
    _
  $region17: #{discriminator_forward.9} parent=0 // pred_fallthru
    _
  // Predicated region
  $region18: #{discriminator_forward.9} parent=0 // pred_check
    _
  $region19: #{discriminator_forward.9} parent=0 // pred_check_branch
    %1449 = sbr.rel (0) target = $region21
  $region20: #{discriminator_forward.9} parent=0 // pred_region
    _
  $region21: #{discriminator_forward.9} parent=0 // pred_fallthru
    _
  // Predicated region
  $region22: #{discriminator_forward.9} parent=0 // pred_check
    _
  $region23: #{discriminator_forward.9} parent=0 // pred_check_branch
    %1451 = sbr.rel (0) target = $region25
  $region24: #{discriminator_forward.9} parent=0 // pred_region
    _
  $region25: #{discriminator_forward.9} parent=0 // pred_fallthru
    _
  // Predicated region
  $region26: #{discriminator_forward.9} parent=0 // pred_check
    _
  $region27: #{discriminator_forward.9} parent=0 // pred_check_branch
    %1453 = sbr.rel (0) target = $region29
  $region28: #{discriminator_forward.9} parent=0 // pred_region
    _
  $region29: #{discriminator_forward.9} parent=0 // pred_fallthru
    _

// kernel: discriminator_forward.11
$region0: #{discriminator_forward.11}
  #allocation0 [shape = 'u32[]', space=smem, size = 0x4, offset = 0x4, fixed_abs, tag = 'smem constant byte address 0x4 - core index']
  #allocation1 [shape = 'u32[144,128]{1,0:T(1,128)}', space=vmem, size = 0x12000, scoped, tag = 'internal scratch']
  %s0 = inlined_call_operand.vmem [shape: bf16[32,2048], index: 0, kind: input, shape index: {}]
  %s1 = inlined_call_operand.vmem [shape: bf16[2048,256], index: 1, kind: input, shape index: {}]
  %s2 = inlined_call_operand.vmem [shape: bf16[32,256], index: 2, kind: output, shape index: {0}]
  %s3 = inlined_call_operand.vmem [shape: f32[2,256], index: 3, kind: output, shape index: {1}]
  %4 = xla_tuple %s2, %s3
  %s5 = sld [smem:[#allocation0]]
  $region30: #{discriminator_forward.11} parent=0
    _
  %s7 = ssub.s32 1, %s5
  %s8 = scalar_select 0, %s7, %s5
  // Predicated region
  $region2: #{discriminator_forward.11} parent=0 // pred_check
    _
  $region3: #{discriminator_forward.11} parent=0 // pred_check_branch
    %10 = sbr.rel (0) target = $region5
  $region4: #{discriminator_forward.11} parent=0 // pred_region
    _
  $region5: #{discriminator_forward.11} parent=0 // pred_fallthru
    _
  // Predicated region
  $region6: #{discriminator_forward.11} parent=0 // pred_check
    _
  $region7: #{discriminator_forward.11} parent=0 // pred_check_branch
    %12 = sbr.rel (0) target = $region9
  $region8: #{discriminator_forward.11} parent=0 // pred_region
    _
  $region9: #{discriminator_forward.11} parent=0 // pred_fallthru
    _
  %v13 = vld [vmem:[%s0] sm:$0xff]
  %v14 = vld [vmem:[%s0 + $0x8] sm:$0xff]
  %v15 = vld [vmem:[%s0 + $0x10] sm:$0xff]
  %v16 = vld [vmem:[%s0 + $0x18] sm:$0xff]
  %v17 = vld [vmem:[%s0 + $0x20] sm:$0xff]
  %v18 = vld [vmem:[%s0 + $0x28] sm:$0xff]
  %v19 = vld [vmem:[%s0 + $0x30] sm:$0xff]
  %v20 = vld [vmem:[%s0 + $0x38] sm:$0xff]
  %v21 = vld [vmem:[%s0 + $0x40] sm:$0xff]
  %v22 = vld [vmem:[%s0 + $0x48] sm:$0xff]
  %v23 = vld [vmem:[%s0 + $0x50] sm:$0xff]
  %v24 = vld [vmem:[%s0 + $0x58] sm:$0xff]
  %v25 = vld [vmem:[%s0 + $0x60] sm:$0xff]
  %v26 = vld [vmem:[%s0 + $0x68] sm:$0xff]
  %v27 = vld [vmem:[%s0 + $0x70] sm:$0xff]
  %v28 = vld [vmem:[%s0 + $0x78] sm:$0xff]
  %v29 = vld [vmem:[%s0 + $0x80] sm:$0xff]
  %v30 = vld [vmem:[%s0 + $0x88] sm:$0xff]
  %v31 = vld [vmem:[%s0 + $0x90] sm:$0xff]
  %v32 = vld [vmem:[%s0 + $0x98] sm:$0xff]
  %v33 = vld [vmem:[%s0 + $0xa0] sm:$0xff]
  %v34 = vld [vmem:[%s0 + $0xa8] sm:$0xff]
  %v35 = vld [vmem:[%s0 + $0xb0] sm:$0xff]
  %v36 = vld [vmem:[%s0 + $0xb8] sm:$0xff]
  %v37 = vld [vmem:[%s0 + $0xc0] sm:$0xff]
  %v38 = vld [vmem:[%s0 + $0xc8] sm:$0xff]
  %v39 = vld [vmem:[%s0 + $0xd0] sm:$0xff]
  %v40 = vld [vmem:[%s0 + $0xd8] sm:$0xff]
  %v41 = vld [vmem:[%s0 + $0xe0] sm:$0xff]
  %v42 = vld [vmem:[%s0 + $0xe8] sm:$0xff]
  %v43 = vld [vmem:[%s0 + $0xf0] sm:$0xff]
  %v44 = vld [vmem:[%s0 + $0xf8] sm:$0xff]
  %v45 = vld [vmem:[%s1] sm:$0xff]
  %v46 = vld [vmem:[%s1 + $0x8] sm:$0xff]
  %v47 = vld [vmem:[%s1 + $0x10] sm:$0xff]
  %v48 = vld [vmem:[%s1 + $0x18] sm:$0xff]
  %v49 = vld [vmem:[%s1 + $0x20] sm:$0xff]
  %v50 = vld [vmem:[%s1 + $0x28] sm:$0xff]
  %v51 = vld [vmem:[%s1 + $0x30] sm:$0xff]
  %v52 = vld [vmem:[%s1 + $0x38] sm:$0xff]
  %v53 = vld [vmem:[%s1 + $0x40] sm:$0xff]
  %v54 = vld [vmem:[%s1 + $0x48] sm:$0xff]
  %v55 = vld [vmem:[%s1 + $0x50] sm:$0xff]
  %v56 = vld [vmem:[%s1 + $0x58] sm:$0xff]
  %v57 = vld [vmem:[%s1 + $0x60] sm:$0xff]
  %v58 = vld [vmem:[%s1 + $0x68] sm:$0xff]
  %v59 = vld [vmem:[%s1 + $0x70] sm:$0xff]
  %v60 = vld [vmem:[%s1 + $0x78] sm:$0xff]
  %v61 = vld [vmem:[%s1 + $0x80] sm:$0xff]
  %v62 = vld [vmem:[%s1 + $0x88] sm:$0xff]
  %v63 = vld [vmem:[%s1 + $0x90] sm:$0xff]
  %v64 = vld [vmem:[%s1 + $0x98] sm:$0xff]
  %v65 = vld [vmem:[%s1 + $0xa0] sm:$0xff]
  %v66 = vld [vmem:[%s1 + $0xa8] sm:$0xff]
  %v67 = vld [vmem:[%s1 + $0xb0] sm:$0xff]
  %v68 = vld [vmem:[%s1 + $0xb8] sm:$0xff]
  %v69 = vld [vmem:[%s1 + $0xc0] sm:$0xff]
  %v70 = vld [vmem:[%s1 + $0xc8] sm:$0xff]
  %v71 = vld [vmem:[%s1 + $0xd0] sm:$0xff]
  %v72 = vld [vmem:[%s1 + $0xd8] sm:$0xff]
  %v73 = vld [vmem:[%s1 + $0xe0] sm:$0xff]
  %v74 = vld [vmem:[%s1 + $0xe8] sm:$0xff]
  %v75 = vld [vmem:[%s1 + $0xf0] sm:$0xff]
  %v76 = vld [vmem:[%s1 + $0xf8] sm:$0xff]
  %v77 = vld [vmem:[%s1 + $0x100] sm:$0xff]
  %v78 = vld [vmem:[%s1 + $0x108] sm:$0xff]
  %v79 = vld [vmem:[%s1 + $0x110] sm:$0xff]
  %v80 = vld [vmem:[%s1 + $0x118] sm:$0xff]
  %v81 = vld [vmem:[%s1 + $0x120] sm:$0xff]
  %v82 = vld [vmem:[%s1 + $0x128] sm:$0xff]
  %v83 = vld [vmem:[%s1 + $0x130] sm:$0xff]
  %v84 = vld [vmem:[%s1 + $0x138] sm:$0xff]
  %v85 = vld [vmem:[%s1 + $0x140] sm:$0xff]
  %v86 = vld [vmem:[%s1 + $0x148] sm:$0xff]
  %v87 = vld [vmem:[%s1 + $0x150] sm:$0xff]
  %v88 = vld [vmem:[%s1 + $0x158] sm:$0xff]
  %v89 = vld [vmem:[%s1 + $0x160] sm:$0xff]
  %v90 = vld [vmem:[%s1 + $0x168] sm:$0xff]
  %v91 = vld [vmem:[%s1 + $0x170] sm:$0xff]
  %v92 = vld [vmem:[%s1 + $0x178] sm:$0xff]
  %v93 = vld [vmem:[%s1 + $0x180] sm:$0xff]
  %v94 = vld [vmem:[%s1 + $0x188] sm:$0xff]
  %v95 = vld [vmem:[%s1 + $0x190] sm:$0xff]
  %v96 = vld [vmem:[%s1 + $0x198] sm:$0xff]
  %v97 = vld [vmem:[%s1 + $0x1a0] sm:$0xff]
  %v98 = vld [vmem:[%s1 + $0x1a8] sm:$0xff]
  %v99 = vld [vmem:[%s1 + $0x1b0] sm:$0xff]
  %v100 = vld [vmem:[%s1 + $0x1b8] sm:$0xff]
  %v101 = vld [vmem:[%s1 + $0x1c0] sm:$0xff]
  %v102 = vld [vmem:[%s1 + $0x1c8] sm:$0xff]
  %v103 = vld [vmem:[%s1 + $0x1d0] sm:$0xff]
  %v104 = vld [vmem:[%s1 + $0x1d8] sm:$0xff]
  %v105 = vld [vmem:[%s1 + $0x1e0] sm:$0xff]
  %v106 = vld [vmem:[%s1 + $0x1e8] sm:$0xff]
  %v107 = vld [vmem:[%s1 + $0x1f0] sm:$0xff]
  %v108 = vld [vmem:[%s1 + $0x1f8] sm:$0xff]
  %v109 = vld [vmem:[%s1 + $0x200] sm:$0xff]
  %v110 = vld [vmem:[%s1 + $0x208] sm:$0xff]
  %v111 = vld [vmem:[%s1 + $0x210] sm:$0xff]
  %v112 = vld [vmem:[%s1 + $0x218] sm:$0xff]
  %v113 = vld [vmem:[%s1 + $0x220] sm:$0xff]
  %v114 = vld [vmem:[%s1 + $0x228] sm:$0xff]
  %v115 = vld [vmem:[%s1 + $0x230] sm:$0xff]
  %v116 = vld [vmem:[%s1 + $0x238] sm:$0xff]
  %v117 = vld [vmem:[%s1 + $0x240] sm:$0xff]
  %v118 = vld [vmem:[%s1 + $0x248] sm:$0xff]
  %v119 = vld [vmem:[%s1 + $0x250] sm:$0xff]
  %v120 = vld [vmem:[%s1 + $0x258] sm:$0xff]
  %v121 = vld [vmem:[%s1 + $0x260] sm:$0xff]
  %v122 = vld [vmem:[%s1 + $0x268] sm:$0xff]
  %v123 = vld [vmem:[%s1 + $0x270] sm:$0xff]
  %v124 = vld [vmem:[%s1 + $0x278] sm:$0xff]
  %v125 = vld [vmem:[%s1 + $0x280] sm:$0xff]
  %v126 = vld [vmem:[%s1 + $0x288] sm:$0xff]
  %v127 = vld [vmem:[%s1 + $0x290] sm:$0xff]
  %v128 = vld [vmem:[%s1 + $0x298] sm:$0xff]
  %v129 = vld [vmem:[%s1 + $0x2a0] sm:$0xff]
  %v130 = vld [vmem:[%s1 + $0x2a8] sm:$0xff]
  %v131 = vld [vmem:[%s1 + $0x2b0] sm:$0xff]
  %v132 = vld [vmem:[%s1 + $0x2b8] sm:$0xff]
  %v133 = vld [vmem:[%s1 + $0x2c0] sm:$0xff]
  %v134 = vld [vmem:[%s1 + $0x2c8] sm:$0xff]
  %v135 = vld [vmem:[%s1 + $0x2d0] sm:$0xff]
  %v136 = vld [vmem:[%s1 + $0x2d8] sm:$0xff]
  %v137 = vld [vmem:[%s1 + $0x2e0] sm:$0xff]
  %v138 = vld [vmem:[%s1 + $0x2e8] sm:$0xff]
  %v139 = vld [vmem:[%s1 + $0x2f0] sm:$0xff]
  %v140 = vld [vmem:[%s1 + $0x2f8] sm:$0xff]
  %v141 = vld [vmem:[%s1 + $0x300] sm:$0xff]
  %v142 = vld [vmem:[%s1 + $0x308] sm:$0xff]
  %v143 = vld [vmem:[%s1 + $0x310] sm:$0xff]
  %v144 = vld [vmem:[%s1 + $0x318] sm:$0xff]
  %v145 = vld [vmem:[%s1 + $0x320] sm:$0xff]
  %v146 = vld [vmem:[%s1 + $0x328] sm:$0xff]
  %v147 = vld [vmem:[%s1 + $0x330] sm:$0xff]
  %v148 = vld [vmem:[%s1 + $0x338] sm:$0xff]
  %v149 = vld [vmem:[%s1 + $0x340] sm:$0xff]
  %v150 = vld [vmem:[%s1 + $0x348] sm:$0xff]
  %v151 = vld [vmem:[%s1 + $0x350] sm:$0xff]
  %v152 = vld [vmem:[%s1 + $0x358] sm:$0xff]
  %v153 = vld [vmem:[%s1 + $0x360] sm:$0xff]
  %v154 = vld [vmem:[%s1 + $0x368] sm:$0xff]
  %v155 = vld [vmem:[%s1 + $0x370] sm:$0xff]
  %v156 = vld [vmem:[%s1 + $0x378] sm:$0xff]
  %v157 = vld [vmem:[%s1 + $0x380] sm:$0xff]
  %v158 = vld [vmem:[%s1 + $0x388] sm:$0xff]
  %v159 = vld [vmem:[%s1 + $0x390] sm:$0xff]
  %v160 = vld [vmem:[%s1 + $0x398] sm:$0xff]
  %v161 = vld [vmem:[%s1 + $0x3a0] sm:$0xff]
  %v162 = vld [vmem:[%s1 + $0x3a8] sm:$0xff]
  %v163 = vld [vmem:[%s1 + $0x3b0] sm:$0xff]
  %v164 = vld [vmem:[%s1 + $0x3b8] sm:$0xff]
  %v165 = vld [vmem:[%s1 + $0x3c0] sm:$0xff]
  %v166 = vld [vmem:[%s1 + $0x3c8] sm:$0xff]
  %v167 = vld [vmem:[%s1 + $0x3d0] sm:$0xff]
  %v168 = vld [vmem:[%s1 + $0x3d8] sm:$0xff]
  %v169 = vld [vmem:[%s1 + $0x3e0] sm:$0xff]
  %v170 = vld [vmem:[%s1 + $0x3e8] sm:$0xff]
  %v171 = vld [vmem:[%s1 + $0x3f0] sm:$0xff]
  %v172 = vld [vmem:[%s1 + $0x3f8] sm:$0xff]
  %v173 = vld [vmem:[%s1 + $0x400] sm:$0xff]
  %v174 = vld [vmem:[%s1 + $0x408] sm:$0xff]
  %v175 = vld [vmem:[%s1 + $0x410] sm:$0xff]
  %v176 = vld [vmem:[%s1 + $0x418] sm:$0xff]
  %v177 = vld [vmem:[%s1 + $0x420] sm:$0xff]
  %v178 = vld [vmem:[%s1 + $0x428] sm:$0xff]
  %v179 = vld [vmem:[%s1 + $0x430] sm:$0xff]
  %v180 = vld [vmem:[%s1 + $0x438] sm:$0xff]
  %v181 = vld [vmem:[%s1 + $0x440] sm:$0xff]
  %v182 = vld [vmem:[%s1 + $0x448] sm:$0xff]
  %v183 = vld [vmem:[%s1 + $0x450] sm:$0xff]
  %v184 = vld [vmem:[%s1 + $0x458] sm:$0xff]
  %v185 = vld [vmem:[%s1 + $0x460] sm:$0xff]
  %v186 = vld [vmem:[%s1 + $0x468] sm:$0xff]
  %v187 = vld [vmem:[%s1 + $0x470] sm:$0xff]
  %v188 = vld [vmem:[%s1 + $0x478] sm:$0xff]
  %v189 = vld [vmem:[%s1 + $0x480] sm:$0xff]
  %v190 = vld [vmem:[%s1 + $0x488] sm:$0xff]
  %v191 = vld [vmem:[%s1 + $0x490] sm:$0xff]
  %v192 = vld [vmem:[%s1 + $0x498] sm:$0xff]
  %v193 = vld [vmem:[%s1 + $0x4a0] sm:$0xff]
  %v194 = vld [vmem:[%s1 + $0x4a8] sm:$0xff]
  %v195 = vld [vmem:[%s1 + $0x4b0] sm:$0xff]
  %v196 = vld [vmem:[%s1 + $0x4b8] sm:$0xff]
  %v197 = vld [vmem:[%s1 + $0x4c0] sm:$0xff]
  %v198 = vld [vmem:[%s1 + $0x4c8] sm:$0xff]
  %v199 = vld [vmem:[%s1 + $0x4d0] sm:$0xff]
  %v200 = vld [vmem:[%s1 + $0x4d8] sm:$0xff]
  %v201 = vld [vmem:[%s1 + $0x4e0] sm:$0xff]
  %v202 = vld [vmem:[%s1 + $0x4e8] sm:$0xff]
  %v203 = vld [vmem:[%s1 + $0x4f0] sm:$0xff]
  %v204 = vld [vmem:[%s1 + $0x4f8] sm:$0xff]
  %v205 = vld [vmem:[%s1 + $0x500] sm:$0xff]
  %v206 = vld [vmem:[%s1 + $0x508] sm:$0xff]
  %v207 = vld [vmem:[%s1 + $0x510] sm:$0xff]
  %v208 = vld [vmem:[%s1 + $0x518] sm:$0xff]
  %v209 = vld [vmem:[%s1 + $0x520] sm:$0xff]
  %v210 = vld [vmem:[%s1 + $0x528] sm:$0xff]
  %v211 = vld [vmem:[%s1 + $0x530] sm:$0xff]
  %v212 = vld [vmem:[%s1 + $0x538] sm:$0xff]
  %v213 = vld [vmem:[%s1 + $0x540] sm:$0xff]
  %v214 = vld [vmem:[%s1 + $0x548] sm:$0xff]
  %v215 = vld [vmem:[%s1 + $0x550] sm:$0xff]
  %v216 = vld [vmem:[%s1 + $0x558] sm:$0xff]
  %v217 = vld [vmem:[%s1 + $0x560] sm:$0xff]
  %v218 = vld [vmem:[%s1 + $0x568] sm:$0xff]
  %v219 = vld [vmem:[%s1 + $0x570] sm:$0xff]
  %v220 = vld [vmem:[%s1 + $0x578] sm:$0xff]
  %v221 = vld [vmem:[%s1 + $0x580] sm:$0xff]
  %v222 = vld [vmem:[%s1 + $0x588] sm:$0xff]
  %v223 = vld [vmem:[%s1 + $0x590] sm:$0xff]
  %v224 = vld [vmem:[%s1 + $0x598] sm:$0xff]
  %v225 = vld [vmem:[%s1 + $0x5a0] sm:$0xff]
  %v226 = vld [vmem:[%s1 + $0x5a8] sm:$0xff]
  %v227 = vld [vmem:[%s1 + $0x5b0] sm:$0xff]
  %v228 = vld [vmem:[%s1 + $0x5b8] sm:$0xff]
  %v229 = vld [vmem:[%s1 + $0x5c0] sm:$0xff]
  %v230 = vld [vmem:[%s1 + $0x5c8] sm:$0xff]
  %v231 = vld [vmem:[%s1 + $0x5d0] sm:$0xff]
  %v232 = vld [vmem:[%s1 + $0x5d8] sm:$0xff]
  %v233 = vld [vmem:[%s1 + $0x5e0] sm:$0xff]
  %v234 = vld [vmem:[%s1 + $0x5e8] sm:$0xff]
  %v235 = vld [vmem:[%s1 + $0x5f0] sm:$0xff]
  %v236 = vld [vmem:[%s1 + $0x5f8] sm:$0xff]
  %v237 = vld [vmem:[%s1 + $0x600] sm:$0xff]
  %v238 = vld [vmem:[%s1 + $0x608] sm:$0xff]
  %v239 = vld [vmem:[%s1 + $0x610] sm:$0xff]
  %v240 = vld [vmem:[%s1 + $0x618] sm:$0xff]
  %v241 = vld [vmem:[%s1 + $0x620] sm:$0xff]
  %v242 = vld [vmem:[%s1 + $0x628] sm:$0xff]
  %v243 = vld [vmem:[%s1 + $0x630] sm:$0xff]
  %v244 = vld [vmem:[%s1 + $0x638] sm:$0xff]
  %v245 = vld [vmem:[%s1 + $0x640] sm:$0xff]
  %v246 = vld [vmem:[%s1 + $0x648] sm:$0xff]
  %v247 = vld [vmem:[%s1 + $0x650] sm:$0xff]
  %v248 = vld [vmem:[%s1 + $0x658] sm:$0xff]
  %v249 = vld [vmem:[%s1 + $0x660] sm:$0xff]
  %v250 = vld [vmem:[%s1 + $0x668] sm:$0xff]
  %v251 = vld [vmem:[%s1 + $0x670] sm:$0xff]
  %v252 = vld [vmem:[%s1 + $0x678] sm:$0xff]
  %v253 = vld [vmem:[%s1 + $0x680] sm:$0xff]
  %v254 = vld [vmem:[%s1 + $0x688] sm:$0xff]
  %v255 = vld [vmem:[%s1 + $0x690] sm:$0xff]
  %v256 = vld [vmem:[%s1 + $0x698] sm:$0xff]
  %v257 = vld [vmem:[%s1 + $0x6a0] sm:$0xff]
  %v258 = vld [vmem:[%s1 + $0x6a8] sm:$0xff]
  %v259 = vld [vmem:[%s1 + $0x6b0] sm:$0xff]
  %v260 = vld [vmem:[%s1 + $0x6b8] sm:$0xff]
  %v261 = vld [vmem:[%s1 + $0x6c0] sm:$0xff]
  %v262 = vld [vmem:[%s1 + $0x6c8] sm:$0xff]
  %v263 = vld [vmem:[%s1 + $0x6d0] sm:$0xff]
  %v264 = vld [vmem:[%s1 + $0x6d8] sm:$0xff]
  %v265 = vld [vmem:[%s1 + $0x6e0] sm:$0xff]
  %v266 = vld [vmem:[%s1 + $0x6e8] sm:$0xff]
  %v267 = vld [vmem:[%s1 + $0x6f0] sm:$0xff]
  %v268 = vld [vmem:[%s1 + $0x6f8] sm:$0xff]
  %v269 = vld [vmem:[%s1 + $0x700] sm:$0xff]
  %v270 = vld [vmem:[%s1 + $0x708] sm:$0xff]
  %v271 = vld [vmem:[%s1 + $0x710] sm:$0xff]
  %v272 = vld [vmem:[%s1 + $0x718] sm:$0xff]
  %v273 = vld [vmem:[%s1 + $0x720] sm:$0xff]
  %v274 = vld [vmem:[%s1 + $0x728] sm:$0xff]
  %v275 = vld [vmem:[%s1 + $0x730] sm:$0xff]
  %v276 = vld [vmem:[%s1 + $0x738] sm:$0xff]
  %v277 = vld [vmem:[%s1 + $0x740] sm:$0xff]
  %v278 = vld [vmem:[%s1 + $0x748] sm:$0xff]
  %v279 = vld [vmem:[%s1 + $0x750] sm:$0xff]
  %v280 = vld [vmem:[%s1 + $0x758] sm:$0xff]
  %v281 = vld [vmem:[%s1 + $0x760] sm:$0xff]
  %v282 = vld [vmem:[%s1 + $0x768] sm:$0xff]
  %v283 = vld [vmem:[%s1 + $0x770] sm:$0xff]
  %v284 = vld [vmem:[%s1 + $0x778] sm:$0xff]
  %v285 = vld [vmem:[%s1 + $0x780] sm:$0xff]
  %v286 = vld [vmem:[%s1 + $0x788] sm:$0xff]
  %v287 = vld [vmem:[%s1 + $0x790] sm:$0xff]
  %v288 = vld [vmem:[%s1 + $0x798] sm:$0xff]
  %v289 = vld [vmem:[%s1 + $0x7a0] sm:$0xff]
  %v290 = vld [vmem:[%s1 + $0x7a8] sm:$0xff]
  %v291 = vld [vmem:[%s1 + $0x7b0] sm:$0xff]
  %v292 = vld [vmem:[%s1 + $0x7b8] sm:$0xff]
  %v293 = vld [vmem:[%s1 + $0x7c0] sm:$0xff]
  %v294 = vld [vmem:[%s1 + $0x7c8] sm:$0xff]
  %v295 = vld [vmem:[%s1 + $0x7d0] sm:$0xff]
  %v296 = vld [vmem:[%s1 + $0x7d8] sm:$0xff]
  %v297 = vld [vmem:[%s1 + $0x7e0] sm:$0xff]
  %v298 = vld [vmem:[%s1 + $0x7e8] sm:$0xff]
  %v299 = vld [vmem:[%s1 + $0x7f0] sm:$0xff]
  %v300 = vld [vmem:[%s1 + $0x7f8] sm:$0xff]
  %v333 = vunpack.c.l.b16 %v13
  %v334 = vunpack.c.h.b16 %v13
  %v335 = vunpack.c.l.b16 %v14
  %v336 = vunpack.c.h.b16 %v14
  %v337 = vunpack.c.l.b16 %v15
  %v338 = vunpack.c.h.b16 %v15
  %v339 = vunpack.c.l.b16 %v16
  %v340 = vunpack.c.h.b16 %v16
  %v341 = vunpack.c.l.b16 %v17
  %v342 = vunpack.c.h.b16 %v17
  %v343 = vunpack.c.l.b16 %v18
  %v344 = vunpack.c.h.b16 %v18
  %v345 = vunpack.c.l.b16 %v19
  %v346 = vunpack.c.h.b16 %v19
  %v347 = vunpack.c.l.b16 %v20
  %v348 = vunpack.c.h.b16 %v20
  %v349 = vunpack.c.l.b16 %v21
  %v350 = vunpack.c.h.b16 %v21
  %v351 = vunpack.c.l.b16 %v22
  %v352 = vunpack.c.h.b16 %v22
  %v353 = vunpack.c.l.b16 %v23
  %v354 = vunpack.c.h.b16 %v23
  %v355 = vunpack.c.l.b16 %v24
  %v356 = vunpack.c.h.b16 %v24
  %v357 = vunpack.c.l.b16 %v25
  %v358 = vunpack.c.h.b16 %v25
  %v359 = vunpack.c.l.b16 %v26
  %v360 = vunpack.c.h.b16 %v26
  %v361 = vunpack.c.l.b16 %v27
  %v362 = vunpack.c.h.b16 %v27
  %v363 = vunpack.c.l.b16 %v28
  %v364 = vunpack.c.h.b16 %v28
  %v365 = vunpack.c.l.b16 %v29
  %v366 = vunpack.c.h.b16 %v29
  %v367 = vunpack.c.l.b16 %v30
  %v368 = vunpack.c.h.b16 %v30
  %v369 = vunpack.c.l.b16 %v31
  %v370 = vunpack.c.h.b16 %v31
  %v371 = vunpack.c.l.b16 %v32
  %v372 = vunpack.c.h.b16 %v32
  %v373 = vunpack.c.l.b16 %v33
  %v374 = vunpack.c.h.b16 %v33
  %v375 = vunpack.c.l.b16 %v34
  %v376 = vunpack.c.h.b16 %v34
  %v377 = vunpack.c.l.b16 %v35
  %v378 = vunpack.c.h.b16 %v35
  %v379 = vunpack.c.l.b16 %v36
  %v380 = vunpack.c.h.b16 %v36
  %v381 = vunpack.c.l.b16 %v37
  %v382 = vunpack.c.h.b16 %v37
  %v383 = vunpack.c.l.b16 %v38
  %v384 = vunpack.c.h.b16 %v38
  %v385 = vunpack.c.l.b16 %v39
  %v386 = vunpack.c.h.b16 %v39
  %v387 = vunpack.c.l.b16 %v40
  %v388 = vunpack.c.h.b16 %v40
  %v389 = vunpack.c.l.b16 %v41
  %v390 = vunpack.c.h.b16 %v41
  %v391 = vunpack.c.l.b16 %v42
  %v392 = vunpack.c.h.b16 %v42
  %v393 = vunpack.c.l.b16 %v43
  %v394 = vunpack.c.h.b16 %v43
  %v395 = vunpack.c.l.b16 %v44
  %v396 = vunpack.c.h.b16 %v44
  %v397 = vpack.c.b16 %v349, %v333
  %v398 = vpack.c.b16 %v350, %v334
  %v399 = vpack.c.b16 %v351, %v335
  %v400 = vpack.c.b16 %v352, %v336
  %v401 = vpack.c.b16 %v353, %v337
  %v402 = vpack.c.b16 %v354, %v338
  %v403 = vpack.c.b16 %v355, %v339
  %v404 = vpack.c.b16 %v356, %v340
  %v405 = vpack.c.b16 %v357, %v341
  %v406 = vpack.c.b16 %v358, %v342
  %v407 = vpack.c.b16 %v359, %v343
  %v408 = vpack.c.b16 %v360, %v344
  %v409 = vpack.c.b16 %v361, %v345
  %v410 = vpack.c.b16 %v362, %v346
  %v411 = vpack.c.b16 %v363, %v347
  %v412 = vpack.c.b16 %v364, %v348
  %v413 = vpack.c.b16 %v381, %v365
  %v414 = vpack.c.b16 %v382, %v366
  %v415 = vpack.c.b16 %v383, %v367
  %v416 = vpack.c.b16 %v384, %v368
  %v417 = vpack.c.b16 %v385, %v369
  %v418 = vpack.c.b16 %v386, %v370
  %v419 = vpack.c.b16 %v387, %v371
  %v420 = vpack.c.b16 %v388, %v372
  %v421 = vpack.c.b16 %v389, %v373
  %v422 = vpack.c.b16 %v390, %v374
  %v423 = vpack.c.b16 %v391, %v375
  %v424 = vpack.c.b16 %v392, %v376
  %v425 = vpack.c.b16 %v393, %v377
  %v426 = vpack.c.b16 %v394, %v378
  %v427 = vpack.c.b16 %v395, %v379
  %v428 = vpack.c.b16 %v396, %v380
  %v717 = vunpack.c.l.b16 %v45
  %v718 = vunpack.c.h.b16 %v45
  %v719 = vunpack.c.l.b16 %v46
  %v720 = vunpack.c.h.b16 %v46
  %v721 = vunpack.c.l.b16 %v47
  %v722 = vunpack.c.h.b16 %v47
  %v723 = vunpack.c.l.b16 %v48
  %v724 = vunpack.c.h.b16 %v48
  %v725 = vunpack.c.l.b16 %v49
  %v726 = vunpack.c.h.b16 %v49
  %v727 = vunpack.c.l.b16 %v50
  %v728 = vunpack.c.h.b16 %v50
  %v729 = vunpack.c.l.b16 %v51
  %v730 = vunpack.c.h.b16 %v51
  %v731 = vunpack.c.l.b16 %v52
  %v732 = vunpack.c.h.b16 %v52
  %v733 = vunpack.c.l.b16 %v53
  %v734 = vunpack.c.h.b16 %v53
  %v735 = vunpack.c.l.b16 %v54
  %v736 = vunpack.c.h.b16 %v54
  %v737 = vunpack.c.l.b16 %v55
  %v738 = vunpack.c.h.b16 %v55
  %v739 = vunpack.c.l.b16 %v56
  %v740 = vunpack.c.h.b16 %v56
  %v741 = vunpack.c.l.b16 %v57
  %v742 = vunpack.c.h.b16 %v57
  %v743 = vunpack.c.l.b16 %v58
  %v744 = vunpack.c.h.b16 %v58
  %v745 = vunpack.c.l.b16 %v59
  %v746 = vunpack.c.h.b16 %v59
  %v747 = vunpack.c.l.b16 %v60
  %v748 = vunpack.c.h.b16 %v60
  %v749 = vunpack.c.l.b16 %v61
  %v750 = vunpack.c.h.b16 %v61
  %v751 = vunpack.c.l.b16 %v62
  %v752 = vunpack.c.h.b16 %v62
  %v753 = vunpack.c.l.b16 %v63
  %v754 = vunpack.c.h.b16 %v63
  %v755 = vunpack.c.l.b16 %v64
  %v756 = vunpack.c.h.b16 %v64
  %v757 = vunpack.c.l.b16 %v65
  %v758 = vunpack.c.h.b16 %v65
  %v759 = vunpack.c.l.b16 %v66
  %v760 = vunpack.c.h.b16 %v66
  %v761 = vunpack.c.l.b16 %v67
  %v762 = vunpack.c.h.b16 %v67
  %v763 = vunpack.c.l.b16 %v68
  %v764 = vunpack.c.h.b16 %v68
  %v765 = vunpack.c.l.b16 %v69
  %v766 = vunpack.c.h.b16 %v69
  %v767 = vunpack.c.l.b16 %v70
  %v768 = vunpack.c.h.b16 %v70
  %v769 = vunpack.c.l.b16 %v71
  %v770 = vunpack.c.h.b16 %v71
  %v771 = vunpack.c.l.b16 %v72
  %v772 = vunpack.c.h.b16 %v72
  %v773 = vunpack.c.l.b16 %v73
  %v774 = vunpack.c.h.b16 %v73
  %v775 = vunpack.c.l.b16 %v74
  %v776 = vunpack.c.h.b16 %v74
  %v777 = vunpack.c.l.b16 %v75
  %v778 = vunpack.c.h.b16 %v75
  %v779 = vunpack.c.l.b16 %v76
  %v780 = vunpack.c.h.b16 %v76
  %v781 = vunpack.c.l.b16 %v77
  %v782 = vunpack.c.h.b16 %v77
  %v783 = vunpack.c.l.b16 %v78
  %v784 = vunpack.c.h.b16 %v78
  %v785 = vunpack.c.l.b16 %v79
  %v786 = vunpack.c.h.b16 %v79
  %v787 = vunpack.c.l.b16 %v80
  %v788 = vunpack.c.h.b16 %v80
  %v789 = vunpack.c.l.b16 %v81
  %v790 = vunpack.c.h.b16 %v81
  %v791 = vunpack.c.l.b16 %v82
  %v792 = vunpack.c.h.b16 %v82
  %v793 = vunpack.c.l.b16 %v83
  %v794 = vunpack.c.h.b16 %v83
  %v795 = vunpack.c.l.b16 %v84
  %v796 = vunpack.c.h.b16 %v84
  %v797 = vunpack.c.l.b16 %v85
  %v798 = vunpack.c.h.b16 %v85
  %v799 = vunpack.c.l.b16 %v86
  %v800 = vunpack.c.h.b16 %v86
  %v801 = vunpack.c.l.b16 %v87
  %v802 = vunpack.c.h.b16 %v87
  %v803 = vunpack.c.l.b16 %v88
  %v804 = vunpack.c.h.b16 %v88
  %v805 = vunpack.c.l.b16 %v89
  %v806 = vunpack.c.h.b16 %v89
  %v807 = vunpack.c.l.b16 %v90
  %v808 = vunpack.c.h.b16 %v90
  %v809 = vunpack.c.l.b16 %v91
  %v810 = vunpack.c.h.b16 %v91
  %v811 = vunpack.c.l.b16 %v92
  %v812 = vunpack.c.h.b16 %v92
  %v813 = vunpack.c.l.b16 %v93
  %v814 = vunpack.c.h.b16 %v93
  %v815 = vunpack.c.l.b16 %v94
  %v816 = vunpack.c.h.b16 %v94
  %v817 = vunpack.c.l.b16 %v95
  %v818 = vunpack.c.h.b16 %v95
  %v819 = vunpack.c.l.b16 %v96
  %v820 = vunpack.c.h.b16 %v96
  %v821 = vunpack.c.l.b16 %v97
  %v822 = vunpack.c.h.b16 %v97
  %v823 = vunpack.c.l.b16 %v98
  %v824 = vunpack.c.h.b16 %v98
  %v825 = vunpack.c.l.b16 %v99
  %v826 = vunpack.c.h.b16 %v99
  %v827 = vunpack.c.l.b16 %v100
  %v828 = vunpack.c.h.b16 %v100
  %v829 = vunpack.c.l.b16 %v101
  %v830 = vunpack.c.h.b16 %v101
  %v831 = vunpack.c.l.b16 %v102
  %v832 = vunpack.c.h.b16 %v102
  %v833 = vunpack.c.l.b16 %v103
  %v834 = vunpack.c.h.b16 %v103
  %v835 = vunpack.c.l.b16 %v104
  %v836 = vunpack.c.h.b16 %v104
  %v837 = vunpack.c.l.b16 %v105
  %v838 = vunpack.c.h.b16 %v105
  %v839 = vunpack.c.l.b16 %v106
  %v840 = vunpack.c.h.b16 %v106
  %v841 = vunpack.c.l.b16 %v107
  %v842 = vunpack.c.h.b16 %v107
  %v843 = vunpack.c.l.b16 %v108
  %v844 = vunpack.c.h.b16 %v108
  %v845 = vunpack.c.l.b16 %v109
  %v846 = vunpack.c.h.b16 %v109
  %v847 = vunpack.c.l.b16 %v110
  %v848 = vunpack.c.h.b16 %v110
  %v849 = vunpack.c.l.b16 %v111
  %v850 = vunpack.c.h.b16 %v111
  %v851 = vunpack.c.l.b16 %v112
  %v852 = vunpack.c.h.b16 %v112
  %v853 = vunpack.c.l.b16 %v113
  %v854 = vunpack.c.h.b16 %v113
  %v855 = vunpack.c.l.b16 %v114
  %v856 = vunpack.c.h.b16 %v114
  %v857 = vunpack.c.l.b16 %v115
  %v858 = vunpack.c.h.b16 %v115
  %v859 = vunpack.c.l.b16 %v116
  %v860 = vunpack.c.h.b16 %v116
  %v861 = vunpack.c.l.b16 %v117
  %v862 = vunpack.c.h.b16 %v117
  %v863 = vunpack.c.l.b16 %v118
  %v864 = vunpack.c.h.b16 %v118
  %v865 = vunpack.c.l.b16 %v119
  %v866 = vunpack.c.h.b16 %v119
  %v867 = vunpack.c.l.b16 %v120
  %v868 = vunpack.c.h.b16 %v120
  %v869 = vunpack.c.l.b16 %v121
  %v870 = vunpack.c.h.b16 %v121
  %v871 = vunpack.c.l.b16 %v122
  %v872 = vunpack.c.h.b16 %v122
  %v873 = vunpack.c.l.b16 %v123
  %v874 = vunpack.c.h.b16 %v123
  %v875 = vunpack.c.l.b16 %v124
  %v876 = vunpack.c.h.b16 %v124
  %v877 = vunpack.c.l.b16 %v125
  %v878 = vunpack.c.h.b16 %v125
  %v879 = vunpack.c.l.b16 %v126
  %v880 = vunpack.c.h.b16 %v126
  %v881 = vunpack.c.l.b16 %v127
  %v882 = vunpack.c.h.b16 %v127
  %v883 = vunpack.c.l.b16 %v128
  %v884 = vunpack.c.h.b16 %v128
  %v885 = vunpack.c.l.b16 %v129
  %v886 = vunpack.c.h.b16 %v129
  %v887 = vunpack.c.l.b16 %v130
  %v888 = vunpack.c.h.b16 %v130
  %v889 = vunpack.c.l.b16 %v131
  %v890 = vunpack.c.h.b16 %v131
  %v891 = vunpack.c.l.b16 %v132
  %v892 = vunpack.c.h.b16 %v132
  %v893 = vunpack.c.l.b16 %v133
  %v894 = vunpack.c.h.b16 %v133
  %v895 = vunpack.c.l.b16 %v134
  %v896 = vunpack.c.h.b16 %v134
  %v897 = vunpack.c.l.b16 %v135
  %v898 = vunpack.c.h.b16 %v135
  %v899 = vunpack.c.l.b16 %v136
  %v900 = vunpack.c.h.b16 %v136
  %v901 = vunpack.c.l.b16 %v137
  %v902 = vunpack.c.h.b16 %v137
  %v903 = vunpack.c.l.b16 %v138
  %v904 = vunpack.c.h.b16 %v138
  %v905 = vunpack.c.l.b16 %v139
  %v906 = vunpack.c.h.b16 %v139
  %v907 = vunpack.c.l.b16 %v140
  %v908 = vunpack.c.h.b16 %v140
  %v909 = vunpack.c.l.b16 %v141
  %v910 = vunpack.c.h.b16 %v141
  %v911 = vunpack.c.l.b16 %v142
  %v912 = vunpack.c.h.b16 %v142
  %v913 = vunpack.c.l.b16 %v143
  %v914 = vunpack.c.h.b16 %v143
  %v915 = vunpack.c.l.b16 %v144
  %v916 = vunpack.c.h.b16 %v144
  %v917 = vunpack.c.l.b16 %v145
  %v918 = vunpack.c.h.b16 %v145
  %v919 = vunpack.c.l.b16 %v146
  %v920 = vunpack.c.h.b16 %v146
  %v921 = vunpack.c.l.b16 %v147
  %v922 = vunpack.c.h.b16 %v147
  %v923 = vunpack.c.l.b16 %v148
  %v924 = vunpack.c.h.b16 %v148
  %v925 = vunpack.c.l.b16 %v149
  %v926 = vunpack.c.h.b16 %v149
  %v927 = vunpack.c.l.b16 %v150
  %v928 = vunpack.c.h.b16 %v150
  %v929 = vunpack.c.l.b16 %v151
  %v930 = vunpack.c.h.b16 %v151
  %v931 = vunpack.c.l.b16 %v152
  %v932 = vunpack.c.h.b16 %v152
  %v933 = vunpack.c.l.b16 %v153
  %v934 = vunpack.c.h.b16 %v153
  %v935 = vunpack.c.l.b16 %v154
  %v936 = vunpack.c.h.b16 %v154
  %v937 = vunpack.c.l.b16 %v155
  %v938 = vunpack.c.h.b16 %v155
  %v939 = vunpack.c.l.b16 %v156
  %v940 = vunpack.c.h.b16 %v156
  %v941 = vunpack.c.l.b16 %v157
  %v942 = vunpack.c.h.b16 %v157
  %v943 = vunpack.c.l.b16 %v158
  %v944 = vunpack.c.h.b16 %v158
  %v945 = vunpack.c.l.b16 %v159
  %v946 = vunpack.c.h.b16 %v159
  %v947 = vunpack.c.l.b16 %v160
  %v948 = vunpack.c.h.b16 %v160
  %v949 = vunpack.c.l.b16 %v161
  %v950 = vunpack.c.h.b16 %v161
  %v951 = vunpack.c.l.b16 %v162
  %v952 = vunpack.c.h.b16 %v162
  %v953 = vunpack.c.l.b16 %v163
  %v954 = vunpack.c.h.b16 %v163
  %v955 = vunpack.c.l.b16 %v164
  %v956 = vunpack.c.h.b16 %v164
  %v957 = vunpack.c.l.b16 %v165
  %v958 = vunpack.c.h.b16 %v165
  %v959 = vunpack.c.l.b16 %v166
  %v960 = vunpack.c.h.b16 %v166
  %v961 = vunpack.c.l.b16 %v167
  %v962 = vunpack.c.h.b16 %v167
  %v963 = vunpack.c.l.b16 %v168
  %v964 = vunpack.c.h.b16 %v168
  %v965 = vunpack.c.l.b16 %v169
  %v966 = vunpack.c.h.b16 %v169
  %v967 = vunpack.c.l.b16 %v170
  %v968 = vunpack.c.h.b16 %v170
  %v969 = vunpack.c.l.b16 %v171
  %v970 = vunpack.c.h.b16 %v171
  %v971 = vunpack.c.l.b16 %v172
  %v972 = vunpack.c.h.b16 %v172
  %v973 = vunpack.c.l.b16 %v173
  %v974 = vunpack.c.h.b16 %v173
  %v975 = vunpack.c.l.b16 %v174
  %v976 = vunpack.c.h.b16 %v174
  %v977 = vunpack.c.l.b16 %v175
  %v978 = vunpack.c.h.b16 %v175
  %v979 = vunpack.c.l.b16 %v176
  %v980 = vunpack.c.h.b16 %v176
  %v981 = vunpack.c.l.b16 %v177
  %v982 = vunpack.c.h.b16 %v177
  %v983 = vunpack.c.l.b16 %v178
  %v984 = vunpack.c.h.b16 %v178
  %v985 = vunpack.c.l.b16 %v179
  %v986 = vunpack.c.h.b16 %v179
  %v987 = vunpack.c.l.b16 %v180
  %v988 = vunpack.c.h.b16 %v180
  %v989 = vunpack.c.l.b16 %v181
  %v990 = vunpack.c.h.b16 %v181
  %v991 = vunpack.c.l.b16 %v182
  %v992 = vunpack.c.h.b16 %v182
  %v993 = vunpack.c.l.b16 %v183
  %v994 = vunpack.c.h.b16 %v183
  %v995 = vunpack.c.l.b16 %v184
  %v996 = vunpack.c.h.b16 %v184
  %v997 = vunpack.c.l.b16 %v185
  %v998 = vunpack.c.h.b16 %v185
  %v999 = vunpack.c.l.b16 %v186
  %v1000 = vunpack.c.h.b16 %v186
  %v1001 = vunpack.c.l.b16 %v187
  %v1002 = vunpack.c.h.b16 %v187
  %v1003 = vunpack.c.l.b16 %v188
  %v1004 = vunpack.c.h.b16 %v188
  %v1005 = vunpack.c.l.b16 %v189
  %v1006 = vunpack.c.h.b16 %v189
  %v1007 = vunpack.c.l.b16 %v190
  %v1008 = vunpack.c.h.b16 %v190
  %v1009 = vunpack.c.l.b16 %v191
  %v1010 = vunpack.c.h.b16 %v191
  %v1011 = vunpack.c.l.b16 %v192
  %v1012 = vunpack.c.h.b16 %v192
  %v1013 = vunpack.c.l.b16 %v193
  %v1014 = vunpack.c.h.b16 %v193
  %v1015 = vunpack.c.l.b16 %v194
  %v1016 = vunpack.c.h.b16 %v194
  %v1017 = vunpack.c.l.b16 %v195
  %v1018 = vunpack.c.h.b16 %v195
  %v1019 = vunpack.c.l.b16 %v196
  %v1020 = vunpack.c.h.b16 %v196
  %v1021 = vunpack.c.l.b16 %v197
  %v1022 = vunpack.c.h.b16 %v197
  %v1023 = vunpack.c.l.b16 %v198
  %v1024 = vunpack.c.h.b16 %v198
  %v1025 = vunpack.c.l.b16 %v199
  %v1026 = vunpack.c.h.b16 %v199
  %v1027 = vunpack.c.l.b16 %v200
  %v1028 = vunpack.c.h.b16 %v200
  %v1029 = vunpack.c.l.b16 %v201
  %v1030 = vunpack.c.h.b16 %v201
  %v1031 = vunpack.c.l.b16 %v202
  %v1032 = vunpack.c.h.b16 %v202
  %v1033 = vunpack.c.l.b16 %v203
  %v1034 = vunpack.c.h.b16 %v203
  %v1035 = vunpack.c.l.b16 %v204
  %v1036 = vunpack.c.h.b16 %v204
  %v1037 = vunpack.c.l.b16 %v205
  %v1038 = vunpack.c.h.b16 %v205
  %v1039 = vunpack.c.l.b16 %v206
  %v1040 = vunpack.c.h.b16 %v206
  %v1041 = vunpack.c.l.b16 %v207
  %v1042 = vunpack.c.h.b16 %v207
  %v1043 = vunpack.c.l.b16 %v208
  %v1044 = vunpack.c.h.b16 %v208
  %v1045 = vunpack.c.l.b16 %v209
  %v1046 = vunpack.c.h.b16 %v209
  %v1047 = vunpack.c.l.b16 %v210
  %v1048 = vunpack.c.h.b16 %v210
  %v1049 = vunpack.c.l.b16 %v211
  %v1050 = vunpack.c.h.b16 %v211
  %v1051 = vunpack.c.l.b16 %v212
  %v1052 = vunpack.c.h.b16 %v212
  %v1053 = vunpack.c.l.b16 %v213
  %v1054 = vunpack.c.h.b16 %v213
  %v1055 = vunpack.c.l.b16 %v214
  %v1056 = vunpack.c.h.b16 %v214
  %v1057 = vunpack.c.l.b16 %v215
  %v1058 = vunpack.c.h.b16 %v215
  %v1059 = vunpack.c.l.b16 %v216
  %v1060 = vunpack.c.h.b16 %v216
  %v1061 = vunpack.c.l.b16 %v217
  %v1062 = vunpack.c.h.b16 %v217
  %v1063 = vunpack.c.l.b16 %v218
  %v1064 = vunpack.c.h.b16 %v218
  %v1065 = vunpack.c.l.b16 %v219
  %v1066 = vunpack.c.h.b16 %v219
  %v1067 = vunpack.c.l.b16 %v220
  %v1068 = vunpack.c.h.b16 %v220
  %v1069 = vunpack.c.l.b16 %v221
  %v1070 = vunpack.c.h.b16 %v221
  %v1071 = vunpack.c.l.b16 %v222
  %v1072 = vunpack.c.h.b16 %v222
  %v1073 = vunpack.c.l.b16 %v223
  %v1074 = vunpack.c.h.b16 %v223
  %v1075 = vunpack.c.l.b16 %v224
  %v1076 = vunpack.c.h.b16 %v224
  %v1077 = vunpack.c.l.b16 %v225
  %v1078 = vunpack.c.h.b16 %v225
  %v1079 = vunpack.c.l.b16 %v226
  %v1080 = vunpack.c.h.b16 %v226
  %v1081 = vunpack.c.l.b16 %v227
  %v1082 = vunpack.c.h.b16 %v227
  %v1083 = vunpack.c.l.b16 %v228
  %v1084 = vunpack.c.h.b16 %v228
  %v1085 = vunpack.c.l.b16 %v229
  %v1086 = vunpack.c.h.b16 %v229
  %v1087 = vunpack.c.l.b16 %v230
  %v1088 = vunpack.c.h.b16 %v230
  %v1089 = vunpack.c.l.b16 %v231
  %v1090 = vunpack.c.h.b16 %v231
  %v1091 = vunpack.c.l.b16 %v232
  %v1092 = vunpack.c.h.b16 %v232
  %v1093 = vunpack.c.l.b16 %v233
  %v1094 = vunpack.c.h.b16 %v233
  %v1095 = vunpack.c.l.b16 %v234
  %v1096 = vunpack.c.h.b16 %v234
  %v1097 = vunpack.c.l.b16 %v235
  %v1098 = vunpack.c.h.b16 %v235
  %v1099 = vunpack.c.l.b16 %v236
  %v1100 = vunpack.c.h.b16 %v236
  %v1101 = vunpack.c.l.b16 %v237
  %v1102 = vunpack.c.h.b16 %v237
  %v1103 = vunpack.c.l.b16 %v238
  %v1104 = vunpack.c.h.b16 %v238
  %v1105 = vunpack.c.l.b16 %v239
  %v1106 = vunpack.c.h.b16 %v239
  %v1107 = vunpack.c.l.b16 %v240
  %v1108 = vunpack.c.h.b16 %v240
  %v1109 = vunpack.c.l.b16 %v241
  %v1110 = vunpack.c.h.b16 %v241
  %v1111 = vunpack.c.l.b16 %v242
  %v1112 = vunpack.c.h.b16 %v242
  %v1113 = vunpack.c.l.b16 %v243
  %v1114 = vunpack.c.h.b16 %v243
  %v1115 = vunpack.c.l.b16 %v244
  %v1116 = vunpack.c.h.b16 %v244
  %v1117 = vunpack.c.l.b16 %v245
  %v1118 = vunpack.c.h.b16 %v245
  %v1119 = vunpack.c.l.b16 %v246
  %v1120 = vunpack.c.h.b16 %v246
  %v1121 = vunpack.c.l.b16 %v247
  %v1122 = vunpack.c.h.b16 %v247
  %v1123 = vunpack.c.l.b16 %v248
  %v1124 = vunpack.c.h.b16 %v248
  %v1125 = vunpack.c.l.b16 %v249
  %v1126 = vunpack.c.h.b16 %v249
  %v1127 = vunpack.c.l.b16 %v250
  %v1128 = vunpack.c.h.b16 %v250
  %v1129 = vunpack.c.l.b16 %v251
  %v1130 = vunpack.c.h.b16 %v251
  %v1131 = vunpack.c.l.b16 %v252
  %v1132 = vunpack.c.h.b16 %v252
  %v1133 = vunpack.c.l.b16 %v253
  %v1134 = vunpack.c.h.b16 %v253
  %v1135 = vunpack.c.l.b16 %v254
  %v1136 = vunpack.c.h.b16 %v254
  %v1137 = vunpack.c.l.b16 %v255
  %v1138 = vunpack.c.h.b16 %v255
  %v1139 = vunpack.c.l.b16 %v256
  %v1140 = vunpack.c.h.b16 %v256
  %v1141 = vunpack.c.l.b16 %v257
  %v1142 = vunpack.c.h.b16 %v257
  %v1143 = vunpack.c.l.b16 %v258
  %v1144 = vunpack.c.h.b16 %v258
  %v1145 = vunpack.c.l.b16 %v259
  %v1146 = vunpack.c.h.b16 %v259
  %v1147 = vunpack.c.l.b16 %v260
  %v1148 = vunpack.c.h.b16 %v260
  %v1149 = vunpack.c.l.b16 %v261
  %v1150 = vunpack.c.h.b16 %v261
  %v1151 = vunpack.c.l.b16 %v262
  %v1152 = vunpack.c.h.b16 %v262
  %v1153 = vunpack.c.l.b16 %v263
  %v1154 = vunpack.c.h.b16 %v263
  %v1155 = vunpack.c.l.b16 %v264
  %v1156 = vunpack.c.h.b16 %v264
  %v1157 = vunpack.c.l.b16 %v265
  %v1158 = vunpack.c.h.b16 %v265
  %v1159 = vunpack.c.l.b16 %v266
  %v1160 = vunpack.c.h.b16 %v266
  %v1161 = vunpack.c.l.b16 %v267
  %v1162 = vunpack.c.h.b16 %v267
  %v1163 = vunpack.c.l.b16 %v268
  %v1164 = vunpack.c.h.b16 %v268
  %v1165 = vunpack.c.l.b16 %v269
  %v1166 = vunpack.c.h.b16 %v269
  %v1167 = vunpack.c.l.b16 %v270
  %v1168 = vunpack.c.h.b16 %v270
  %v1169 = vunpack.c.l.b16 %v271
  %v1170 = vunpack.c.h.b16 %v271
  %v1171 = vunpack.c.l.b16 %v272
  %v1172 = vunpack.c.h.b16 %v272
  %v1173 = vunpack.c.l.b16 %v273
  %v1174 = vunpack.c.h.b16 %v273
  %v1175 = vunpack.c.l.b16 %v274
  %v1176 = vunpack.c.h.b16 %v274
  %v1177 = vunpack.c.l.b16 %v275
  %v1178 = vunpack.c.h.b16 %v275
  %v1179 = vunpack.c.l.b16 %v276
  %v1180 = vunpack.c.h.b16 %v276
  %v1181 = vunpack.c.l.b16 %v277
  %v1182 = vunpack.c.h.b16 %v277
  %v1183 = vunpack.c.l.b16 %v278
  %v1184 = vunpack.c.h.b16 %v278
  %v1185 = vunpack.c.l.b16 %v279
  %v1186 = vunpack.c.h.b16 %v279
  %v1187 = vunpack.c.l.b16 %v280
  %v1188 = vunpack.c.h.b16 %v280
  %v1189 = vunpack.c.l.b16 %v281
  %v1190 = vunpack.c.h.b16 %v281
  %v1191 = vunpack.c.l.b16 %v282
  %v1192 = vunpack.c.h.b16 %v282
  %v1193 = vunpack.c.l.b16 %v283
  %v1194 = vunpack.c.h.b16 %v283
  %v1195 = vunpack.c.l.b16 %v284
  %v1196 = vunpack.c.h.b16 %v284
  %v1197 = vunpack.c.l.b16 %v285
  %v1198 = vunpack.c.h.b16 %v285
  %v1199 = vunpack.c.l.b16 %v286
  %v1200 = vunpack.c.h.b16 %v286
  %v1201 = vunpack.c.l.b16 %v287
  %v1202 = vunpack.c.h.b16 %v287
  %v1203 = vunpack.c.l.b16 %v288
  %v1204 = vunpack.c.h.b16 %v288
  %v1205 = vunpack.c.l.b16 %v289
  %v1206 = vunpack.c.h.b16 %v289
  %v1207 = vunpack.c.l.b16 %v290
  %v1208 = vunpack.c.h.b16 %v290
  %v1209 = vunpack.c.l.b16 %v291
  %v1210 = vunpack.c.h.b16 %v291
  %v1211 = vunpack.c.l.b16 %v292
  %v1212 = vunpack.c.h.b16 %v292
  %v1213 = vunpack.c.l.b16 %v293
  %v1214 = vunpack.c.h.b16 %v293
  %v1215 = vunpack.c.l.b16 %v294
  %v1216 = vunpack.c.h.b16 %v294
  %v1217 = vunpack.c.l.b16 %v295
  %v1218 = vunpack.c.h.b16 %v295
  %v1219 = vunpack.c.l.b16 %v296
  %v1220 = vunpack.c.h.b16 %v296
  %v1221 = vunpack.c.l.b16 %v297
  %v1222 = vunpack.c.h.b16 %v297
  %v1223 = vunpack.c.l.b16 %v298
  %v1224 = vunpack.c.h.b16 %v298
  %v1225 = vunpack.c.l.b16 %v299
  %v1226 = vunpack.c.h.b16 %v299
  %v1227 = vunpack.c.l.b16 %v300
  %v1228 = vunpack.c.h.b16 %v300
  %v1229 = vpack.c.b16 %v719, %v717
  %v1230 = vpack.c.b16 %v720, %v718
  %v1231 = vpack.c.b16 %v723, %v721
  %v1232 = vpack.c.b16 %v724, %v722
  %v1233 = vpack.c.b16 %v727, %v725
  %v1234 = vpack.c.b16 %v728, %v726
  %v1235 = vpack.c.b16 %v731, %v729
  %v1236 = vpack.c.b16 %v732, %v730
  %v1237 = vpack.c.b16 %v735, %v733
  %v1238 = vpack.c.b16 %v736, %v734
  %v1239 = vpack.c.b16 %v739, %v737
  %v1240 = vpack.c.b16 %v740, %v738
  %v1241 = vpack.c.b16 %v743, %v741
  %v1242 = vpack.c.b16 %v744, %v742
  %v1243 = vpack.c.b16 %v747, %v745
  %v1244 = vpack.c.b16 %v748, %v746
  %v1245 = vpack.c.b16 %v751, %v749
  %v1246 = vpack.c.b16 %v752, %v750
  %v1247 = vpack.c.b16 %v755, %v753
  %v1248 = vpack.c.b16 %v756, %v754
  %v1249 = vpack.c.b16 %v759, %v757
  %v1250 = vpack.c.b16 %v760, %v758
  %v1251 = vpack.c.b16 %v763, %v761
  %v1252 = vpack.c.b16 %v764, %v762
  %v1253 = vpack.c.b16 %v767, %v765
  %v1254 = vpack.c.b16 %v768, %v766
  %v1255 = vpack.c.b16 %v771, %v769
  %v1256 = vpack.c.b16 %v772, %v770
  %v1257 = vpack.c.b16 %v775, %v773
  %v1258 = vpack.c.b16 %v776, %v774
  %v1259 = vpack.c.b16 %v779, %v777
  %v1260 = vpack.c.b16 %v780, %v778
  %v1261 = vpack.c.b16 %v783, %v781
  %v1262 = vpack.c.b16 %v784, %v782
  %v1263 = vpack.c.b16 %v787, %v785
  %v1264 = vpack.c.b16 %v788, %v786
  %v1265 = vpack.c.b16 %v791, %v789
  %v1266 = vpack.c.b16 %v792, %v790
  %v1267 = vpack.c.b16 %v795, %v793
  %v1268 = vpack.c.b16 %v796, %v794
  %v1269 = vpack.c.b16 %v799, %v797
  %v1270 = vpack.c.b16 %v800, %v798
  %v1271 = vpack.c.b16 %v803, %v801
  %v1272 = vpack.c.b16 %v804, %v802
  %v1273 = vpack.c.b16 %v807, %v805
  %v1274 = vpack.c.b16 %v808, %v806
  %v1275 = vpack.c.b16 %v811, %v809
  %v1276 = vpack.c.b16 %v812, %v810
  %v1277 = vpack.c.b16 %v815, %v813
  %v1278 = vpack.c.b16 %v816, %v814
  %v1279 = vpack.c.b16 %v819, %v817
  %v1280 = vpack.c.b16 %v820, %v818
  %v1281 = vpack.c.b16 %v823, %v821
  %v1282 = vpack.c.b16 %v824, %v822
  %v1283 = vpack.c.b16 %v827, %v825
  %v1284 = vpack.c.b16 %v828, %v826
  %v1285 = vpack.c.b16 %v831, %v829
  %v1286 = vpack.c.b16 %v832, %v830
  %v1287 = vpack.c.b16 %v835, %v833
  %v1288 = vpack.c.b16 %v836, %v834
  %v1289 = vpack.c.b16 %v839, %v837
  %v1290 = vpack.c.b16 %v840, %v838
  %v1291 = vpack.c.b16 %v843, %v841
  %v1292 = vpack.c.b16 %v844, %v842
  %v1293 = vpack.c.b16 %v847, %v845
  %v1294 = vpack.c.b16 %v848, %v846
  %v1295 = vpack.c.b16 %v851, %v849
  %v1296 = vpack.c.b16 %v852, %v850
  %v1297 = vpack.c.b16 %v855, %v853
  %v1298 = vpack.c.b16 %v856, %v854
  %v1299 = vpack.c.b16 %v859, %v857
  %v1300 = vpack.c.b16 %v860, %v858
  %v1301 = vpack.c.b16 %v863, %v861
  %v1302 = vpack.c.b16 %v864, %v862
  %v1303 = vpack.c.b16 %v867, %v865
  %v1304 = vpack.c.b16 %v868, %v866
  %v1305 = vpack.c.b16 %v871, %v869
  %v1306 = vpack.c.b16 %v872, %v870
  %v1307 = vpack.c.b16 %v875, %v873
  %v1308 = vpack.c.b16 %v876, %v874
  %v1309 = vpack.c.b16 %v879, %v877
  %v1310 = vpack.c.b16 %v880, %v878
  %v1311 = vpack.c.b16 %v883, %v881
  %v1312 = vpack.c.b16 %v884, %v882
  %v1313 = vpack.c.b16 %v887, %v885
  %v1314 = vpack.c.b16 %v888, %v886
  %v1315 = vpack.c.b16 %v891, %v889
  %v1316 = vpack.c.b16 %v892, %v890
  %v1317 = vpack.c.b16 %v895, %v893
  %v1318 = vpack.c.b16 %v896, %v894
  %v1319 = vpack.c.b16 %v899, %v897
  %v1320 = vpack.c.b16 %v900, %v898
  %v1321 = vpack.c.b16 %v903, %v901
  %v1322 = vpack.c.b16 %v904, %v902
  %v1323 = vpack.c.b16 %v907, %v905
  %v1324 = vpack.c.b16 %v908, %v906
  %v1325 = vpack.c.b16 %v911, %v909
  %v1326 = vpack.c.b16 %v912, %v910
  %v1327 = vpack.c.b16 %v915, %v913
  %v1328 = vpack.c.b16 %v916, %v914
  %v1329 = vpack.c.b16 %v919, %v917
  %v1330 = vpack.c.b16 %v920, %v918
  %v1331 = vpack.c.b16 %v923, %v921
  %v1332 = vpack.c.b16 %v924, %v922
  %v1333 = vpack.c.b16 %v927, %v925
  %v1334 = vpack.c.b16 %v928, %v926
  %v1335 = vpack.c.b16 %v931, %v929
  %v1336 = vpack.c.b16 %v932, %v930
  %v1337 = vpack.c.b16 %v935, %v933
  %v1338 = vpack.c.b16 %v936, %v934
  %v1339 = vpack.c.b16 %v939, %v937
  %v1340 = vpack.c.b16 %v940, %v938
  %v1341 = vpack.c.b16 %v943, %v941
  %v1342 = vpack.c.b16 %v944, %v942
  %v1343 = vpack.c.b16 %v947, %v945
  %v1344 = vpack.c.b16 %v948, %v946
  %v1345 = vpack.c.b16 %v951, %v949
  %v1346 = vpack.c.b16 %v952, %v950
  %v1347 = vpack.c.b16 %v955, %v953
  %v1348 = vpack.c.b16 %v956, %v954
  %v1349 = vpack.c.b16 %v959, %v957
  %v1350 = vpack.c.b16 %v960, %v958
  %v1351 = vpack.c.b16 %v963, %v961
  %v1352 = vpack.c.b16 %v964, %v962
  %v1353 = vpack.c.b16 %v967, %v965
  %v1354 = vpack.c.b16 %v968, %v966
  %v1355 = vpack.c.b16 %v971, %v969
  %v1356 = vpack.c.b16 %v972, %v970
  %v1357 = vpack.c.b16 %v975, %v973
  %v1358 = vpack.c.b16 %v976, %v974
  %v1359 = vpack.c.b16 %v979, %v977
  %v1360 = vpack.c.b16 %v980, %v978
  %v1361 = vpack.c.b16 %v983, %v981
  %v1362 = vpack.c.b16 %v984, %v982
  %v1363 = vpack.c.b16 %v987, %v985
  %v1364 = vpack.c.b16 %v988, %v986
  %v1365 = vpack.c.b16 %v991, %v989
  %v1366 = vpack.c.b16 %v992, %v990
  %v1367 = vpack.c.b16 %v995, %v993
  %v1368 = vpack.c.b16 %v996, %v994
  %v1369 = vpack.c.b16 %v999, %v997
  %v1370 = vpack.c.b16 %v1000, %v998
  %v1371 = vpack.c.b16 %v1003, %v1001
  %v1372 = vpack.c.b16 %v1004, %v1002
  %v1373 = vpack.c.b16 %v1007, %v1005
  %v1374 = vpack.c.b16 %v1008, %v1006
  %v1375 = vpack.c.b16 %v1011, %v1009
  %v1376 = vpack.c.b16 %v1012, %v1010
  %v1377 = vpack.c.b16 %v1015, %v1013
  %v1378 = vpack.c.b16 %v1016, %v1014
  %v1379 = vpack.c.b16 %v1019, %v1017
  %v1380 = vpack.c.b16 %v1020, %v1018
  %v1381 = vpack.c.b16 %v1023, %v1021
  %v1382 = vpack.c.b16 %v1024, %v1022
  %v1383 = vpack.c.b16 %v1027, %v1025
  %v1384 = vpack.c.b16 %v1028, %v1026
  %v1385 = vpack.c.b16 %v1031, %v1029
  %v1386 = vpack.c.b16 %v1032, %v1030
  %v1387 = vpack.c.b16 %v1035, %v1033
  %v1388 = vpack.c.b16 %v1036, %v1034
  %v1389 = vpack.c.b16 %v1039, %v1037
  %v1390 = vpack.c.b16 %v1040, %v1038
  %v1391 = vpack.c.b16 %v1043, %v1041
  %v1392 = vpack.c.b16 %v1044, %v1042
  %v1393 = vpack.c.b16 %v1047, %v1045
  %v1394 = vpack.c.b16 %v1048, %v1046
  %v1395 = vpack.c.b16 %v1051, %v1049
  %v1396 = vpack.c.b16 %v1052, %v1050
  %v1397 = vpack.c.b16 %v1055, %v1053
  %v1398 = vpack.c.b16 %v1056, %v1054
  %v1399 = vpack.c.b16 %v1059, %v1057
  %v1400 = vpack.c.b16 %v1060, %v1058
  %v1401 = vpack.c.b16 %v1063, %v1061
  %v1402 = vpack.c.b16 %v1064, %v1062
  %v1403 = vpack.c.b16 %v1067, %v1065
  %v1404 = vpack.c.b16 %v1068, %v1066
  %v1405 = vpack.c.b16 %v1071, %v1069
  %v1406 = vpack.c.b16 %v1072, %v1070
  %v1407 = vpack.c.b16 %v1075, %v1073
  %v1408 = vpack.c.b16 %v1076, %v1074
  %v1409 = vpack.c.b16 %v1079, %v1077
  %v1410 = vpack.c.b16 %v1080, %v1078
  %v1411 = vpack.c.b16 %v1083, %v1081
  %v1412 = vpack.c.b16 %v1084, %v1082
  %v1413 = vpack.c.b16 %v1087, %v1085
  %v1414 = vpack.c.b16 %v1088, %v1086
  %v1415 = vpack.c.b16 %v1091, %v1089
  %v1416 = vpack.c.b16 %v1092, %v1090
  %v1417 = vpack.c.b16 %v1095, %v1093
  %v1418 = vpack.c.b16 %v1096, %v1094
  %v1419 = vpack.c.b16 %v1099, %v1097
  %v1420 = vpack.c.b16 %v1100, %v1098
  %v1421 = vpack.c.b16 %v1103, %v1101
  %v1422 = vpack.c.b16 %v1104, %v1102
  %v1423 = vpack.c.b16 %v1107, %v1105
  %v1424 = vpack.c.b16 %v1108, %v1106
  %v1425 = vpack.c.b16 %v1111, %v1109
  %v1426 = vpack.c.b16 %v1112, %v1110
  %v1427 = vpack.c.b16 %v1115, %v1113
  %v1428 = vpack.c.b16 %v1116, %v1114
  %v1429 = vpack.c.b16 %v1119, %v1117
  %v1430 = vpack.c.b16 %v1120, %v1118
  %v1431 = vpack.c.b16 %v1123, %v1121
  %v1432 = vpack.c.b16 %v1124, %v1122
  %v1433 = vpack.c.b16 %v1127, %v1125
  %v1434 = vpack.c.b16 %v1128, %v1126
  %v1435 = vpack.c.b16 %v1131, %v1129
  %v1436 = vpack.c.b16 %v1132, %v1130
  %v1437 = vpack.c.b16 %v1135, %v1133
  %v1438 = vpack.c.b16 %v1136, %v1134
  %v1439 = vpack.c.b16 %v1139, %v1137
  %v1440 = vpack.c.b16 %v1140, %v1138
  %v1441 = vpack.c.b16 %v1143, %v1141
  %v1442 = vpack.c.b16 %v1144, %v1142
  %v1443 = vpack.c.b16 %v1147, %v1145
  %v1444 = vpack.c.b16 %v1148, %v1146
  %v1445 = vpack.c.b16 %v1151, %v1149
  %v1446 = vpack.c.b16 %v1152, %v1150
  %v1447 = vpack.c.b16 %v1155, %v1153
  %v1448 = vpack.c.b16 %v1156, %v1154
  %v1449 = vpack.c.b16 %v1159, %v1157
  %v1450 = vpack.c.b16 %v1160, %v1158
  %v1451 = vpack.c.b16 %v1163, %v1161
  %v1452 = vpack.c.b16 %v1164, %v1162
  %v1453 = vpack.c.b16 %v1167, %v1165
  %v1454 = vpack.c.b16 %v1168, %v1166
  %v1455 = vpack.c.b16 %v1171, %v1169
  %v1456 = vpack.c.b16 %v1172, %v1170
  %v1457 = vpack.c.b16 %v1175, %v1173
  %v1458 = vpack.c.b16 %v1176, %v1174
  %v1459 = vpack.c.b16 %v1179, %v1177
  %v1460 = vpack.c.b16 %v1180, %v1178
  %v1461 = vpack.c.b16 %v1183, %v1181
  %v1462 = vpack.c.b16 %v1184, %v1182
  %v1463 = vpack.c.b16 %v1187, %v1185
  %v1464 = vpack.c.b16 %v1188, %v1186
  %v1465 = vpack.c.b16 %v1191, %v1189
  %v1466 = vpack.c.b16 %v1192, %v1190
  %v1467 = vpack.c.b16 %v1195, %v1193
  %v1468 = vpack.c.b16 %v1196, %v1194
  %v1469 = vpack.c.b16 %v1199, %v1197
  %v1470 = vpack.c.b16 %v1200, %v1198
  %v1471 = vpack.c.b16 %v1203, %v1201
  %v1472 = vpack.c.b16 %v1204, %v1202
  %v1473 = vpack.c.b16 %v1207, %v1205
  %v1474 = vpack.c.b16 %v1208, %v1206
  %v1475 = vpack.c.b16 %v1211, %v1209
  %v1476 = vpack.c.b16 %v1212, %v1210
  %v1477 = vpack.c.b16 %v1215, %v1213
  %v1478 = vpack.c.b16 %v1216, %v1214
  %v1479 = vpack.c.b16 %v1219, %v1217
  %v1480 = vpack.c.b16 %v1220, %v1218
  %v1481 = vpack.c.b16 %v1223, %v1221
  %v1482 = vpack.c.b16 %v1224, %v1222
  %v1483 = vpack.c.b16 %v1227, %v1225
  %v1484 = vpack.c.b16 %v1228, %v1226
  %1741 = vmatprep.subr.bf16.mxu0 %v1230
  %1742 = vmatpush1.bf16.msra.mxu0 %v1229
  %1743 = vmatprep.subr.bf16.mxu0 %v1232
  %1744 = vmatpush1.bf16.msra.mxu0 %v1231
  %1745 = vmatprep.subr.bf16.mxu0 %v1234
  %1746 = vmatpush1.bf16.msra.mxu0 %v1233
  %1747 = vmatprep.subr.bf16.mxu0 %v1236
  %1748 = vmatpush1.bf16.msra.mxu0 %v1235
  %1749 = vmatprep.subr.bf16.mxu0 %v1238
  %1750 = vmatpush1.bf16.msra.mxu0 %v1237
  %1751 = vmatprep.subr.bf16.mxu0 %v1240
  %1752 = vmatpush1.bf16.msra.mxu0 %v1239
  %1753 = vmatprep.subr.bf16.mxu0 %v1242
  %1754 = vmatpush1.bf16.msra.mxu0 %v1241
  %1755 = vmatprep.subr.bf16.mxu0 %v1244
  %1756 = vmatpush1.bf16.msra.mxu0 %v1243
  %1757 = vmatprep.subr.bf16.mxu0 %v1246
  %1758 = vmatpush1.bf16.msra.mxu0 %v1245
  %1759 = vmatprep.subr.bf16.mxu0 %v1248
  %1760 = vmatpush1.bf16.msra.mxu0 %v1247
  %1761 = vmatprep.subr.bf16.mxu0 %v1250
  %1762 = vmatpush1.bf16.msra.mxu0 %v1249
  %1763 = vmatprep.subr.bf16.mxu0 %v1252
  %1764 = vmatpush1.bf16.msra.mxu0 %v1251
  %1765 = vmatprep.subr.bf16.mxu0 %v1254
  %1766 = vmatpush1.bf16.msra.mxu0 %v1253
  %1767 = vmatprep.subr.bf16.mxu0 %v1256
  %1768 = vmatpush1.bf16.msra.mxu0 %v1255
  %1769 = vmatprep.subr.bf16.mxu0 %v1258
  %1770 = vmatpush1.bf16.msra.mxu0 %v1257
  %1771 = vmatprep.subr.bf16.mxu0 %v1260
  %1772 = vmatpush1.bf16.msra.mxu0 %v1259
  %1773 = vmatprep.mubr.bf16.mxu0 %v398
  %1774 = vmatmul.mubr.bf16.gmra.mrb[0].mxu0 %v397
  %v1775 = vpop.f32.mrb[0].mxu0
  %v1776 = vadd.f32 0.0, %v1775
  %v1777 = vpop.f32.mrb[0].mxu0
  %v1778 = vadd.f32 0.0, %v1777
  %v1779 = vpop.f32.mrb[0].mxu0
  %v1780 = vadd.f32 0.0, %v1779
  %v1781 = vpop.f32.mrb[0].mxu0
  %v1782 = vadd.f32 0.0, %v1781
  %1783 = vmatprep.mubr.bf16.mxu0 %v414
  %1784 = vmatmul.mubr.bf16.gmra.mrb[0].mxu0 %v413
  %v1785 = vpop.f32.mrb[0].mxu0
  %v1786 = vadd.f32 0.0, %v1785
  %v1787 = vpop.f32.mrb[0].mxu0
  %v1788 = vadd.f32 0.0, %v1787
  %v1789 = vpop.f32.mrb[0].mxu0
  %v1790 = vadd.f32 0.0, %v1789
  %v1791 = vpop.f32.mrb[0].mxu0
  %v1792 = vadd.f32 0.0, %v1791
  %1793 = vdwg.mxu0
  %1794 = vmatprep.subr.bf16.mxu0 %v1262
  %1795 = vmatpush1.bf16.msra.mxu0 %v1261
  %1796 = vmatprep.subr.bf16.mxu0 %v1264
  %1797 = vmatpush1.bf16.msra.mxu0 %v1263
  %1798 = vmatprep.subr.bf16.mxu0 %v1266
  %1799 = vmatpush1.bf16.msra.mxu0 %v1265
  %1800 = vmatprep.subr.bf16.mxu0 %v1268
  %1801 = vmatpush1.bf16.msra.mxu0 %v1267
  %1802 = vmatprep.subr.bf16.mxu0 %v1270
  %1803 = vmatpush1.bf16.msra.mxu0 %v1269
  %1804 = vmatprep.subr.bf16.mxu0 %v1272
  %1805 = vmatpush1.bf16.msra.mxu0 %v1271
  %1806 = vmatprep.subr.bf16.mxu0 %v1274
  %1807 = vmatpush1.bf16.msra.mxu0 %v1273
  %1808 = vmatprep.subr.bf16.mxu0 %v1276
  %1809 = vmatpush1.bf16.msra.mxu0 %v1275
  %1810 = vmatprep.subr.bf16.mxu0 %v1278
  %1811 = vmatpush1.bf16.msra.mxu0 %v1277
  %1812 = vmatprep.subr.bf16.mxu0 %v1280
  %1813 = vmatpush1.bf16.msra.mxu0 %v1279
  %1814 = vmatprep.subr.bf16.mxu0 %v1282
  %1815 = vmatpush1.bf16.msra.mxu0 %v1281
  %1816 = vmatprep.subr.bf16.mxu0 %v1284
  %1817 = vmatpush1.bf16.msra.mxu0 %v1283
  %1818 = vmatprep.subr.bf16.mxu0 %v1286
  %1819 = vmatpush1.bf16.msra.mxu0 %v1285
  %1820 = vmatprep.subr.bf16.mxu0 %v1288
  %1821 = vmatpush1.bf16.msra.mxu0 %v1287
  %1822 = vmatprep.subr.bf16.mxu0 %v1290
  %1823 = vmatpush1.bf16.msra.mxu0 %v1289
  %1824 = vmatprep.subr.bf16.mxu0 %v1292
  %1825 = vmatpush1.bf16.msra.mxu0 %v1291
  %1826 = vmatprep.mubr.bf16.mxu0 %v400
  %1827 = vmatmul.mubr.bf16.gmra.mrb[0].mxu0 %v399
  %v1828 = vpop.f32.mrb[0].mxu0
  %v1829 = vadd.f32 %v1776, %v1828
  %v1830 = vpop.f32.mrb[0].mxu0
  %v1831 = vadd.f32 %v1778, %v1830
  %v1832 = vpop.f32.mrb[0].mxu0
  %v1833 = vadd.f32 %v1780, %v1832
  %v1834 = vpop.f32.mrb[0].mxu0
  %v1835 = vadd.f32 %v1782, %v1834
  %1836 = vmatprep.mubr.bf16.mxu0 %v416
  %1837 = vmatmul.mubr.bf16.gmra.mrb[0].mxu0 %v415
  %v1838 = vpop.f32.mrb[0].mxu0
  %v1839 = vadd.f32 %v1786, %v1838
  %v1840 = vpop.f32.mrb[0].mxu0
  %v1841 = vadd.f32 %v1788, %v1840
  %v1842 = vpop.f32.mrb[0].mxu0
  %v1843 = vadd.f32 %v1790, %v1842
  %v1844 = vpop.f32.mrb[0].mxu0
  %v1845 = vadd.f32 %v1792, %v1844
  %1846 = vdwg.mxu0
  %1847 = vmatprep.subr.bf16.mxu0 %v1294
  %1848 = vmatpush1.bf16.msra.mxu0 %v1293
  %1849 = vmatprep.subr.bf16.mxu0 %v1296
  %1850 = vmatpush1.bf16.msra.mxu0 %v1295
  %1851 = vmatprep.subr.bf16.mxu0 %v1298
  %1852 = vmatpush1.bf16.msra.mxu0 %v1297
  %1853 = vmatprep.subr.bf16.mxu0 %v1300
  %1854 = vmatpush1.bf16.msra.mxu0 %v1299
  %1855 = vmatprep.subr.bf16.mxu0 %v1302
  %1856 = vmatpush1.bf16.msra.mxu0 %v1301
  %1857 = vmatprep.subr.bf16.mxu0 %v1304
  %1858 = vmatpush1.bf16.msra.mxu0 %v1303
  %1859 = vmatprep.subr.bf16.mxu0 %v1306
  %1860 = vmatpush1.bf16.msra.mxu0 %v1305
  %1861 = vmatprep.subr.bf16.mxu0 %v1308
  %1862 = vmatpush1.bf16.msra.mxu0 %v1307
  %1863 = vmatprep.subr.bf16.mxu0 %v1310
  %1864 = vmatpush1.bf16.msra.mxu0 %v1309
  %1865 = vmatprep.subr.bf16.mxu0 %v1312
  %1866 = vmatpush1.bf16.msra.mxu0 %v1311
  %1867 = vmatprep.subr.bf16.mxu0 %v1314
  %1868 = vmatpush1.bf16.msra.mxu0 %v1313
  %1869 = vmatprep.subr.bf16.mxu0 %v1316
  %1870 = vmatpush1.bf16.msra.mxu0 %v1315
  %1871 = vmatprep.subr.bf16.mxu0 %v1318
  %1872 = vmatpush1.bf16.msra.mxu0 %v1317
  %1873 = vmatprep.subr.bf16.mxu0 %v1320
  %1874 = vmatpush1.bf16.msra.mxu0 %v1319
  %1875 = vmatprep.subr.bf16.mxu0 %v1322
  %1876 = vmatpush1.bf16.msra.mxu0 %v1321
  %1877 = vmatprep.subr.bf16.mxu0 %v1324
  %1878 = vmatpush1.bf16.msra.mxu0 %v1323
  %1879 = vmatprep.mubr.bf16.mxu0 %v402
  %1880 = vmatmul.mubr.bf16.gmra.mrb[0].mxu0 %v401
  %v1881 = vpop.f32.mrb[0].mxu0
  %v1882 = vadd.f32 %v1829, %v1881
  %v1883 = vpop.f32.mrb[0].mxu0
  %v1884 = vadd.f32 %v1831, %v1883
  %v1885 = vpop.f32.mrb[0].mxu0
  %v1886 = vadd.f32 %v1833, %v1885
  %v1887 = vpop.f32.mrb[0].mxu0
  %v1888 = vadd.f32 %v1835, %v1887
  %1889 = vmatprep.mubr.bf16.mxu0 %v418
  %1890 = vmatmul.mubr.bf16.gmra.mrb[0].mxu0 %v417
  %v1891 = vpop.f32.mrb[0].mxu0
  %v1892 = vadd.f32 %v1839, %v1891
  %v1893 = vpop.f32.mrb[0].mxu0
  %v1894 = vadd.f32 %v1841, %v1893
  %v1895 = vpop.f32.mrb[0].mxu0
  %v1896 = vadd.f32 %v1843, %v1895
  %v1897 = vpop.f32.mrb[0].mxu0
  %v1898 = vadd.f32 %v1845, %v1897
  %1899 = vdwg.mxu0
  %1900 = vmatprep.subr.bf16.mxu0 %v1326
  %1901 = vmatpush1.bf16.msra.mxu0 %v1325
  %1902 = vmatprep.subr.bf16.mxu0 %v1328
  %1903 = vmatpush1.bf16.msra.mxu0 %v1327
  %1904 = vmatprep.subr.bf16.mxu0 %v1330
  %1905 = vmatpush1.bf16.msra.mxu0 %v1329
  %1906 = vmatprep.subr.bf16.mxu0 %v1332
  %1907 = vmatpush1.bf16.msra.mxu0 %v1331
  %1908 = vmatprep.subr.bf16.mxu0 %v1334
  %1909 = vmatpush1.bf16.msra.mxu0 %v1333
  %1910 = vmatprep.subr.bf16.mxu0 %v1336
  %1911 = vmatpush1.bf16.msra.mxu0 %v1335
  %1912 = vmatprep.subr.bf16.mxu0 %v1338
  %1913 = vmatpush1.bf16.msra.mxu0 %v1337
  %1914 = vmatprep.subr.bf16.mxu0 %v1340
  %1915 = vmatpush1.bf16.msra.mxu0 %v1339
  %1916 = vmatprep.subr.bf16.mxu0 %v1342
  %1917 = vmatpush1.bf16.msra.mxu0 %v1341
  %1918 = vmatprep.subr.bf16.mxu0 %v1344
  %1919 = vmatpush1.bf16.msra.mxu0 %v1343
  %1920 = vmatprep.subr.bf16.mxu0 %v1346
  %1921 = vmatpush1.bf16.msra.mxu0 %v1345
  %1922 = vmatprep.subr.bf16.mxu0 %v1348
  %1923 = vmatpush1.bf16.msra.mxu0 %v1347
  %1924 = vmatprep.subr.bf16.mxu0 %v1350
  %1925 = vmatpush1.bf16.msra.mxu0 %v1349
  %1926 = vmatprep.subr.bf16.mxu0 %v1352
  %1927 = vmatpush1.bf16.msra.mxu0 %v1351
  %1928 = vmatprep.subr.bf16.mxu0 %v1354
  %1929 = vmatpush1.bf16.msra.mxu0 %v1353
  %1930 = vmatprep.subr.bf16.mxu0 %v1356
  %1931 = vmatpush1.bf16.msra.mxu0 %v1355
  %1932 = vmatprep.mubr.bf16.mxu0 %v404
  %1933 = vmatmul.mubr.bf16.gmra.mrb[0].mxu0 %v403
  %v1934 = vpop.f32.mrb[0].mxu0
  %v1935 = vadd.f32 %v1882, %v1934
  %v1936 = vpop.f32.mrb[0].mxu0
  %v1937 = vadd.f32 %v1884, %v1936
  %v1938 = vpop.f32.mrb[0].mxu0
  %v1939 = vadd.f32 %v1886, %v1938
  %v1940 = vpop.f32.mrb[0].mxu0
  %v1941 = vadd.f32 %v1888, %v1940
  %1942 = vmatprep.mubr.bf16.mxu0 %v420
  %1943 = vmatmul.mubr.bf16.gmra.mrb[0].mxu0 %v419
  %v1944 = vpop.f32.mrb[0].mxu0
  %v1945 = vadd.f32 %v1892, %v1944
  %v1946 = vpop.f32.mrb[0].mxu0
  %v1947 = vadd.f32 %v1894, %v1946
  %v1948 = vpop.f32.mrb[0].mxu0
  %v1949 = vadd.f32 %v1896, %v1948
  %v1950 = vpop.f32.mrb[0].mxu0
  %v1951 = vadd.f32 %v1898, %v1950
  %1952 = vdwg.mxu0
  %1953 = vmatprep.subr.bf16.mxu0 %v1358
  %1954 = vmatpush1.bf16.msra.mxu0 %v1357
  %1955 = vmatprep.subr.bf16.mxu0 %v1360
  %1956 = vmatpush1.bf16.msra.mxu0 %v1359
  %1957 = vmatprep.subr.bf16.mxu0 %v1362
  %1958 = vmatpush1.bf16.msra.mxu0 %v1361
  %1959 = vmatprep.subr.bf16.mxu0 %v1364
  %1960 = vmatpush1.bf16.msra.mxu0 %v1363
  %1961 = vmatprep.subr.bf16.mxu0 %v1366
  %1962 = vmatpush1.bf16.msra.mxu0 %v1365
  %1963 = vmatprep.subr.bf16.mxu0 %v1368
  %1964 = vmatpush1.bf16.msra.mxu0 %v1367
  %1965 = vmatprep.subr.bf16.mxu0 %v1370
  %1966 = vmatpush1.bf16.msra.mxu0 %v1369
  %1967 = vmatprep.subr.bf16.mxu0 %v1372
  %1968 = vmatpush1.bf16.msra.mxu0 %v1371
  %1969 = vmatprep.subr.bf16.mxu0 %v1374
  %1970 = vmatpush1.bf16.msra.mxu0 %v1373
  %1971 = vmatprep.subr.bf16.mxu0 %v1376
  %1972 = vmatpush1.bf16.msra.mxu0 %v1375
  %1973 = vmatprep.subr.bf16.mxu0 %v1378
  %1974 = vmatpush1.bf16.msra.mxu0 %v1377
  %1975 = vmatprep.subr.bf16.mxu0 %v1380
  %1976 = vmatpush1.bf16.msra.mxu0 %v1379
  %1977 = vmatprep.subr.bf16.mxu0 %v1382
  %1978 = vmatpush1.bf16.msra.mxu0 %v1381
  %1979 = vmatprep.subr.bf16.mxu0 %v1384
  %1980 = vmatpush1.bf16.msra.mxu0 %v1383
  %1981 = vmatprep.subr.bf16.mxu0 %v1386
  %1982 = vmatpush1.bf16.msra.mxu0 %v1385
  %1983 = vmatprep.subr.bf16.mxu0 %v1388
  %1984 = vmatpush1.bf16.msra.mxu0 %v1387
  %1985 = vmatprep.mubr.bf16.mxu0 %v406
  %1986 = vmatmul.mubr.bf16.gmra.mrb[0].mxu0 %v405
  %v1987 = vpop.f32.mrb[0].mxu0
  %v1988 = vadd.f32 %v1935, %v1987
  %v1989 = vpop.f32.mrb[0].mxu0
  %v1990 = vadd.f32 %v1937, %v1989
  %v1991 = vpop.f32.mrb[0].mxu0
  %v1992 = vadd.f32 %v1939, %v1991
  %v1993 = vpop.f32.mrb[0].mxu0
  %v1994 = vadd.f32 %v1941, %v1993
  %1995 = vmatprep.mubr.bf16.mxu0 %v422
  %1996 = vmatmul.mubr.bf16.gmra.mrb[0].mxu0 %v421
  %v1997 = vpop.f32.mrb[0].mxu0
  %v1998 = vadd.f32 %v1945, %v1997
  %v1999 = vpop.f32.mrb[0].mxu0
  %v2000 = vadd.f32 %v1947, %v1999
  %v2001 = vpop.f32.mrb[0].mxu0
  %v2002 = vadd.f32 %v1949, %v2001
  %v2003 = vpop.f32.mrb[0].mxu0
  %v2004 = vadd.f32 %v1951, %v2003
  %2005 = vdwg.mxu0
  %2006 = vmatprep.subr.bf16.mxu0 %v1390
  %2007 = vmatpush1.bf16.msra.mxu0 %v1389
  %2008 = vmatprep.subr.bf16.mxu0 %v1392
  %2009 = vmatpush1.bf16.msra.mxu0 %v1391
  %2010 = vmatprep.subr.bf16.mxu0 %v1394
  %2011 = vmatpush1.bf16.msra.mxu0 %v1393
  %2012 = vmatprep.subr.bf16.mxu0 %v1396
  %2013 = vmatpush1.bf16.msra.mxu0 %v1395
  %2014 = vmatprep.subr.bf16.mxu0 %v1398
  %2015 = vmatpush1.bf16.msra.mxu0 %v1397
  %2016 = vmatprep.subr.bf16.mxu0 %v1400
  %2017 = vmatpush1.bf16.msra.mxu0 %v1399
  %2018 = vmatprep.subr.bf16.mxu0 %v1402
  %2019 = vmatpush1.bf16.msra.mxu0 %v1401
  %2020 = vmatprep.subr.bf16.mxu0 %v1404
  %2021 = vmatpush1.bf16.msra.mxu0 %v1403
  %2022 = vmatprep.subr.bf16.mxu0 %v1406
  %2023 = vmatpush1.bf16.msra.mxu0 %v1405
  %2024 = vmatprep.subr.bf16.mxu0 %v1408
  %2025 = vmatpush1.bf16.msra.mxu0 %v1407
  %2026 = vmatprep.subr.bf16.mxu0 %v1410
  %2027 = vmatpush1.bf16.msra.mxu0 %v1409
  %2028 = vmatprep.subr.bf16.mxu0 %v1412
  %2029 = vmatpush1.bf16.msra.mxu0 %v1411
  %2030 = vmatprep.subr.bf16.mxu0 %v1414
  %2031 = vmatpush1.bf16.msra.mxu0 %v1413
  %2032 = vmatprep.subr.bf16.mxu0 %v1416
  %2033 = vmatpush1.bf16.msra.mxu0 %v1415
  %2034 = vmatprep.subr.bf16.mxu0 %v1418
  %2035 = vmatpush1.bf16.msra.mxu0 %v1417
  %2036 = vmatprep.subr.bf16.mxu0 %v1420
  %2037 = vmatpush1.bf16.msra.mxu0 %v1419
  %2038 = vmatprep.mubr.bf16.mxu0 %v408
  %2039 = vmatmul.mubr.bf16.gmra.mrb[0].mxu0 %v407
  %v2040 = vpop.f32.mrb[0].mxu0
  %v2041 = vadd.f32 %v1988, %v2040
  %v2042 = vpop.f32.mrb[0].mxu0
  %v2043 = vadd.f32 %v1990, %v2042
  %v2044 = vpop.f32.mrb[0].mxu0
  %v2045 = vadd.f32 %v1992, %v2044
  %v2046 = vpop.f32.mrb[0].mxu0
  %v2047 = vadd.f32 %v1994, %v2046
  %2048 = vmatprep.mubr.bf16.mxu0 %v424
  %2049 = vmatmul.mubr.bf16.gmra.mrb[0].mxu0 %v423
  %v2050 = vpop.f32.mrb[0].mxu0
  %v2051 = vadd.f32 %v1998, %v2050
  %v2052 = vpop.f32.mrb[0].mxu0
  %v2053 = vadd.f32 %v2000, %v2052
  %v2054 = vpop.f32.mrb[0].mxu0
  %v2055 = vadd.f32 %v2002, %v2054
  %v2056 = vpop.f32.mrb[0].mxu0
  %v2057 = vadd.f32 %v2004, %v2056
  %2058 = vdwg.mxu0
  %2059 = vmatprep.subr.bf16.mxu0 %v1422
  %2060 = vmatpush1.bf16.msra.mxu0 %v1421
  %2061 = vmatprep.subr.bf16.mxu0 %v1424
  %2062 = vmatpush1.bf16.msra.mxu0 %v1423
  %2063 = vmatprep.subr.bf16.mxu0 %v1426
  %2064 = vmatpush1.bf16.msra.mxu0 %v1425
  %2065 = vmatprep.subr.bf16.mxu0 %v1428
  %2066 = vmatpush1.bf16.msra.mxu0 %v1427
  %2067 = vmatprep.subr.bf16.mxu0 %v1430
  %2068 = vmatpush1.bf16.msra.mxu0 %v1429
  %2069 = vmatprep.subr.bf16.mxu0 %v1432
  %2070 = vmatpush1.bf16.msra.mxu0 %v1431
  %2071 = vmatprep.subr.bf16.mxu0 %v1434
  %2072 = vmatpush1.bf16.msra.mxu0 %v1433
  %2073 = vmatprep.subr.bf16.mxu0 %v1436
  %2074 = vmatpush1.bf16.msra.mxu0 %v1435
  %2075 = vmatprep.subr.bf16.mxu0 %v1438
  %2076 = vmatpush1.bf16.msra.mxu0 %v1437
  %2077 = vmatprep.subr.bf16.mxu0 %v1440
  %2078 = vmatpush1.bf16.msra.mxu0 %v1439
  %2079 = vmatprep.subr.bf16.mxu0 %v1442
  %2080 = vmatpush1.bf16.msra.mxu0 %v1441
  %2081 = vmatprep.subr.bf16.mxu0 %v1444
  %2082 = vmatpush1.bf16.msra.mxu0 %v1443
  %2083 = vmatprep.subr.bf16.mxu0 %v1446
  %2084 = vmatpush1.bf16.msra.mxu0 %v1445
  %2085 = vmatprep.subr.bf16.mxu0 %v1448
  %2086 = vmatpush1.bf16.msra.mxu0 %v1447
  %2087 = vmatprep.subr.bf16.mxu0 %v1450
  %2088 = vmatpush1.bf16.msra.mxu0 %v1449
  %2089 = vmatprep.subr.bf16.mxu0 %v1452
  %2090 = vmatpush1.bf16.msra.mxu0 %v1451
  %2091 = vmatprep.mubr.bf16.mxu0 %v410
  %2092 = vmatmul.mubr.bf16.gmra.mrb[0].mxu0 %v409
  %v2093 = vpop.f32.mrb[0].mxu0
  %v2094 = vadd.f32 %v2041, %v2093
  %v2095 = vpop.f32.mrb[0].mxu0
  %v2096 = vadd.f32 %v2043, %v2095
  %v2097 = vpop.f32.mrb[0].mxu0
  %v2098 = vadd.f32 %v2045, %v2097
  %v2099 = vpop.f32.mrb[0].mxu0
  %v2100 = vadd.f32 %v2047, %v2099
  %2101 = vmatprep.mubr.bf16.mxu0 %v426
  %2102 = vmatmul.mubr.bf16.gmra.mrb[0].mxu0 %v425
  %v2103 = vpop.f32.mrb[0].mxu0
  %v2104 = vadd.f32 %v2051, %v2103
  %v2105 = vpop.f32.mrb[0].mxu0
  %v2106 = vadd.f32 %v2053, %v2105
  %v2107 = vpop.f32.mrb[0].mxu0
  %v2108 = vadd.f32 %v2055, %v2107
  %v2109 = vpop.f32.mrb[0].mxu0
  %v2110 = vadd.f32 %v2057, %v2109
  %2111 = vdwg.mxu0
  %2112 = vmatprep.subr.bf16.mxu0 %v1454
  %2113 = vmatpush1.bf16.msra.mxu0 %v1453
  %2114 = vmatprep.subr.bf16.mxu0 %v1456
  %2115 = vmatpush1.bf16.msra.mxu0 %v1455
  %2116 = vmatprep.subr.bf16.mxu0 %v1458
  %2117 = vmatpush1.bf16.msra.mxu0 %v1457
  %2118 = vmatprep.subr.bf16.mxu0 %v1460
  %2119 = vmatpush1.bf16.msra.mxu0 %v1459
  %2120 = vmatprep.subr.bf16.mxu0 %v1462
  %2121 = vmatpush1.bf16.msra.mxu0 %v1461
  %2122 = vmatprep.subr.bf16.mxu0 %v1464
  %2123 = vmatpush1.bf16.msra.mxu0 %v1463
  %2124 = vmatprep.subr.bf16.mxu0 %v1466
  %2125 = vmatpush1.bf16.msra.mxu0 %v1465
  %2126 = vmatprep.subr.bf16.mxu0 %v1468
  %2127 = vmatpush1.bf16.msra.mxu0 %v1467
  %2128 = vmatprep.subr.bf16.mxu0 %v1470
  %2129 = vmatpush1.bf16.msra.mxu0 %v1469
  %2130 = vmatprep.subr.bf16.mxu0 %v1472
  %2131 = vmatpush1.bf16.msra.mxu0 %v1471
  %2132 = vmatprep.subr.bf16.mxu0 %v1474
  %2133 = vmatpush1.bf16.msra.mxu0 %v1473
  %2134 = vmatprep.subr.bf16.mxu0 %v1476
  %2135 = vmatpush1.bf16.msra.mxu0 %v1475
  %2136 = vmatprep.subr.bf16.mxu0 %v1478
  %2137 = vmatpush1.bf16.msra.mxu0 %v1477
  %2138 = vmatprep.subr.bf16.mxu0 %v1480
  %2139 = vmatpush1.bf16.msra.mxu0 %v1479
  %2140 = vmatprep.subr.bf16.mxu0 %v1482
  %2141 = vmatpush1.bf16.msra.mxu0 %v1481
  %2142 = vmatprep.subr.bf16.mxu0 %v1484
  %2143 = vmatpush1.bf16.msra.mxu0 %v1483
  %2144 = vmatprep.mubr.bf16.mxu0 %v412
  %2145 = vmatmul.mubr.bf16.gmra.mrb[0].mxu0 %v411
  %v2146 = vpop.f32.mrb[0].mxu0
  %v2147 = vadd.f32 %v2094, %v2146
  %v2148 = vpop.f32.mrb[0].mxu0
  %v2149 = vadd.f32 %v2096, %v2148
  %v2150 = vpop.f32.mrb[0].mxu0
  %v2151 = vadd.f32 %v2098, %v2150
  %v2152 = vpop.f32.mrb[0].mxu0
  %v2153 = vadd.f32 %v2100, %v2152
  %2154 = vmatprep.mubr.bf16.mxu0 %v428
  %2155 = vmatmul.mubr.bf16.gmra.mrb[0].mxu0 %v427
  %v2156 = vpop.f32.mrb[0].mxu0
  %v2157 = vadd.f32 %v2104, %v2156
  %v2158 = vpop.f32.mrb[0].mxu0
  %v2159 = vadd.f32 %v2106, %v2158
  %v2160 = vpop.f32.mrb[0].mxu0
  %v2161 = vadd.f32 %v2108, %v2160
  %v2162 = vpop.f32.mrb[0].mxu0
  %v2163 = vadd.f32 %v2110, %v2162
  %2164 = vdwg.mxu0
  %v2165 = vpack.c.bf16 %v2151, %v2147
  %v2166 = vpack.c.bf16 %v2153, %v2149
  %v2167 = vpack.c.bf16 %v2161, %v2157
  %v2168 = vpack.c.bf16 %v2163, %v2159
  %v2173 = vunpack.c.l.b16 %v2165
  %v2174 = vunpack.c.l.b16 %v2166
  %v2175 = vunpack.c.h.b16 %v2165
  %v2176 = vunpack.c.h.b16 %v2166
  %v2177 = vunpack.c.l.b16 %v2167
  %v2178 = vunpack.c.l.b16 %v2168
  %v2179 = vunpack.c.h.b16 %v2167
  %v2180 = vunpack.c.h.b16 %v2168
  %v2181 = vpack.c.b16 %v2174, %v2173
  %v2182 = vpack.c.b16 %v2176, %v2175
  %v2183 = vpack.c.b16 %v2178, %v2177
  %v2184 = vpack.c.b16 %v2180, %v2179
  %2189 = vst [vmem:[%s2] sm:$0xff] %v2181
  %2190 = vst [vmem:[%s2 + $0x8] sm:$0xff] %v2182
  %2191 = vst [vmem:[%s2 + $0x10] sm:$0xff] %v2183
  %2192 = vst [vmem:[%s2 + $0x18] sm:$0xff] %v2184
  %p2193 = scmp.eq.s32.totalorder 0, 0
  // Predicated region
  $region10: #{discriminator_forward.11} parent=0 // pred_check
    %p2194 = pneg %p2193
  $region11: #{discriminator_forward.11} parent=0 // pred_check_branch
    %2196 = sbr.rel (%p2194) target = $region13
  $region12: #{discriminator_forward.11} parent=0 // pred_region
    %2197 = vst [vmem:[%s3] sm:$0xf] 0.0
  $region13: #{discriminator_forward.11} parent=0 // pred_fallthru
    _
  %v2198 = vadd.f32 %v2147, %v2151
  %v2199 = vadd.f32 %v2198, %v2157
  %v2200 = vadd.f32 %v2199, %v2161
  %v2201 = vrot.slane %v2200, 4
  %v2202 = vadd.f32 %v2200, %v2201
  %v2203 = vrot.slane %v2202, 2
  %v2204 = vadd.f32 %v2202, %v2203
  %v2205 = vrot.slane %v2204, 1
  %v2206 = vadd.f32 %v2204, %v2205
  %v2207 = vadd.f32 %v2149, %v2153
  %v2208 = vadd.f32 %v2207, %v2159
  %v2209 = vadd.f32 %v2208, %v2163
  %v2210 = vrot.slane %v2209, 4
  %v2211 = vadd.f32 %v2209, %v2210
  %v2212 = vrot.slane %v2211, 2
  %v2213 = vadd.f32 %v2211, %v2212
  %v2214 = vrot.slane %v2213, 1
  %v2215 = vadd.f32 %v2213, %v2214
  %v2216 = vmul.f32 %v2147, %v2147
  %v2217 = vmul.f32 %v2149, %v2149
  %v2218 = vmul.f32 %v2151, %v2151
  %v2219 = vmul.f32 %v2153, %v2153
  %v2220 = vmul.f32 %v2157, %v2157
  %v2221 = vmul.f32 %v2159, %v2159
  %v2222 = vmul.f32 %v2161, %v2161
  %v2223 = vmul.f32 %v2163, %v2163
  %v2224 = vadd.f32 %v2216, %v2218
  %v2225 = vadd.f32 %v2224, %v2220
  %v2226 = vadd.f32 %v2225, %v2222
  %v2227 = vrot.slane %v2226, 4
  %v2228 = vadd.f32 %v2226, %v2227
  %v2229 = vrot.slane %v2228, 2
  %v2230 = vadd.f32 %v2228, %v2229
  %v2231 = vrot.slane %v2230, 1
  %v2232 = vadd.f32 %v2230, %v2231
  %v2233 = vadd.f32 %v2217, %v2219
  %v2234 = vadd.f32 %v2233, %v2221
  %v2235 = vadd.f32 %v2234, %v2223
  %v2236 = vrot.slane %v2235, 4
  %v2237 = vadd.f32 %v2235, %v2236
  %v2238 = vrot.slane %v2237, 2
  %v2239 = vadd.f32 %v2237, %v2238
  %v2240 = vrot.slane %v2239, 1
  %v2241 = vadd.f32 %v2239, %v2240
  %vm2242 = vcmask 1040384
  %v2243 = vsel %vm2242, %v2206, %v2232
  %v2244 = vsel %vm2242, %v2215, %v2241
  %v2245 = vld [vmem:[%s3] sm:$0xf]
  %v2248 = vcombine.low %v2243, %v2244
  %v2250 = vunpack.c.l.s4 1983009808
  %v2251 = vunpack.c.0.s8 %v2250
  %v2252 = vlaneseq
  %v2253 = vshrl.u32 %v2252, 7
  %v2254 = vsub.s32 %v2251, %v2253
  %v2255 = vrot.slane %v2248, %v2254
  %v2257 = vadd.f32 %v2245, %v2255
  %2258 = vst [vmem:[%s3] sm:$0xf] %v2257
  // Predicated region
  $region14: #{discriminator_forward.11} parent=0 // pred_check
    _
  $region15: #{discriminator_forward.11} parent=0 // pred_check_branch
    %2260 = sbr.rel (0) target = $region17
  $region16: #{discriminator_forward.11} parent=0 // pred_region
    _
  $region17: #{discriminator_forward.11} parent=0 // pred_fallthru
    _
  // Predicated region
  $region18: #{discriminator_forward.11} parent=0 // pred_check
    _
  $region19: #{discriminator_forward.11} parent=0 // pred_check_branch
    %2262 = sbr.rel (0) target = $region21
  $region20: #{discriminator_forward.11} parent=0 // pred_region
    _
  $region21: #{discriminator_forward.11} parent=0 // pred_fallthru
    _
  // Predicated region
  $region22: #{discriminator_forward.11} parent=0 // pred_check
    _
  $region23: #{discriminator_forward.11} parent=0 // pred_check_branch
    %2264 = sbr.rel (0) target = $region25
  $region24: #{discriminator_forward.11} parent=0 // pred_region
    _
  $region25: #{discriminator_forward.11} parent=0 // pred_fallthru
    _
  // Predicated region
  $region26: #{discriminator_forward.11} parent=0 // pred_check
    _
  $region27: #{discriminator_forward.11} parent=0 // pred_check_branch
    %2266 = sbr.rel (0) target = $region29
  $region28: #{discriminator_forward.11} parent=0 // pred_region
    _
  $region29: #{discriminator_forward.11} parent=0 // pred_fallthru
    _

// kernel: discriminator_forward.12
$region0: #{discriminator_forward.12}
  #allocation0 [shape = 'u32[]', space=smem, size = 0x4, offset = 0x4, fixed_abs, tag = 'smem constant byte address 0x4 - core index']
  #allocation1 [shape = 'u32[144,128]{1,0:T(1,128)}', space=vmem, size = 0x12000, scoped, tag = 'internal scratch']
  %s0 = inlined_call_operand.vmem [shape: bf16[32,256], index: 0, kind: input, shape index: {}]
  %s1 = inlined_call_operand.vmem [shape: f32[2,256], index: 1, kind: input, shape index: {}]
  %s2 = inlined_call_operand.vmem [shape: f32[1,256], index: 2, kind: input, shape index: {}]
  %s3 = inlined_call_operand.vmem [shape: f32[1,256], index: 3, kind: input, shape index: {}]
  %s4 = inlined_call_operand.vmem [shape: bf16[32,256], index: 4, kind: output, shape index: {}]
  %s5 = sld [smem:[#allocation0]]
  $region26: #{discriminator_forward.12} parent=0
    _
  %s7 = ssub.s32 1, %s5
  %s8 = scalar_select 0, %s7, %s5
  // Predicated region
  $region2: #{discriminator_forward.12} parent=0 // pred_check
    _
  $region3: #{discriminator_forward.12} parent=0 // pred_check_branch
    %10 = sbr.rel (0) target = $region5
  $region4: #{discriminator_forward.12} parent=0 // pred_region
    _
  $region5: #{discriminator_forward.12} parent=0 // pred_fallthru
    _
  // Predicated region
  $region6: #{discriminator_forward.12} parent=0 // pred_check
    _
  $region7: #{discriminator_forward.12} parent=0 // pred_check_branch
    %12 = sbr.rel (0) target = $region9
  $region8: #{discriminator_forward.12} parent=0 // pred_region
    _
  $region9: #{discriminator_forward.12} parent=0 // pred_fallthru
    _
  // Predicated region
  $region10: #{discriminator_forward.12} parent=0 // pred_check
    _
  $region11: #{discriminator_forward.12} parent=0 // pred_check_branch
    %14 = sbr.rel (0) target = $region13
  $region12: #{discriminator_forward.12} parent=0 // pred_region
    _
  $region13: #{discriminator_forward.12} parent=0 // pred_fallthru
    _
  // Predicated region
  $region14: #{discriminator_forward.12} parent=0 // pred_check
    _
  $region15: #{discriminator_forward.12} parent=0 // pred_check_branch
    %16 = sbr.rel (0) target = $region17
  $region16: #{discriminator_forward.12} parent=0 // pred_region
    _
  $region17: #{discriminator_forward.12} parent=0 // pred_fallthru
    _
  %v17 = vld [vmem:[%s1] sm:$0xf]
  %v18 = vmul.f32 %v17, 0.03125
  %v19 = vmul.f32 %v18, %v18
  %v21 = vrot.slane %v19, 7
  %v23 = vsub.f32 %v18, %v21
  %v24 = vmax.f32 %v23, 0.0
  %v25 = vld [vmem:[%s2] sm:$0x3]
  %v26 = vadd.f32 %v24, 1e-05
  %v27 = vrsqrt.pop %v26
  %v30 = vunpack.c.l.s4 1966171168
  %v31 = vunpack.c.0.s8 %v30
  %v32 = vlaneseq
  %v33 = vshrl.u32 %v32, 7
  %v34 = vsub.s32 %v31, %v33
  %v35 = vrot.slane %v27, %v34
  %v36 = vcombine.high %v35, %v35
  %v38 = vmul.f32 %v25, %v36
  %v39 = vld [vmem:[%s3] sm:$0x3]
  %v42 = vunpack.c.l.s4 857870592
  %v43 = vunpack.c.0.s8 %v42
  %v44 = vlaneseq
  %v45 = vshrl.u32 %v44, 7
  %v46 = vsub.s32 %v43, %v45
  %v47 = vrot.slane %v38, %v46
  %v49 = vmul.f32 %v18, %v47
  %v52 = vunpack.c.l.s4 1966171168
  %v53 = vunpack.c.0.s8 %v52
  %v54 = vlaneseq
  %v55 = vshrl.u32 %v54, 7
  %v56 = vsub.s32 %v53, %v55
  %v57 = vrot.slane %v49, %v56
  %v59 = vsub.f32 %v39, %v57
  %v60 = vld [vmem:[%s0] sm:$0xff]
  %v61 = vld [vmem:[%s0 + $0x8] sm:$0xff]
  %v62 = vld [vmem:[%s0 + $0x10] sm:$0xff]
  %v63 = vld [vmem:[%s0 + $0x18] sm:$0xff]
  %v64 = vunpack.c.l.bf16 %v60
  %v65 = vunpack.c.h.bf16 %v60
  %v66 = vunpack.c.l.bf16 %v61
  %v67 = vunpack.c.h.bf16 %v61
  %v68 = vunpack.c.l.bf16 %v62
  %v69 = vunpack.c.h.bf16 %v62
  %v70 = vunpack.c.l.bf16 %v63
  %v71 = vunpack.c.h.bf16 %v63
  %v72 = vlaneseq
  %v73 = vshrl.u32 %v72, 7
  %v74 = vsub.s32 0, %v73
  %v75 = vrot.slane %v38, %v74
  %v76 = vlaneseq
  %v77 = vshrl.u32 %v76, 7
  %v78 = vsub.s32 1, %v77
  %v79 = vrot.slane %v38, %v78
  %v82 = vmul.f32 %v64, %v75
  %v83 = vmul.f32 %v65, %v79
  %v84 = vmul.f32 %v66, %v75
  %v85 = vmul.f32 %v67, %v79
  %v86 = vmul.f32 %v68, %v75
  %v87 = vmul.f32 %v69, %v79
  %v88 = vmul.f32 %v70, %v75
  %v89 = vmul.f32 %v71, %v79
  %v91 = vlaneseq
  %v92 = vshrl.u32 %v91, 7
  %v93 = vsub.s32 0, %v92
  %v94 = vrot.slane %v59, %v93
  %v95 = vlaneseq
  %v96 = vshrl.u32 %v95, 7
  %v97 = vsub.s32 1, %v96
  %v98 = vrot.slane %v59, %v97
  %v101 = vadd.f32 %v82, %v94
  %v102 = vadd.f32 %v83, %v98
  %v103 = vadd.f32 %v84, %v94
  %v104 = vadd.f32 %v85, %v98
  %v105 = vadd.f32 %v86, %v94
  %v106 = vadd.f32 %v87, %v98
  %v107 = vadd.f32 %v88, %v94
  %v108 = vadd.f32 %v89, %v98
  %vm109 = vcmp.ge.f32.partialorder %v101, 0.0
  %vm110 = vcmp.ge.f32.partialorder %v102, 0.0
  %vm111 = vcmp.ge.f32.partialorder %v103, 0.0
  %vm112 = vcmp.ge.f32.partialorder %v104, 0.0
  %vm113 = vcmp.ge.f32.partialorder %v105, 0.0
  %vm114 = vcmp.ge.f32.partialorder %v106, 0.0
  %vm115 = vcmp.ge.f32.partialorder %v107, 0.0
  %vm116 = vcmp.ge.f32.partialorder %v108, 0.0
  %v117 = vmul.f32 %v101, 0.2
  %v118 = vmul.f32 %v102, 0.2
  %v119 = vmul.f32 %v103, 0.2
  %v120 = vmul.f32 %v104, 0.2
  %v121 = vmul.f32 %v105, 0.2
  %v122 = vmul.f32 %v106, 0.2
  %v123 = vmul.f32 %v107, 0.2
  %v124 = vmul.f32 %v108, 0.2
  %v125 = vsel %vm109, %v101, %v117
  %v126 = vsel %vm110, %v102, %v118
  %v127 = vsel %vm111, %v103, %v119
  %v128 = vsel %vm112, %v104, %v120
  %v129 = vsel %vm113, %v105, %v121
  %v130 = vsel %vm114, %v106, %v122
  %v131 = vsel %vm115, %v107, %v123
  %v132 = vsel %vm116, %v108, %v124
  %v133 = vpack.c.bf16 %v127, %v125
  %v134 = vpack.c.bf16 %v128, %v126
  %v135 = vpack.c.bf16 %v131, %v129
  %v136 = vpack.c.bf16 %v132, %v130
  %v141 = vunpack.c.l.b16 %v133
  %v142 = vunpack.c.l.b16 %v134
  %v143 = vunpack.c.h.b16 %v133
  %v144 = vunpack.c.h.b16 %v134
  %v145 = vunpack.c.l.b16 %v135
  %v146 = vunpack.c.l.b16 %v136
  %v147 = vunpack.c.h.b16 %v135
  %v148 = vunpack.c.h.b16 %v136
  %v149 = vpack.c.b16 %v142, %v141
  %v150 = vpack.c.b16 %v144, %v143
  %v151 = vpack.c.b16 %v146, %v145
  %v152 = vpack.c.b16 %v148, %v147
  %157 = vst [vmem:[%s4] sm:$0xff] %v149
  %158 = vst [vmem:[%s4 + $0x8] sm:$0xff] %v150
  %159 = vst [vmem:[%s4 + $0x10] sm:$0xff] %v151
  %160 = vst [vmem:[%s4 + $0x18] sm:$0xff] %v152
  // Predicated region
  $region18: #{discriminator_forward.12} parent=0 // pred_check
    _
  $region19: #{discriminator_forward.12} parent=0 // pred_check_branch
    %162 = sbr.rel (0) target = $region21
  $region20: #{discriminator_forward.12} parent=0 // pred_region
    _
  $region21: #{discriminator_forward.12} parent=0 // pred_fallthru
    _
  // Predicated region
  $region22: #{discriminator_forward.12} parent=0 // pred_check
    _
  $region23: #{discriminator_forward.12} parent=0 // pred_check_branch
    %164 = sbr.rel (0) target = $region25
  $region24: #{discriminator_forward.12} parent=0 // pred_region
    _
  $region25: #{discriminator_forward.12} parent=0 // pred_fallthru
    _

// kernel: discriminator_forward.13
$region0: #{discriminator_forward.13}
  #allocation0 [shape = 'u32[]', space=smem, size = 0x4, offset = 0x4, fixed_abs, tag = 'smem constant byte address 0x4 - core index']
  #allocation1 [shape = 'u32[144,128]{1,0:T(1,128)}', space=vmem, size = 0x12000, scoped, tag = 'internal scratch']
  %s0 = inlined_call_operand.vmem [shape: bf16[8,4096], index: 0, kind: input, shape index: {}]
  %s1 = inlined_call_operand.vmem [shape: bf16[4096,128], index: 1, kind: input, shape index: {}]
  %s2 = inlined_call_operand.vmem [shape: f32[8,128], index: 2, kind: output, shape index: {}]
  %s3 = sld [smem:[#allocation0]]
  $region18: #{discriminator_forward.13} parent=0
    _
  %s5 = ssub.s32 1, %s3
  %s6 = scalar_select 0, %s5, %s3
  // Predicated region
  $region2: #{discriminator_forward.13} parent=0 // pred_check
    _
  $region3: #{discriminator_forward.13} parent=0 // pred_check_branch
    %8 = sbr.rel (0) target = $region5
  $region4: #{discriminator_forward.13} parent=0 // pred_region
    _
  $region5: #{discriminator_forward.13} parent=0 // pred_fallthru
    _
  // Predicated region
  $region6: #{discriminator_forward.13} parent=0 // pred_check
    _
  $region7: #{discriminator_forward.13} parent=0 // pred_check_branch
    %10 = sbr.rel (0) target = $region9
  $region8: #{discriminator_forward.13} parent=0 // pred_region
    _
  $region9: #{discriminator_forward.13} parent=0 // pred_fallthru
    _
  %v12 = vld [vmem:[%s0] sm:$0xff]
  %v13 = vld [vmem:[%s0 + $0x8] sm:$0xff]
  %v14 = vld [vmem:[%s0 + $0x10] sm:$0xff]
  %v15 = vld [vmem:[%s0 + $0x18] sm:$0xff]
  %v16 = vld [vmem:[%s0 + $0x20] sm:$0xff]
  %v17 = vld [vmem:[%s0 + $0x28] sm:$0xff]
  %v18 = vld [vmem:[%s0 + $0x30] sm:$0xff]
  %v19 = vld [vmem:[%s0 + $0x38] sm:$0xff]
  %v20 = vld [vmem:[%s0 + $0x40] sm:$0xff]
  %v21 = vld [vmem:[%s0 + $0x48] sm:$0xff]
  %v22 = vld [vmem:[%s0 + $0x50] sm:$0xff]
  %v23 = vld [vmem:[%s0 + $0x58] sm:$0xff]
  %v24 = vld [vmem:[%s0 + $0x60] sm:$0xff]
  %v25 = vld [vmem:[%s0 + $0x68] sm:$0xff]
  %v26 = vld [vmem:[%s0 + $0x70] sm:$0xff]
  %v27 = vld [vmem:[%s0 + $0x78] sm:$0xff]
  %v28 = vld [vmem:[%s1] sm:$0xf]
  %v29 = vld [vmem:[%s1 + $0x4] sm:$0xf]
  %v30 = vld [vmem:[%s1 + $0x8] sm:$0xf]
  %v31 = vld [vmem:[%s1 + $0xc] sm:$0xf]
  %v32 = vld [vmem:[%s1 + $0x10] sm:$0xf]
  %v33 = vld [vmem:[%s1 + $0x14] sm:$0xf]
  %v34 = vld [vmem:[%s1 + $0x18] sm:$0xf]
  %v35 = vld [vmem:[%s1 + $0x1c] sm:$0xf]
  %v36 = vld [vmem:[%s1 + $0x20] sm:$0xf]
  %v37 = vld [vmem:[%s1 + $0x24] sm:$0xf]
  %v38 = vld [vmem:[%s1 + $0x28] sm:$0xf]
  %v39 = vld [vmem:[%s1 + $0x2c] sm:$0xf]
  %v40 = vld [vmem:[%s1 + $0x30] sm:$0xf]
  %v41 = vld [vmem:[%s1 + $0x34] sm:$0xf]
  %v42 = vld [vmem:[%s1 + $0x38] sm:$0xf]
  %v43 = vld [vmem:[%s1 + $0x3c] sm:$0xf]
  %v44 = vld [vmem:[%s1 + $0x40] sm:$0xf]
  %v45 = vld [vmem:[%s1 + $0x44] sm:$0xf]
  %v46 = vld [vmem:[%s1 + $0x48] sm:$0xf]
  %v47 = vld [vmem:[%s1 + $0x4c] sm:$0xf]
  %v48 = vld [vmem:[%s1 + $0x50] sm:$0xf]
  %v49 = vld [vmem:[%s1 + $0x54] sm:$0xf]
  %v50 = vld [vmem:[%s1 + $0x58] sm:$0xf]
  %v51 = vld [vmem:[%s1 + $0x5c] sm:$0xf]
  %v52 = vld [vmem:[%s1 + $0x60] sm:$0xf]
  %v53 = vld [vmem:[%s1 + $0x64] sm:$0xf]
  %v54 = vld [vmem:[%s1 + $0x68] sm:$0xf]
  %v55 = vld [vmem:[%s1 + $0x6c] sm:$0xf]
  %v56 = vld [vmem:[%s1 + $0x70] sm:$0xf]
  %v57 = vld [vmem:[%s1 + $0x74] sm:$0xf]
  %v58 = vld [vmem:[%s1 + $0x78] sm:$0xf]
  %v59 = vld [vmem:[%s1 + $0x7c] sm:$0xf]
  %v60 = vld [vmem:[%s1 + $0x80] sm:$0xf]
  %v61 = vld [vmem:[%s1 + $0x84] sm:$0xf]
  %v62 = vld [vmem:[%s1 + $0x88] sm:$0xf]
  %v63 = vld [vmem:[%s1 + $0x8c] sm:$0xf]
  %v64 = vld [vmem:[%s1 + $0x90] sm:$0xf]
  %v65 = vld [vmem:[%s1 + $0x94] sm:$0xf]
  %v66 = vld [vmem:[%s1 + $0x98] sm:$0xf]
  %v67 = vld [vmem:[%s1 + $0x9c] sm:$0xf]
  %v68 = vld [vmem:[%s1 + $0xa0] sm:$0xf]
  %v69 = vld [vmem:[%s1 + $0xa4] sm:$0xf]
  %v70 = vld [vmem:[%s1 + $0xa8] sm:$0xf]
  %v71 = vld [vmem:[%s1 + $0xac] sm:$0xf]
  %v72 = vld [vmem:[%s1 + $0xb0] sm:$0xf]
  %v73 = vld [vmem:[%s1 + $0xb4] sm:$0xf]
  %v74 = vld [vmem:[%s1 + $0xb8] sm:$0xf]
  %v75 = vld [vmem:[%s1 + $0xbc] sm:$0xf]
  %v76 = vld [vmem:[%s1 + $0xc0] sm:$0xf]
  %v77 = vld [vmem:[%s1 + $0xc4] sm:$0xf]
  %v78 = vld [vmem:[%s1 + $0xc8] sm:$0xf]
  %v79 = vld [vmem:[%s1 + $0xcc] sm:$0xf]
  %v80 = vld [vmem:[%s1 + $0xd0] sm:$0xf]
  %v81 = vld [vmem:[%s1 + $0xd4] sm:$0xf]
  %v82 = vld [vmem:[%s1 + $0xd8] sm:$0xf]
  %v83 = vld [vmem:[%s1 + $0xdc] sm:$0xf]
  %v84 = vld [vmem:[%s1 + $0xe0] sm:$0xf]
  %v85 = vld [vmem:[%s1 + $0xe4] sm:$0xf]
  %v86 = vld [vmem:[%s1 + $0xe8] sm:$0xf]
  %v87 = vld [vmem:[%s1 + $0xec] sm:$0xf]
  %v88 = vld [vmem:[%s1 + $0xf0] sm:$0xf]
  %v89 = vld [vmem:[%s1 + $0xf4] sm:$0xf]
  %v90 = vld [vmem:[%s1 + $0xf8] sm:$0xf]
  %v91 = vld [vmem:[%s1 + $0xfc] sm:$0xf]
  %v92 = vld [vmem:[%s1 + $0x100] sm:$0xf]
  %v93 = vld [vmem:[%s1 + $0x104] sm:$0xf]
  %v94 = vld [vmem:[%s1 + $0x108] sm:$0xf]
  %v95 = vld [vmem:[%s1 + $0x10c] sm:$0xf]
  %v96 = vld [vmem:[%s1 + $0x110] sm:$0xf]
  %v97 = vld [vmem:[%s1 + $0x114] sm:$0xf]
  %v98 = vld [vmem:[%s1 + $0x118] sm:$0xf]
  %v99 = vld [vmem:[%s1 + $0x11c] sm:$0xf]
  %v100 = vld [vmem:[%s1 + $0x120] sm:$0xf]
  %v101 = vld [vmem:[%s1 + $0x124] sm:$0xf]
  %v102 = vld [vmem:[%s1 + $0x128] sm:$0xf]
  %v103 = vld [vmem:[%s1 + $0x12c] sm:$0xf]
  %v104 = vld [vmem:[%s1 + $0x130] sm:$0xf]
  %v105 = vld [vmem:[%s1 + $0x134] sm:$0xf]
  %v106 = vld [vmem:[%s1 + $0x138] sm:$0xf]
  %v107 = vld [vmem:[%s1 + $0x13c] sm:$0xf]
  %v108 = vld [vmem:[%s1 + $0x140] sm:$0xf]
  %v109 = vld [vmem:[%s1 + $0x144] sm:$0xf]
  %v110 = vld [vmem:[%s1 + $0x148] sm:$0xf]
  %v111 = vld [vmem:[%s1 + $0x14c] sm:$0xf]
  %v112 = vld [vmem:[%s1 + $0x150] sm:$0xf]
  %v113 = vld [vmem:[%s1 + $0x154] sm:$0xf]
  %v114 = vld [vmem:[%s1 + $0x158] sm:$0xf]
  %v115 = vld [vmem:[%s1 + $0x15c] sm:$0xf]
  %v116 = vld [vmem:[%s1 + $0x160] sm:$0xf]
  %v117 = vld [vmem:[%s1 + $0x164] sm:$0xf]
  %v118 = vld [vmem:[%s1 + $0x168] sm:$0xf]
  %v119 = vld [vmem:[%s1 + $0x16c] sm:$0xf]
  %v120 = vld [vmem:[%s1 + $0x170] sm:$0xf]
  %v121 = vld [vmem:[%s1 + $0x174] sm:$0xf]
  %v122 = vld [vmem:[%s1 + $0x178] sm:$0xf]
  %v123 = vld [vmem:[%s1 + $0x17c] sm:$0xf]
  %v124 = vld [vmem:[%s1 + $0x180] sm:$0xf]
  %v125 = vld [vmem:[%s1 + $0x184] sm:$0xf]
  %v126 = vld [vmem:[%s1 + $0x188] sm:$0xf]
  %v127 = vld [vmem:[%s1 + $0x18c] sm:$0xf]
  %v128 = vld [vmem:[%s1 + $0x190] sm:$0xf]
  %v129 = vld [vmem:[%s1 + $0x194] sm:$0xf]
  %v130 = vld [vmem:[%s1 + $0x198] sm:$0xf]
  %v131 = vld [vmem:[%s1 + $0x19c] sm:$0xf]
  %v132 = vld [vmem:[%s1 + $0x1a0] sm:$0xf]
  %v133 = vld [vmem:[%s1 + $0x1a4] sm:$0xf]
  %v134 = vld [vmem:[%s1 + $0x1a8] sm:$0xf]
  %v135 = vld [vmem:[%s1 + $0x1ac] sm:$0xf]
  %v136 = vld [vmem:[%s1 + $0x1b0] sm:$0xf]
  %v137 = vld [vmem:[%s1 + $0x1b4] sm:$0xf]
  %v138 = vld [vmem:[%s1 + $0x1b8] sm:$0xf]
  %v139 = vld [vmem:[%s1 + $0x1bc] sm:$0xf]
  %v140 = vld [vmem:[%s1 + $0x1c0] sm:$0xf]
  %v141 = vld [vmem:[%s1 + $0x1c4] sm:$0xf]
  %v142 = vld [vmem:[%s1 + $0x1c8] sm:$0xf]
  %v143 = vld [vmem:[%s1 + $0x1cc] sm:$0xf]
  %v144 = vld [vmem:[%s1 + $0x1d0] sm:$0xf]
  %v145 = vld [vmem:[%s1 + $0x1d4] sm:$0xf]
  %v146 = vld [vmem:[%s1 + $0x1d8] sm:$0xf]
  %v147 = vld [vmem:[%s1 + $0x1dc] sm:$0xf]
  %v148 = vld [vmem:[%s1 + $0x1e0] sm:$0xf]
  %v149 = vld [vmem:[%s1 + $0x1e4] sm:$0xf]
  %v150 = vld [vmem:[%s1 + $0x1e8] sm:$0xf]
  %v151 = vld [vmem:[%s1 + $0x1ec] sm:$0xf]
  %v152 = vld [vmem:[%s1 + $0x1f0] sm:$0xf]
  %v153 = vld [vmem:[%s1 + $0x1f4] sm:$0xf]
  %v154 = vld [vmem:[%s1 + $0x1f8] sm:$0xf]
  %v155 = vld [vmem:[%s1 + $0x1fc] sm:$0xf]
  %v156 = vld [vmem:[%s1 + $0x200] sm:$0xf]
  %v157 = vld [vmem:[%s1 + $0x204] sm:$0xf]
  %v158 = vld [vmem:[%s1 + $0x208] sm:$0xf]
  %v159 = vld [vmem:[%s1 + $0x20c] sm:$0xf]
  %v160 = vld [vmem:[%s1 + $0x210] sm:$0xf]
  %v161 = vld [vmem:[%s1 + $0x214] sm:$0xf]
  %v162 = vld [vmem:[%s1 + $0x218] sm:$0xf]
  %v163 = vld [vmem:[%s1 + $0x21c] sm:$0xf]
  %v164 = vld [vmem:[%s1 + $0x220] sm:$0xf]
  %v165 = vld [vmem:[%s1 + $0x224] sm:$0xf]
  %v166 = vld [vmem:[%s1 + $0x228] sm:$0xf]
  %v167 = vld [vmem:[%s1 + $0x22c] sm:$0xf]
  %v168 = vld [vmem:[%s1 + $0x230] sm:$0xf]
  %v169 = vld [vmem:[%s1 + $0x234] sm:$0xf]
  %v170 = vld [vmem:[%s1 + $0x238] sm:$0xf]
  %v171 = vld [vmem:[%s1 + $0x23c] sm:$0xf]
  %v172 = vld [vmem:[%s1 + $0x240] sm:$0xf]
  %v173 = vld [vmem:[%s1 + $0x244] sm:$0xf]
  %v174 = vld [vmem:[%s1 + $0x248] sm:$0xf]
  %v175 = vld [vmem:[%s1 + $0x24c] sm:$0xf]
  %v176 = vld [vmem:[%s1 + $0x250] sm:$0xf]
  %v177 = vld [vmem:[%s1 + $0x254] sm:$0xf]
  %v178 = vld [vmem:[%s1 + $0x258] sm:$0xf]
  %v179 = vld [vmem:[%s1 + $0x25c] sm:$0xf]
  %v180 = vld [vmem:[%s1 + $0x260] sm:$0xf]
  %v181 = vld [vmem:[%s1 + $0x264] sm:$0xf]
  %v182 = vld [vmem:[%s1 + $0x268] sm:$0xf]
  %v183 = vld [vmem:[%s1 + $0x26c] sm:$0xf]
  %v184 = vld [vmem:[%s1 + $0x270] sm:$0xf]
  %v185 = vld [vmem:[%s1 + $0x274] sm:$0xf]
  %v186 = vld [vmem:[%s1 + $0x278] sm:$0xf]
  %v187 = vld [vmem:[%s1 + $0x27c] sm:$0xf]
  %v188 = vld [vmem:[%s1 + $0x280] sm:$0xf]
  %v189 = vld [vmem:[%s1 + $0x284] sm:$0xf]
  %v190 = vld [vmem:[%s1 + $0x288] sm:$0xf]
  %v191 = vld [vmem:[%s1 + $0x28c] sm:$0xf]
  %v192 = vld [vmem:[%s1 + $0x290] sm:$0xf]
  %v193 = vld [vmem:[%s1 + $0x294] sm:$0xf]
  %v194 = vld [vmem:[%s1 + $0x298] sm:$0xf]
  %v195 = vld [vmem:[%s1 + $0x29c] sm:$0xf]
  %v196 = vld [vmem:[%s1 + $0x2a0] sm:$0xf]
  %v197 = vld [vmem:[%s1 + $0x2a4] sm:$0xf]
  %v198 = vld [vmem:[%s1 + $0x2a8] sm:$0xf]
  %v199 = vld [vmem:[%s1 + $0x2ac] sm:$0xf]
  %v200 = vld [vmem:[%s1 + $0x2b0] sm:$0xf]
  %v201 = vld [vmem:[%s1 + $0x2b4] sm:$0xf]
  %v202 = vld [vmem:[%s1 + $0x2b8] sm:$0xf]
  %v203 = vld [vmem:[%s1 + $0x2bc] sm:$0xf]
  %v204 = vld [vmem:[%s1 + $0x2c0] sm:$0xf]
  %v205 = vld [vmem:[%s1 + $0x2c4] sm:$0xf]
  %v206 = vld [vmem:[%s1 + $0x2c8] sm:$0xf]
  %v207 = vld [vmem:[%s1 + $0x2cc] sm:$0xf]
  %v208 = vld [vmem:[%s1 + $0x2d0] sm:$0xf]
  %v209 = vld [vmem:[%s1 + $0x2d4] sm:$0xf]
  %v210 = vld [vmem:[%s1 + $0x2d8] sm:$0xf]
  %v211 = vld [vmem:[%s1 + $0x2dc] sm:$0xf]
  %v212 = vld [vmem:[%s1 + $0x2e0] sm:$0xf]
  %v213 = vld [vmem:[%s1 + $0x2e4] sm:$0xf]
  %v214 = vld [vmem:[%s1 + $0x2e8] sm:$0xf]
  %v215 = vld [vmem:[%s1 + $0x2ec] sm:$0xf]
  %v216 = vld [vmem:[%s1 + $0x2f0] sm:$0xf]
  %v217 = vld [vmem:[%s1 + $0x2f4] sm:$0xf]
  %v218 = vld [vmem:[%s1 + $0x2f8] sm:$0xf]
  %v219 = vld [vmem:[%s1 + $0x2fc] sm:$0xf]
  %v220 = vld [vmem:[%s1 + $0x300] sm:$0xf]
  %v221 = vld [vmem:[%s1 + $0x304] sm:$0xf]
  %v222 = vld [vmem:[%s1 + $0x308] sm:$0xf]
  %v223 = vld [vmem:[%s1 + $0x30c] sm:$0xf]
  %v224 = vld [vmem:[%s1 + $0x310] sm:$0xf]
  %v225 = vld [vmem:[%s1 + $0x314] sm:$0xf]
  %v226 = vld [vmem:[%s1 + $0x318] sm:$0xf]
  %v227 = vld [vmem:[%s1 + $0x31c] sm:$0xf]
  %v228 = vld [vmem:[%s1 + $0x320] sm:$0xf]
  %v229 = vld [vmem:[%s1 + $0x324] sm:$0xf]
  %v230 = vld [vmem:[%s1 + $0x328] sm:$0xf]
  %v231 = vld [vmem:[%s1 + $0x32c] sm:$0xf]
  %v232 = vld [vmem:[%s1 + $0x330] sm:$0xf]
  %v233 = vld [vmem:[%s1 + $0x334] sm:$0xf]
  %v234 = vld [vmem:[%s1 + $0x338] sm:$0xf]
  %v235 = vld [vmem:[%s1 + $0x33c] sm:$0xf]
  %v236 = vld [vmem:[%s1 + $0x340] sm:$0xf]
  %v237 = vld [vmem:[%s1 + $0x344] sm:$0xf]
  %v238 = vld [vmem:[%s1 + $0x348] sm:$0xf]
  %v239 = vld [vmem:[%s1 + $0x34c] sm:$0xf]
  %v240 = vld [vmem:[%s1 + $0x350] sm:$0xf]
  %v241 = vld [vmem:[%s1 + $0x354] sm:$0xf]
  %v242 = vld [vmem:[%s1 + $0x358] sm:$0xf]
  %v243 = vld [vmem:[%s1 + $0x35c] sm:$0xf]
  %v244 = vld [vmem:[%s1 + $0x360] sm:$0xf]
  %v245 = vld [vmem:[%s1 + $0x364] sm:$0xf]
  %v246 = vld [vmem:[%s1 + $0x368] sm:$0xf]
  %v247 = vld [vmem:[%s1 + $0x36c] sm:$0xf]
  %v248 = vld [vmem:[%s1 + $0x370] sm:$0xf]
  %v249 = vld [vmem:[%s1 + $0x374] sm:$0xf]
  %v250 = vld [vmem:[%s1 + $0x378] sm:$0xf]
  %v251 = vld [vmem:[%s1 + $0x37c] sm:$0xf]
  %v252 = vld [vmem:[%s1 + $0x380] sm:$0xf]
  %v253 = vld [vmem:[%s1 + $0x384] sm:$0xf]
  %v254 = vld [vmem:[%s1 + $0x388] sm:$0xf]
  %v255 = vld [vmem:[%s1 + $0x38c] sm:$0xf]
  %v256 = vld [vmem:[%s1 + $0x390] sm:$0xf]
  %v257 = vld [vmem:[%s1 + $0x394] sm:$0xf]
  %v258 = vld [vmem:[%s1 + $0x398] sm:$0xf]
  %v259 = vld [vmem:[%s1 + $0x39c] sm:$0xf]
  %v260 = vld [vmem:[%s1 + $0x3a0] sm:$0xf]
  %v261 = vld [vmem:[%s1 + $0x3a4] sm:$0xf]
  %v262 = vld [vmem:[%s1 + $0x3a8] sm:$0xf]
  %v263 = vld [vmem:[%s1 + $0x3ac] sm:$0xf]
  %v264 = vld [vmem:[%s1 + $0x3b0] sm:$0xf]
  %v265 = vld [vmem:[%s1 + $0x3b4] sm:$0xf]
  %v266 = vld [vmem:[%s1 + $0x3b8] sm:$0xf]
  %v267 = vld [vmem:[%s1 + $0x3bc] sm:$0xf]
  %v268 = vld [vmem:[%s1 + $0x3c0] sm:$0xf]
  %v269 = vld [vmem:[%s1 + $0x3c4] sm:$0xf]
  %v270 = vld [vmem:[%s1 + $0x3c8] sm:$0xf]
  %v271 = vld [vmem:[%s1 + $0x3cc] sm:$0xf]
  %v272 = vld [vmem:[%s1 + $0x3d0] sm:$0xf]
  %v273 = vld [vmem:[%s1 + $0x3d4] sm:$0xf]
  %v274 = vld [vmem:[%s1 + $0x3d8] sm:$0xf]
  %v275 = vld [vmem:[%s1 + $0x3dc] sm:$0xf]
  %v276 = vld [vmem:[%s1 + $0x3e0] sm:$0xf]
  %v277 = vld [vmem:[%s1 + $0x3e4] sm:$0xf]
  %v278 = vld [vmem:[%s1 + $0x3e8] sm:$0xf]
  %v279 = vld [vmem:[%s1 + $0x3ec] sm:$0xf]
  %v280 = vld [vmem:[%s1 + $0x3f0] sm:$0xf]
  %v281 = vld [vmem:[%s1 + $0x3f4] sm:$0xf]
  %v282 = vld [vmem:[%s1 + $0x3f8] sm:$0xf]
  %v283 = vld [vmem:[%s1 + $0x3fc] sm:$0xf]
  %v284 = vld [vmem:[%s1 + $0x400] sm:$0xf]
  %v285 = vld [vmem:[%s1 + $0x404] sm:$0xf]
  %v286 = vld [vmem:[%s1 + $0x408] sm:$0xf]
  %v287 = vld [vmem:[%s1 + $0x40c] sm:$0xf]
  %v288 = vld [vmem:[%s1 + $0x410] sm:$0xf]
  %v289 = vld [vmem:[%s1 + $0x414] sm:$0xf]
  %v290 = vld [vmem:[%s1 + $0x418] sm:$0xf]
  %v291 = vld [vmem:[%s1 + $0x41c] sm:$0xf]
  %v292 = vld [vmem:[%s1 + $0x420] sm:$0xf]
  %v293 = vld [vmem:[%s1 + $0x424] sm:$0xf]
  %v294 = vld [vmem:[%s1 + $0x428] sm:$0xf]
  %v295 = vld [vmem:[%s1 + $0x42c] sm:$0xf]
  %v296 = vld [vmem:[%s1 + $0x430] sm:$0xf]
  %v297 = vld [vmem:[%s1 + $0x434] sm:$0xf]
  %v298 = vld [vmem:[%s1 + $0x438] sm:$0xf]
  %v299 = vld [vmem:[%s1 + $0x43c] sm:$0xf]
  %v300 = vld [vmem:[%s1 + $0x440] sm:$0xf]
  %v301 = vld [vmem:[%s1 + $0x444] sm:$0xf]
  %v302 = vld [vmem:[%s1 + $0x448] sm:$0xf]
  %v303 = vld [vmem:[%s1 + $0x44c] sm:$0xf]
  %v304 = vld [vmem:[%s1 + $0x450] sm:$0xf]
  %v305 = vld [vmem:[%s1 + $0x454] sm:$0xf]
  %v306 = vld [vmem:[%s1 + $0x458] sm:$0xf]
  %v307 = vld [vmem:[%s1 + $0x45c] sm:$0xf]
  %v308 = vld [vmem:[%s1 + $0x460] sm:$0xf]
  %v309 = vld [vmem:[%s1 + $0x464] sm:$0xf]
  %v310 = vld [vmem:[%s1 + $0x468] sm:$0xf]
  %v311 = vld [vmem:[%s1 + $0x46c] sm:$0xf]
  %v312 = vld [vmem:[%s1 + $0x470] sm:$0xf]
  %v313 = vld [vmem:[%s1 + $0x474] sm:$0xf]
  %v314 = vld [vmem:[%s1 + $0x478] sm:$0xf]
  %v315 = vld [vmem:[%s1 + $0x47c] sm:$0xf]
  %v316 = vld [vmem:[%s1 + $0x480] sm:$0xf]
  %v317 = vld [vmem:[%s1 + $0x484] sm:$0xf]
  %v318 = vld [vmem:[%s1 + $0x488] sm:$0xf]
  %v319 = vld [vmem:[%s1 + $0x48c] sm:$0xf]
  %v320 = vld [vmem:[%s1 + $0x490] sm:$0xf]
  %v321 = vld [vmem:[%s1 + $0x494] sm:$0xf]
  %v322 = vld [vmem:[%s1 + $0x498] sm:$0xf]
  %v323 = vld [vmem:[%s1 + $0x49c] sm:$0xf]
  %v324 = vld [vmem:[%s1 + $0x4a0] sm:$0xf]
  %v325 = vld [vmem:[%s1 + $0x4a4] sm:$0xf]
  %v326 = vld [vmem:[%s1 + $0x4a8] sm:$0xf]
  %v327 = vld [vmem:[%s1 + $0x4ac] sm:$0xf]
  %v328 = vld [vmem:[%s1 + $0x4b0] sm:$0xf]
  %v329 = vld [vmem:[%s1 + $0x4b4] sm:$0xf]
  %v330 = vld [vmem:[%s1 + $0x4b8] sm:$0xf]
  %v331 = vld [vmem:[%s1 + $0x4bc] sm:$0xf]
  %v332 = vld [vmem:[%s1 + $0x4c0] sm:$0xf]
  %v333 = vld [vmem:[%s1 + $0x4c4] sm:$0xf]
  %v334 = vld [vmem:[%s1 + $0x4c8] sm:$0xf]
  %v335 = vld [vmem:[%s1 + $0x4cc] sm:$0xf]
  %v336 = vld [vmem:[%s1 + $0x4d0] sm:$0xf]
  %v337 = vld [vmem:[%s1 + $0x4d4] sm:$0xf]
  %v338 = vld [vmem:[%s1 + $0x4d8] sm:$0xf]
  %v339 = vld [vmem:[%s1 + $0x4dc] sm:$0xf]
  %v340 = vld [vmem:[%s1 + $0x4e0] sm:$0xf]
  %v341 = vld [vmem:[%s1 + $0x4e4] sm:$0xf]
  %v342 = vld [vmem:[%s1 + $0x4e8] sm:$0xf]
  %v343 = vld [vmem:[%s1 + $0x4ec] sm:$0xf]
  %v344 = vld [vmem:[%s1 + $0x4f0] sm:$0xf]
  %v345 = vld [vmem:[%s1 + $0x4f4] sm:$0xf]
  %v346 = vld [vmem:[%s1 + $0x4f8] sm:$0xf]
  %v347 = vld [vmem:[%s1 + $0x4fc] sm:$0xf]
  %v348 = vld [vmem:[%s1 + $0x500] sm:$0xf]
  %v349 = vld [vmem:[%s1 + $0x504] sm:$0xf]
  %v350 = vld [vmem:[%s1 + $0x508] sm:$0xf]
  %v351 = vld [vmem:[%s1 + $0x50c] sm:$0xf]
  %v352 = vld [vmem:[%s1 + $0x510] sm:$0xf]
  %v353 = vld [vmem:[%s1 + $0x514] sm:$0xf]
  %v354 = vld [vmem:[%s1 + $0x518] sm:$0xf]
  %v355 = vld [vmem:[%s1 + $0x51c] sm:$0xf]
  %v356 = vld [vmem:[%s1 + $0x520] sm:$0xf]
  %v357 = vld [vmem:[%s1 + $0x524] sm:$0xf]
  %v358 = vld [vmem:[%s1 + $0x528] sm:$0xf]
  %v359 = vld [vmem:[%s1 + $0x52c] sm:$0xf]
  %v360 = vld [vmem:[%s1 + $0x530] sm:$0xf]
  %v361 = vld [vmem:[%s1 + $0x534] sm:$0xf]
  %v362 = vld [vmem:[%s1 + $0x538] sm:$0xf]
  %v363 = vld [vmem:[%s1 + $0x53c] sm:$0xf]
  %v364 = vld [vmem:[%s1 + $0x540] sm:$0xf]
  %v365 = vld [vmem:[%s1 + $0x544] sm:$0xf]
  %v366 = vld [vmem:[%s1 + $0x548] sm:$0xf]
  %v367 = vld [vmem:[%s1 + $0x54c] sm:$0xf]
  %v368 = vld [vmem:[%s1 + $0x550] sm:$0xf]
  %v369 = vld [vmem:[%s1 + $0x554] sm:$0xf]
  %v370 = vld [vmem:[%s1 + $0x558] sm:$0xf]
  %v371 = vld [vmem:[%s1 + $0x55c] sm:$0xf]
  %v372 = vld [vmem:[%s1 + $0x560] sm:$0xf]
  %v373 = vld [vmem:[%s1 + $0x564] sm:$0xf]
  %v374 = vld [vmem:[%s1 + $0x568] sm:$0xf]
  %v375 = vld [vmem:[%s1 + $0x56c] sm:$0xf]
  %v376 = vld [vmem:[%s1 + $0x570] sm:$0xf]
  %v377 = vld [vmem:[%s1 + $0x574] sm:$0xf]
  %v378 = vld [vmem:[%s1 + $0x578] sm:$0xf]
  %v379 = vld [vmem:[%s1 + $0x57c] sm:$0xf]
  %v380 = vld [vmem:[%s1 + $0x580] sm:$0xf]
  %v381 = vld [vmem:[%s1 + $0x584] sm:$0xf]
  %v382 = vld [vmem:[%s1 + $0x588] sm:$0xf]
  %v383 = vld [vmem:[%s1 + $0x58c] sm:$0xf]
  %v384 = vld [vmem:[%s1 + $0x590] sm:$0xf]
  %v385 = vld [vmem:[%s1 + $0x594] sm:$0xf]
  %v386 = vld [vmem:[%s1 + $0x598] sm:$0xf]
  %v387 = vld [vmem:[%s1 + $0x59c] sm:$0xf]
  %v388 = vld [vmem:[%s1 + $0x5a0] sm:$0xf]
  %v389 = vld [vmem:[%s1 + $0x5a4] sm:$0xf]
  %v390 = vld [vmem:[%s1 + $0x5a8] sm:$0xf]
  %v391 = vld [vmem:[%s1 + $0x5ac] sm:$0xf]
  %v392 = vld [vmem:[%s1 + $0x5b0] sm:$0xf]
  %v393 = vld [vmem:[%s1 + $0x5b4] sm:$0xf]
  %v394 = vld [vmem:[%s1 + $0x5b8] sm:$0xf]
  %v395 = vld [vmem:[%s1 + $0x5bc] sm:$0xf]
  %v396 = vld [vmem:[%s1 + $0x5c0] sm:$0xf]
  %v397 = vld [vmem:[%s1 + $0x5c4] sm:$0xf]
  %v398 = vld [vmem:[%s1 + $0x5c8] sm:$0xf]
  %v399 = vld [vmem:[%s1 + $0x5cc] sm:$0xf]
  %v400 = vld [vmem:[%s1 + $0x5d0] sm:$0xf]
  %v401 = vld [vmem:[%s1 + $0x5d4] sm:$0xf]
  %v402 = vld [vmem:[%s1 + $0x5d8] sm:$0xf]
  %v403 = vld [vmem:[%s1 + $0x5dc] sm:$0xf]
  %v404 = vld [vmem:[%s1 + $0x5e0] sm:$0xf]
  %v405 = vld [vmem:[%s1 + $0x5e4] sm:$0xf]
  %v406 = vld [vmem:[%s1 + $0x5e8] sm:$0xf]
  %v407 = vld [vmem:[%s1 + $0x5ec] sm:$0xf]
  %v408 = vld [vmem:[%s1 + $0x5f0] sm:$0xf]
  %v409 = vld [vmem:[%s1 + $0x5f4] sm:$0xf]
  %v410 = vld [vmem:[%s1 + $0x5f8] sm:$0xf]
  %v411 = vld [vmem:[%s1 + $0x5fc] sm:$0xf]
  %v412 = vld [vmem:[%s1 + $0x600] sm:$0xf]
  %v413 = vld [vmem:[%s1 + $0x604] sm:$0xf]
  %v414 = vld [vmem:[%s1 + $0x608] sm:$0xf]
  %v415 = vld [vmem:[%s1 + $0x60c] sm:$0xf]
  %v416 = vld [vmem:[%s1 + $0x610] sm:$0xf]
  %v417 = vld [vmem:[%s1 + $0x614] sm:$0xf]
  %v418 = vld [vmem:[%s1 + $0x618] sm:$0xf]
  %v419 = vld [vmem:[%s1 + $0x61c] sm:$0xf]
  %v420 = vld [vmem:[%s1 + $0x620] sm:$0xf]
  %v421 = vld [vmem:[%s1 + $0x624] sm:$0xf]
  %v422 = vld [vmem:[%s1 + $0x628] sm:$0xf]
  %v423 = vld [vmem:[%s1 + $0x62c] sm:$0xf]
  %v424 = vld [vmem:[%s1 + $0x630] sm:$0xf]
  %v425 = vld [vmem:[%s1 + $0x634] sm:$0xf]
  %v426 = vld [vmem:[%s1 + $0x638] sm:$0xf]
  %v427 = vld [vmem:[%s1 + $0x63c] sm:$0xf]
  %v428 = vld [vmem:[%s1 + $0x640] sm:$0xf]
  %v429 = vld [vmem:[%s1 + $0x644] sm:$0xf]
  %v430 = vld [vmem:[%s1 + $0x648] sm:$0xf]
  %v431 = vld [vmem:[%s1 + $0x64c] sm:$0xf]
  %v432 = vld [vmem:[%s1 + $0x650] sm:$0xf]
  %v433 = vld [vmem:[%s1 + $0x654] sm:$0xf]
  %v434 = vld [vmem:[%s1 + $0x658] sm:$0xf]
  %v435 = vld [vmem:[%s1 + $0x65c] sm:$0xf]
  %v436 = vld [vmem:[%s1 + $0x660] sm:$0xf]
  %v437 = vld [vmem:[%s1 + $0x664] sm:$0xf]
  %v438 = vld [vmem:[%s1 + $0x668] sm:$0xf]
  %v439 = vld [vmem:[%s1 + $0x66c] sm:$0xf]
  %v440 = vld [vmem:[%s1 + $0x670] sm:$0xf]
  %v441 = vld [vmem:[%s1 + $0x674] sm:$0xf]
  %v442 = vld [vmem:[%s1 + $0x678] sm:$0xf]
  %v443 = vld [vmem:[%s1 + $0x67c] sm:$0xf]
  %v444 = vld [vmem:[%s1 + $0x680] sm:$0xf]
  %v445 = vld [vmem:[%s1 + $0x684] sm:$0xf]
  %v446 = vld [vmem:[%s1 + $0x688] sm:$0xf]
  %v447 = vld [vmem:[%s1 + $0x68c] sm:$0xf]
  %v448 = vld [vmem:[%s1 + $0x690] sm:$0xf]
  %v449 = vld [vmem:[%s1 + $0x694] sm:$0xf]
  %v450 = vld [vmem:[%s1 + $0x698] sm:$0xf]
  %v451 = vld [vmem:[%s1 + $0x69c] sm:$0xf]
  %v452 = vld [vmem:[%s1 + $0x6a0] sm:$0xf]
  %v453 = vld [vmem:[%s1 + $0x6a4] sm:$0xf]
  %v454 = vld [vmem:[%s1 + $0x6a8] sm:$0xf]
  %v455 = vld [vmem:[%s1 + $0x6ac] sm:$0xf]
  %v456 = vld [vmem:[%s1 + $0x6b0] sm:$0xf]
  %v457 = vld [vmem:[%s1 + $0x6b4] sm:$0xf]
  %v458 = vld [vmem:[%s1 + $0x6b8] sm:$0xf]
  %v459 = vld [vmem:[%s1 + $0x6bc] sm:$0xf]
  %v460 = vld [vmem:[%s1 + $0x6c0] sm:$0xf]
  %v461 = vld [vmem:[%s1 + $0x6c4] sm:$0xf]
  %v462 = vld [vmem:[%s1 + $0x6c8] sm:$0xf]
  %v463 = vld [vmem:[%s1 + $0x6cc] sm:$0xf]
  %v464 = vld [vmem:[%s1 + $0x6d0] sm:$0xf]
  %v465 = vld [vmem:[%s1 + $0x6d4] sm:$0xf]
  %v466 = vld [vmem:[%s1 + $0x6d8] sm:$0xf]
  %v467 = vld [vmem:[%s1 + $0x6dc] sm:$0xf]
  %v468 = vld [vmem:[%s1 + $0x6e0] sm:$0xf]
  %v469 = vld [vmem:[%s1 + $0x6e4] sm:$0xf]
  %v470 = vld [vmem:[%s1 + $0x6e8] sm:$0xf]
  %v471 = vld [vmem:[%s1 + $0x6ec] sm:$0xf]
  %v472 = vld [vmem:[%s1 + $0x6f0] sm:$0xf]
  %v473 = vld [vmem:[%s1 + $0x6f4] sm:$0xf]
  %v474 = vld [vmem:[%s1 + $0x6f8] sm:$0xf]
  %v475 = vld [vmem:[%s1 + $0x6fc] sm:$0xf]
  %v476 = vld [vmem:[%s1 + $0x700] sm:$0xf]
  %v477 = vld [vmem:[%s1 + $0x704] sm:$0xf]
  %v478 = vld [vmem:[%s1 + $0x708] sm:$0xf]
  %v479 = vld [vmem:[%s1 + $0x70c] sm:$0xf]
  %v480 = vld [vmem:[%s1 + $0x710] sm:$0xf]
  %v481 = vld [vmem:[%s1 + $0x714] sm:$0xf]
  %v482 = vld [vmem:[%s1 + $0x718] sm:$0xf]
  %v483 = vld [vmem:[%s1 + $0x71c] sm:$0xf]
  %v484 = vld [vmem:[%s1 + $0x720] sm:$0xf]
  %v485 = vld [vmem:[%s1 + $0x724] sm:$0xf]
  %v486 = vld [vmem:[%s1 + $0x728] sm:$0xf]
  %v487 = vld [vmem:[%s1 + $0x72c] sm:$0xf]
  %v488 = vld [vmem:[%s1 + $0x730] sm:$0xf]
  %v489 = vld [vmem:[%s1 + $0x734] sm:$0xf]
  %v490 = vld [vmem:[%s1 + $0x738] sm:$0xf]
  %v491 = vld [vmem:[%s1 + $0x73c] sm:$0xf]
  %v492 = vld [vmem:[%s1 + $0x740] sm:$0xf]
  %v493 = vld [vmem:[%s1 + $0x744] sm:$0xf]
  %v494 = vld [vmem:[%s1 + $0x748] sm:$0xf]
  %v495 = vld [vmem:[%s1 + $0x74c] sm:$0xf]
  %v496 = vld [vmem:[%s1 + $0x750] sm:$0xf]
  %v497 = vld [vmem:[%s1 + $0x754] sm:$0xf]
  %v498 = vld [vmem:[%s1 + $0x758] sm:$0xf]
  %v499 = vld [vmem:[%s1 + $0x75c] sm:$0xf]
  %v500 = vld [vmem:[%s1 + $0x760] sm:$0xf]
  %v501 = vld [vmem:[%s1 + $0x764] sm:$0xf]
  %v502 = vld [vmem:[%s1 + $0x768] sm:$0xf]
  %v503 = vld [vmem:[%s1 + $0x76c] sm:$0xf]
  %v504 = vld [vmem:[%s1 + $0x770] sm:$0xf]
  %v505 = vld [vmem:[%s1 + $0x774] sm:$0xf]
  %v506 = vld [vmem:[%s1 + $0x778] sm:$0xf]
  %v507 = vld [vmem:[%s1 + $0x77c] sm:$0xf]
  %v508 = vld [vmem:[%s1 + $0x780] sm:$0xf]
  %v509 = vld [vmem:[%s1 + $0x784] sm:$0xf]
  %v510 = vld [vmem:[%s1 + $0x788] sm:$0xf]
  %v511 = vld [vmem:[%s1 + $0x78c] sm:$0xf]
  %v512 = vld [vmem:[%s1 + $0x790] sm:$0xf]
  %v513 = vld [vmem:[%s1 + $0x794] sm:$0xf]
  %v514 = vld [vmem:[%s1 + $0x798] sm:$0xf]
  %v515 = vld [vmem:[%s1 + $0x79c] sm:$0xf]
  %v516 = vld [vmem:[%s1 + $0x7a0] sm:$0xf]
  %v517 = vld [vmem:[%s1 + $0x7a4] sm:$0xf]
  %v518 = vld [vmem:[%s1 + $0x7a8] sm:$0xf]
  %v519 = vld [vmem:[%s1 + $0x7ac] sm:$0xf]
  %v520 = vld [vmem:[%s1 + $0x7b0] sm:$0xf]
  %v521 = vld [vmem:[%s1 + $0x7b4] sm:$0xf]
  %v522 = vld [vmem:[%s1 + $0x7b8] sm:$0xf]
  %v523 = vld [vmem:[%s1 + $0x7bc] sm:$0xf]
  %v524 = vld [vmem:[%s1 + $0x7c0] sm:$0xf]
  %v525 = vld [vmem:[%s1 + $0x7c4] sm:$0xf]
  %v526 = vld [vmem:[%s1 + $0x7c8] sm:$0xf]
  %v527 = vld [vmem:[%s1 + $0x7cc] sm:$0xf]
  %v528 = vld [vmem:[%s1 + $0x7d0] sm:$0xf]
  %v529 = vld [vmem:[%s1 + $0x7d4] sm:$0xf]
  %v530 = vld [vmem:[%s1 + $0x7d8] sm:$0xf]
  %v531 = vld [vmem:[%s1 + $0x7dc] sm:$0xf]
  %v532 = vld [vmem:[%s1 + $0x7e0] sm:$0xf]
  %v533 = vld [vmem:[%s1 + $0x7e4] sm:$0xf]
  %v534 = vld [vmem:[%s1 + $0x7e8] sm:$0xf]
  %v535 = vld [vmem:[%s1 + $0x7ec] sm:$0xf]
  %v536 = vld [vmem:[%s1 + $0x7f0] sm:$0xf]
  %v537 = vld [vmem:[%s1 + $0x7f4] sm:$0xf]
  %v538 = vld [vmem:[%s1 + $0x7f8] sm:$0xf]
  %v539 = vld [vmem:[%s1 + $0x7fc] sm:$0xf]
  %v556 = vunpack.c.l.b16 %v12
  %v557 = vunpack.c.h.b16 %v12
  %v558 = vunpack.c.l.b16 %v13
  %v559 = vunpack.c.h.b16 %v13
  %v560 = vunpack.c.l.b16 %v14
  %v561 = vunpack.c.h.b16 %v14
  %v562 = vunpack.c.l.b16 %v15
  %v563 = vunpack.c.h.b16 %v15
  %v564 = vunpack.c.l.b16 %v16
  %v565 = vunpack.c.h.b16 %v16
  %v566 = vunpack.c.l.b16 %v17
  %v567 = vunpack.c.h.b16 %v17
  %v568 = vunpack.c.l.b16 %v18
  %v569 = vunpack.c.h.b16 %v18
  %v570 = vunpack.c.l.b16 %v19
  %v571 = vunpack.c.h.b16 %v19
  %v572 = vunpack.c.l.b16 %v20
  %v573 = vunpack.c.h.b16 %v20
  %v574 = vunpack.c.l.b16 %v21
  %v575 = vunpack.c.h.b16 %v21
  %v576 = vunpack.c.l.b16 %v22
  %v577 = vunpack.c.h.b16 %v22
  %v578 = vunpack.c.l.b16 %v23
  %v579 = vunpack.c.h.b16 %v23
  %v580 = vunpack.c.l.b16 %v24
  %v581 = vunpack.c.h.b16 %v24
  %v582 = vunpack.c.l.b16 %v25
  %v583 = vunpack.c.h.b16 %v25
  %v584 = vunpack.c.l.b16 %v26
  %v585 = vunpack.c.h.b16 %v26
  %v586 = vunpack.c.l.b16 %v27
  %v587 = vunpack.c.h.b16 %v27
  %v588 = vpack.c.b16 %v556, %v556
  %v589 = vpack.c.b16 %v557, %v557
  %v590 = vpack.c.b16 %v558, %v558
  %v591 = vpack.c.b16 %v559, %v559
  %v592 = vpack.c.b16 %v560, %v560
  %v593 = vpack.c.b16 %v561, %v561
  %v594 = vpack.c.b16 %v562, %v562
  %v595 = vpack.c.b16 %v563, %v563
  %v596 = vpack.c.b16 %v564, %v564
  %v597 = vpack.c.b16 %v565, %v565
  %v598 = vpack.c.b16 %v566, %v566
  %v599 = vpack.c.b16 %v567, %v567
  %v600 = vpack.c.b16 %v568, %v568
  %v601 = vpack.c.b16 %v569, %v569
  %v602 = vpack.c.b16 %v570, %v570
  %v603 = vpack.c.b16 %v571, %v571
  %v604 = vpack.c.b16 %v572, %v572
  %v605 = vpack.c.b16 %v573, %v573
  %v606 = vpack.c.b16 %v574, %v574
  %v607 = vpack.c.b16 %v575, %v575
  %v608 = vpack.c.b16 %v576, %v576
  %v609 = vpack.c.b16 %v577, %v577
  %v610 = vpack.c.b16 %v578, %v578
  %v611 = vpack.c.b16 %v579, %v579
  %v612 = vpack.c.b16 %v580, %v580
  %v613 = vpack.c.b16 %v581, %v581
  %v614 = vpack.c.b16 %v582, %v582
  %v615 = vpack.c.b16 %v583, %v583
  %v616 = vpack.c.b16 %v584, %v584
  %v617 = vpack.c.b16 %v585, %v585
  %v618 = vpack.c.b16 %v586, %v586
  %v619 = vpack.c.b16 %v587, %v587
  %v1164 = vunpack.c.l.b16 %v28
  %v1165 = vunpack.c.l.b16 %v29
  %v1166 = vunpack.c.l.b16 %v30
  %v1167 = vunpack.c.l.b16 %v31
  %v1168 = vunpack.c.l.b16 %v32
  %v1169 = vunpack.c.l.b16 %v33
  %v1170 = vunpack.c.l.b16 %v34
  %v1171 = vunpack.c.l.b16 %v35
  %v1172 = vunpack.c.l.b16 %v36
  %v1173 = vunpack.c.l.b16 %v37
  %v1174 = vunpack.c.l.b16 %v38
  %v1175 = vunpack.c.l.b16 %v39
  %v1176 = vunpack.c.l.b16 %v40
  %v1177 = vunpack.c.l.b16 %v41
  %v1178 = vunpack.c.l.b16 %v42
  %v1179 = vunpack.c.l.b16 %v43
  %v1180 = vunpack.c.l.b16 %v44
  %v1181 = vunpack.c.l.b16 %v45
  %v1182 = vunpack.c.l.b16 %v46
  %v1183 = vunpack.c.l.b16 %v47
  %v1184 = vunpack.c.l.b16 %v48
  %v1185 = vunpack.c.l.b16 %v49
  %v1186 = vunpack.c.l.b16 %v50
  %v1187 = vunpack.c.l.b16 %v51
  %v1188 = vunpack.c.l.b16 %v52
  %v1189 = vunpack.c.l.b16 %v53
  %v1190 = vunpack.c.l.b16 %v54
  %v1191 = vunpack.c.l.b16 %v55
  %v1192 = vunpack.c.l.b16 %v56
  %v1193 = vunpack.c.l.b16 %v57
  %v1194 = vunpack.c.l.b16 %v58
  %v1195 = vunpack.c.l.b16 %v59
  %v1196 = vunpack.c.l.b16 %v60
  %v1197 = vunpack.c.l.b16 %v61
  %v1198 = vunpack.c.l.b16 %v62
  %v1199 = vunpack.c.l.b16 %v63
  %v1200 = vunpack.c.l.b16 %v64
  %v1201 = vunpack.c.l.b16 %v65
  %v1202 = vunpack.c.l.b16 %v66
  %v1203 = vunpack.c.l.b16 %v67
  %v1204 = vunpack.c.l.b16 %v68
  %v1205 = vunpack.c.l.b16 %v69
  %v1206 = vunpack.c.l.b16 %v70
  %v1207 = vunpack.c.l.b16 %v71
  %v1208 = vunpack.c.l.b16 %v72
  %v1209 = vunpack.c.l.b16 %v73
  %v1210 = vunpack.c.l.b16 %v74
  %v1211 = vunpack.c.l.b16 %v75
  %v1212 = vunpack.c.l.b16 %v76
  %v1213 = vunpack.c.l.b16 %v77
  %v1214 = vunpack.c.l.b16 %v78
  %v1215 = vunpack.c.l.b16 %v79
  %v1216 = vunpack.c.l.b16 %v80
  %v1217 = vunpack.c.l.b16 %v81
  %v1218 = vunpack.c.l.b16 %v82
  %v1219 = vunpack.c.l.b16 %v83
  %v1220 = vunpack.c.l.b16 %v84
  %v1221 = vunpack.c.l.b16 %v85
  %v1222 = vunpack.c.l.b16 %v86
  %v1223 = vunpack.c.l.b16 %v87
  %v1224 = vunpack.c.l.b16 %v88
  %v1225 = vunpack.c.l.b16 %v89
  %v1226 = vunpack.c.l.b16 %v90
  %v1227 = vunpack.c.l.b16 %v91
  %v1228 = vunpack.c.l.b16 %v92
  %v1229 = vunpack.c.l.b16 %v93
  %v1230 = vunpack.c.l.b16 %v94
  %v1231 = vunpack.c.l.b16 %v95
  %v1232 = vunpack.c.l.b16 %v96
  %v1233 = vunpack.c.l.b16 %v97
  %v1234 = vunpack.c.l.b16 %v98
  %v1235 = vunpack.c.l.b16 %v99
  %v1236 = vunpack.c.l.b16 %v100
  %v1237 = vunpack.c.l.b16 %v101
  %v1238 = vunpack.c.l.b16 %v102
  %v1239 = vunpack.c.l.b16 %v103
  %v1240 = vunpack.c.l.b16 %v104
  %v1241 = vunpack.c.l.b16 %v105
  %v1242 = vunpack.c.l.b16 %v106
  %v1243 = vunpack.c.l.b16 %v107
  %v1244 = vunpack.c.l.b16 %v108
  %v1245 = vunpack.c.l.b16 %v109
  %v1246 = vunpack.c.l.b16 %v110
  %v1247 = vunpack.c.l.b16 %v111
  %v1248 = vunpack.c.l.b16 %v112
  %v1249 = vunpack.c.l.b16 %v113
  %v1250 = vunpack.c.l.b16 %v114
  %v1251 = vunpack.c.l.b16 %v115
  %v1252 = vunpack.c.l.b16 %v116
  %v1253 = vunpack.c.l.b16 %v117
  %v1254 = vunpack.c.l.b16 %v118
  %v1255 = vunpack.c.l.b16 %v119
  %v1256 = vunpack.c.l.b16 %v120
  %v1257 = vunpack.c.l.b16 %v121
  %v1258 = vunpack.c.l.b16 %v122
  %v1259 = vunpack.c.l.b16 %v123
  %v1260 = vunpack.c.l.b16 %v124
  %v1261 = vunpack.c.l.b16 %v125
  %v1262 = vunpack.c.l.b16 %v126
  %v1263 = vunpack.c.l.b16 %v127
  %v1264 = vunpack.c.l.b16 %v128
  %v1265 = vunpack.c.l.b16 %v129
  %v1266 = vunpack.c.l.b16 %v130
  %v1267 = vunpack.c.l.b16 %v131
  %v1268 = vunpack.c.l.b16 %v132
  %v1269 = vunpack.c.l.b16 %v133
  %v1270 = vunpack.c.l.b16 %v134
  %v1271 = vunpack.c.l.b16 %v135
  %v1272 = vunpack.c.l.b16 %v136
  %v1273 = vunpack.c.l.b16 %v137
  %v1274 = vunpack.c.l.b16 %v138
  %v1275 = vunpack.c.l.b16 %v139
  %v1276 = vunpack.c.l.b16 %v140
  %v1277 = vunpack.c.l.b16 %v141
  %v1278 = vunpack.c.l.b16 %v142
  %v1279 = vunpack.c.l.b16 %v143
  %v1280 = vunpack.c.l.b16 %v144
  %v1281 = vunpack.c.l.b16 %v145
  %v1282 = vunpack.c.l.b16 %v146
  %v1283 = vunpack.c.l.b16 %v147
  %v1284 = vunpack.c.l.b16 %v148
  %v1285 = vunpack.c.l.b16 %v149
  %v1286 = vunpack.c.l.b16 %v150
  %v1287 = vunpack.c.l.b16 %v151
  %v1288 = vunpack.c.l.b16 %v152
  %v1289 = vunpack.c.l.b16 %v153
  %v1290 = vunpack.c.l.b16 %v154
  %v1291 = vunpack.c.l.b16 %v155
  %v1292 = vunpack.c.l.b16 %v156
  %v1293 = vunpack.c.l.b16 %v157
  %v1294 = vunpack.c.l.b16 %v158
  %v1295 = vunpack.c.l.b16 %v159
  %v1296 = vunpack.c.l.b16 %v160
  %v1297 = vunpack.c.l.b16 %v161
  %v1298 = vunpack.c.l.b16 %v162
  %v1299 = vunpack.c.l.b16 %v163
  %v1300 = vunpack.c.l.b16 %v164
  %v1301 = vunpack.c.l.b16 %v165
  %v1302 = vunpack.c.l.b16 %v166
  %v1303 = vunpack.c.l.b16 %v167
  %v1304 = vunpack.c.l.b16 %v168
  %v1305 = vunpack.c.l.b16 %v169
  %v1306 = vunpack.c.l.b16 %v170
  %v1307 = vunpack.c.l.b16 %v171
  %v1308 = vunpack.c.l.b16 %v172
  %v1309 = vunpack.c.l.b16 %v173
  %v1310 = vunpack.c.l.b16 %v174
  %v1311 = vunpack.c.l.b16 %v175
  %v1312 = vunpack.c.l.b16 %v176
  %v1313 = vunpack.c.l.b16 %v177
  %v1314 = vunpack.c.l.b16 %v178
  %v1315 = vunpack.c.l.b16 %v179
  %v1316 = vunpack.c.l.b16 %v180
  %v1317 = vunpack.c.l.b16 %v181
  %v1318 = vunpack.c.l.b16 %v182
  %v1319 = vunpack.c.l.b16 %v183
  %v1320 = vunpack.c.l.b16 %v184
  %v1321 = vunpack.c.l.b16 %v185
  %v1322 = vunpack.c.l.b16 %v186
  %v1323 = vunpack.c.l.b16 %v187
  %v1324 = vunpack.c.l.b16 %v188
  %v1325 = vunpack.c.l.b16 %v189
  %v1326 = vunpack.c.l.b16 %v190
  %v1327 = vunpack.c.l.b16 %v191
  %v1328 = vunpack.c.l.b16 %v192
  %v1329 = vunpack.c.l.b16 %v193
  %v1330 = vunpack.c.l.b16 %v194
  %v1331 = vunpack.c.l.b16 %v195
  %v1332 = vunpack.c.l.b16 %v196
  %v1333 = vunpack.c.l.b16 %v197
  %v1334 = vunpack.c.l.b16 %v198
  %v1335 = vunpack.c.l.b16 %v199
  %v1336 = vunpack.c.l.b16 %v200
  %v1337 = vunpack.c.l.b16 %v201
  %v1338 = vunpack.c.l.b16 %v202
  %v1339 = vunpack.c.l.b16 %v203
  %v1340 = vunpack.c.l.b16 %v204
  %v1341 = vunpack.c.l.b16 %v205
  %v1342 = vunpack.c.l.b16 %v206
  %v1343 = vunpack.c.l.b16 %v207
  %v1344 = vunpack.c.l.b16 %v208
  %v1345 = vunpack.c.l.b16 %v209
  %v1346 = vunpack.c.l.b16 %v210
  %v1347 = vunpack.c.l.b16 %v211
  %v1348 = vunpack.c.l.b16 %v212
  %v1349 = vunpack.c.l.b16 %v213
  %v1350 = vunpack.c.l.b16 %v214
  %v1351 = vunpack.c.l.b16 %v215
  %v1352 = vunpack.c.l.b16 %v216
  %v1353 = vunpack.c.l.b16 %v217
  %v1354 = vunpack.c.l.b16 %v218
  %v1355 = vunpack.c.l.b16 %v219
  %v1356 = vunpack.c.l.b16 %v220
  %v1357 = vunpack.c.l.b16 %v221
  %v1358 = vunpack.c.l.b16 %v222
  %v1359 = vunpack.c.l.b16 %v223
  %v1360 = vunpack.c.l.b16 %v224
  %v1361 = vunpack.c.l.b16 %v225
  %v1362 = vunpack.c.l.b16 %v226
  %v1363 = vunpack.c.l.b16 %v227
  %v1364 = vunpack.c.l.b16 %v228
  %v1365 = vunpack.c.l.b16 %v229
  %v1366 = vunpack.c.l.b16 %v230
  %v1367 = vunpack.c.l.b16 %v231
  %v1368 = vunpack.c.l.b16 %v232
  %v1369 = vunpack.c.l.b16 %v233
  %v1370 = vunpack.c.l.b16 %v234
  %v1371 = vunpack.c.l.b16 %v235
  %v1372 = vunpack.c.l.b16 %v236
  %v1373 = vunpack.c.l.b16 %v237
  %v1374 = vunpack.c.l.b16 %v238
  %v1375 = vunpack.c.l.b16 %v239
  %v1376 = vunpack.c.l.b16 %v240
  %v1377 = vunpack.c.l.b16 %v241
  %v1378 = vunpack.c.l.b16 %v242
  %v1379 = vunpack.c.l.b16 %v243
  %v1380 = vunpack.c.l.b16 %v244
  %v1381 = vunpack.c.l.b16 %v245
  %v1382 = vunpack.c.l.b16 %v246
  %v1383 = vunpack.c.l.b16 %v247
  %v1384 = vunpack.c.l.b16 %v248
  %v1385 = vunpack.c.l.b16 %v249
  %v1386 = vunpack.c.l.b16 %v250
  %v1387 = vunpack.c.l.b16 %v251
  %v1388 = vunpack.c.l.b16 %v252
  %v1389 = vunpack.c.l.b16 %v253
  %v1390 = vunpack.c.l.b16 %v254
  %v1391 = vunpack.c.l.b16 %v255
  %v1392 = vunpack.c.l.b16 %v256
  %v1393 = vunpack.c.l.b16 %v257
  %v1394 = vunpack.c.l.b16 %v258
  %v1395 = vunpack.c.l.b16 %v259
  %v1396 = vunpack.c.l.b16 %v260
  %v1397 = vunpack.c.l.b16 %v261
  %v1398 = vunpack.c.l.b16 %v262
  %v1399 = vunpack.c.l.b16 %v263
  %v1400 = vunpack.c.l.b16 %v264
  %v1401 = vunpack.c.l.b16 %v265
  %v1402 = vunpack.c.l.b16 %v266
  %v1403 = vunpack.c.l.b16 %v267
  %v1404 = vunpack.c.l.b16 %v268
  %v1405 = vunpack.c.l.b16 %v269
  %v1406 = vunpack.c.l.b16 %v270
  %v1407 = vunpack.c.l.b16 %v271
  %v1408 = vunpack.c.l.b16 %v272
  %v1409 = vunpack.c.l.b16 %v273
  %v1410 = vunpack.c.l.b16 %v274
  %v1411 = vunpack.c.l.b16 %v275
  %v1412 = vunpack.c.l.b16 %v276
  %v1413 = vunpack.c.l.b16 %v277
  %v1414 = vunpack.c.l.b16 %v278
  %v1415 = vunpack.c.l.b16 %v279
  %v1416 = vunpack.c.l.b16 %v280
  %v1417 = vunpack.c.l.b16 %v281
  %v1418 = vunpack.c.l.b16 %v282
  %v1419 = vunpack.c.l.b16 %v283
  %v1420 = vunpack.c.l.b16 %v284
  %v1421 = vunpack.c.l.b16 %v285
  %v1422 = vunpack.c.l.b16 %v286
  %v1423 = vunpack.c.l.b16 %v287
  %v1424 = vunpack.c.l.b16 %v288
  %v1425 = vunpack.c.l.b16 %v289
  %v1426 = vunpack.c.l.b16 %v290
  %v1427 = vunpack.c.l.b16 %v291
  %v1428 = vunpack.c.l.b16 %v292
  %v1429 = vunpack.c.l.b16 %v293
  %v1430 = vunpack.c.l.b16 %v294
  %v1431 = vunpack.c.l.b16 %v295
  %v1432 = vunpack.c.l.b16 %v296
  %v1433 = vunpack.c.l.b16 %v297
  %v1434 = vunpack.c.l.b16 %v298
  %v1435 = vunpack.c.l.b16 %v299
  %v1436 = vunpack.c.l.b16 %v300
  %v1437 = vunpack.c.l.b16 %v301
  %v1438 = vunpack.c.l.b16 %v302
  %v1439 = vunpack.c.l.b16 %v303
  %v1440 = vunpack.c.l.b16 %v304
  %v1441 = vunpack.c.l.b16 %v305
  %v1442 = vunpack.c.l.b16 %v306
  %v1443 = vunpack.c.l.b16 %v307
  %v1444 = vunpack.c.l.b16 %v308
  %v1445 = vunpack.c.l.b16 %v309
  %v1446 = vunpack.c.l.b16 %v310
  %v1447 = vunpack.c.l.b16 %v311
  %v1448 = vunpack.c.l.b16 %v312
  %v1449 = vunpack.c.l.b16 %v313
  %v1450 = vunpack.c.l.b16 %v314
  %v1451 = vunpack.c.l.b16 %v315
  %v1452 = vunpack.c.l.b16 %v316
  %v1453 = vunpack.c.l.b16 %v317
  %v1454 = vunpack.c.l.b16 %v318
  %v1455 = vunpack.c.l.b16 %v319
  %v1456 = vunpack.c.l.b16 %v320
  %v1457 = vunpack.c.l.b16 %v321
  %v1458 = vunpack.c.l.b16 %v322
  %v1459 = vunpack.c.l.b16 %v323
  %v1460 = vunpack.c.l.b16 %v324
  %v1461 = vunpack.c.l.b16 %v325
  %v1462 = vunpack.c.l.b16 %v326
  %v1463 = vunpack.c.l.b16 %v327
  %v1464 = vunpack.c.l.b16 %v328
  %v1465 = vunpack.c.l.b16 %v329
  %v1466 = vunpack.c.l.b16 %v330
  %v1467 = vunpack.c.l.b16 %v331
  %v1468 = vunpack.c.l.b16 %v332
  %v1469 = vunpack.c.l.b16 %v333
  %v1470 = vunpack.c.l.b16 %v334
  %v1471 = vunpack.c.l.b16 %v335
  %v1472 = vunpack.c.l.b16 %v336
  %v1473 = vunpack.c.l.b16 %v337
  %v1474 = vunpack.c.l.b16 %v338
  %v1475 = vunpack.c.l.b16 %v339
  %v1476 = vunpack.c.l.b16 %v340
  %v1477 = vunpack.c.l.b16 %v341
  %v1478 = vunpack.c.l.b16 %v342
  %v1479 = vunpack.c.l.b16 %v343
  %v1480 = vunpack.c.l.b16 %v344
  %v1481 = vunpack.c.l.b16 %v345
  %v1482 = vunpack.c.l.b16 %v346
  %v1483 = vunpack.c.l.b16 %v347
  %v1484 = vunpack.c.l.b16 %v348
  %v1485 = vunpack.c.l.b16 %v349
  %v1486 = vunpack.c.l.b16 %v350
  %v1487 = vunpack.c.l.b16 %v351
  %v1488 = vunpack.c.l.b16 %v352
  %v1489 = vunpack.c.l.b16 %v353
  %v1490 = vunpack.c.l.b16 %v354
  %v1491 = vunpack.c.l.b16 %v355
  %v1492 = vunpack.c.l.b16 %v356
  %v1493 = vunpack.c.l.b16 %v357
  %v1494 = vunpack.c.l.b16 %v358
  %v1495 = vunpack.c.l.b16 %v359
  %v1496 = vunpack.c.l.b16 %v360
  %v1497 = vunpack.c.l.b16 %v361
  %v1498 = vunpack.c.l.b16 %v362
  %v1499 = vunpack.c.l.b16 %v363
  %v1500 = vunpack.c.l.b16 %v364
  %v1501 = vunpack.c.l.b16 %v365
  %v1502 = vunpack.c.l.b16 %v366
  %v1503 = vunpack.c.l.b16 %v367
  %v1504 = vunpack.c.l.b16 %v368
  %v1505 = vunpack.c.l.b16 %v369
  %v1506 = vunpack.c.l.b16 %v370
  %v1507 = vunpack.c.l.b16 %v371
  %v1508 = vunpack.c.l.b16 %v372
  %v1509 = vunpack.c.l.b16 %v373
  %v1510 = vunpack.c.l.b16 %v374
  %v1511 = vunpack.c.l.b16 %v375
  %v1512 = vunpack.c.l.b16 %v376
  %v1513 = vunpack.c.l.b16 %v377
  %v1514 = vunpack.c.l.b16 %v378
  %v1515 = vunpack.c.l.b16 %v379
  %v1516 = vunpack.c.l.b16 %v380
  %v1517 = vunpack.c.l.b16 %v381
  %v1518 = vunpack.c.l.b16 %v382
  %v1519 = vunpack.c.l.b16 %v383
  %v1520 = vunpack.c.l.b16 %v384
  %v1521 = vunpack.c.l.b16 %v385
  %v1522 = vunpack.c.l.b16 %v386
  %v1523 = vunpack.c.l.b16 %v387
  %v1524 = vunpack.c.l.b16 %v388
  %v1525 = vunpack.c.l.b16 %v389
  %v1526 = vunpack.c.l.b16 %v390
  %v1527 = vunpack.c.l.b16 %v391
  %v1528 = vunpack.c.l.b16 %v392
  %v1529 = vunpack.c.l.b16 %v393
  %v1530 = vunpack.c.l.b16 %v394
  %v1531 = vunpack.c.l.b16 %v395
  %v1532 = vunpack.c.l.b16 %v396
  %v1533 = vunpack.c.l.b16 %v397
  %v1534 = vunpack.c.l.b16 %v398
  %v1535 = vunpack.c.l.b16 %v399
  %v1536 = vunpack.c.l.b16 %v400
  %v1537 = vunpack.c.l.b16 %v401
  %v1538 = vunpack.c.l.b16 %v402
  %v1539 = vunpack.c.l.b16 %v403
  %v1540 = vunpack.c.l.b16 %v404
  %v1541 = vunpack.c.l.b16 %v405
  %v1542 = vunpack.c.l.b16 %v406
  %v1543 = vunpack.c.l.b16 %v407
  %v1544 = vunpack.c.l.b16 %v408
  %v1545 = vunpack.c.l.b16 %v409
  %v1546 = vunpack.c.l.b16 %v410
  %v1547 = vunpack.c.l.b16 %v411
  %v1548 = vunpack.c.l.b16 %v412
  %v1549 = vunpack.c.l.b16 %v413
  %v1550 = vunpack.c.l.b16 %v414
  %v1551 = vunpack.c.l.b16 %v415
  %v1552 = vunpack.c.l.b16 %v416
  %v1553 = vunpack.c.l.b16 %v417
  %v1554 = vunpack.c.l.b16 %v418
  %v1555 = vunpack.c.l.b16 %v419
  %v1556 = vunpack.c.l.b16 %v420
  %v1557 = vunpack.c.l.b16 %v421
  %v1558 = vunpack.c.l.b16 %v422
  %v1559 = vunpack.c.l.b16 %v423
  %v1560 = vunpack.c.l.b16 %v424
  %v1561 = vunpack.c.l.b16 %v425
  %v1562 = vunpack.c.l.b16 %v426
  %v1563 = vunpack.c.l.b16 %v427
  %v1564 = vunpack.c.l.b16 %v428
  %v1565 = vunpack.c.l.b16 %v429
  %v1566 = vunpack.c.l.b16 %v430
  %v1567 = vunpack.c.l.b16 %v431
  %v1568 = vunpack.c.l.b16 %v432
  %v1569 = vunpack.c.l.b16 %v433
  %v1570 = vunpack.c.l.b16 %v434
  %v1571 = vunpack.c.l.b16 %v435
  %v1572 = vunpack.c.l.b16 %v436
  %v1573 = vunpack.c.l.b16 %v437
  %v1574 = vunpack.c.l.b16 %v438
  %v1575 = vunpack.c.l.b16 %v439
  %v1576 = vunpack.c.l.b16 %v440
  %v1577 = vunpack.c.l.b16 %v441
  %v1578 = vunpack.c.l.b16 %v442
  %v1579 = vunpack.c.l.b16 %v443
  %v1580 = vunpack.c.l.b16 %v444
  %v1581 = vunpack.c.l.b16 %v445
  %v1582 = vunpack.c.l.b16 %v446
  %v1583 = vunpack.c.l.b16 %v447
  %v1584 = vunpack.c.l.b16 %v448
  %v1585 = vunpack.c.l.b16 %v449
  %v1586 = vunpack.c.l.b16 %v450
  %v1587 = vunpack.c.l.b16 %v451
  %v1588 = vunpack.c.l.b16 %v452
  %v1589 = vunpack.c.l.b16 %v453
  %v1590 = vunpack.c.l.b16 %v454
  %v1591 = vunpack.c.l.b16 %v455
  %v1592 = vunpack.c.l.b16 %v456
  %v1593 = vunpack.c.l.b16 %v457
  %v1594 = vunpack.c.l.b16 %v458
  %v1595 = vunpack.c.l.b16 %v459
  %v1596 = vunpack.c.l.b16 %v460
  %v1597 = vunpack.c.l.b16 %v461
  %v1598 = vunpack.c.l.b16 %v462
  %v1599 = vunpack.c.l.b16 %v463
  %v1600 = vunpack.c.l.b16 %v464
  %v1601 = vunpack.c.l.b16 %v465
  %v1602 = vunpack.c.l.b16 %v466
  %v1603 = vunpack.c.l.b16 %v467
  %v1604 = vunpack.c.l.b16 %v468
  %v1605 = vunpack.c.l.b16 %v469
  %v1606 = vunpack.c.l.b16 %v470
  %v1607 = vunpack.c.l.b16 %v471
  %v1608 = vunpack.c.l.b16 %v472
  %v1609 = vunpack.c.l.b16 %v473
  %v1610 = vunpack.c.l.b16 %v474
  %v1611 = vunpack.c.l.b16 %v475
  %v1612 = vunpack.c.l.b16 %v476
  %v1613 = vunpack.c.l.b16 %v477
  %v1614 = vunpack.c.l.b16 %v478
  %v1615 = vunpack.c.l.b16 %v479
  %v1616 = vunpack.c.l.b16 %v480
  %v1617 = vunpack.c.l.b16 %v481
  %v1618 = vunpack.c.l.b16 %v482
  %v1619 = vunpack.c.l.b16 %v483
  %v1620 = vunpack.c.l.b16 %v484
  %v1621 = vunpack.c.l.b16 %v485
  %v1622 = vunpack.c.l.b16 %v486
  %v1623 = vunpack.c.l.b16 %v487
  %v1624 = vunpack.c.l.b16 %v488
  %v1625 = vunpack.c.l.b16 %v489
  %v1626 = vunpack.c.l.b16 %v490
  %v1627 = vunpack.c.l.b16 %v491
  %v1628 = vunpack.c.l.b16 %v492
  %v1629 = vunpack.c.l.b16 %v493
  %v1630 = vunpack.c.l.b16 %v494
  %v1631 = vunpack.c.l.b16 %v495
  %v1632 = vunpack.c.l.b16 %v496
  %v1633 = vunpack.c.l.b16 %v497
  %v1634 = vunpack.c.l.b16 %v498
  %v1635 = vunpack.c.l.b16 %v499
  %v1636 = vunpack.c.l.b16 %v500
  %v1637 = vunpack.c.l.b16 %v501
  %v1638 = vunpack.c.l.b16 %v502
  %v1639 = vunpack.c.l.b16 %v503
  %v1640 = vunpack.c.l.b16 %v504
  %v1641 = vunpack.c.l.b16 %v505
  %v1642 = vunpack.c.l.b16 %v506
  %v1643 = vunpack.c.l.b16 %v507
  %v1644 = vunpack.c.l.b16 %v508
  %v1645 = vunpack.c.l.b16 %v509
  %v1646 = vunpack.c.l.b16 %v510
  %v1647 = vunpack.c.l.b16 %v511
  %v1648 = vunpack.c.l.b16 %v512
  %v1649 = vunpack.c.l.b16 %v513
  %v1650 = vunpack.c.l.b16 %v514
  %v1651 = vunpack.c.l.b16 %v515
  %v1652 = vunpack.c.l.b16 %v516
  %v1653 = vunpack.c.l.b16 %v517
  %v1654 = vunpack.c.l.b16 %v518
  %v1655 = vunpack.c.l.b16 %v519
  %v1656 = vunpack.c.l.b16 %v520
  %v1657 = vunpack.c.l.b16 %v521
  %v1658 = vunpack.c.l.b16 %v522
  %v1659 = vunpack.c.l.b16 %v523
  %v1660 = vunpack.c.l.b16 %v524
  %v1661 = vunpack.c.l.b16 %v525
  %v1662 = vunpack.c.l.b16 %v526
  %v1663 = vunpack.c.l.b16 %v527
  %v1664 = vunpack.c.l.b16 %v528
  %v1665 = vunpack.c.l.b16 %v529
  %v1666 = vunpack.c.l.b16 %v530
  %v1667 = vunpack.c.l.b16 %v531
  %v1668 = vunpack.c.l.b16 %v532
  %v1669 = vunpack.c.l.b16 %v533
  %v1670 = vunpack.c.l.b16 %v534
  %v1671 = vunpack.c.l.b16 %v535
  %v1672 = vunpack.c.l.b16 %v536
  %v1673 = vunpack.c.l.b16 %v537
  %v1674 = vunpack.c.l.b16 %v538
  %v1675 = vunpack.c.l.b16 %v539
  %v1676 = vpack.c.b16 %v1165, %v1164
  %v1677 = vpack.c.b16 %v1167, %v1166
  %v1678 = vpack.c.b16 %v1169, %v1168
  %v1679 = vpack.c.b16 %v1171, %v1170
  %v1680 = vpack.c.b16 %v1173, %v1172
  %v1681 = vpack.c.b16 %v1175, %v1174
  %v1682 = vpack.c.b16 %v1177, %v1176
  %v1683 = vpack.c.b16 %v1179, %v1178
  %v1684 = vpack.c.b16 %v1181, %v1180
  %v1685 = vpack.c.b16 %v1183, %v1182
  %v1686 = vpack.c.b16 %v1185, %v1184
  %v1687 = vpack.c.b16 %v1187, %v1186
  %v1688 = vpack.c.b16 %v1189, %v1188
  %v1689 = vpack.c.b16 %v1191, %v1190
  %v1690 = vpack.c.b16 %v1193, %v1192
  %v1691 = vpack.c.b16 %v1195, %v1194
  %v1692 = vpack.c.b16 %v1197, %v1196
  %v1693 = vpack.c.b16 %v1199, %v1198
  %v1694 = vpack.c.b16 %v1201, %v1200
  %v1695 = vpack.c.b16 %v1203, %v1202
  %v1696 = vpack.c.b16 %v1205, %v1204
  %v1697 = vpack.c.b16 %v1207, %v1206
  %v1698 = vpack.c.b16 %v1209, %v1208
  %v1699 = vpack.c.b16 %v1211, %v1210
  %v1700 = vpack.c.b16 %v1213, %v1212
  %v1701 = vpack.c.b16 %v1215, %v1214
  %v1702 = vpack.c.b16 %v1217, %v1216
  %v1703 = vpack.c.b16 %v1219, %v1218
  %v1704 = vpack.c.b16 %v1221, %v1220
  %v1705 = vpack.c.b16 %v1223, %v1222
  %v1706 = vpack.c.b16 %v1225, %v1224
  %v1707 = vpack.c.b16 %v1227, %v1226
  %v1708 = vpack.c.b16 %v1229, %v1228
  %v1709 = vpack.c.b16 %v1231, %v1230
  %v1710 = vpack.c.b16 %v1233, %v1232
  %v1711 = vpack.c.b16 %v1235, %v1234
  %v1712 = vpack.c.b16 %v1237, %v1236
  %v1713 = vpack.c.b16 %v1239, %v1238
  %v1714 = vpack.c.b16 %v1241, %v1240
  %v1715 = vpack.c.b16 %v1243, %v1242
  %v1716 = vpack.c.b16 %v1245, %v1244
  %v1717 = vpack.c.b16 %v1247, %v1246
  %v1718 = vpack.c.b16 %v1249, %v1248
  %v1719 = vpack.c.b16 %v1251, %v1250
  %v1720 = vpack.c.b16 %v1253, %v1252
  %v1721 = vpack.c.b16 %v1255, %v1254
  %v1722 = vpack.c.b16 %v1257, %v1256
  %v1723 = vpack.c.b16 %v1259, %v1258
  %v1724 = vpack.c.b16 %v1261, %v1260
  %v1725 = vpack.c.b16 %v1263, %v1262
  %v1726 = vpack.c.b16 %v1265, %v1264
  %v1727 = vpack.c.b16 %v1267, %v1266
  %v1728 = vpack.c.b16 %v1269, %v1268
  %v1729 = vpack.c.b16 %v1271, %v1270
  %v1730 = vpack.c.b16 %v1273, %v1272
  %v1731 = vpack.c.b16 %v1275, %v1274
  %v1732 = vpack.c.b16 %v1277, %v1276
  %v1733 = vpack.c.b16 %v1279, %v1278
  %v1734 = vpack.c.b16 %v1281, %v1280
  %v1735 = vpack.c.b16 %v1283, %v1282
  %v1736 = vpack.c.b16 %v1285, %v1284
  %v1737 = vpack.c.b16 %v1287, %v1286
  %v1738 = vpack.c.b16 %v1289, %v1288
  %v1739 = vpack.c.b16 %v1291, %v1290
  %v1740 = vpack.c.b16 %v1293, %v1292
  %v1741 = vpack.c.b16 %v1295, %v1294
  %v1742 = vpack.c.b16 %v1297, %v1296
  %v1743 = vpack.c.b16 %v1299, %v1298
  %v1744 = vpack.c.b16 %v1301, %v1300
  %v1745 = vpack.c.b16 %v1303, %v1302
  %v1746 = vpack.c.b16 %v1305, %v1304
  %v1747 = vpack.c.b16 %v1307, %v1306
  %v1748 = vpack.c.b16 %v1309, %v1308
  %v1749 = vpack.c.b16 %v1311, %v1310
  %v1750 = vpack.c.b16 %v1313, %v1312
  %v1751 = vpack.c.b16 %v1315, %v1314
  %v1752 = vpack.c.b16 %v1317, %v1316
  %v1753 = vpack.c.b16 %v1319, %v1318
  %v1754 = vpack.c.b16 %v1321, %v1320
  %v1755 = vpack.c.b16 %v1323, %v1322
  %v1756 = vpack.c.b16 %v1325, %v1324
  %v1757 = vpack.c.b16 %v1327, %v1326
  %v1758 = vpack.c.b16 %v1329, %v1328
  %v1759 = vpack.c.b16 %v1331, %v1330
  %v1760 = vpack.c.b16 %v1333, %v1332
  %v1761 = vpack.c.b16 %v1335, %v1334
  %v1762 = vpack.c.b16 %v1337, %v1336
  %v1763 = vpack.c.b16 %v1339, %v1338
  %v1764 = vpack.c.b16 %v1341, %v1340
  %v1765 = vpack.c.b16 %v1343, %v1342
  %v1766 = vpack.c.b16 %v1345, %v1344
  %v1767 = vpack.c.b16 %v1347, %v1346
  %v1768 = vpack.c.b16 %v1349, %v1348
  %v1769 = vpack.c.b16 %v1351, %v1350
  %v1770 = vpack.c.b16 %v1353, %v1352
  %v1771 = vpack.c.b16 %v1355, %v1354
  %v1772 = vpack.c.b16 %v1357, %v1356
  %v1773 = vpack.c.b16 %v1359, %v1358
  %v1774 = vpack.c.b16 %v1361, %v1360
  %v1775 = vpack.c.b16 %v1363, %v1362
  %v1776 = vpack.c.b16 %v1365, %v1364
  %v1777 = vpack.c.b16 %v1367, %v1366
  %v1778 = vpack.c.b16 %v1369, %v1368
  %v1779 = vpack.c.b16 %v1371, %v1370
  %v1780 = vpack.c.b16 %v1373, %v1372
  %v1781 = vpack.c.b16 %v1375, %v1374
  %v1782 = vpack.c.b16 %v1377, %v1376
  %v1783 = vpack.c.b16 %v1379, %v1378
  %v1784 = vpack.c.b16 %v1381, %v1380
  %v1785 = vpack.c.b16 %v1383, %v1382
  %v1786 = vpack.c.b16 %v1385, %v1384
  %v1787 = vpack.c.b16 %v1387, %v1386
  %v1788 = vpack.c.b16 %v1389, %v1388
  %v1789 = vpack.c.b16 %v1391, %v1390
  %v1790 = vpack.c.b16 %v1393, %v1392
  %v1791 = vpack.c.b16 %v1395, %v1394
  %v1792 = vpack.c.b16 %v1397, %v1396
  %v1793 = vpack.c.b16 %v1399, %v1398
  %v1794 = vpack.c.b16 %v1401, %v1400
  %v1795 = vpack.c.b16 %v1403, %v1402
  %v1796 = vpack.c.b16 %v1405, %v1404
  %v1797 = vpack.c.b16 %v1407, %v1406
  %v1798 = vpack.c.b16 %v1409, %v1408
  %v1799 = vpack.c.b16 %v1411, %v1410
  %v1800 = vpack.c.b16 %v1413, %v1412
  %v1801 = vpack.c.b16 %v1415, %v1414
  %v1802 = vpack.c.b16 %v1417, %v1416
  %v1803 = vpack.c.b16 %v1419, %v1418
  %v1804 = vpack.c.b16 %v1421, %v1420
  %v1805 = vpack.c.b16 %v1423, %v1422
  %v1806 = vpack.c.b16 %v1425, %v1424
  %v1807 = vpack.c.b16 %v1427, %v1426
  %v1808 = vpack.c.b16 %v1429, %v1428
  %v1809 = vpack.c.b16 %v1431, %v1430
  %v1810 = vpack.c.b16 %v1433, %v1432
  %v1811 = vpack.c.b16 %v1435, %v1434
  %v1812 = vpack.c.b16 %v1437, %v1436
  %v1813 = vpack.c.b16 %v1439, %v1438
  %v1814 = vpack.c.b16 %v1441, %v1440
  %v1815 = vpack.c.b16 %v1443, %v1442
  %v1816 = vpack.c.b16 %v1445, %v1444
  %v1817 = vpack.c.b16 %v1447, %v1446
  %v1818 = vpack.c.b16 %v1449, %v1448
  %v1819 = vpack.c.b16 %v1451, %v1450
  %v1820 = vpack.c.b16 %v1453, %v1452
  %v1821 = vpack.c.b16 %v1455, %v1454
  %v1822 = vpack.c.b16 %v1457, %v1456
  %v1823 = vpack.c.b16 %v1459, %v1458
  %v1824 = vpack.c.b16 %v1461, %v1460
  %v1825 = vpack.c.b16 %v1463, %v1462
  %v1826 = vpack.c.b16 %v1465, %v1464
  %v1827 = vpack.c.b16 %v1467, %v1466
  %v1828 = vpack.c.b16 %v1469, %v1468
  %v1829 = vpack.c.b16 %v1471, %v1470
  %v1830 = vpack.c.b16 %v1473, %v1472
  %v1831 = vpack.c.b16 %v1475, %v1474
  %v1832 = vpack.c.b16 %v1477, %v1476
  %v1833 = vpack.c.b16 %v1479, %v1478
  %v1834 = vpack.c.b16 %v1481, %v1480
  %v1835 = vpack.c.b16 %v1483, %v1482
  %v1836 = vpack.c.b16 %v1485, %v1484
  %v1837 = vpack.c.b16 %v1487, %v1486
  %v1838 = vpack.c.b16 %v1489, %v1488
  %v1839 = vpack.c.b16 %v1491, %v1490
  %v1840 = vpack.c.b16 %v1493, %v1492
  %v1841 = vpack.c.b16 %v1495, %v1494
  %v1842 = vpack.c.b16 %v1497, %v1496
  %v1843 = vpack.c.b16 %v1499, %v1498
  %v1844 = vpack.c.b16 %v1501, %v1500
  %v1845 = vpack.c.b16 %v1503, %v1502
  %v1846 = vpack.c.b16 %v1505, %v1504
  %v1847 = vpack.c.b16 %v1507, %v1506
  %v1848 = vpack.c.b16 %v1509, %v1508
  %v1849 = vpack.c.b16 %v1511, %v1510
  %v1850 = vpack.c.b16 %v1513, %v1512
  %v1851 = vpack.c.b16 %v1515, %v1514
  %v1852 = vpack.c.b16 %v1517, %v1516
  %v1853 = vpack.c.b16 %v1519, %v1518
  %v1854 = vpack.c.b16 %v1521, %v1520
  %v1855 = vpack.c.b16 %v1523, %v1522
  %v1856 = vpack.c.b16 %v1525, %v1524
  %v1857 = vpack.c.b16 %v1527, %v1526
  %v1858 = vpack.c.b16 %v1529, %v1528
  %v1859 = vpack.c.b16 %v1531, %v1530
  %v1860 = vpack.c.b16 %v1533, %v1532
  %v1861 = vpack.c.b16 %v1535, %v1534
  %v1862 = vpack.c.b16 %v1537, %v1536
  %v1863 = vpack.c.b16 %v1539, %v1538
  %v1864 = vpack.c.b16 %v1541, %v1540
  %v1865 = vpack.c.b16 %v1543, %v1542
  %v1866 = vpack.c.b16 %v1545, %v1544
  %v1867 = vpack.c.b16 %v1547, %v1546
  %v1868 = vpack.c.b16 %v1549, %v1548
  %v1869 = vpack.c.b16 %v1551, %v1550
  %v1870 = vpack.c.b16 %v1553, %v1552
  %v1871 = vpack.c.b16 %v1555, %v1554
  %v1872 = vpack.c.b16 %v1557, %v1556
  %v1873 = vpack.c.b16 %v1559, %v1558
  %v1874 = vpack.c.b16 %v1561, %v1560
  %v1875 = vpack.c.b16 %v1563, %v1562
  %v1876 = vpack.c.b16 %v1565, %v1564
  %v1877 = vpack.c.b16 %v1567, %v1566
  %v1878 = vpack.c.b16 %v1569, %v1568
  %v1879 = vpack.c.b16 %v1571, %v1570
  %v1880 = vpack.c.b16 %v1573, %v1572
  %v1881 = vpack.c.b16 %v1575, %v1574
  %v1882 = vpack.c.b16 %v1577, %v1576
  %v1883 = vpack.c.b16 %v1579, %v1578
  %v1884 = vpack.c.b16 %v1581, %v1580
  %v1885 = vpack.c.b16 %v1583, %v1582
  %v1886 = vpack.c.b16 %v1585, %v1584
  %v1887 = vpack.c.b16 %v1587, %v1586
  %v1888 = vpack.c.b16 %v1589, %v1588
  %v1889 = vpack.c.b16 %v1591, %v1590
  %v1890 = vpack.c.b16 %v1593, %v1592
  %v1891 = vpack.c.b16 %v1595, %v1594
  %v1892 = vpack.c.b16 %v1597, %v1596
  %v1893 = vpack.c.b16 %v1599, %v1598
  %v1894 = vpack.c.b16 %v1601, %v1600
  %v1895 = vpack.c.b16 %v1603, %v1602
  %v1896 = vpack.c.b16 %v1605, %v1604
  %v1897 = vpack.c.b16 %v1607, %v1606
  %v1898 = vpack.c.b16 %v1609, %v1608
  %v1899 = vpack.c.b16 %v1611, %v1610
  %v1900 = vpack.c.b16 %v1613, %v1612
  %v1901 = vpack.c.b16 %v1615, %v1614
  %v1902 = vpack.c.b16 %v1617, %v1616
  %v1903 = vpack.c.b16 %v1619, %v1618
  %v1904 = vpack.c.b16 %v1621, %v1620
  %v1905 = vpack.c.b16 %v1623, %v1622
  %v1906 = vpack.c.b16 %v1625, %v1624
  %v1907 = vpack.c.b16 %v1627, %v1626
  %v1908 = vpack.c.b16 %v1629, %v1628
  %v1909 = vpack.c.b16 %v1631, %v1630
  %v1910 = vpack.c.b16 %v1633, %v1632
  %v1911 = vpack.c.b16 %v1635, %v1634
  %v1912 = vpack.c.b16 %v1637, %v1636
  %v1913 = vpack.c.b16 %v1639, %v1638
  %v1914 = vpack.c.b16 %v1641, %v1640
  %v1915 = vpack.c.b16 %v1643, %v1642
  %v1916 = vpack.c.b16 %v1645, %v1644
  %v1917 = vpack.c.b16 %v1647, %v1646
  %v1918 = vpack.c.b16 %v1649, %v1648
  %v1919 = vpack.c.b16 %v1651, %v1650
  %v1920 = vpack.c.b16 %v1653, %v1652
  %v1921 = vpack.c.b16 %v1655, %v1654
  %v1922 = vpack.c.b16 %v1657, %v1656
  %v1923 = vpack.c.b16 %v1659, %v1658
  %v1924 = vpack.c.b16 %v1661, %v1660
  %v1925 = vpack.c.b16 %v1663, %v1662
  %v1926 = vpack.c.b16 %v1665, %v1664
  %v1927 = vpack.c.b16 %v1667, %v1666
  %v1928 = vpack.c.b16 %v1669, %v1668
  %v1929 = vpack.c.b16 %v1671, %v1670
  %v1930 = vpack.c.b16 %v1673, %v1672
  %v1931 = vpack.c.b16 %v1675, %v1674
  %2188 = vmatprep.subr.bf16.mxu0 0
  %2189 = vmatpush1.bf16.msra.mxu0 %v1676
  %2190 = vmatprep.subr.bf16.mxu0 0
  %2191 = vmatpush1.bf16.msra.mxu0 %v1677
  %2192 = vmatprep.subr.bf16.mxu0 0
  %2193 = vmatpush1.bf16.msra.mxu0 %v1678
  %2194 = vmatprep.subr.bf16.mxu0 0
  %2195 = vmatpush1.bf16.msra.mxu0 %v1679
  %2196 = vmatprep.subr.bf16.mxu0 0
  %2197 = vmatpush1.bf16.msra.mxu0 %v1680
  %2198 = vmatprep.subr.bf16.mxu0 0
  %2199 = vmatpush1.bf16.msra.mxu0 %v1681
  %2200 = vmatprep.subr.bf16.mxu0 0
  %2201 = vmatpush1.bf16.msra.mxu0 %v1682
  %2202 = vmatprep.subr.bf16.mxu0 0
  %2203 = vmatpush1.bf16.msra.mxu0 %v1683
  %2204 = vmatprep.subr.bf16.mxu0 0
  %2205 = vmatpush1.bf16.msra.mxu0 %v1684
  %2206 = vmatprep.subr.bf16.mxu0 0
  %2207 = vmatpush1.bf16.msra.mxu0 %v1685
  %2208 = vmatprep.subr.bf16.mxu0 0
  %2209 = vmatpush1.bf16.msra.mxu0 %v1686
  %2210 = vmatprep.subr.bf16.mxu0 0
  %2211 = vmatpush1.bf16.msra.mxu0 %v1687
  %2212 = vmatprep.subr.bf16.mxu0 0
  %2213 = vmatpush1.bf16.msra.mxu0 %v1688
  %2214 = vmatprep.subr.bf16.mxu0 0
  %2215 = vmatpush1.bf16.msra.mxu0 %v1689
  %2216 = vmatprep.subr.bf16.mxu0 0
  %2217 = vmatpush1.bf16.msra.mxu0 %v1690
  %2218 = vmatprep.subr.bf16.mxu0 0
  %2219 = vmatpush1.bf16.msra.mxu0 %v1691
  %2220 = vmatprep.mubr.bf16.mxu0 %v589
  %2221 = vmatmul.mubr.bf16.gmra.mrb[0].mxu0 %v588
  %v2222 = vpop.f32.mrb[0].mxu0
  %v2223 = vadd.f32 0.0, %v2222
  %v2224 = vpop.f32.mrb[0].mxu0
  %v2225 = vpop.f32.mrb[0].mxu0
  %v2226 = vpop.f32.mrb[0].mxu0
  %2227 = vdwg.mxu0
  %2228 = vmatprep.subr.bf16.mxu0 0
  %2229 = vmatpush1.bf16.msra.mxu0 %v1692
  %2230 = vmatprep.subr.bf16.mxu0 0
  %2231 = vmatpush1.bf16.msra.mxu0 %v1693
  %2232 = vmatprep.subr.bf16.mxu0 0
  %2233 = vmatpush1.bf16.msra.mxu0 %v1694
  %2234 = vmatprep.subr.bf16.mxu0 0
  %2235 = vmatpush1.bf16.msra.mxu0 %v1695
  %2236 = vmatprep.subr.bf16.mxu0 0
  %2237 = vmatpush1.bf16.msra.mxu0 %v1696
  %2238 = vmatprep.subr.bf16.mxu0 0
  %2239 = vmatpush1.bf16.msra.mxu0 %v1697
  %2240 = vmatprep.subr.bf16.mxu0 0
  %2241 = vmatpush1.bf16.msra.mxu0 %v1698
  %2242 = vmatprep.subr.bf16.mxu0 0
  %2243 = vmatpush1.bf16.msra.mxu0 %v1699
  %2244 = vmatprep.subr.bf16.mxu0 0
  %2245 = vmatpush1.bf16.msra.mxu0 %v1700
  %2246 = vmatprep.subr.bf16.mxu0 0
  %2247 = vmatpush1.bf16.msra.mxu0 %v1701
  %2248 = vmatprep.subr.bf16.mxu0 0
  %2249 = vmatpush1.bf16.msra.mxu0 %v1702
  %2250 = vmatprep.subr.bf16.mxu0 0
  %2251 = vmatpush1.bf16.msra.mxu0 %v1703
  %2252 = vmatprep.subr.bf16.mxu0 0
  %2253 = vmatpush1.bf16.msra.mxu0 %v1704
  %2254 = vmatprep.subr.bf16.mxu0 0
  %2255 = vmatpush1.bf16.msra.mxu0 %v1705
  %2256 = vmatprep.subr.bf16.mxu0 0
  %2257 = vmatpush1.bf16.msra.mxu0 %v1706
  %2258 = vmatprep.subr.bf16.mxu0 0
  %2259 = vmatpush1.bf16.msra.mxu0 %v1707
  %2260 = vmatprep.mubr.bf16.mxu0 %v591
  %2261 = vmatmul.mubr.bf16.gmra.mrb[0].mxu0 %v590
  %v2262 = vpop.f32.mrb[0].mxu0
  %v2263 = vadd.f32 %v2223, %v2262
  %v2264 = vpop.f32.mrb[0].mxu0
  %v2265 = vpop.f32.mrb[0].mxu0
  %v2266 = vpop.f32.mrb[0].mxu0
  %2267 = vdwg.mxu0
  %2268 = vmatprep.subr.bf16.mxu0 0
  %2269 = vmatpush1.bf16.msra.mxu0 %v1708
  %2270 = vmatprep.subr.bf16.mxu0 0
  %2271 = vmatpush1.bf16.msra.mxu0 %v1709
  %2272 = vmatprep.subr.bf16.mxu0 0
  %2273 = vmatpush1.bf16.msra.mxu0 %v1710
  %2274 = vmatprep.subr.bf16.mxu0 0
  %2275 = vmatpush1.bf16.msra.mxu0 %v1711
  %2276 = vmatprep.subr.bf16.mxu0 0
  %2277 = vmatpush1.bf16.msra.mxu0 %v1712
  %2278 = vmatprep.subr.bf16.mxu0 0
  %2279 = vmatpush1.bf16.msra.mxu0 %v1713
  %2280 = vmatprep.subr.bf16.mxu0 0
  %2281 = vmatpush1.bf16.msra.mxu0 %v1714
  %2282 = vmatprep.subr.bf16.mxu0 0
  %2283 = vmatpush1.bf16.msra.mxu0 %v1715
  %2284 = vmatprep.subr.bf16.mxu0 0
  %2285 = vmatpush1.bf16.msra.mxu0 %v1716
  %2286 = vmatprep.subr.bf16.mxu0 0
  %2287 = vmatpush1.bf16.msra.mxu0 %v1717
  %2288 = vmatprep.subr.bf16.mxu0 0
  %2289 = vmatpush1.bf16.msra.mxu0 %v1718
  %2290 = vmatprep.subr.bf16.mxu0 0
  %2291 = vmatpush1.bf16.msra.mxu0 %v1719
  %2292 = vmatprep.subr.bf16.mxu0 0
  %2293 = vmatpush1.bf16.msra.mxu0 %v1720
  %2294 = vmatprep.subr.bf16.mxu0 0
  %2295 = vmatpush1.bf16.msra.mxu0 %v1721
  %2296 = vmatprep.subr.bf16.mxu0 0
  %2297 = vmatpush1.bf16.msra.mxu0 %v1722
  %2298 = vmatprep.subr.bf16.mxu0 0
  %2299 = vmatpush1.bf16.msra.mxu0 %v1723
  %2300 = vmatprep.mubr.bf16.mxu0 %v593
  %2301 = vmatmul.mubr.bf16.gmra.mrb[0].mxu0 %v592
  %v2302 = vpop.f32.mrb[0].mxu0
  %v2303 = vadd.f32 %v2263, %v2302
  %v2304 = vpop.f32.mrb[0].mxu0
  %v2305 = vpop.f32.mrb[0].mxu0
  %v2306 = vpop.f32.mrb[0].mxu0
  %2307 = vdwg.mxu0
  %2308 = vmatprep.subr.bf16.mxu0 0
  %2309 = vmatpush1.bf16.msra.mxu0 %v1724
  %2310 = vmatprep.subr.bf16.mxu0 0
  %2311 = vmatpush1.bf16.msra.mxu0 %v1725
  %2312 = vmatprep.subr.bf16.mxu0 0
  %2313 = vmatpush1.bf16.msra.mxu0 %v1726
  %2314 = vmatprep.subr.bf16.mxu0 0
  %2315 = vmatpush1.bf16.msra.mxu0 %v1727
  %2316 = vmatprep.subr.bf16.mxu0 0
  %2317 = vmatpush1.bf16.msra.mxu0 %v1728
  %2318 = vmatprep.subr.bf16.mxu0 0
  %2319 = vmatpush1.bf16.msra.mxu0 %v1729
  %2320 = vmatprep.subr.bf16.mxu0 0
  %2321 = vmatpush1.bf16.msra.mxu0 %v1730
  %2322 = vmatprep.subr.bf16.mxu0 0
  %2323 = vmatpush1.bf16.msra.mxu0 %v1731
  %2324 = vmatprep.subr.bf16.mxu0 0
  %2325 = vmatpush1.bf16.msra.mxu0 %v1732
  %2326 = vmatprep.subr.bf16.mxu0 0
  %2327 = vmatpush1.bf16.msra.mxu0 %v1733
  %2328 = vmatprep.subr.bf16.mxu0 0
  %2329 = vmatpush1.bf16.msra.mxu0 %v1734
  %2330 = vmatprep.subr.bf16.mxu0 0
  %2331 = vmatpush1.bf16.msra.mxu0 %v1735
  %2332 = vmatprep.subr.bf16.mxu0 0
  %2333 = vmatpush1.bf16.msra.mxu0 %v1736
  %2334 = vmatprep.subr.bf16.mxu0 0
  %2335 = vmatpush1.bf16.msra.mxu0 %v1737
  %2336 = vmatprep.subr.bf16.mxu0 0
  %2337 = vmatpush1.bf16.msra.mxu0 %v1738
  %2338 = vmatprep.subr.bf16.mxu0 0
  %2339 = vmatpush1.bf16.msra.mxu0 %v1739
  %2340 = vmatprep.mubr.bf16.mxu0 %v595
  %2341 = vmatmul.mubr.bf16.gmra.mrb[0].mxu0 %v594
  %v2342 = vpop.f32.mrb[0].mxu0
  %v2343 = vadd.f32 %v2303, %v2342
  %v2344 = vpop.f32.mrb[0].mxu0
  %v2345 = vpop.f32.mrb[0].mxu0
  %v2346 = vpop.f32.mrb[0].mxu0
  %2347 = vdwg.mxu0
  %2348 = vmatprep.subr.bf16.mxu0 0
  %2349 = vmatpush1.bf16.msra.mxu0 %v1740
  %2350 = vmatprep.subr.bf16.mxu0 0
  %2351 = vmatpush1.bf16.msra.mxu0 %v1741
  %2352 = vmatprep.subr.bf16.mxu0 0
  %2353 = vmatpush1.bf16.msra.mxu0 %v1742
  %2354 = vmatprep.subr.bf16.mxu0 0
  %2355 = vmatpush1.bf16.msra.mxu0 %v1743
  %2356 = vmatprep.subr.bf16.mxu0 0
  %2357 = vmatpush1.bf16.msra.mxu0 %v1744
  %2358 = vmatprep.subr.bf16.mxu0 0
  %2359 = vmatpush1.bf16.msra.mxu0 %v1745
  %2360 = vmatprep.subr.bf16.mxu0 0
  %2361 = vmatpush1.bf16.msra.mxu0 %v1746
  %2362 = vmatprep.subr.bf16.mxu0 0
  %2363 = vmatpush1.bf16.msra.mxu0 %v1747
  %2364 = vmatprep.subr.bf16.mxu0 0
  %2365 = vmatpush1.bf16.msra.mxu0 %v1748
  %2366 = vmatprep.subr.bf16.mxu0 0
  %2367 = vmatpush1.bf16.msra.mxu0 %v1749
  %2368 = vmatprep.subr.bf16.mxu0 0
  %2369 = vmatpush1.bf16.msra.mxu0 %v1750
  %2370 = vmatprep.subr.bf16.mxu0 0
  %2371 = vmatpush1.bf16.msra.mxu0 %v1751
  %2372 = vmatprep.subr.bf16.mxu0 0
  %2373 = vmatpush1.bf16.msra.mxu0 %v1752
  %2374 = vmatprep.subr.bf16.mxu0 0
  %2375 = vmatpush1.bf16.msra.mxu0 %v1753
  %2376 = vmatprep.subr.bf16.mxu0 0
  %2377 = vmatpush1.bf16.msra.mxu0 %v1754
  %2378 = vmatprep.subr.bf16.mxu0 0
  %2379 = vmatpush1.bf16.msra.mxu0 %v1755
  %2380 = vmatprep.mubr.bf16.mxu0 %v597
  %2381 = vmatmul.mubr.bf16.gmra.mrb[0].mxu0 %v596
  %v2382 = vpop.f32.mrb[0].mxu0
  %v2383 = vadd.f32 %v2343, %v2382
  %v2384 = vpop.f32.mrb[0].mxu0
  %v2385 = vpop.f32.mrb[0].mxu0
  %v2386 = vpop.f32.mrb[0].mxu0
  %2387 = vdwg.mxu0
  %2388 = vmatprep.subr.bf16.mxu0 0
  %2389 = vmatpush1.bf16.msra.mxu0 %v1756
  %2390 = vmatprep.subr.bf16.mxu0 0
  %2391 = vmatpush1.bf16.msra.mxu0 %v1757
  %2392 = vmatprep.subr.bf16.mxu0 0
  %2393 = vmatpush1.bf16.msra.mxu0 %v1758
  %2394 = vmatprep.subr.bf16.mxu0 0
  %2395 = vmatpush1.bf16.msra.mxu0 %v1759
  %2396 = vmatprep.subr.bf16.mxu0 0
  %2397 = vmatpush1.bf16.msra.mxu0 %v1760
  %2398 = vmatprep.subr.bf16.mxu0 0
  %2399 = vmatpush1.bf16.msra.mxu0 %v1761
  %2400 = vmatprep.subr.bf16.mxu0 0
  %2401 = vmatpush1.bf16.msra.mxu0 %v1762
  %2402 = vmatprep.subr.bf16.mxu0 0
  %2403 = vmatpush1.bf16.msra.mxu0 %v1763
  %2404 = vmatprep.subr.bf16.mxu0 0
  %2405 = vmatpush1.bf16.msra.mxu0 %v1764
  %2406 = vmatprep.subr.bf16.mxu0 0
  %2407 = vmatpush1.bf16.msra.mxu0 %v1765
  %2408 = vmatprep.subr.bf16.mxu0 0
  %2409 = vmatpush1.bf16.msra.mxu0 %v1766
  %2410 = vmatprep.subr.bf16.mxu0 0
  %2411 = vmatpush1.bf16.msra.mxu0 %v1767
  %2412 = vmatprep.subr.bf16.mxu0 0
  %2413 = vmatpush1.bf16.msra.mxu0 %v1768
  %2414 = vmatprep.subr.bf16.mxu0 0
  %2415 = vmatpush1.bf16.msra.mxu0 %v1769
  %2416 = vmatprep.subr.bf16.mxu0 0
  %2417 = vmatpush1.bf16.msra.mxu0 %v1770
  %2418 = vmatprep.subr.bf16.mxu0 0
  %2419 = vmatpush1.bf16.msra.mxu0 %v1771
  %2420 = vmatprep.mubr.bf16.mxu0 %v599
  %2421 = vmatmul.mubr.bf16.gmra.mrb[0].mxu0 %v598
  %v2422 = vpop.f32.mrb[0].mxu0
  %v2423 = vadd.f32 %v2383, %v2422
  %v2424 = vpop.f32.mrb[0].mxu0
  %v2425 = vpop.f32.mrb[0].mxu0
  %v2426 = vpop.f32.mrb[0].mxu0
  %2427 = vdwg.mxu0
  %2428 = vmatprep.subr.bf16.mxu0 0
  %2429 = vmatpush1.bf16.msra.mxu0 %v1772
  %2430 = vmatprep.subr.bf16.mxu0 0
  %2431 = vmatpush1.bf16.msra.mxu0 %v1773
  %2432 = vmatprep.subr.bf16.mxu0 0
  %2433 = vmatpush1.bf16.msra.mxu0 %v1774
  %2434 = vmatprep.subr.bf16.mxu0 0
  %2435 = vmatpush1.bf16.msra.mxu0 %v1775
  %2436 = vmatprep.subr.bf16.mxu0 0
  %2437 = vmatpush1.bf16.msra.mxu0 %v1776
  %2438 = vmatprep.subr.bf16.mxu0 0
  %2439 = vmatpush1.bf16.msra.mxu0 %v1777
  %2440 = vmatprep.subr.bf16.mxu0 0
  %2441 = vmatpush1.bf16.msra.mxu0 %v1778
  %2442 = vmatprep.subr.bf16.mxu0 0
  %2443 = vmatpush1.bf16.msra.mxu0 %v1779
  %2444 = vmatprep.subr.bf16.mxu0 0
  %2445 = vmatpush1.bf16.msra.mxu0 %v1780
  %2446 = vmatprep.subr.bf16.mxu0 0
  %2447 = vmatpush1.bf16.msra.mxu0 %v1781
  %2448 = vmatprep.subr.bf16.mxu0 0
  %2449 = vmatpush1.bf16.msra.mxu0 %v1782
  %2450 = vmatprep.subr.bf16.mxu0 0
  %2451 = vmatpush1.bf16.msra.mxu0 %v1783
  %2452 = vmatprep.subr.bf16.mxu0 0
  %2453 = vmatpush1.bf16.msra.mxu0 %v1784
  %2454 = vmatprep.subr.bf16.mxu0 0
  %2455 = vmatpush1.bf16.msra.mxu0 %v1785
  %2456 = vmatprep.subr.bf16.mxu0 0
  %2457 = vmatpush1.bf16.msra.mxu0 %v1786
  %2458 = vmatprep.subr.bf16.mxu0 0
  %2459 = vmatpush1.bf16.msra.mxu0 %v1787
  %2460 = vmatprep.mubr.bf16.mxu0 %v601
  %2461 = vmatmul.mubr.bf16.gmra.mrb[0].mxu0 %v600
  %v2462 = vpop.f32.mrb[0].mxu0
  %v2463 = vadd.f32 %v2423, %v2462
  %v2464 = vpop.f32.mrb[0].mxu0
  %v2465 = vpop.f32.mrb[0].mxu0
  %v2466 = vpop.f32.mrb[0].mxu0
  %2467 = vdwg.mxu0
  %2468 = vmatprep.subr.bf16.mxu0 0
  %2469 = vmatpush1.bf16.msra.mxu0 %v1788
  %2470 = vmatprep.subr.bf16.mxu0 0
  %2471 = vmatpush1.bf16.msra.mxu0 %v1789
  %2472 = vmatprep.subr.bf16.mxu0 0
  %2473 = vmatpush1.bf16.msra.mxu0 %v1790
  %2474 = vmatprep.subr.bf16.mxu0 0
  %2475 = vmatpush1.bf16.msra.mxu0 %v1791
  %2476 = vmatprep.subr.bf16.mxu0 0
  %2477 = vmatpush1.bf16.msra.mxu0 %v1792
  %2478 = vmatprep.subr.bf16.mxu0 0
  %2479 = vmatpush1.bf16.msra.mxu0 %v1793
  %2480 = vmatprep.subr.bf16.mxu0 0
  %2481 = vmatpush1.bf16.msra.mxu0 %v1794
  %2482 = vmatprep.subr.bf16.mxu0 0
  %2483 = vmatpush1.bf16.msra.mxu0 %v1795
  %2484 = vmatprep.subr.bf16.mxu0 0
  %2485 = vmatpush1.bf16.msra.mxu0 %v1796
  %2486 = vmatprep.subr.bf16.mxu0 0
  %2487 = vmatpush1.bf16.msra.mxu0 %v1797
  %2488 = vmatprep.subr.bf16.mxu0 0
  %2489 = vmatpush1.bf16.msra.mxu0 %v1798
  %2490 = vmatprep.subr.bf16.mxu0 0
  %2491 = vmatpush1.bf16.msra.mxu0 %v1799
  %2492 = vmatprep.subr.bf16.mxu0 0
  %2493 = vmatpush1.bf16.msra.mxu0 %v1800
  %2494 = vmatprep.subr.bf16.mxu0 0
  %2495 = vmatpush1.bf16.msra.mxu0 %v1801
  %2496 = vmatprep.subr.bf16.mxu0 0
  %2497 = vmatpush1.bf16.msra.mxu0 %v1802
  %2498 = vmatprep.subr.bf16.mxu0 0
  %2499 = vmatpush1.bf16.msra.mxu0 %v1803
  %2500 = vmatprep.mubr.bf16.mxu0 %v603
  %2501 = vmatmul.mubr.bf16.gmra.mrb[0].mxu0 %v602
  %v2502 = vpop.f32.mrb[0].mxu0
  %v2503 = vadd.f32 %v2463, %v2502
  %v2504 = vpop.f32.mrb[0].mxu0
  %v2505 = vpop.f32.mrb[0].mxu0
  %v2506 = vpop.f32.mrb[0].mxu0
  %2507 = vdwg.mxu0
  %2508 = vmatprep.subr.bf16.mxu0 0
  %2509 = vmatpush1.bf16.msra.mxu0 %v1804
  %2510 = vmatprep.subr.bf16.mxu0 0
  %2511 = vmatpush1.bf16.msra.mxu0 %v1805
  %2512 = vmatprep.subr.bf16.mxu0 0
  %2513 = vmatpush1.bf16.msra.mxu0 %v1806
  %2514 = vmatprep.subr.bf16.mxu0 0
  %2515 = vmatpush1.bf16.msra.mxu0 %v1807
  %2516 = vmatprep.subr.bf16.mxu0 0
  %2517 = vmatpush1.bf16.msra.mxu0 %v1808
  %2518 = vmatprep.subr.bf16.mxu0 0
  %2519 = vmatpush1.bf16.msra.mxu0 %v1809
  %2520 = vmatprep.subr.bf16.mxu0 0
  %2521 = vmatpush1.bf16.msra.mxu0 %v1810
  %2522 = vmatprep.subr.bf16.mxu0 0
  %2523 = vmatpush1.bf16.msra.mxu0 %v1811
  %2524 = vmatprep.subr.bf16.mxu0 0
  %2525 = vmatpush1.bf16.msra.mxu0 %v1812
  %2526 = vmatprep.subr.bf16.mxu0 0
  %2527 = vmatpush1.bf16.msra.mxu0 %v1813
  %2528 = vmatprep.subr.bf16.mxu0 0
  %2529 = vmatpush1.bf16.msra.mxu0 %v1814
  %2530 = vmatprep.subr.bf16.mxu0 0
  %2531 = vmatpush1.bf16.msra.mxu0 %v1815
  %2532 = vmatprep.subr.bf16.mxu0 0
  %2533 = vmatpush1.bf16.msra.mxu0 %v1816
  %2534 = vmatprep.subr.bf16.mxu0 0
  %2535 = vmatpush1.bf16.msra.mxu0 %v1817
  %2536 = vmatprep.subr.bf16.mxu0 0
  %2537 = vmatpush1.bf16.msra.mxu0 %v1818
  %2538 = vmatprep.subr.bf16.mxu0 0
  %2539 = vmatpush1.bf16.msra.mxu0 %v1819
  %2540 = vmatprep.mubr.bf16.mxu0 %v605
  %2541 = vmatmul.mubr.bf16.gmra.mrb[0].mxu0 %v604
  %v2542 = vpop.f32.mrb[0].mxu0
  %v2543 = vadd.f32 %v2503, %v2542
  %v2544 = vpop.f32.mrb[0].mxu0
  %v2545 = vpop.f32.mrb[0].mxu0
  %v2546 = vpop.f32.mrb[0].mxu0
  %2547 = vdwg.mxu0
  %2548 = vmatprep.subr.bf16.mxu0 0
  %2549 = vmatpush1.bf16.msra.mxu0 %v1820
  %2550 = vmatprep.subr.bf16.mxu0 0
  %2551 = vmatpush1.bf16.msra.mxu0 %v1821
  %2552 = vmatprep.subr.bf16.mxu0 0
  %2553 = vmatpush1.bf16.msra.mxu0 %v1822
  %2554 = vmatprep.subr.bf16.mxu0 0
  %2555 = vmatpush1.bf16.msra.mxu0 %v1823
  %2556 = vmatprep.subr.bf16.mxu0 0
  %2557 = vmatpush1.bf16.msra.mxu0 %v1824
  %2558 = vmatprep.subr.bf16.mxu0 0
  %2559 = vmatpush1.bf16.msra.mxu0 %v1825
  %2560 = vmatprep.subr.bf16.mxu0 0
  %2561 = vmatpush1.bf16.msra.mxu0 %v1826
  %2562 = vmatprep.subr.bf16.mxu0 0
  %2563 = vmatpush1.bf16.msra.mxu0 %v1827
  %2564 = vmatprep.subr.bf16.mxu0 0
  %2565 = vmatpush1.bf16.msra.mxu0 %v1828
  %2566 = vmatprep.subr.bf16.mxu0 0
  %2567 = vmatpush1.bf16.msra.mxu0 %v1829
  %2568 = vmatprep.subr.bf16.mxu0 0
  %2569 = vmatpush1.bf16.msra.mxu0 %v1830
  %2570 = vmatprep.subr.bf16.mxu0 0
  %2571 = vmatpush1.bf16.msra.mxu0 %v1831
  %2572 = vmatprep.subr.bf16.mxu0 0
  %2573 = vmatpush1.bf16.msra.mxu0 %v1832
  %2574 = vmatprep.subr.bf16.mxu0 0
  %2575 = vmatpush1.bf16.msra.mxu0 %v1833
  %2576 = vmatprep.subr.bf16.mxu0 0
  %2577 = vmatpush1.bf16.msra.mxu0 %v1834
  %2578 = vmatprep.subr.bf16.mxu0 0
  %2579 = vmatpush1.bf16.msra.mxu0 %v1835
  %2580 = vmatprep.mubr.bf16.mxu0 %v607
  %2581 = vmatmul.mubr.bf16.gmra.mrb[0].mxu0 %v606
  %v2582 = vpop.f32.mrb[0].mxu0
  %v2583 = vadd.f32 %v2543, %v2582
  %v2584 = vpop.f32.mrb[0].mxu0
  %v2585 = vpop.f32.mrb[0].mxu0
  %v2586 = vpop.f32.mrb[0].mxu0
  %2587 = vdwg.mxu0
  %2588 = vmatprep.subr.bf16.mxu0 0
  %2589 = vmatpush1.bf16.msra.mxu0 %v1836
  %2590 = vmatprep.subr.bf16.mxu0 0
  %2591 = vmatpush1.bf16.msra.mxu0 %v1837
  %2592 = vmatprep.subr.bf16.mxu0 0
  %2593 = vmatpush1.bf16.msra.mxu0 %v1838
  %2594 = vmatprep.subr.bf16.mxu0 0
  %2595 = vmatpush1.bf16.msra.mxu0 %v1839
  %2596 = vmatprep.subr.bf16.mxu0 0
  %2597 = vmatpush1.bf16.msra.mxu0 %v1840
  %2598 = vmatprep.subr.bf16.mxu0 0
  %2599 = vmatpush1.bf16.msra.mxu0 %v1841
  %2600 = vmatprep.subr.bf16.mxu0 0
  %2601 = vmatpush1.bf16.msra.mxu0 %v1842
  %2602 = vmatprep.subr.bf16.mxu0 0
  %2603 = vmatpush1.bf16.msra.mxu0 %v1843
  %2604 = vmatprep.subr.bf16.mxu0 0
  %2605 = vmatpush1.bf16.msra.mxu0 %v1844
  %2606 = vmatprep.subr.bf16.mxu0 0
  %2607 = vmatpush1.bf16.msra.mxu0 %v1845
  %2608 = vmatprep.subr.bf16.mxu0 0
  %2609 = vmatpush1.bf16.msra.mxu0 %v1846
  %2610 = vmatprep.subr.bf16.mxu0 0
  %2611 = vmatpush1.bf16.msra.mxu0 %v1847
  %2612 = vmatprep.subr.bf16.mxu0 0
  %2613 = vmatpush1.bf16.msra.mxu0 %v1848
  %2614 = vmatprep.subr.bf16.mxu0 0
  %2615 = vmatpush1.bf16.msra.mxu0 %v1849
  %2616 = vmatprep.subr.bf16.mxu0 0
  %2617 = vmatpush1.bf16.msra.mxu0 %v1850
  %2618 = vmatprep.subr.bf16.mxu0 0
  %2619 = vmatpush1.bf16.msra.mxu0 %v1851
  %2620 = vmatprep.mubr.bf16.mxu0 %v609
  %2621 = vmatmul.mubr.bf16.gmra.mrb[0].mxu0 %v608
  %v2622 = vpop.f32.mrb[0].mxu0
  %v2623 = vadd.f32 %v2583, %v2622
  %v2624 = vpop.f32.mrb[0].mxu0
  %v2625 = vpop.f32.mrb[0].mxu0
  %v2626 = vpop.f32.mrb[0].mxu0
  %2627 = vdwg.mxu0
  %2628 = vmatprep.subr.bf16.mxu0 0
  %2629 = vmatpush1.bf16.msra.mxu0 %v1852
  %2630 = vmatprep.subr.bf16.mxu0 0
  %2631 = vmatpush1.bf16.msra.mxu0 %v1853
  %2632 = vmatprep.subr.bf16.mxu0 0
  %2633 = vmatpush1.bf16.msra.mxu0 %v1854
  %2634 = vmatprep.subr.bf16.mxu0 0
  %2635 = vmatpush1.bf16.msra.mxu0 %v1855
  %2636 = vmatprep.subr.bf16.mxu0 0
  %2637 = vmatpush1.bf16.msra.mxu0 %v1856
  %2638 = vmatprep.subr.bf16.mxu0 0
  %2639 = vmatpush1.bf16.msra.mxu0 %v1857
  %2640 = vmatprep.subr.bf16.mxu0 0
  %2641 = vmatpush1.bf16.msra.mxu0 %v1858
  %2642 = vmatprep.subr.bf16.mxu0 0
  %2643 = vmatpush1.bf16.msra.mxu0 %v1859
  %2644 = vmatprep.subr.bf16.mxu0 0
  %2645 = vmatpush1.bf16.msra.mxu0 %v1860
  %2646 = vmatprep.subr.bf16.mxu0 0
  %2647 = vmatpush1.bf16.msra.mxu0 %v1861
  %2648 = vmatprep.subr.bf16.mxu0 0
  %2649 = vmatpush1.bf16.msra.mxu0 %v1862
  %2650 = vmatprep.subr.bf16.mxu0 0
  %2651 = vmatpush1.bf16.msra.mxu0 %v1863
  %2652 = vmatprep.subr.bf16.mxu0 0
  %2653 = vmatpush1.bf16.msra.mxu0 %v1864
  %2654 = vmatprep.subr.bf16.mxu0 0
  %2655 = vmatpush1.bf16.msra.mxu0 %v1865
  %2656 = vmatprep.subr.bf16.mxu0 0
  %2657 = vmatpush1.bf16.msra.mxu0 %v1866
  %2658 = vmatprep.subr.bf16.mxu0 0
  %2659 = vmatpush1.bf16.msra.mxu0 %v1867
  %2660 = vmatprep.mubr.bf16.mxu0 %v611
  %2661 = vmatmul.mubr.bf16.gmra.mrb[0].mxu0 %v610
  %v2662 = vpop.f32.mrb[0].mxu0
  %v2663 = vadd.f32 %v2623, %v2662
  %v2664 = vpop.f32.mrb[0].mxu0
  %v2665 = vpop.f32.mrb[0].mxu0
  %v2666 = vpop.f32.mrb[0].mxu0
  %2667 = vdwg.mxu0
  %2668 = vmatprep.subr.bf16.mxu0 0
  %2669 = vmatpush1.bf16.msra.mxu0 %v1868
  %2670 = vmatprep.subr.bf16.mxu0 0
  %2671 = vmatpush1.bf16.msra.mxu0 %v1869
  %2672 = vmatprep.subr.bf16.mxu0 0
  %2673 = vmatpush1.bf16.msra.mxu0 %v1870
  %2674 = vmatprep.subr.bf16.mxu0 0
  %2675 = vmatpush1.bf16.msra.mxu0 %v1871
  %2676 = vmatprep.subr.bf16.mxu0 0
  %2677 = vmatpush1.bf16.msra.mxu0 %v1872
  %2678 = vmatprep.subr.bf16.mxu0 0
  %2679 = vmatpush1.bf16.msra.mxu0 %v1873
  %2680 = vmatprep.subr.bf16.mxu0 0
  %2681 = vmatpush1.bf16.msra.mxu0 %v1874
  %2682 = vmatprep.subr.bf16.mxu0 0
  %2683 = vmatpush1.bf16.msra.mxu0 %v1875
  %2684 = vmatprep.subr.bf16.mxu0 0
  %2685 = vmatpush1.bf16.msra.mxu0 %v1876
  %2686 = vmatprep.subr.bf16.mxu0 0
  %2687 = vmatpush1.bf16.msra.mxu0 %v1877
  %2688 = vmatprep.subr.bf16.mxu0 0
  %2689 = vmatpush1.bf16.msra.mxu0 %v1878
  %2690 = vmatprep.subr.bf16.mxu0 0
  %2691 = vmatpush1.bf16.msra.mxu0 %v1879
  %2692 = vmatprep.subr.bf16.mxu0 0
  %2693 = vmatpush1.bf16.msra.mxu0 %v1880
  %2694 = vmatprep.subr.bf16.mxu0 0
  %2695 = vmatpush1.bf16.msra.mxu0 %v1881
  %2696 = vmatprep.subr.bf16.mxu0 0
  %2697 = vmatpush1.bf16.msra.mxu0 %v1882
  %2698 = vmatprep.subr.bf16.mxu0 0
  %2699 = vmatpush1.bf16.msra.mxu0 %v1883
  %2700 = vmatprep.mubr.bf16.mxu0 %v613
  %2701 = vmatmul.mubr.bf16.gmra.mrb[0].mxu0 %v612
  %v2702 = vpop.f32.mrb[0].mxu0
  %v2703 = vadd.f32 %v2663, %v2702
  %v2704 = vpop.f32.mrb[0].mxu0
  %v2705 = vpop.f32.mrb[0].mxu0
  %v2706 = vpop.f32.mrb[0].mxu0
  %2707 = vdwg.mxu0
  %2708 = vmatprep.subr.bf16.mxu0 0
  %2709 = vmatpush1.bf16.msra.mxu0 %v1884
  %2710 = vmatprep.subr.bf16.mxu0 0
  %2711 = vmatpush1.bf16.msra.mxu0 %v1885
  %2712 = vmatprep.subr.bf16.mxu0 0
  %2713 = vmatpush1.bf16.msra.mxu0 %v1886
  %2714 = vmatprep.subr.bf16.mxu0 0
  %2715 = vmatpush1.bf16.msra.mxu0 %v1887
  %2716 = vmatprep.subr.bf16.mxu0 0
  %2717 = vmatpush1.bf16.msra.mxu0 %v1888
  %2718 = vmatprep.subr.bf16.mxu0 0
  %2719 = vmatpush1.bf16.msra.mxu0 %v1889
  %2720 = vmatprep.subr.bf16.mxu0 0
  %2721 = vmatpush1.bf16.msra.mxu0 %v1890
  %2722 = vmatprep.subr.bf16.mxu0 0
  %2723 = vmatpush1.bf16.msra.mxu0 %v1891
  %2724 = vmatprep.subr.bf16.mxu0 0
  %2725 = vmatpush1.bf16.msra.mxu0 %v1892
  %2726 = vmatprep.subr.bf16.mxu0 0
  %2727 = vmatpush1.bf16.msra.mxu0 %v1893
  %2728 = vmatprep.subr.bf16.mxu0 0
  %2729 = vmatpush1.bf16.msra.mxu0 %v1894
  %2730 = vmatprep.subr.bf16.mxu0 0
  %2731 = vmatpush1.bf16.msra.mxu0 %v1895
  %2732 = vmatprep.subr.bf16.mxu0 0
  %2733 = vmatpush1.bf16.msra.mxu0 %v1896
  %2734 = vmatprep.subr.bf16.mxu0 0
  %2735 = vmatpush1.bf16.msra.mxu0 %v1897
  %2736 = vmatprep.subr.bf16.mxu0 0
  %2737 = vmatpush1.bf16.msra.mxu0 %v1898
  %2738 = vmatprep.subr.bf16.mxu0 0
  %2739 = vmatpush1.bf16.msra.mxu0 %v1899
  %2740 = vmatprep.mubr.bf16.mxu0 %v615
  %2741 = vmatmul.mubr.bf16.gmra.mrb[0].mxu0 %v614
  %v2742 = vpop.f32.mrb[0].mxu0
  %v2743 = vadd.f32 %v2703, %v2742
  %v2744 = vpop.f32.mrb[0].mxu0
  %v2745 = vpop.f32.mrb[0].mxu0
  %v2746 = vpop.f32.mrb[0].mxu0
  %2747 = vdwg.mxu0
  %2748 = vmatprep.subr.bf16.mxu0 0
  %2749 = vmatpush1.bf16.msra.mxu0 %v1900
  %2750 = vmatprep.subr.bf16.mxu0 0
  %2751 = vmatpush1.bf16.msra.mxu0 %v1901
  %2752 = vmatprep.subr.bf16.mxu0 0
  %2753 = vmatpush1.bf16.msra.mxu0 %v1902
  %2754 = vmatprep.subr.bf16.mxu0 0
  %2755 = vmatpush1.bf16.msra.mxu0 %v1903
  %2756 = vmatprep.subr.bf16.mxu0 0
  %2757 = vmatpush1.bf16.msra.mxu0 %v1904
  %2758 = vmatprep.subr.bf16.mxu0 0
  %2759 = vmatpush1.bf16.msra.mxu0 %v1905
  %2760 = vmatprep.subr.bf16.mxu0 0
  %2761 = vmatpush1.bf16.msra.mxu0 %v1906
  %2762 = vmatprep.subr.bf16.mxu0 0
  %2763 = vmatpush1.bf16.msra.mxu0 %v1907
  %2764 = vmatprep.subr.bf16.mxu0 0
  %2765 = vmatpush1.bf16.msra.mxu0 %v1908
  %2766 = vmatprep.subr.bf16.mxu0 0
  %2767 = vmatpush1.bf16.msra.mxu0 %v1909
  %2768 = vmatprep.subr.bf16.mxu0 0
  %2769 = vmatpush1.bf16.msra.mxu0 %v1910
  %2770 = vmatprep.subr.bf16.mxu0 0
  %2771 = vmatpush1.bf16.msra.mxu0 %v1911
  %2772 = vmatprep.subr.bf16.mxu0 0
  %2773 = vmatpush1.bf16.msra.mxu0 %v1912
  %2774 = vmatprep.subr.bf16.mxu0 0
  %2775 = vmatpush1.bf16.msra.mxu0 %v1913
  %2776 = vmatprep.subr.bf16.mxu0 0
  %2777 = vmatpush1.bf16.msra.mxu0 %v1914
  %2778 = vmatprep.subr.bf16.mxu0 0
  %2779 = vmatpush1.bf16.msra.mxu0 %v1915
  %2780 = vmatprep.mubr.bf16.mxu0 %v617
  %2781 = vmatmul.mubr.bf16.gmra.mrb[0].mxu0 %v616
  %v2782 = vpop.f32.mrb[0].mxu0
  %v2783 = vadd.f32 %v2743, %v2782
  %v2784 = vpop.f32.mrb[0].mxu0
  %v2785 = vpop.f32.mrb[0].mxu0
  %v2786 = vpop.f32.mrb[0].mxu0
  %2787 = vdwg.mxu0
  %2788 = vmatprep.subr.bf16.mxu0 0
  %2789 = vmatpush1.bf16.msra.mxu0 %v1916
  %2790 = vmatprep.subr.bf16.mxu0 0
  %2791 = vmatpush1.bf16.msra.mxu0 %v1917
  %2792 = vmatprep.subr.bf16.mxu0 0
  %2793 = vmatpush1.bf16.msra.mxu0 %v1918
  %2794 = vmatprep.subr.bf16.mxu0 0
  %2795 = vmatpush1.bf16.msra.mxu0 %v1919
  %2796 = vmatprep.subr.bf16.mxu0 0
  %2797 = vmatpush1.bf16.msra.mxu0 %v1920
  %2798 = vmatprep.subr.bf16.mxu0 0
  %2799 = vmatpush1.bf16.msra.mxu0 %v1921
  %2800 = vmatprep.subr.bf16.mxu0 0
  %2801 = vmatpush1.bf16.msra.mxu0 %v1922
  %2802 = vmatprep.subr.bf16.mxu0 0
  %2803 = vmatpush1.bf16.msra.mxu0 %v1923
  %2804 = vmatprep.subr.bf16.mxu0 0
  %2805 = vmatpush1.bf16.msra.mxu0 %v1924
  %2806 = vmatprep.subr.bf16.mxu0 0
  %2807 = vmatpush1.bf16.msra.mxu0 %v1925
  %2808 = vmatprep.subr.bf16.mxu0 0
  %2809 = vmatpush1.bf16.msra.mxu0 %v1926
  %2810 = vmatprep.subr.bf16.mxu0 0
  %2811 = vmatpush1.bf16.msra.mxu0 %v1927
  %2812 = vmatprep.subr.bf16.mxu0 0
  %2813 = vmatpush1.bf16.msra.mxu0 %v1928
  %2814 = vmatprep.subr.bf16.mxu0 0
  %2815 = vmatpush1.bf16.msra.mxu0 %v1929
  %2816 = vmatprep.subr.bf16.mxu0 0
  %2817 = vmatpush1.bf16.msra.mxu0 %v1930
  %2818 = vmatprep.subr.bf16.mxu0 0
  %2819 = vmatpush1.bf16.msra.mxu0 %v1931
  %2820 = vmatprep.mubr.bf16.mxu0 %v619
  %2821 = vmatmul.mubr.bf16.gmra.mrb[0].mxu0 %v618
  %v2822 = vpop.f32.mrb[0].mxu0
  %v2823 = vadd.f32 %v2783, %v2822
  %v2824 = vpop.f32.mrb[0].mxu0
  %v2825 = vpop.f32.mrb[0].mxu0
  %v2826 = vpop.f32.mrb[0].mxu0
  %2827 = vdwg.mxu0
  %v2828 = vxor.u32 %v2823, 2147483648
  %v2829 = vmul.f32 %v2828, 1.442695
  %v2830 = vpow.pop %v2829
  %v2831 = vadd.f32 %v2830, 1.0
  %v2832 = vrcp.pop %v2831
  %v2833 = vmul.f32 1.0, %v2832
  %2834 = vst [vmem:[%s2] sm:$0xff] %v2833
  // Predicated region
  $region10: #{discriminator_forward.13} parent=0 // pred_check
    _
  $region11: #{discriminator_forward.13} parent=0 // pred_check_branch
    %2836 = sbr.rel (0) target = $region13
  $region12: #{discriminator_forward.13} parent=0 // pred_region
    _
  $region13: #{discriminator_forward.13} parent=0 // pred_fallthru
    _
  // Predicated region
  $region14: #{discriminator_forward.13} parent=0 // pred_check
    _
  $region15: #{discriminator_forward.13} parent=0 // pred_check_branch
    %2838 = sbr.rel (0) target = $region17
  $region16: #{discriminator_forward.13} parent=0 // pred_region
    _
  $region17: #{discriminator_forward.13} parent=0 // pred_fallthru
    _

</llo_original>
